<compile_context>
chip_gen: v6e
topology: v6e:2x2x1
jax: 0.10.0
libtpu: 0.0.40
codegen_flags: <defaults>
</compile_context>

<pallas_src>
import functools

import jax
import jax.numpy as jnp
from jax.experimental import pallas as pl
from jax.experimental.pallas import tpu as pltpu

EPS = 1e-5          # nn.BatchNorm2d default eps
LANES = 128         # channel padding -> lane-dense vregs, unmasked vst
SUBLANES = 8        # batch padding  -> tile-preserving reshapes
NUM_LAYERS = 4
COUT = 24


def _conv_relu_bn_layer(x, w_taps, bias, gamma, beta, n_real_batch):
    """One Conv2d(3x3, stride=2, pad=1) + bias -> ReLU -> BatchNorm2d (batch stats).

    x:      (H, W, Bp, C) f32 value (Bp = 8, C = 128, zero padded)
    w_taps: (9, C, C)     conv weight, tap-major (kh*3+kw), [cin, cout]
    bias/gamma/beta: (1, C)
    """
    H, W, Bp, C = x.shape
    assert H % 2 == 0 and W % 2 == 0, "stride-2 layer expects even spatial dims"
    Ho, Wo = H // 2, W // 2
    M = Ho * Wo * Bp

    # --- zero-pad the spatial border (leading-dim concats only) ---------------
    zrow = jnp.zeros((1, W, Bp, C), x.dtype)
    xh = jnp.concatenate([zrow, x, zrow], axis=0)            # (H+2, W,   Bp, C)
    zcol = jnp.zeros((H + 2, 1, Bp, C), x.dtype)
    xp = jnp.concatenate([zcol, xh, zcol], axis=1)           # (H+2, W+2, Bp, C)

    # --- expose the stride-2 even/odd structure on leading dims (free) --------
    xr = xp.reshape(Ho + 1, 2, Wo + 1, 2, Bp, C)

    # kernel offset -> (block start, parity):  tap rows are {2*o + k}
    sel = ((0, 0), (0, 1), (1, 0))

    # --- 9-tap im2col as 9 accumulated MXU matmuls (K = 128 each) -------------
    y = None
    for kh in range(3):
        h0, hp = sel[kh]
        for kw in range(3):
            w0, wp = sel[kw]
            tap = xr[h0:h0 + Ho, hp, w0:w0 + Wo, wp, :, :]   # (Ho, Wo, Bp, C)
            t2d = tap.reshape(M, C)                          # tile preserving
            part = jnp.dot(t2d, w_taps[kh * 3 + kw],
                           preferred_element_type=jnp.float32)
            y = part if y is None else y + part

    y = y + bias                                             # conv bias
    y = jnp.maximum(y, 0.0)                                  # ReLU

    # --- BatchNorm2d, training-mode biased stats over the *real* rows only ----
    ridx = jax.lax.broadcasted_iota(jnp.int32, (M, 1), 0)
    mask = (jnp.bitwise_and(ridx, Bp - 1) < n_real_batch).astype(jnp.float32)
    cnt = float(Ho * Wo * n_real_batch)
    s1 = jnp.sum(y * mask, axis=0, keepdims=True)
    s2 = jnp.sum(y * y * mask, axis=0, keepdims=True)
    mean = s1 * (1.0 / cnt)
    var = jnp.maximum(s2 * (1.0 / cnt) - mean * mean, 0.0)
    scale = gamma * jax.lax.rsqrt(var + EPS)                 # (1, C)
    shift = beta - mean * scale                              # (1, C)
    y = y * scale + shift                                    # single FMA epilogue

    return y.reshape(Ho, Wo, Bp, C)


def _fused_cnn_kernel(x_ref, w_ref, b_ref, g_ref, beta_ref, o_ref, *, n_real_batch):
    x = x_ref[...]                                           # (H, W, 8, 128)
    for layer in range(NUM_LAYERS):
        x = _conv_relu_bn_layer(x, w_ref[layer], b_ref[layer], g_ref[layer],
                                beta_ref[layer], n_real_batch)
    o_ref[...] = x                                           # (Hf, Wf, 8, 128)


def _pack_params(params):
    """Pack (w_oihw, b, gamma, beta) per layer into padded stacked arrays."""
    ws, bs, gs, betas = [], [], [], []
    for (w, b, g, beta) in params:
        cout, cin = w.shape[0], w.shape[1]
        wt = jnp.transpose(w, (2, 3, 1, 0))                  # (3, 3, cin, cout)
        wt = jnp.pad(wt, ((0, 0), (0, 0), (0, LANES - cin), (0, LANES - cout)))
        ws.append(wt.reshape(9, LANES, LANES))
        bs.append(jnp.pad(b, (0, LANES - cout)).reshape(1, LANES))
        gs.append(jnp.pad(g, (0, LANES - cout)).reshape(1, LANES))
        betas.append(jnp.pad(beta, (0, LANES - cout)).reshape(1, LANES))
    return jnp.stack(ws), jnp.stack(bs), jnp.stack(gs), jnp.stack(betas)


def image_encoding(img_nchw, params):
    """Forward pass equivalent to ImageEncoding.forward (training-mode BN)."""
    B, Cin, H, W = img_nchw.shape
    assert B <= SUBLANES and Cin <= LANES

    w_all, b_all, g_all, beta_all = _pack_params(params)

    # NCHW -> (H, W, B, C), pad batch -> 8 sublanes, channels -> 128 lanes.
    x = jnp.transpose(img_nchw, (2, 3, 0, 1)).astype(jnp.float32)
    x = jnp.pad(x, ((0, 0), (0, 0), (0, SUBLANES - B), (0, LANES - Cin)))

    hf, wf, flops = H, W, 0
    for _ in range(NUM_LAYERS):
        hf, wf = hf // 2, wf // 2
        flops += 2 * (hf * wf * SUBLANES) * (9 * LANES) * LANES

    out_elems = hf * wf * SUBLANES * LANES
    bytes_accessed = 4 * (x.size + w_all.size + b_all.size + g_all.size
                          + beta_all.size + out_elems)

    kernel = functools.partial(_fused_cnn_kernel, n_real_batch=B)
    out = pl.pallas_call(
        kernel,
        out_shape=jax.ShapeDtypeStruct((hf, wf, SUBLANES, LANES), jnp.float32),
        in_specs=[pl.BlockSpec(memory_space=pltpu.MemorySpace.VMEM)] * 5,
        out_specs=pl.BlockSpec(memory_space=pltpu.MemorySpace.VMEM),
        cost_estimate=pl.CostEstimate(flops=flops,
                                      transcendentals=NUM_LAYERS * LANES,
                                      bytes_accessed=bytes_accessed),
    )(x, w_all, b_all, g_all, beta_all)

    out = out[:, :, :B, :COUT]                  # drop batch/channel padding
    return jnp.transpose(out, (2, 3, 0, 1))     # (B, 24, Hf, Wf)


def init_params(key):
    """Deterministic parameter init mimicking PyTorch defaults (shapes from __init__)."""
    params = []
    cins = [3, 24, 24, 24]
    for cin in cins:
        key, k1, k2 = jax.random.split(key, 3)
        fan_in = cin * 3 * 3
        bound = 1.0 / (fan_in ** 0.5)
        w = jax.random.uniform(k1, (COUT, cin, 3, 3), minval=-bound, maxval=bound,
                               dtype=jnp.float32)
        b = jax.random.uniform(k2, (COUT,), minval=-bound, maxval=bound,
                               dtype=jnp.float32)
        gamma = jnp.ones((COUT,), jnp.float32)   # BatchNorm2d default weight
        beta = jnp.zeros((COUT,), jnp.float32)   # BatchNorm2d default bias
        params.append((w, b, gamma, beta))
    return params


def _reference(img, params):
    """Pure-JAX (XLA) reference: Conv -> bias -> ReLU -> BatchNorm (batch stats)."""
    x = img
    for (w, b, g, beta) in params:
        x = jax.lax.conv_general_dilated(
            x, w, window_strides=(2, 2), padding=((1, 1), (1, 1)),
            dimension_numbers=('NCHW', 'OIHW', 'NCHW'))
        x = x + b.reshape(1, -1, 1, 1)
        x = jnp.maximum(x, 0.0)
        mean = jnp.mean(x, axis=(0, 2, 3), keepdims=True)
        var = jnp.mean(jnp.square(x - mean), axis=(0, 2, 3), keepdims=True)
        x = ((x - mean) * jax.lax.rsqrt(var + EPS) * g.reshape(1, -1, 1, 1)
             + beta.reshape(1, -1, 1, 1))
    return x


if __name__ == "__main__":
    key = jax.random.PRNGKey(0)
    key, pkey, xkey = jax.random.split(key, 3)
    params = init_params(pkey)
    # Small input consistent with the module: [batch=2, channels=3, H=16, W=16]
    img = jax.random.normal(xkey, (2, 3, 16, 16), dtype=jnp.float32)

    out = jax.jit(image_encoding)(img, params)
    out = jax.block_until_ready(out)
    assert out.shape == (2, 24, 1, 1), out.shape   # 16 -> 8 -> 4 -> 2 -> 1 spatial
    assert bool(jnp.all(jnp.isfinite(out)))

    ref = _reference(img, params)
    max_err = float(jnp.max(jnp.abs(out - ref)))
    assert max_err < 2e-3, f"mismatch vs reference: {max_err}"

    print("KERNEL_OK")
</pallas_src>

<mosaic_0001>
module attributes {stable_mosaic.version = 11 : i64} {
  func.func @_fused_cnn_kernel(%arg0: memref<16x16x8x128xf32, #tpu.memory_space<vmem>>, %arg1: memref<4x9x128x128xf32, #tpu.memory_space<vmem>>, %arg2: memref<4x1x128xf32, #tpu.memory_space<vmem>>, %arg3: memref<4x1x128xf32, #tpu.memory_space<vmem>>, %arg4: memref<4x1x128xf32, #tpu.memory_space<vmem>>, %arg5: memref<1x1x8x128xf32, #tpu.memory_space<vmem>>) attributes {dimension_semantics = [], scalar_prefetch = 0 : i64, scratch_operands = 0 : i64, tpu.core_type = #tpu.core_type<tc>} {
    %c0 = arith.constant 0 : index
    %c0_0 = arith.constant 0 : index
    %c0_1 = arith.constant 0 : index
    %c0_2 = arith.constant 0 : index
    %0 = vector.load %arg0[%c0, %c0_0, %c0_1, %c0_2] : memref<16x16x8x128xf32, #tpu.memory_space<vmem>>, vector<16x16x8x128xf32>
    %c0_3 = arith.constant 0 : index
    %c0_4 = arith.constant 0 : index
    %c0_5 = arith.constant 0 : index
    %c0_6 = arith.constant 0 : index
    %1 = vector.load %arg1[%c0_3, %c0_4, %c0_5, %c0_6] : memref<4x9x128x128xf32, #tpu.memory_space<vmem>>, vector<1x9x128x128xf32>
    %2 = vector.shape_cast %1 : vector<1x9x128x128xf32> to vector<9x128x128xf32>
    %c0_7 = arith.constant 0 : index
    %c0_8 = arith.constant 0 : index
    %c0_9 = arith.constant 0 : index
    %3 = vector.load %arg2[%c0_7, %c0_8, %c0_9] : memref<4x1x128xf32, #tpu.memory_space<vmem>>, vector<1x1x128xf32>
    %4 = vector.shape_cast %3 : vector<1x1x128xf32> to vector<1x128xf32>
    %c0_10 = arith.constant 0 : index
    %c0_11 = arith.constant 0 : index
    %c0_12 = arith.constant 0 : index
    %5 = vector.load %arg3[%c0_10, %c0_11, %c0_12] : memref<4x1x128xf32, #tpu.memory_space<vmem>>, vector<1x1x128xf32>
    %6 = vector.shape_cast %5 : vector<1x1x128xf32> to vector<1x128xf32>
    %c0_13 = arith.constant 0 : index
    %c0_14 = arith.constant 0 : index
    %c0_15 = arith.constant 0 : index
    %7 = vector.load %arg4[%c0_13, %c0_14, %c0_15] : memref<4x1x128xf32, #tpu.memory_space<vmem>>, vector<1x1x128xf32>
    %8 = vector.shape_cast %7 : vector<1x1x128xf32> to vector<1x128xf32>
    %cst = arith.constant 0.000000e+00 : f32
    %9 = vector.broadcast %cst : f32 to vector<1x16x8x128xf32>
    %10 = tpu.concatenate %9, %0, %9 in 0 : vector<1x16x8x128xf32>, vector<16x16x8x128xf32>, vector<1x16x8x128xf32> -> vector<18x16x8x128xf32>
    %cst_16 = arith.constant 0.000000e+00 : f32
    %11 = vector.broadcast %cst_16 : f32 to vector<18x1x8x128xf32>
    %12 = tpu.concatenate %11, %10, %11 in 1 : vector<18x1x8x128xf32>, vector<18x16x8x128xf32>, vector<18x1x8x128xf32> -> vector<18x18x8x128xf32>
    %13 = vector.shape_cast %12 : vector<18x18x8x128xf32> to vector<9x2x9x2x8x128xf32>
    %14 = vector.extract_strided_slice %13 {offsets = [0, 0, 0, 0, 0, 0], sizes = [8, 1, 8, 1, 8, 128], strides = [1, 1, 1, 1, 1, 1]} : vector<9x2x9x2x8x128xf32> to vector<8x1x8x1x8x128xf32>
    %15 = vector.shape_cast %14 : vector<8x1x8x1x8x128xf32> to vector<8x8x8x128xf32>
    %16 = vector.shape_cast %15 : vector<8x8x8x128xf32> to vector<512x128xf32>
    %17 = vector.extract_strided_slice %2 {offsets = [0, 0, 0], sizes = [1, 128, 128], strides = [1, 1, 1]} : vector<9x128x128xf32> to vector<1x128x128xf32>
    %18 = vector.shape_cast %17 : vector<1x128x128xf32> to vector<128x128xf32>
    %cst_17 = arith.constant dense<0.000000e+00> : vector<512x128xf32>
    %19 = tpu.matmul %16, %18, %cst_17 {dimension_numbers = #tpu.dot_dimension_numbers<[1], [0], [0], [1], [0, 0, 1, 1], [], []>} : vector<512x128xf32>, vector<128x128xf32>, vector<512x128xf32> -> vector<512x128xf32>
    %20 = vector.extract_strided_slice %13 {offsets = [0, 0, 0, 1, 0, 0], sizes = [8, 1, 8, 1, 8, 128], strides = [1, 1, 1, 1, 1, 1]} : vector<9x2x9x2x8x128xf32> to vector<8x1x8x1x8x128xf32>
    %21 = vector.shape_cast %20 : vector<8x1x8x1x8x128xf32> to vector<8x8x8x128xf32>
    %22 = vector.shape_cast %21 : vector<8x8x8x128xf32> to vector<512x128xf32>
    %23 = vector.extract_strided_slice %2 {offsets = [1, 0, 0], sizes = [1, 128, 128], strides = [1, 1, 1]} : vector<9x128x128xf32> to vector<1x128x128xf32>
    %24 = vector.shape_cast %23 : vector<1x128x128xf32> to vector<128x128xf32>
    %cst_18 = arith.constant dense<0.000000e+00> : vector<512x128xf32>
    %25 = tpu.matmul %22, %24, %cst_18 {dimension_numbers = #tpu.dot_dimension_numbers<[1], [0], [0], [1], [0, 0, 1, 1], [], []>} : vector<512x128xf32>, vector<128x128xf32>, vector<512x128xf32> -> vector<512x128xf32>
    %26 = arith.addf %19, %25 : vector<512x128xf32>
    %27 = vector.extract_strided_slice %13 {offsets = [0, 0, 1, 0, 0, 0], sizes = [8, 1, 8, 1, 8, 128], strides = [1, 1, 1, 1, 1, 1]} : vector<9x2x9x2x8x128xf32> to vector<8x1x8x1x8x128xf32>
    %28 = vector.shape_cast %27 : vector<8x1x8x1x8x128xf32> to vector<8x8x8x128xf32>
    %29 = vector.shape_cast %28 : vector<8x8x8x128xf32> to vector<512x128xf32>
    %30 = vector.extract_strided_slice %2 {offsets = [2, 0, 0], sizes = [1, 128, 128], strides = [1, 1, 1]} : vector<9x128x128xf32> to vector<1x128x128xf32>
    %31 = vector.shape_cast %30 : vector<1x128x128xf32> to vector<128x128xf32>
    %cst_19 = arith.constant dense<0.000000e+00> : vector<512x128xf32>
    %32 = tpu.matmul %29, %31, %cst_19 {dimension_numbers = #tpu.dot_dimension_numbers<[1], [0], [0], [1], [0, 0, 1, 1], [], []>} : vector<512x128xf32>, vector<128x128xf32>, vector<512x128xf32> -> vector<512x128xf32>
    %33 = arith.addf %26, %32 : vector<512x128xf32>
    %34 = vector.extract_strided_slice %13 {offsets = [0, 1, 0, 0, 0, 0], sizes = [8, 1, 8, 1, 8, 128], strides = [1, 1, 1, 1, 1, 1]} : vector<9x2x9x2x8x128xf32> to vector<8x1x8x1x8x128xf32>
    %35 = vector.shape_cast %34 : vector<8x1x8x1x8x128xf32> to vector<8x8x8x128xf32>
    %36 = vector.shape_cast %35 : vector<8x8x8x128xf32> to vector<512x128xf32>
    %37 = vector.extract_strided_slice %2 {offsets = [3, 0, 0], sizes = [1, 128, 128], strides = [1, 1, 1]} : vector<9x128x128xf32> to vector<1x128x128xf32>
    %38 = vector.shape_cast %37 : vector<1x128x128xf32> to vector<128x128xf32>
    %cst_20 = arith.constant dense<0.000000e+00> : vector<512x128xf32>
    %39 = tpu.matmul %36, %38, %cst_20 {dimension_numbers = #tpu.dot_dimension_numbers<[1], [0], [0], [1], [0, 0, 1, 1], [], []>} : vector<512x128xf32>, vector<128x128xf32>, vector<512x128xf32> -> vector<512x128xf32>
    %40 = arith.addf %33, %39 : vector<512x128xf32>
    %41 = vector.extract_strided_slice %13 {offsets = [0, 1, 0, 1, 0, 0], sizes = [8, 1, 8, 1, 8, 128], strides = [1, 1, 1, 1, 1, 1]} : vector<9x2x9x2x8x128xf32> to vector<8x1x8x1x8x128xf32>
    %42 = vector.shape_cast %41 : vector<8x1x8x1x8x128xf32> to vector<8x8x8x128xf32>
    %43 = vector.shape_cast %42 : vector<8x8x8x128xf32> to vector<512x128xf32>
    %44 = vector.extract_strided_slice %2 {offsets = [4, 0, 0], sizes = [1, 128, 128], strides = [1, 1, 1]} : vector<9x128x128xf32> to vector<1x128x128xf32>
    %45 = vector.shape_cast %44 : vector<1x128x128xf32> to vector<128x128xf32>
    %cst_21 = arith.constant dense<0.000000e+00> : vector<512x128xf32>
    %46 = tpu.matmul %43, %45, %cst_21 {dimension_numbers = #tpu.dot_dimension_numbers<[1], [0], [0], [1], [0, 0, 1, 1], [], []>} : vector<512x128xf32>, vector<128x128xf32>, vector<512x128xf32> -> vector<512x128xf32>
    %47 = arith.addf %40, %46 : vector<512x128xf32>
    %48 = vector.extract_strided_slice %13 {offsets = [0, 1, 1, 0, 0, 0], sizes = [8, 1, 8, 1, 8, 128], strides = [1, 1, 1, 1, 1, 1]} : vector<9x2x9x2x8x128xf32> to vector<8x1x8x1x8x128xf32>
    %49 = vector.shape_cast %48 : vector<8x1x8x1x8x128xf32> to vector<8x8x8x128xf32>
    %50 = vector.shape_cast %49 : vector<8x8x8x128xf32> to vector<512x128xf32>
    %51 = vector.extract_strided_slice %2 {offsets = [5, 0, 0], sizes = [1, 128, 128], strides = [1, 1, 1]} : vector<9x128x128xf32> to vector<1x128x128xf32>
    %52 = vector.shape_cast %51 : vector<1x128x128xf32> to vector<128x128xf32>
    %cst_22 = arith.constant dense<0.000000e+00> : vector<512x128xf32>
    %53 = tpu.matmul %50, %52, %cst_22 {dimension_numbers = #tpu.dot_dimension_numbers<[1], [0], [0], [1], [0, 0, 1, 1], [], []>} : vector<512x128xf32>, vector<128x128xf32>, vector<512x128xf32> -> vector<512x128xf32>
    %54 = arith.addf %47, %53 : vector<512x128xf32>
    %55 = vector.extract_strided_slice %13 {offsets = [1, 0, 0, 0, 0, 0], sizes = [8, 1, 8, 1, 8, 128], strides = [1, 1, 1, 1, 1, 1]} : vector<9x2x9x2x8x128xf32> to vector<8x1x8x1x8x128xf32>
    %56 = vector.shape_cast %55 : vector<8x1x8x1x8x128xf32> to vector<8x8x8x128xf32>
    %57 = vector.shape_cast %56 : vector<8x8x8x128xf32> to vector<512x128xf32>
    %58 = vector.extract_strided_slice %2 {offsets = [6, 0, 0], sizes = [1, 128, 128], strides = [1, 1, 1]} : vector<9x128x128xf32> to vector<1x128x128xf32>
    %59 = vector.shape_cast %58 : vector<1x128x128xf32> to vector<128x128xf32>
    %cst_23 = arith.constant dense<0.000000e+00> : vector<512x128xf32>
    %60 = tpu.matmul %57, %59, %cst_23 {dimension_numbers = #tpu.dot_dimension_numbers<[1], [0], [0], [1], [0, 0, 1, 1], [], []>} : vector<512x128xf32>, vector<128x128xf32>, vector<512x128xf32> -> vector<512x128xf32>
    %61 = arith.addf %54, %60 : vector<512x128xf32>
    %62 = vector.extract_strided_slice %13 {offsets = [1, 0, 0, 1, 0, 0], sizes = [8, 1, 8, 1, 8, 128], strides = [1, 1, 1, 1, 1, 1]} : vector<9x2x9x2x8x128xf32> to vector<8x1x8x1x8x128xf32>
    %63 = vector.shape_cast %62 : vector<8x1x8x1x8x128xf32> to vector<8x8x8x128xf32>
    %64 = vector.shape_cast %63 : vector<8x8x8x128xf32> to vector<512x128xf32>
    %65 = vector.extract_strided_slice %2 {offsets = [7, 0, 0], sizes = [1, 128, 128], strides = [1, 1, 1]} : vector<9x128x128xf32> to vector<1x128x128xf32>
    %66 = vector.shape_cast %65 : vector<1x128x128xf32> to vector<128x128xf32>
    %cst_24 = arith.constant dense<0.000000e+00> : vector<512x128xf32>
    %67 = tpu.matmul %64, %66, %cst_24 {dimension_numbers = #tpu.dot_dimension_numbers<[1], [0], [0], [1], [0, 0, 1, 1], [], []>} : vector<512x128xf32>, vector<128x128xf32>, vector<512x128xf32> -> vector<512x128xf32>
    %68 = arith.addf %61, %67 : vector<512x128xf32>
    %69 = vector.extract_strided_slice %13 {offsets = [1, 0, 1, 0, 0, 0], sizes = [8, 1, 8, 1, 8, 128], strides = [1, 1, 1, 1, 1, 1]} : vector<9x2x9x2x8x128xf32> to vector<8x1x8x1x8x128xf32>
    %70 = vector.shape_cast %69 : vector<8x1x8x1x8x128xf32> to vector<8x8x8x128xf32>
    %71 = vector.shape_cast %70 : vector<8x8x8x128xf32> to vector<512x128xf32>
    %72 = vector.extract_strided_slice %2 {offsets = [8, 0, 0], sizes = [1, 128, 128], strides = [1, 1, 1]} : vector<9x128x128xf32> to vector<1x128x128xf32>
    %73 = vector.shape_cast %72 : vector<1x128x128xf32> to vector<128x128xf32>
    %cst_25 = arith.constant dense<0.000000e+00> : vector<512x128xf32>
    %74 = tpu.matmul %71, %73, %cst_25 {dimension_numbers = #tpu.dot_dimension_numbers<[1], [0], [0], [1], [0, 0, 1, 1], [], []>} : vector<512x128xf32>, vector<128x128xf32>, vector<512x128xf32> -> vector<512x128xf32>
    %75 = arith.addf %68, %74 : vector<512x128xf32>
    %76 = vector.broadcast %4 : vector<1x128xf32> to vector<512x128xf32>
    %77 = arith.addf %75, %76 : vector<512x128xf32>
    %cst_26 = arith.constant 0.000000e+00 : f32
    %78 = vector.broadcast %cst_26 : f32 to vector<512x128xf32>
    %79 = arith.maximumf %77, %78 : vector<512x128xf32>
    %80 = tpu.iota {dimensions = array<i32: 0>} : vector<512x1xi32>
    %c7_i32 = arith.constant 7 : i32
    %81 = vector.broadcast %c7_i32 : i32 to vector<512x1xi32>
    %82 = arith.andi %80, %81 : vector<512x1xi32>
    %c2_i32 = arith.constant 2 : i32
    %83 = vector.broadcast %c2_i32 : i32 to vector<512x1xi32>
    %84 = arith.cmpi slt, %82, %83 : vector<512x1xi32>
    %85 = arith.extui %84 : vector<512x1xi1> to vector<512x1xi32>
    %86 = arith.sitofp %85 : vector<512x1xi32> to vector<512x1xf32>
    %87 = vector.broadcast %86 : vector<512x1xf32> to vector<512x128xf32>
    %88 = arith.mulf %79, %87 : vector<512x128xf32>
    %cst_27 = arith.constant dense<0.000000e+00> : vector<128xf32>
    %89 = vector.multi_reduction <add>, %88, %cst_27 [0] : vector<512x128xf32> to vector<128xf32>
    %90 = vector.shape_cast %89 : vector<128xf32> to vector<1x128xf32>
    %91 = arith.mulf %79, %79 : vector<512x128xf32>
    %92 = vector.broadcast %86 : vector<512x1xf32> to vector<512x128xf32>
    %93 = arith.mulf %91, %92 : vector<512x128xf32>
    %cst_28 = arith.constant dense<0.000000e+00> : vector<128xf32>
    %94 = vector.multi_reduction <add>, %93, %cst_28 [0] : vector<512x128xf32> to vector<128xf32>
    %95 = vector.shape_cast %94 : vector<128xf32> to vector<1x128xf32>
    %cst_29 = arith.constant 7.812500e-03 : f32
    %96 = vector.broadcast %cst_29 : f32 to vector<1x128xf32>
    %97 = arith.mulf %90, %96 : vector<1x128xf32>
    %cst_30 = arith.constant 7.812500e-03 : f32
    %98 = vector.broadcast %cst_30 : f32 to vector<1x128xf32>
    %99 = arith.mulf %95, %98 : vector<1x128xf32>
    %100 = arith.mulf %97, %97 : vector<1x128xf32>
    %101 = arith.subf %99, %100 : vector<1x128xf32>
    %cst_31 = arith.constant 0.000000e+00 : f32
    %102 = vector.broadcast %cst_31 : f32 to vector<1x128xf32>
    %103 = arith.maximumf %101, %102 : vector<1x128xf32>
    %cst_32 = arith.constant 9.99999974E-6 : f32
    %104 = vector.broadcast %cst_32 : f32 to vector<1x128xf32>
    %105 = arith.addf %103, %104 : vector<1x128xf32>
    %106 = math.rsqrt %105 : vector<1x128xf32>
    %107 = arith.mulf %6, %106 : vector<1x128xf32>
    %108 = arith.mulf %97, %107 : vector<1x128xf32>
    %109 = arith.subf %8, %108 : vector<1x128xf32>
    %110 = vector.broadcast %107 : vector<1x128xf32> to vector<512x128xf32>
    %111 = arith.mulf %79, %110 : vector<512x128xf32>
    %112 = vector.broadcast %109 : vector<1x128xf32> to vector<512x128xf32>
    %113 = arith.addf %111, %112 : vector<512x128xf32>
    %114 = vector.shape_cast %113 : vector<512x128xf32> to vector<8x8x8x128xf32>
    %c1 = arith.constant 1 : index
    %c0_33 = arith.constant 0 : index
    %c0_34 = arith.constant 0 : index
    %c0_35 = arith.constant 0 : index
    %115 = vector.load %arg1[%c1, %c0_33, %c0_34, %c0_35] : memref<4x9x128x128xf32, #tpu.memory_space<vmem>>, vector<1x9x128x128xf32>
    %116 = vector.shape_cast %115 : vector<1x9x128x128xf32> to vector<9x128x128xf32>
    %c1_36 = arith.constant 1 : index
    %c0_37 = arith.constant 0 : index
    %c0_38 = arith.constant 0 : index
    %117 = vector.load %arg2[%c1_36, %c0_37, %c0_38] : memref<4x1x128xf32, #tpu.memory_space<vmem>>, vector<1x1x128xf32>
    %118 = vector.shape_cast %117 : vector<1x1x128xf32> to vector<1x128xf32>
    %c1_39 = arith.constant 1 : index
    %c0_40 = arith.constant 0 : index
    %c0_41 = arith.constant 0 : index
    %119 = vector.load %arg3[%c1_39, %c0_40, %c0_41] : memref<4x1x128xf32, #tpu.memory_space<vmem>>, vector<1x1x128xf32>
    %120 = vector.shape_cast %119 : vector<1x1x128xf32> to vector<1x128xf32>
    %c1_42 = arith.constant 1 : index
    %c0_43 = arith.constant 0 : index
    %c0_44 = arith.constant 0 : index
    %121 = vector.load %arg4[%c1_42, %c0_43, %c0_44] : memref<4x1x128xf32, #tpu.memory_space<vmem>>, vector<1x1x128xf32>
    %122 = vector.shape_cast %121 : vector<1x1x128xf32> to vector<1x128xf32>
    %cst_45 = arith.constant 0.000000e+00 : f32
    %123 = vector.broadcast %cst_45 : f32 to vector<1x8x8x128xf32>
    %124 = tpu.concatenate %123, %114, %123 in 0 : vector<1x8x8x128xf32>, vector<8x8x8x128xf32>, vector<1x8x8x128xf32> -> vector<10x8x8x128xf32>
    %cst_46 = arith.constant 0.000000e+00 : f32
    %125 = vector.broadcast %cst_46 : f32 to vector<10x1x8x128xf32>
    %126 = tpu.concatenate %125, %124, %125 in 1 : vector<10x1x8x128xf32>, vector<10x8x8x128xf32>, vector<10x1x8x128xf32> -> vector<10x10x8x128xf32>
    %127 = vector.shape_cast %126 : vector<10x10x8x128xf32> to vector<5x2x5x2x8x128xf32>
    %128 = vector.extract_strided_slice %127 {offsets = [0, 0, 0, 0, 0, 0], sizes = [4, 1, 4, 1, 8, 128], strides = [1, 1, 1, 1, 1, 1]} : vector<5x2x5x2x8x128xf32> to vector<4x1x4x1x8x128xf32>
    %129 = vector.shape_cast %128 : vector<4x1x4x1x8x128xf32> to vector<4x4x8x128xf32>
    %130 = vector.shape_cast %129 : vector<4x4x8x128xf32> to vector<128x128xf32>
    %131 = vector.extract_strided_slice %116 {offsets = [0, 0, 0], sizes = [1, 128, 128], strides = [1, 1, 1]} : vector<9x128x128xf32> to vector<1x128x128xf32>
    %132 = vector.shape_cast %131 : vector<1x128x128xf32> to vector<128x128xf32>
    %cst_47 = arith.constant dense<0.000000e+00> : vector<128x128xf32>
    %133 = tpu.matmul %130, %132, %cst_47 {dimension_numbers = #tpu.dot_dimension_numbers<[1], [0], [0], [1], [0, 0, 1, 1], [], []>} : vector<128x128xf32>, vector<128x128xf32>, vector<128x128xf32> -> vector<128x128xf32>
    %134 = vector.extract_strided_slice %127 {offsets = [0, 0, 0, 1, 0, 0], sizes = [4, 1, 4, 1, 8, 128], strides = [1, 1, 1, 1, 1, 1]} : vector<5x2x5x2x8x128xf32> to vector<4x1x4x1x8x128xf32>
    %135 = vector.shape_cast %134 : vector<4x1x4x1x8x128xf32> to vector<4x4x8x128xf32>
    %136 = vector.shape_cast %135 : vector<4x4x8x128xf32> to vector<128x128xf32>
    %137 = vector.extract_strided_slice %116 {offsets = [1, 0, 0], sizes = [1, 128, 128], strides = [1, 1, 1]} : vector<9x128x128xf32> to vector<1x128x128xf32>
    %138 = vector.shape_cast %137 : vector<1x128x128xf32> to vector<128x128xf32>
    %cst_48 = arith.constant dense<0.000000e+00> : vector<128x128xf32>
    %139 = tpu.matmul %136, %138, %cst_48 {dimension_numbers = #tpu.dot_dimension_numbers<[1], [0], [0], [1], [0, 0, 1, 1], [], []>} : vector<128x128xf32>, vector<128x128xf32>, vector<128x128xf32> -> vector<128x128xf32>
    %140 = arith.addf %133, %139 : vector<128x128xf32>
    %141 = vector.extract_strided_slice %127 {offsets = [0, 0, 1, 0, 0, 0], sizes = [4, 1, 4, 1, 8, 128], strides = [1, 1, 1, 1, 1, 1]} : vector<5x2x5x2x8x128xf32> to vector<4x1x4x1x8x128xf32>
    %142 = vector.shape_cast %141 : vector<4x1x4x1x8x128xf32> to vector<4x4x8x128xf32>
    %143 = vector.shape_cast %142 : vector<4x4x8x128xf32> to vector<128x128xf32>
    %144 = vector.extract_strided_slice %116 {offsets = [2, 0, 0], sizes = [1, 128, 128], strides = [1, 1, 1]} : vector<9x128x128xf32> to vector<1x128x128xf32>
    %145 = vector.shape_cast %144 : vector<1x128x128xf32> to vector<128x128xf32>
    %cst_49 = arith.constant dense<0.000000e+00> : vector<128x128xf32>
    %146 = tpu.matmul %143, %145, %cst_49 {dimension_numbers = #tpu.dot_dimension_numbers<[1], [0], [0], [1], [0, 0, 1, 1], [], []>} : vector<128x128xf32>, vector<128x128xf32>, vector<128x128xf32> -> vector<128x128xf32>
    %147 = arith.addf %140, %146 : vector<128x128xf32>
    %148 = vector.extract_strided_slice %127 {offsets = [0, 1, 0, 0, 0, 0], sizes = [4, 1, 4, 1, 8, 128], strides = [1, 1, 1, 1, 1, 1]} : vector<5x2x5x2x8x128xf32> to vector<4x1x4x1x8x128xf32>
    %149 = vector.shape_cast %148 : vector<4x1x4x1x8x128xf32> to vector<4x4x8x128xf32>
    %150 = vector.shape_cast %149 : vector<4x4x8x128xf32> to vector<128x128xf32>
    %151 = vector.extract_strided_slice %116 {offsets = [3, 0, 0], sizes = [1, 128, 128], strides = [1, 1, 1]} : vector<9x128x128xf32> to vector<1x128x128xf32>
    %152 = vector.shape_cast %151 : vector<1x128x128xf32> to vector<128x128xf32>
    %cst_50 = arith.constant dense<0.000000e+00> : vector<128x128xf32>
    %153 = tpu.matmul %150, %152, %cst_50 {dimension_numbers = #tpu.dot_dimension_numbers<[1], [0], [0], [1], [0, 0, 1, 1], [], []>} : vector<128x128xf32>, vector<128x128xf32>, vector<128x128xf32> -> vector<128x128xf32>
    %154 = arith.addf %147, %153 : vector<128x128xf32>
    %155 = vector.extract_strided_slice %127 {offsets = [0, 1, 0, 1, 0, 0], sizes = [4, 1, 4, 1, 8, 128], strides = [1, 1, 1, 1, 1, 1]} : vector<5x2x5x2x8x128xf32> to vector<4x1x4x1x8x128xf32>
    %156 = vector.shape_cast %155 : vector<4x1x4x1x8x128xf32> to vector<4x4x8x128xf32>
    %157 = vector.shape_cast %156 : vector<4x4x8x128xf32> to vector<128x128xf32>
    %158 = vector.extract_strided_slice %116 {offsets = [4, 0, 0], sizes = [1, 128, 128], strides = [1, 1, 1]} : vector<9x128x128xf32> to vector<1x128x128xf32>
    %159 = vector.shape_cast %158 : vector<1x128x128xf32> to vector<128x128xf32>
    %cst_51 = arith.constant dense<0.000000e+00> : vector<128x128xf32>
    %160 = tpu.matmul %157, %159, %cst_51 {dimension_numbers = #tpu.dot_dimension_numbers<[1], [0], [0], [1], [0, 0, 1, 1], [], []>} : vector<128x128xf32>, vector<128x128xf32>, vector<128x128xf32> -> vector<128x128xf32>
    %161 = arith.addf %154, %160 : vector<128x128xf32>
    %162 = vector.extract_strided_slice %127 {offsets = [0, 1, 1, 0, 0, 0], sizes = [4, 1, 4, 1, 8, 128], strides = [1, 1, 1, 1, 1, 1]} : vector<5x2x5x2x8x128xf32> to vector<4x1x4x1x8x128xf32>
    %163 = vector.shape_cast %162 : vector<4x1x4x1x8x128xf32> to vector<4x4x8x128xf32>
    %164 = vector.shape_cast %163 : vector<4x4x8x128xf32> to vector<128x128xf32>
    %165 = vector.extract_strided_slice %116 {offsets = [5, 0, 0], sizes = [1, 128, 128], strides = [1, 1, 1]} : vector<9x128x128xf32> to vector<1x128x128xf32>
    %166 = vector.shape_cast %165 : vector<1x128x128xf32> to vector<128x128xf32>
    %cst_52 = arith.constant dense<0.000000e+00> : vector<128x128xf32>
    %167 = tpu.matmul %164, %166, %cst_52 {dimension_numbers = #tpu.dot_dimension_numbers<[1], [0], [0], [1], [0, 0, 1, 1], [], []>} : vector<128x128xf32>, vector<128x128xf32>, vector<128x128xf32> -> vector<128x128xf32>
    %168 = arith.addf %161, %167 : vector<128x128xf32>
    %169 = vector.extract_strided_slice %127 {offsets = [1, 0, 0, 0, 0, 0], sizes = [4, 1, 4, 1, 8, 128], strides = [1, 1, 1, 1, 1, 1]} : vector<5x2x5x2x8x128xf32> to vector<4x1x4x1x8x128xf32>
    %170 = vector.shape_cast %169 : vector<4x1x4x1x8x128xf32> to vector<4x4x8x128xf32>
    %171 = vector.shape_cast %170 : vector<4x4x8x128xf32> to vector<128x128xf32>
    %172 = vector.extract_strided_slice %116 {offsets = [6, 0, 0], sizes = [1, 128, 128], strides = [1, 1, 1]} : vector<9x128x128xf32> to vector<1x128x128xf32>
    %173 = vector.shape_cast %172 : vector<1x128x128xf32> to vector<128x128xf32>
    %cst_53 = arith.constant dense<0.000000e+00> : vector<128x128xf32>
    %174 = tpu.matmul %171, %173, %cst_53 {dimension_numbers = #tpu.dot_dimension_numbers<[1], [0], [0], [1], [0, 0, 1, 1], [], []>} : vector<128x128xf32>, vector<128x128xf32>, vector<128x128xf32> -> vector<128x128xf32>
    %175 = arith.addf %168, %174 : vector<128x128xf32>
    %176 = vector.extract_strided_slice %127 {offsets = [1, 0, 0, 1, 0, 0], sizes = [4, 1, 4, 1, 8, 128], strides = [1, 1, 1, 1, 1, 1]} : vector<5x2x5x2x8x128xf32> to vector<4x1x4x1x8x128xf32>
    %177 = vector.shape_cast %176 : vector<4x1x4x1x8x128xf32> to vector<4x4x8x128xf32>
    %178 = vector.shape_cast %177 : vector<4x4x8x128xf32> to vector<128x128xf32>
    %179 = vector.extract_strided_slice %116 {offsets = [7, 0, 0], sizes = [1, 128, 128], strides = [1, 1, 1]} : vector<9x128x128xf32> to vector<1x128x128xf32>
    %180 = vector.shape_cast %179 : vector<1x128x128xf32> to vector<128x128xf32>
    %cst_54 = arith.constant dense<0.000000e+00> : vector<128x128xf32>
    %181 = tpu.matmul %178, %180, %cst_54 {dimension_numbers = #tpu.dot_dimension_numbers<[1], [0], [0], [1], [0, 0, 1, 1], [], []>} : vector<128x128xf32>, vector<128x128xf32>, vector<128x128xf32> -> vector<128x128xf32>
    %182 = arith.addf %175, %181 : vector<128x128xf32>
    %183 = vector.extract_strided_slice %127 {offsets = [1, 0, 1, 0, 0, 0], sizes = [4, 1, 4, 1, 8, 128], strides = [1, 1, 1, 1, 1, 1]} : vector<5x2x5x2x8x128xf32> to vector<4x1x4x1x8x128xf32>
    %184 = vector.shape_cast %183 : vector<4x1x4x1x8x128xf32> to vector<4x4x8x128xf32>
    %185 = vector.shape_cast %184 : vector<4x4x8x128xf32> to vector<128x128xf32>
    %186 = vector.extract_strided_slice %116 {offsets = [8, 0, 0], sizes = [1, 128, 128], strides = [1, 1, 1]} : vector<9x128x128xf32> to vector<1x128x128xf32>
    %187 = vector.shape_cast %186 : vector<1x128x128xf32> to vector<128x128xf32>
    %cst_55 = arith.constant dense<0.000000e+00> : vector<128x128xf32>
    %188 = tpu.matmul %185, %187, %cst_55 {dimension_numbers = #tpu.dot_dimension_numbers<[1], [0], [0], [1], [0, 0, 1, 1], [], []>} : vector<128x128xf32>, vector<128x128xf32>, vector<128x128xf32> -> vector<128x128xf32>
    %189 = arith.addf %182, %188 : vector<128x128xf32>
    %190 = vector.broadcast %118 : vector<1x128xf32> to vector<128x128xf32>
    %191 = arith.addf %189, %190 : vector<128x128xf32>
    %cst_56 = arith.constant 0.000000e+00 : f32
    %192 = vector.broadcast %cst_56 : f32 to vector<128x128xf32>
    %193 = arith.maximumf %191, %192 : vector<128x128xf32>
    %194 = tpu.iota {dimensions = array<i32: 0>} : vector<128x1xi32>
    %c7_i32_57 = arith.constant 7 : i32
    %195 = vector.broadcast %c7_i32_57 : i32 to vector<128x1xi32>
    %196 = arith.andi %194, %195 : vector<128x1xi32>
    %c2_i32_58 = arith.constant 2 : i32
    %197 = vector.broadcast %c2_i32_58 : i32 to vector<128x1xi32>
    %198 = arith.cmpi slt, %196, %197 : vector<128x1xi32>
    %199 = arith.extui %198 : vector<128x1xi1> to vector<128x1xi32>
    %200 = arith.sitofp %199 : vector<128x1xi32> to vector<128x1xf32>
    %201 = vector.broadcast %200 : vector<128x1xf32> to vector<128x128xf32>
    %202 = arith.mulf %193, %201 : vector<128x128xf32>
    %cst_59 = arith.constant dense<0.000000e+00> : vector<128xf32>
    %203 = vector.multi_reduction <add>, %202, %cst_59 [0] : vector<128x128xf32> to vector<128xf32>
    %204 = vector.shape_cast %203 : vector<128xf32> to vector<1x128xf32>
    %205 = arith.mulf %193, %193 : vector<128x128xf32>
    %206 = vector.broadcast %200 : vector<128x1xf32> to vector<128x128xf32>
    %207 = arith.mulf %205, %206 : vector<128x128xf32>
    %cst_60 = arith.constant dense<0.000000e+00> : vector<128xf32>
    %208 = vector.multi_reduction <add>, %207, %cst_60 [0] : vector<128x128xf32> to vector<128xf32>
    %209 = vector.shape_cast %208 : vector<128xf32> to vector<1x128xf32>
    %cst_61 = arith.constant 3.125000e-02 : f32
    %210 = vector.broadcast %cst_61 : f32 to vector<1x128xf32>
    %211 = arith.mulf %204, %210 : vector<1x128xf32>
    %cst_62 = arith.constant 3.125000e-02 : f32
    %212 = vector.broadcast %cst_62 : f32 to vector<1x128xf32>
    %213 = arith.mulf %209, %212 : vector<1x128xf32>
    %214 = arith.mulf %211, %211 : vector<1x128xf32>
    %215 = arith.subf %213, %214 : vector<1x128xf32>
    %cst_63 = arith.constant 0.000000e+00 : f32
    %216 = vector.broadcast %cst_63 : f32 to vector<1x128xf32>
    %217 = arith.maximumf %215, %216 : vector<1x128xf32>
    %cst_64 = arith.constant 9.99999974E-6 : f32
    %218 = vector.broadcast %cst_64 : f32 to vector<1x128xf32>
    %219 = arith.addf %217, %218 : vector<1x128xf32>
    %220 = math.rsqrt %219 : vector<1x128xf32>
    %221 = arith.mulf %120, %220 : vector<1x128xf32>
    %222 = arith.mulf %211, %221 : vector<1x128xf32>
    %223 = arith.subf %122, %222 : vector<1x128xf32>
    %224 = vector.broadcast %221 : vector<1x128xf32> to vector<128x128xf32>
    %225 = arith.mulf %193, %224 : vector<128x128xf32>
    %226 = vector.broadcast %223 : vector<1x128xf32> to vector<128x128xf32>
    %227 = arith.addf %225, %226 : vector<128x128xf32>
    %228 = vector.shape_cast %227 : vector<128x128xf32> to vector<4x4x8x128xf32>
    %c2 = arith.constant 2 : index
    %c0_65 = arith.constant 0 : index
    %c0_66 = arith.constant 0 : index
    %c0_67 = arith.constant 0 : index
    %229 = vector.load %arg1[%c2, %c0_65, %c0_66, %c0_67] : memref<4x9x128x128xf32, #tpu.memory_space<vmem>>, vector<1x9x128x128xf32>
    %230 = vector.shape_cast %229 : vector<1x9x128x128xf32> to vector<9x128x128xf32>
    %c2_68 = arith.constant 2 : index
    %c0_69 = arith.constant 0 : index
    %c0_70 = arith.constant 0 : index
    %231 = vector.load %arg2[%c2_68, %c0_69, %c0_70] : memref<4x1x128xf32, #tpu.memory_space<vmem>>, vector<1x1x128xf32>
    %232 = vector.shape_cast %231 : vector<1x1x128xf32> to vector<1x128xf32>
    %c2_71 = arith.constant 2 : index
    %c0_72 = arith.constant 0 : index
    %c0_73 = arith.constant 0 : index
    %233 = vector.load %arg3[%c2_71, %c0_72, %c0_73] : memref<4x1x128xf32, #tpu.memory_space<vmem>>, vector<1x1x128xf32>
    %234 = vector.shape_cast %233 : vector<1x1x128xf32> to vector<1x128xf32>
    %c2_74 = arith.constant 2 : index
    %c0_75 = arith.constant 0 : index
    %c0_76 = arith.constant 0 : index
    %235 = vector.load %arg4[%c2_74, %c0_75, %c0_76] : memref<4x1x128xf32, #tpu.memory_space<vmem>>, vector<1x1x128xf32>
    %236 = vector.shape_cast %235 : vector<1x1x128xf32> to vector<1x128xf32>
    %cst_77 = arith.constant 0.000000e+00 : f32
    %237 = vector.broadcast %cst_77 : f32 to vector<1x4x8x128xf32>
    %238 = tpu.concatenate %237, %228, %237 in 0 : vector<1x4x8x128xf32>, vector<4x4x8x128xf32>, vector<1x4x8x128xf32> -> vector<6x4x8x128xf32>
    %cst_78 = arith.constant 0.000000e+00 : f32
    %239 = vector.broadcast %cst_78 : f32 to vector<6x1x8x128xf32>
    %240 = tpu.concatenate %239, %238, %239 in 1 : vector<6x1x8x128xf32>, vector<6x4x8x128xf32>, vector<6x1x8x128xf32> -> vector<6x6x8x128xf32>
    %241 = vector.shape_cast %240 : vector<6x6x8x128xf32> to vector<3x2x3x2x8x128xf32>
    %242 = vector.extract_strided_slice %241 {offsets = [0, 0, 0, 0, 0, 0], sizes = [2, 1, 2, 1, 8, 128], strides = [1, 1, 1, 1, 1, 1]} : vector<3x2x3x2x8x128xf32> to vector<2x1x2x1x8x128xf32>
    %243 = vector.shape_cast %242 : vector<2x1x2x1x8x128xf32> to vector<2x2x8x128xf32>
    %244 = vector.shape_cast %243 : vector<2x2x8x128xf32> to vector<32x128xf32>
    %245 = vector.extract_strided_slice %230 {offsets = [0, 0, 0], sizes = [1, 128, 128], strides = [1, 1, 1]} : vector<9x128x128xf32> to vector<1x128x128xf32>
    %246 = vector.shape_cast %245 : vector<1x128x128xf32> to vector<128x128xf32>
    %cst_79 = arith.constant dense<0.000000e+00> : vector<32x128xf32>
    %247 = tpu.matmul %244, %246, %cst_79 {dimension_numbers = #tpu.dot_dimension_numbers<[1], [0], [0], [1], [0, 0, 1, 1], [], []>} : vector<32x128xf32>, vector<128x128xf32>, vector<32x128xf32> -> vector<32x128xf32>
    %248 = vector.extract_strided_slice %241 {offsets = [0, 0, 0, 1, 0, 0], sizes = [2, 1, 2, 1, 8, 128], strides = [1, 1, 1, 1, 1, 1]} : vector<3x2x3x2x8x128xf32> to vector<2x1x2x1x8x128xf32>
    %249 = vector.shape_cast %248 : vector<2x1x2x1x8x128xf32> to vector<2x2x8x128xf32>
    %250 = vector.shape_cast %249 : vector<2x2x8x128xf32> to vector<32x128xf32>
    %251 = vector.extract_strided_slice %230 {offsets = [1, 0, 0], sizes = [1, 128, 128], strides = [1, 1, 1]} : vector<9x128x128xf32> to vector<1x128x128xf32>
    %252 = vector.shape_cast %251 : vector<1x128x128xf32> to vector<128x128xf32>
    %cst_80 = arith.constant dense<0.000000e+00> : vector<32x128xf32>
    %253 = tpu.matmul %250, %252, %cst_80 {dimension_numbers = #tpu.dot_dimension_numbers<[1], [0], [0], [1], [0, 0, 1, 1], [], []>} : vector<32x128xf32>, vector<128x128xf32>, vector<32x128xf32> -> vector<32x128xf32>
    %254 = arith.addf %247, %253 : vector<32x128xf32>
    %255 = vector.extract_strided_slice %241 {offsets = [0, 0, 1, 0, 0, 0], sizes = [2, 1, 2, 1, 8, 128], strides = [1, 1, 1, 1, 1, 1]} : vector<3x2x3x2x8x128xf32> to vector<2x1x2x1x8x128xf32>
    %256 = vector.shape_cast %255 : vector<2x1x2x1x8x128xf32> to vector<2x2x8x128xf32>
    %257 = vector.shape_cast %256 : vector<2x2x8x128xf32> to vector<32x128xf32>
    %258 = vector.extract_strided_slice %230 {offsets = [2, 0, 0], sizes = [1, 128, 128], strides = [1, 1, 1]} : vector<9x128x128xf32> to vector<1x128x128xf32>
    %259 = vector.shape_cast %258 : vector<1x128x128xf32> to vector<128x128xf32>
    %cst_81 = arith.constant dense<0.000000e+00> : vector<32x128xf32>
    %260 = tpu.matmul %257, %259, %cst_81 {dimension_numbers = #tpu.dot_dimension_numbers<[1], [0], [0], [1], [0, 0, 1, 1], [], []>} : vector<32x128xf32>, vector<128x128xf32>, vector<32x128xf32> -> vector<32x128xf32>
    %261 = arith.addf %254, %260 : vector<32x128xf32>
    %262 = vector.extract_strided_slice %241 {offsets = [0, 1, 0, 0, 0, 0], sizes = [2, 1, 2, 1, 8, 128], strides = [1, 1, 1, 1, 1, 1]} : vector<3x2x3x2x8x128xf32> to vector<2x1x2x1x8x128xf32>
    %263 = vector.shape_cast %262 : vector<2x1x2x1x8x128xf32> to vector<2x2x8x128xf32>
    %264 = vector.shape_cast %263 : vector<2x2x8x128xf32> to vector<32x128xf32>
    %265 = vector.extract_strided_slice %230 {offsets = [3, 0, 0], sizes = [1, 128, 128], strides = [1, 1, 1]} : vector<9x128x128xf32> to vector<1x128x128xf32>
    %266 = vector.shape_cast %265 : vector<1x128x128xf32> to vector<128x128xf32>
    %cst_82 = arith.constant dense<0.000000e+00> : vector<32x128xf32>
    %267 = tpu.matmul %264, %266, %cst_82 {dimension_numbers = #tpu.dot_dimension_numbers<[1], [0], [0], [1], [0, 0, 1, 1], [], []>} : vector<32x128xf32>, vector<128x128xf32>, vector<32x128xf32> -> vector<32x128xf32>
    %268 = arith.addf %261, %267 : vector<32x128xf32>
    %269 = vector.extract_strided_slice %241 {offsets = [0, 1, 0, 1, 0, 0], sizes = [2, 1, 2, 1, 8, 128], strides = [1, 1, 1, 1, 1, 1]} : vector<3x2x3x2x8x128xf32> to vector<2x1x2x1x8x128xf32>
    %270 = vector.shape_cast %269 : vector<2x1x2x1x8x128xf32> to vector<2x2x8x128xf32>
    %271 = vector.shape_cast %270 : vector<2x2x8x128xf32> to vector<32x128xf32>
    %272 = vector.extract_strided_slice %230 {offsets = [4, 0, 0], sizes = [1, 128, 128], strides = [1, 1, 1]} : vector<9x128x128xf32> to vector<1x128x128xf32>
    %273 = vector.shape_cast %272 : vector<1x128x128xf32> to vector<128x128xf32>
    %cst_83 = arith.constant dense<0.000000e+00> : vector<32x128xf32>
    %274 = tpu.matmul %271, %273, %cst_83 {dimension_numbers = #tpu.dot_dimension_numbers<[1], [0], [0], [1], [0, 0, 1, 1], [], []>} : vector<32x128xf32>, vector<128x128xf32>, vector<32x128xf32> -> vector<32x128xf32>
    %275 = arith.addf %268, %274 : vector<32x128xf32>
    %276 = vector.extract_strided_slice %241 {offsets = [0, 1, 1, 0, 0, 0], sizes = [2, 1, 2, 1, 8, 128], strides = [1, 1, 1, 1, 1, 1]} : vector<3x2x3x2x8x128xf32> to vector<2x1x2x1x8x128xf32>
    %277 = vector.shape_cast %276 : vector<2x1x2x1x8x128xf32> to vector<2x2x8x128xf32>
    %278 = vector.shape_cast %277 : vector<2x2x8x128xf32> to vector<32x128xf32>
    %279 = vector.extract_strided_slice %230 {offsets = [5, 0, 0], sizes = [1, 128, 128], strides = [1, 1, 1]} : vector<9x128x128xf32> to vector<1x128x128xf32>
    %280 = vector.shape_cast %279 : vector<1x128x128xf32> to vector<128x128xf32>
    %cst_84 = arith.constant dense<0.000000e+00> : vector<32x128xf32>
    %281 = tpu.matmul %278, %280, %cst_84 {dimension_numbers = #tpu.dot_dimension_numbers<[1], [0], [0], [1], [0, 0, 1, 1], [], []>} : vector<32x128xf32>, vector<128x128xf32>, vector<32x128xf32> -> vector<32x128xf32>
    %282 = arith.addf %275, %281 : vector<32x128xf32>
    %283 = vector.extract_strided_slice %241 {offsets = [1, 0, 0, 0, 0, 0], sizes = [2, 1, 2, 1, 8, 128], strides = [1, 1, 1, 1, 1, 1]} : vector<3x2x3x2x8x128xf32> to vector<2x1x2x1x8x128xf32>
    %284 = vector.shape_cast %283 : vector<2x1x2x1x8x128xf32> to vector<2x2x8x128xf32>
    %285 = vector.shape_cast %284 : vector<2x2x8x128xf32> to vector<32x128xf32>
    %286 = vector.extract_strided_slice %230 {offsets = [6, 0, 0], sizes = [1, 128, 128], strides = [1, 1, 1]} : vector<9x128x128xf32> to vector<1x128x128xf32>
    %287 = vector.shape_cast %286 : vector<1x128x128xf32> to vector<128x128xf32>
    %cst_85 = arith.constant dense<0.000000e+00> : vector<32x128xf32>
    %288 = tpu.matmul %285, %287, %cst_85 {dimension_numbers = #tpu.dot_dimension_numbers<[1], [0], [0], [1], [0, 0, 1, 1], [], []>} : vector<32x128xf32>, vector<128x128xf32>, vector<32x128xf32> -> vector<32x128xf32>
    %289 = arith.addf %282, %288 : vector<32x128xf32>
    %290 = vector.extract_strided_slice %241 {offsets = [1, 0, 0, 1, 0, 0], sizes = [2, 1, 2, 1, 8, 128], strides = [1, 1, 1, 1, 1, 1]} : vector<3x2x3x2x8x128xf32> to vector<2x1x2x1x8x128xf32>
    %291 = vector.shape_cast %290 : vector<2x1x2x1x8x128xf32> to vector<2x2x8x128xf32>
    %292 = vector.shape_cast %291 : vector<2x2x8x128xf32> to vector<32x128xf32>
    %293 = vector.extract_strided_slice %230 {offsets = [7, 0, 0], sizes = [1, 128, 128], strides = [1, 1, 1]} : vector<9x128x128xf32> to vector<1x128x128xf32>
    %294 = vector.shape_cast %293 : vector<1x128x128xf32> to vector<128x128xf32>
    %cst_86 = arith.constant dense<0.000000e+00> : vector<32x128xf32>
    %295 = tpu.matmul %292, %294, %cst_86 {dimension_numbers = #tpu.dot_dimension_numbers<[1], [0], [0], [1], [0, 0, 1, 1], [], []>} : vector<32x128xf32>, vector<128x128xf32>, vector<32x128xf32> -> vector<32x128xf32>
    %296 = arith.addf %289, %295 : vector<32x128xf32>
    %297 = vector.extract_strided_slice %241 {offsets = [1, 0, 1, 0, 0, 0], sizes = [2, 1, 2, 1, 8, 128], strides = [1, 1, 1, 1, 1, 1]} : vector<3x2x3x2x8x128xf32> to vector<2x1x2x1x8x128xf32>
    %298 = vector.shape_cast %297 : vector<2x1x2x1x8x128xf32> to vector<2x2x8x128xf32>
    %299 = vector.shape_cast %298 : vector<2x2x8x128xf32> to vector<32x128xf32>
    %300 = vector.extract_strided_slice %230 {offsets = [8, 0, 0], sizes = [1, 128, 128], strides = [1, 1, 1]} : vector<9x128x128xf32> to vector<1x128x128xf32>
    %301 = vector.shape_cast %300 : vector<1x128x128xf32> to vector<128x128xf32>
    %cst_87 = arith.constant dense<0.000000e+00> : vector<32x128xf32>
    %302 = tpu.matmul %299, %301, %cst_87 {dimension_numbers = #tpu.dot_dimension_numbers<[1], [0], [0], [1], [0, 0, 1, 1], [], []>} : vector<32x128xf32>, vector<128x128xf32>, vector<32x128xf32> -> vector<32x128xf32>
    %303 = arith.addf %296, %302 : vector<32x128xf32>
    %304 = vector.broadcast %232 : vector<1x128xf32> to vector<32x128xf32>
    %305 = arith.addf %303, %304 : vector<32x128xf32>
    %cst_88 = arith.constant 0.000000e+00 : f32
    %306 = vector.broadcast %cst_88 : f32 to vector<32x128xf32>
    %307 = arith.maximumf %305, %306 : vector<32x128xf32>
    %308 = tpu.iota {dimensions = array<i32: 0>} : vector<32x1xi32>
    %c7_i32_89 = arith.constant 7 : i32
    %309 = vector.broadcast %c7_i32_89 : i32 to vector<32x1xi32>
    %310 = arith.andi %308, %309 : vector<32x1xi32>
    %c2_i32_90 = arith.constant 2 : i32
    %311 = vector.broadcast %c2_i32_90 : i32 to vector<32x1xi32>
    %312 = arith.cmpi slt, %310, %311 : vector<32x1xi32>
    %313 = arith.extui %312 : vector<32x1xi1> to vector<32x1xi32>
    %314 = arith.sitofp %313 : vector<32x1xi32> to vector<32x1xf32>
    %315 = vector.broadcast %314 : vector<32x1xf32> to vector<32x128xf32>
    %316 = arith.mulf %307, %315 : vector<32x128xf32>
    %cst_91 = arith.constant dense<0.000000e+00> : vector<128xf32>
    %317 = vector.multi_reduction <add>, %316, %cst_91 [0] : vector<32x128xf32> to vector<128xf32>
    %318 = vector.shape_cast %317 : vector<128xf32> to vector<1x128xf32>
    %319 = arith.mulf %307, %307 : vector<32x128xf32>
    %320 = vector.broadcast %314 : vector<32x1xf32> to vector<32x128xf32>
    %321 = arith.mulf %319, %320 : vector<32x128xf32>
    %cst_92 = arith.constant dense<0.000000e+00> : vector<128xf32>
    %322 = vector.multi_reduction <add>, %321, %cst_92 [0] : vector<32x128xf32> to vector<128xf32>
    %323 = vector.shape_cast %322 : vector<128xf32> to vector<1x128xf32>
    %cst_93 = arith.constant 1.250000e-01 : f32
    %324 = vector.broadcast %cst_93 : f32 to vector<1x128xf32>
    %325 = arith.mulf %318, %324 : vector<1x128xf32>
    %cst_94 = arith.constant 1.250000e-01 : f32
    %326 = vector.broadcast %cst_94 : f32 to vector<1x128xf32>
    %327 = arith.mulf %323, %326 : vector<1x128xf32>
    %328 = arith.mulf %325, %325 : vector<1x128xf32>
    %329 = arith.subf %327, %328 : vector<1x128xf32>
    %cst_95 = arith.constant 0.000000e+00 : f32
    %330 = vector.broadcast %cst_95 : f32 to vector<1x128xf32>
    %331 = arith.maximumf %329, %330 : vector<1x128xf32>
    %cst_96 = arith.constant 9.99999974E-6 : f32
    %332 = vector.broadcast %cst_96 : f32 to vector<1x128xf32>
    %333 = arith.addf %331, %332 : vector<1x128xf32>
    %334 = math.rsqrt %333 : vector<1x128xf32>
    %335 = arith.mulf %234, %334 : vector<1x128xf32>
    %336 = arith.mulf %325, %335 : vector<1x128xf32>
    %337 = arith.subf %236, %336 : vector<1x128xf32>
    %338 = vector.broadcast %335 : vector<1x128xf32> to vector<32x128xf32>
    %339 = arith.mulf %307, %338 : vector<32x128xf32>
    %340 = vector.broadcast %337 : vector<1x128xf32> to vector<32x128xf32>
    %341 = arith.addf %339, %340 : vector<32x128xf32>
    %342 = vector.shape_cast %341 : vector<32x128xf32> to vector<2x2x8x128xf32>
    %c3 = arith.constant 3 : index
    %c0_97 = arith.constant 0 : index
    %c0_98 = arith.constant 0 : index
    %c0_99 = arith.constant 0 : index
    %343 = vector.load %arg1[%c3, %c0_97, %c0_98, %c0_99] : memref<4x9x128x128xf32, #tpu.memory_space<vmem>>, vector<1x9x128x128xf32>
    %344 = vector.shape_cast %343 : vector<1x9x128x128xf32> to vector<9x128x128xf32>
    %c3_100 = arith.constant 3 : index
    %c0_101 = arith.constant 0 : index
    %c0_102 = arith.constant 0 : index
    %345 = vector.load %arg2[%c3_100, %c0_101, %c0_102] : memref<4x1x128xf32, #tpu.memory_space<vmem>>, vector<1x1x128xf32>
    %346 = vector.shape_cast %345 : vector<1x1x128xf32> to vector<1x128xf32>
    %c3_103 = arith.constant 3 : index
    %c0_104 = arith.constant 0 : index
    %c0_105 = arith.constant 0 : index
    %347 = vector.load %arg3[%c3_103, %c0_104, %c0_105] : memref<4x1x128xf32, #tpu.memory_space<vmem>>, vector<1x1x128xf32>
    %348 = vector.shape_cast %347 : vector<1x1x128xf32> to vector<1x128xf32>
    %c3_106 = arith.constant 3 : index
    %c0_107 = arith.constant 0 : index
    %c0_108 = arith.constant 0 : index
    %349 = vector.load %arg4[%c3_106, %c0_107, %c0_108] : memref<4x1x128xf32, #tpu.memory_space<vmem>>, vector<1x1x128xf32>
    %350 = vector.shape_cast %349 : vector<1x1x128xf32> to vector<1x128xf32>
    %cst_109 = arith.constant 0.000000e+00 : f32
    %351 = vector.broadcast %cst_109 : f32 to vector<1x2x8x128xf32>
    %352 = tpu.concatenate %351, %342, %351 in 0 : vector<1x2x8x128xf32>, vector<2x2x8x128xf32>, vector<1x2x8x128xf32> -> vector<4x2x8x128xf32>
    %cst_110 = arith.constant 0.000000e+00 : f32
    %353 = vector.broadcast %cst_110 : f32 to vector<4x1x8x128xf32>
    %354 = tpu.concatenate %353, %352, %353 in 1 : vector<4x1x8x128xf32>, vector<4x2x8x128xf32>, vector<4x1x8x128xf32> -> vector<4x4x8x128xf32>
    %355 = vector.shape_cast %354 : vector<4x4x8x128xf32> to vector<2x2x2x2x8x128xf32>
    %356 = vector.extract_strided_slice %355 {offsets = [0, 0, 0, 0, 0, 0], sizes = [1, 1, 1, 1, 8, 128], strides = [1, 1, 1, 1, 1, 1]} : vector<2x2x2x2x8x128xf32> to vector<1x1x1x1x8x128xf32>
    %357 = vector.shape_cast %356 : vector<1x1x1x1x8x128xf32> to vector<1x1x8x128xf32>
    %358 = vector.shape_cast %357 : vector<1x1x8x128xf32> to vector<8x128xf32>
    %359 = vector.extract_strided_slice %344 {offsets = [0, 0, 0], sizes = [1, 128, 128], strides = [1, 1, 1]} : vector<9x128x128xf32> to vector<1x128x128xf32>
    %360 = vector.shape_cast %359 : vector<1x128x128xf32> to vector<128x128xf32>
    %cst_111 = arith.constant dense<0.000000e+00> : vector<8x128xf32>
    %361 = tpu.matmul %358, %360, %cst_111 {dimension_numbers = #tpu.dot_dimension_numbers<[1], [0], [0], [1], [0, 0, 1, 1], [], []>} : vector<8x128xf32>, vector<128x128xf32>, vector<8x128xf32> -> vector<8x128xf32>
    %362 = vector.extract_strided_slice %355 {offsets = [0, 0, 0, 1, 0, 0], sizes = [1, 1, 1, 1, 8, 128], strides = [1, 1, 1, 1, 1, 1]} : vector<2x2x2x2x8x128xf32> to vector<1x1x1x1x8x128xf32>
    %363 = vector.shape_cast %362 : vector<1x1x1x1x8x128xf32> to vector<1x1x8x128xf32>
    %364 = vector.shape_cast %363 : vector<1x1x8x128xf32> to vector<8x128xf32>
    %365 = vector.extract_strided_slice %344 {offsets = [1, 0, 0], sizes = [1, 128, 128], strides = [1, 1, 1]} : vector<9x128x128xf32> to vector<1x128x128xf32>
    %366 = vector.shape_cast %365 : vector<1x128x128xf32> to vector<128x128xf32>
    %cst_112 = arith.constant dense<0.000000e+00> : vector<8x128xf32>
    %367 = tpu.matmul %364, %366, %cst_112 {dimension_numbers = #tpu.dot_dimension_numbers<[1], [0], [0], [1], [0, 0, 1, 1], [], []>} : vector<8x128xf32>, vector<128x128xf32>, vector<8x128xf32> -> vector<8x128xf32>
    %368 = arith.addf %361, %367 : vector<8x128xf32>
    %369 = vector.extract_strided_slice %355 {offsets = [0, 0, 1, 0, 0, 0], sizes = [1, 1, 1, 1, 8, 128], strides = [1, 1, 1, 1, 1, 1]} : vector<2x2x2x2x8x128xf32> to vector<1x1x1x1x8x128xf32>
    %370 = vector.shape_cast %369 : vector<1x1x1x1x8x128xf32> to vector<1x1x8x128xf32>
    %371 = vector.shape_cast %370 : vector<1x1x8x128xf32> to vector<8x128xf32>
    %372 = vector.extract_strided_slice %344 {offsets = [2, 0, 0], sizes = [1, 128, 128], strides = [1, 1, 1]} : vector<9x128x128xf32> to vector<1x128x128xf32>
    %373 = vector.shape_cast %372 : vector<1x128x128xf32> to vector<128x128xf32>
    %cst_113 = arith.constant dense<0.000000e+00> : vector<8x128xf32>
    %374 = tpu.matmul %371, %373, %cst_113 {dimension_numbers = #tpu.dot_dimension_numbers<[1], [0], [0], [1], [0, 0, 1, 1], [], []>} : vector<8x128xf32>, vector<128x128xf32>, vector<8x128xf32> -> vector<8x128xf32>
    %375 = arith.addf %368, %374 : vector<8x128xf32>
    %376 = vector.extract_strided_slice %355 {offsets = [0, 1, 0, 0, 0, 0], sizes = [1, 1, 1, 1, 8, 128], strides = [1, 1, 1, 1, 1, 1]} : vector<2x2x2x2x8x128xf32> to vector<1x1x1x1x8x128xf32>
    %377 = vector.shape_cast %376 : vector<1x1x1x1x8x128xf32> to vector<1x1x8x128xf32>
    %378 = vector.shape_cast %377 : vector<1x1x8x128xf32> to vector<8x128xf32>
    %379 = vector.extract_strided_slice %344 {offsets = [3, 0, 0], sizes = [1, 128, 128], strides = [1, 1, 1]} : vector<9x128x128xf32> to vector<1x128x128xf32>
    %380 = vector.shape_cast %379 : vector<1x128x128xf32> to vector<128x128xf32>
    %cst_114 = arith.constant dense<0.000000e+00> : vector<8x128xf32>
    %381 = tpu.matmul %378, %380, %cst_114 {dimension_numbers = #tpu.dot_dimension_numbers<[1], [0], [0], [1], [0, 0, 1, 1], [], []>} : vector<8x128xf32>, vector<128x128xf32>, vector<8x128xf32> -> vector<8x128xf32>
    %382 = arith.addf %375, %381 : vector<8x128xf32>
    %383 = vector.extract_strided_slice %355 {offsets = [0, 1, 0, 1, 0, 0], sizes = [1, 1, 1, 1, 8, 128], strides = [1, 1, 1, 1, 1, 1]} : vector<2x2x2x2x8x128xf32> to vector<1x1x1x1x8x128xf32>
    %384 = vector.shape_cast %383 : vector<1x1x1x1x8x128xf32> to vector<1x1x8x128xf32>
    %385 = vector.shape_cast %384 : vector<1x1x8x128xf32> to vector<8x128xf32>
    %386 = vector.extract_strided_slice %344 {offsets = [4, 0, 0], sizes = [1, 128, 128], strides = [1, 1, 1]} : vector<9x128x128xf32> to vector<1x128x128xf32>
    %387 = vector.shape_cast %386 : vector<1x128x128xf32> to vector<128x128xf32>
    %cst_115 = arith.constant dense<0.000000e+00> : vector<8x128xf32>
    %388 = tpu.matmul %385, %387, %cst_115 {dimension_numbers = #tpu.dot_dimension_numbers<[1], [0], [0], [1], [0, 0, 1, 1], [], []>} : vector<8x128xf32>, vector<128x128xf32>, vector<8x128xf32> -> vector<8x128xf32>
    %389 = arith.addf %382, %388 : vector<8x128xf32>
    %390 = vector.extract_strided_slice %355 {offsets = [0, 1, 1, 0, 0, 0], sizes = [1, 1, 1, 1, 8, 128], strides = [1, 1, 1, 1, 1, 1]} : vector<2x2x2x2x8x128xf32> to vector<1x1x1x1x8x128xf32>
    %391 = vector.shape_cast %390 : vector<1x1x1x1x8x128xf32> to vector<1x1x8x128xf32>
    %392 = vector.shape_cast %391 : vector<1x1x8x128xf32> to vector<8x128xf32>
    %393 = vector.extract_strided_slice %344 {offsets = [5, 0, 0], sizes = [1, 128, 128], strides = [1, 1, 1]} : vector<9x128x128xf32> to vector<1x128x128xf32>
    %394 = vector.shape_cast %393 : vector<1x128x128xf32> to vector<128x128xf32>
    %cst_116 = arith.constant dense<0.000000e+00> : vector<8x128xf32>
    %395 = tpu.matmul %392, %394, %cst_116 {dimension_numbers = #tpu.dot_dimension_numbers<[1], [0], [0], [1], [0, 0, 1, 1], [], []>} : vector<8x128xf32>, vector<128x128xf32>, vector<8x128xf32> -> vector<8x128xf32>
    %396 = arith.addf %389, %395 : vector<8x128xf32>
    %397 = vector.extract_strided_slice %355 {offsets = [1, 0, 0, 0, 0, 0], sizes = [1, 1, 1, 1, 8, 128], strides = [1, 1, 1, 1, 1, 1]} : vector<2x2x2x2x8x128xf32> to vector<1x1x1x1x8x128xf32>
    %398 = vector.shape_cast %397 : vector<1x1x1x1x8x128xf32> to vector<1x1x8x128xf32>
    %399 = vector.shape_cast %398 : vector<1x1x8x128xf32> to vector<8x128xf32>
    %400 = vector.extract_strided_slice %344 {offsets = [6, 0, 0], sizes = [1, 128, 128], strides = [1, 1, 1]} : vector<9x128x128xf32> to vector<1x128x128xf32>
    %401 = vector.shape_cast %400 : vector<1x128x128xf32> to vector<128x128xf32>
    %cst_117 = arith.constant dense<0.000000e+00> : vector<8x128xf32>
    %402 = tpu.matmul %399, %401, %cst_117 {dimension_numbers = #tpu.dot_dimension_numbers<[1], [0], [0], [1], [0, 0, 1, 1], [], []>} : vector<8x128xf32>, vector<128x128xf32>, vector<8x128xf32> -> vector<8x128xf32>
    %403 = arith.addf %396, %402 : vector<8x128xf32>
    %404 = vector.extract_strided_slice %355 {offsets = [1, 0, 0, 1, 0, 0], sizes = [1, 1, 1, 1, 8, 128], strides = [1, 1, 1, 1, 1, 1]} : vector<2x2x2x2x8x128xf32> to vector<1x1x1x1x8x128xf32>
    %405 = vector.shape_cast %404 : vector<1x1x1x1x8x128xf32> to vector<1x1x8x128xf32>
    %406 = vector.shape_cast %405 : vector<1x1x8x128xf32> to vector<8x128xf32>
    %407 = vector.extract_strided_slice %344 {offsets = [7, 0, 0], sizes = [1, 128, 128], strides = [1, 1, 1]} : vector<9x128x128xf32> to vector<1x128x128xf32>
    %408 = vector.shape_cast %407 : vector<1x128x128xf32> to vector<128x128xf32>
    %cst_118 = arith.constant dense<0.000000e+00> : vector<8x128xf32>
    %409 = tpu.matmul %406, %408, %cst_118 {dimension_numbers = #tpu.dot_dimension_numbers<[1], [0], [0], [1], [0, 0, 1, 1], [], []>} : vector<8x128xf32>, vector<128x128xf32>, vector<8x128xf32> -> vector<8x128xf32>
    %410 = arith.addf %403, %409 : vector<8x128xf32>
    %411 = vector.extract_strided_slice %355 {offsets = [1, 0, 1, 0, 0, 0], sizes = [1, 1, 1, 1, 8, 128], strides = [1, 1, 1, 1, 1, 1]} : vector<2x2x2x2x8x128xf32> to vector<1x1x1x1x8x128xf32>
    %412 = vector.shape_cast %411 : vector<1x1x1x1x8x128xf32> to vector<1x1x8x128xf32>
    %413 = vector.shape_cast %412 : vector<1x1x8x128xf32> to vector<8x128xf32>
    %414 = vector.extract_strided_slice %344 {offsets = [8, 0, 0], sizes = [1, 128, 128], strides = [1, 1, 1]} : vector<9x128x128xf32> to vector<1x128x128xf32>
    %415 = vector.shape_cast %414 : vector<1x128x128xf32> to vector<128x128xf32>
    %cst_119 = arith.constant dense<0.000000e+00> : vector<8x128xf32>
    %416 = tpu.matmul %413, %415, %cst_119 {dimension_numbers = #tpu.dot_dimension_numbers<[1], [0], [0], [1], [0, 0, 1, 1], [], []>} : vector<8x128xf32>, vector<128x128xf32>, vector<8x128xf32> -> vector<8x128xf32>
    %417 = arith.addf %410, %416 : vector<8x128xf32>
    %418 = vector.broadcast %346 : vector<1x128xf32> to vector<8x128xf32>
    %419 = arith.addf %417, %418 : vector<8x128xf32>
    %cst_120 = arith.constant 0.000000e+00 : f32
    %420 = vector.broadcast %cst_120 : f32 to vector<8x128xf32>
    %421 = arith.maximumf %419, %420 : vector<8x128xf32>
    %422 = tpu.iota {dimensions = array<i32: 0>} : vector<8x1xi32>
    %c7_i32_121 = arith.constant 7 : i32
    %423 = vector.broadcast %c7_i32_121 : i32 to vector<8x1xi32>
    %424 = arith.andi %422, %423 : vector<8x1xi32>
    %c2_i32_122 = arith.constant 2 : i32
    %425 = vector.broadcast %c2_i32_122 : i32 to vector<8x1xi32>
    %426 = arith.cmpi slt, %424, %425 : vector<8x1xi32>
    %427 = arith.extui %426 : vector<8x1xi1> to vector<8x1xi32>
    %428 = arith.sitofp %427 : vector<8x1xi32> to vector<8x1xf32>
    %429 = vector.broadcast %428 : vector<8x1xf32> to vector<8x128xf32>
    %430 = arith.mulf %421, %429 : vector<8x128xf32>
    %cst_123 = arith.constant dense<0.000000e+00> : vector<128xf32>
    %431 = vector.multi_reduction <add>, %430, %cst_123 [0] : vector<8x128xf32> to vector<128xf32>
    %432 = vector.shape_cast %431 : vector<128xf32> to vector<1x128xf32>
    %433 = arith.mulf %421, %421 : vector<8x128xf32>
    %434 = vector.broadcast %428 : vector<8x1xf32> to vector<8x128xf32>
    %435 = arith.mulf %433, %434 : vector<8x128xf32>
    %cst_124 = arith.constant dense<0.000000e+00> : vector<128xf32>
    %436 = vector.multi_reduction <add>, %435, %cst_124 [0] : vector<8x128xf32> to vector<128xf32>
    %437 = vector.shape_cast %436 : vector<128xf32> to vector<1x128xf32>
    %cst_125 = arith.constant 5.000000e-01 : f32
    %438 = vector.broadcast %cst_125 : f32 to vector<1x128xf32>
    %439 = arith.mulf %432, %438 : vector<1x128xf32>
    %cst_126 = arith.constant 5.000000e-01 : f32
    %440 = vector.broadcast %cst_126 : f32 to vector<1x128xf32>
    %441 = arith.mulf %437, %440 : vector<1x128xf32>
    %442 = arith.mulf %439, %439 : vector<1x128xf32>
    %443 = arith.subf %441, %442 : vector<1x128xf32>
    %cst_127 = arith.constant 0.000000e+00 : f32
    %444 = vector.broadcast %cst_127 : f32 to vector<1x128xf32>
    %445 = arith.maximumf %443, %444 : vector<1x128xf32>
    %cst_128 = arith.constant 9.99999974E-6 : f32
    %446 = vector.broadcast %cst_128 : f32 to vector<1x128xf32>
    %447 = arith.addf %445, %446 : vector<1x128xf32>
    %448 = math.rsqrt %447 : vector<1x128xf32>
    %449 = arith.mulf %348, %448 : vector<1x128xf32>
    %450 = arith.mulf %439, %449 : vector<1x128xf32>
    %451 = arith.subf %350, %450 : vector<1x128xf32>
    %452 = vector.broadcast %449 : vector<1x128xf32> to vector<8x128xf32>
    %453 = arith.mulf %421, %452 : vector<8x128xf32>
    %454 = vector.broadcast %451 : vector<1x128xf32> to vector<8x128xf32>
    %455 = arith.addf %453, %454 : vector<8x128xf32>
    %456 = vector.shape_cast %455 : vector<8x128xf32> to vector<1x1x8x128xf32>
    %c0_129 = arith.constant 0 : index
    %c0_130 = arith.constant 0 : index
    %c0_131 = arith.constant 0 : index
    %c0_132 = arith.constant 0 : index
    %457 = vector.load %arg5[%c0_129, %c0_130, %c0_131, %c0_132] : memref<1x1x8x128xf32, #tpu.memory_space<vmem>>, vector<1x1x8x128xf32>
    tpu.vector_store %arg5[%c0_129, %c0_130, %c0_131, %c0_132], %456 {strides = array<i32>} : memref<1x1x8x128xf32, #tpu.memory_space<vmem>>, vector<1x1x8x128xf32>,
    return
  }
}

</mosaic_0001>

<llo_original>
// kernel: image_encoding.1
$region0: #{image_encoding.1}
  #allocation0 [shape = 'u32[]', space=smem, size = 0x4, offset = 0x4, fixed_abs, tag = 'smem constant byte address 0x4 - core index']
  #allocation1 [shape = 'u32[144,128]{1,0:T(1,128)}', space=vmem, size = 0x12000, scoped, tag = 'internal scratch']
  %s0 = inlined_call_operand.vmem [shape: f32[16,16,8,128], index: 0, kind: input, shape index: {}]
  %s1 = inlined_call_operand.vmem [shape: f32[4,9,128,128], index: 1, kind: input, shape index: {}]
  %s2 = inlined_call_operand.vmem [shape: f32[4,1,128], index: 2, kind: input, shape index: {}]
  %s3 = inlined_call_operand.vmem [shape: f32[4,1,128], index: 3, kind: input, shape index: {}]
  %s4 = inlined_call_operand.vmem [shape: f32[4,1,128], index: 4, kind: input, shape index: {}]
  %s5 = inlined_call_operand.vmem [shape: f32[1,1,8,128], index: 5, kind: output, shape index: {}]
  %s6 = sld [smem:[#allocation0]]
  $region30: #{image_encoding.1} parent=0
    _
  %s8 = ssub.s32 1, %s6
  %s9 = scalar_select 0, %s8, %s6
  // Predicated region
  $region2: #{image_encoding.1} parent=0 // pred_check
    _
  $region3: #{image_encoding.1} parent=0 // pred_check_branch
    %11 = sbr.rel (0) target = $region5
  $region4: #{image_encoding.1} parent=0 // pred_region
    _
  $region5: #{image_encoding.1} parent=0 // pred_fallthru
    _
  // Predicated region
  $region6: #{image_encoding.1} parent=0 // pred_check
    _
  $region7: #{image_encoding.1} parent=0 // pred_check_branch
    %13 = sbr.rel (0) target = $region9
  $region8: #{image_encoding.1} parent=0 // pred_region
    _
  $region9: #{image_encoding.1} parent=0 // pred_fallthru
    _
  // Predicated region
  $region10: #{image_encoding.1} parent=0 // pred_check
    _
  $region11: #{image_encoding.1} parent=0 // pred_check_branch
    %15 = sbr.rel (0) target = $region13
  $region12: #{image_encoding.1} parent=0 // pred_region
    _
  $region13: #{image_encoding.1} parent=0 // pred_fallthru
    _
  // Predicated region
  $region14: #{image_encoding.1} parent=0 // pred_check
    _
  $region15: #{image_encoding.1} parent=0 // pred_check_branch
    %17 = sbr.rel (0) target = $region17
  $region16: #{image_encoding.1} parent=0 // pred_region
    _
  $region17: #{image_encoding.1} parent=0 // pred_fallthru
    _
  // Predicated region
  $region18: #{image_encoding.1} parent=0 // pred_check
    _
  $region19: #{image_encoding.1} parent=0 // pred_check_branch
    %19 = sbr.rel (0) target = $region21
  $region20: #{image_encoding.1} parent=0 // pred_region
    _
  $region21: #{image_encoding.1} parent=0 // pred_fallthru
    _
  %v20 = vld [vmem:[%s0] sm:$0xff]
  %v21 = vld [vmem:[%s0 + $0x8] sm:$0xff]
  %v22 = vld [vmem:[%s0 + $0x10] sm:$0xff]
  %v23 = vld [vmem:[%s0 + $0x18] sm:$0xff]
  %v24 = vld [vmem:[%s0 + $0x20] sm:$0xff]
  %v25 = vld [vmem:[%s0 + $0x28] sm:$0xff]
  %v26 = vld [vmem:[%s0 + $0x30] sm:$0xff]
  %v27 = vld [vmem:[%s0 + $0x38] sm:$0xff]
  %v28 = vld [vmem:[%s0 + $0x40] sm:$0xff]
  %v29 = vld [vmem:[%s0 + $0x48] sm:$0xff]
  %v30 = vld [vmem:[%s0 + $0x50] sm:$0xff]
  %v31 = vld [vmem:[%s0 + $0x58] sm:$0xff]
  %v32 = vld [vmem:[%s0 + $0x60] sm:$0xff]
  %v33 = vld [vmem:[%s0 + $0x68] sm:$0xff]
  %v34 = vld [vmem:[%s0 + $0x70] sm:$0xff]
  %v35 = vld [vmem:[%s0 + $0x78] sm:$0xff]
  %v36 = vld [vmem:[%s0 + $0x80] sm:$0xff]
  %v37 = vld [vmem:[%s0 + $0x88] sm:$0xff]
  %v38 = vld [vmem:[%s0 + $0x90] sm:$0xff]
  %v39 = vld [vmem:[%s0 + $0x98] sm:$0xff]
  %v40 = vld [vmem:[%s0 + $0xa0] sm:$0xff]
  %v41 = vld [vmem:[%s0 + $0xa8] sm:$0xff]
  %v42 = vld [vmem:[%s0 + $0xb0] sm:$0xff]
  %v43 = vld [vmem:[%s0 + $0xb8] sm:$0xff]
  %v44 = vld [vmem:[%s0 + $0xc0] sm:$0xff]
  %v45 = vld [vmem:[%s0 + $0xc8] sm:$0xff]
  %v46 = vld [vmem:[%s0 + $0xd0] sm:$0xff]
  %v47 = vld [vmem:[%s0 + $0xd8] sm:$0xff]
  %v48 = vld [vmem:[%s0 + $0xe0] sm:$0xff]
  %v49 = vld [vmem:[%s0 + $0xe8] sm:$0xff]
  %v50 = vld [vmem:[%s0 + $0xf0] sm:$0xff]
  %v51 = vld [vmem:[%s0 + $0xf8] sm:$0xff]
  %v52 = vld [vmem:[%s0 + $0x100] sm:$0xff]
  %v53 = vld [vmem:[%s0 + $0x108] sm:$0xff]
  %v54 = vld [vmem:[%s0 + $0x110] sm:$0xff]
  %v55 = vld [vmem:[%s0 + $0x118] sm:$0xff]
  %v56 = vld [vmem:[%s0 + $0x120] sm:$0xff]
  %v57 = vld [vmem:[%s0 + $0x128] sm:$0xff]
  %v58 = vld [vmem:[%s0 + $0x130] sm:$0xff]
  %v59 = vld [vmem:[%s0 + $0x138] sm:$0xff]
  %v60 = vld [vmem:[%s0 + $0x140] sm:$0xff]
  %v61 = vld [vmem:[%s0 + $0x148] sm:$0xff]
  %v62 = vld [vmem:[%s0 + $0x150] sm:$0xff]
  %v63 = vld [vmem:[%s0 + $0x158] sm:$0xff]
  %v64 = vld [vmem:[%s0 + $0x160] sm:$0xff]
  %v65 = vld [vmem:[%s0 + $0x168] sm:$0xff]
  %v66 = vld [vmem:[%s0 + $0x170] sm:$0xff]
  %v67 = vld [vmem:[%s0 + $0x178] sm:$0xff]
  %v68 = vld [vmem:[%s0 + $0x180] sm:$0xff]
  %v69 = vld [vmem:[%s0 + $0x188] sm:$0xff]
  %v70 = vld [vmem:[%s0 + $0x190] sm:$0xff]
  %v71 = vld [vmem:[%s0 + $0x198] sm:$0xff]
  %v72 = vld [vmem:[%s0 + $0x1a0] sm:$0xff]
  %v73 = vld [vmem:[%s0 + $0x1a8] sm:$0xff]
  %v74 = vld [vmem:[%s0 + $0x1b0] sm:$0xff]
  %v75 = vld [vmem:[%s0 + $0x1b8] sm:$0xff]
  %v76 = vld [vmem:[%s0 + $0x1c0] sm:$0xff]
  %v77 = vld [vmem:[%s0 + $0x1c8] sm:$0xff]
  %v78 = vld [vmem:[%s0 + $0x1d0] sm:$0xff]
  %v79 = vld [vmem:[%s0 + $0x1d8] sm:$0xff]
  %v80 = vld [vmem:[%s0 + $0x1e0] sm:$0xff]
  %v81 = vld [vmem:[%s0 + $0x1e8] sm:$0xff]
  %v82 = vld [vmem:[%s0 + $0x1f0] sm:$0xff]
  %v83 = vld [vmem:[%s0 + $0x1f8] sm:$0xff]
  %v84 = vld [vmem:[%s0 + $0x200] sm:$0xff]
  %v85 = vld [vmem:[%s0 + $0x208] sm:$0xff]
  %v86 = vld [vmem:[%s0 + $0x210] sm:$0xff]
  %v87 = vld [vmem:[%s0 + $0x218] sm:$0xff]
  %v88 = vld [vmem:[%s0 + $0x220] sm:$0xff]
  %v89 = vld [vmem:[%s0 + $0x228] sm:$0xff]
  %v90 = vld [vmem:[%s0 + $0x230] sm:$0xff]
  %v91 = vld [vmem:[%s0 + $0x238] sm:$0xff]
  %v92 = vld [vmem:[%s0 + $0x240] sm:$0xff]
  %v93 = vld [vmem:[%s0 + $0x248] sm:$0xff]
  %v94 = vld [vmem:[%s0 + $0x250] sm:$0xff]
  %v95 = vld [vmem:[%s0 + $0x258] sm:$0xff]
  %v96 = vld [vmem:[%s0 + $0x260] sm:$0xff]
  %v97 = vld [vmem:[%s0 + $0x268] sm:$0xff]
  %v98 = vld [vmem:[%s0 + $0x270] sm:$0xff]
  %v99 = vld [vmem:[%s0 + $0x278] sm:$0xff]
  %v100 = vld [vmem:[%s0 + $0x280] sm:$0xff]
  %v101 = vld [vmem:[%s0 + $0x288] sm:$0xff]
  %v102 = vld [vmem:[%s0 + $0x290] sm:$0xff]
  %v103 = vld [vmem:[%s0 + $0x298] sm:$0xff]
  %v104 = vld [vmem:[%s0 + $0x2a0] sm:$0xff]
  %v105 = vld [vmem:[%s0 + $0x2a8] sm:$0xff]
  %v106 = vld [vmem:[%s0 + $0x2b0] sm:$0xff]
  %v107 = vld [vmem:[%s0 + $0x2b8] sm:$0xff]
  %v108 = vld [vmem:[%s0 + $0x2c0] sm:$0xff]
  %v109 = vld [vmem:[%s0 + $0x2c8] sm:$0xff]
  %v110 = vld [vmem:[%s0 + $0x2d0] sm:$0xff]
  %v111 = vld [vmem:[%s0 + $0x2d8] sm:$0xff]
  %v112 = vld [vmem:[%s0 + $0x2e0] sm:$0xff]
  %v113 = vld [vmem:[%s0 + $0x2e8] sm:$0xff]
  %v114 = vld [vmem:[%s0 + $0x2f0] sm:$0xff]
  %v115 = vld [vmem:[%s0 + $0x2f8] sm:$0xff]
  %v116 = vld [vmem:[%s0 + $0x300] sm:$0xff]
  %v117 = vld [vmem:[%s0 + $0x308] sm:$0xff]
  %v118 = vld [vmem:[%s0 + $0x310] sm:$0xff]
  %v119 = vld [vmem:[%s0 + $0x318] sm:$0xff]
  %v120 = vld [vmem:[%s0 + $0x320] sm:$0xff]
  %v121 = vld [vmem:[%s0 + $0x328] sm:$0xff]
  %v122 = vld [vmem:[%s0 + $0x330] sm:$0xff]
  %v123 = vld [vmem:[%s0 + $0x338] sm:$0xff]
  %v124 = vld [vmem:[%s0 + $0x340] sm:$0xff]
  %v125 = vld [vmem:[%s0 + $0x348] sm:$0xff]
  %v126 = vld [vmem:[%s0 + $0x350] sm:$0xff]
  %v127 = vld [vmem:[%s0 + $0x358] sm:$0xff]
  %v128 = vld [vmem:[%s0 + $0x360] sm:$0xff]
  %v129 = vld [vmem:[%s0 + $0x368] sm:$0xff]
  %v130 = vld [vmem:[%s0 + $0x370] sm:$0xff]
  %v131 = vld [vmem:[%s0 + $0x378] sm:$0xff]
  %v132 = vld [vmem:[%s0 + $0x380] sm:$0xff]
  %v133 = vld [vmem:[%s0 + $0x388] sm:$0xff]
  %v134 = vld [vmem:[%s0 + $0x390] sm:$0xff]
  %v135 = vld [vmem:[%s0 + $0x398] sm:$0xff]
  %v136 = vld [vmem:[%s0 + $0x3a0] sm:$0xff]
  %v137 = vld [vmem:[%s0 + $0x3a8] sm:$0xff]
  %v138 = vld [vmem:[%s0 + $0x3b0] sm:$0xff]
  %v139 = vld [vmem:[%s0 + $0x3b8] sm:$0xff]
  %v140 = vld [vmem:[%s0 + $0x3c0] sm:$0xff]
  %v141 = vld [vmem:[%s0 + $0x3c8] sm:$0xff]
  %v142 = vld [vmem:[%s0 + $0x3d0] sm:$0xff]
  %v143 = vld [vmem:[%s0 + $0x3d8] sm:$0xff]
  %v144 = vld [vmem:[%s0 + $0x3e0] sm:$0xff]
  %v145 = vld [vmem:[%s0 + $0x3e8] sm:$0xff]
  %v146 = vld [vmem:[%s0 + $0x3f0] sm:$0xff]
  %v147 = vld [vmem:[%s0 + $0x3f8] sm:$0xff]
  %v148 = vld [vmem:[%s0 + $0x400] sm:$0xff]
  %v149 = vld [vmem:[%s0 + $0x408] sm:$0xff]
  %v150 = vld [vmem:[%s0 + $0x410] sm:$0xff]
  %v151 = vld [vmem:[%s0 + $0x418] sm:$0xff]
  %v152 = vld [vmem:[%s0 + $0x420] sm:$0xff]
  %v153 = vld [vmem:[%s0 + $0x428] sm:$0xff]
  %v154 = vld [vmem:[%s0 + $0x430] sm:$0xff]
  %v155 = vld [vmem:[%s0 + $0x438] sm:$0xff]
  %v156 = vld [vmem:[%s0 + $0x440] sm:$0xff]
  %v157 = vld [vmem:[%s0 + $0x448] sm:$0xff]
  %v158 = vld [vmem:[%s0 + $0x450] sm:$0xff]
  %v159 = vld [vmem:[%s0 + $0x458] sm:$0xff]
  %v160 = vld [vmem:[%s0 + $0x460] sm:$0xff]
  %v161 = vld [vmem:[%s0 + $0x468] sm:$0xff]
  %v162 = vld [vmem:[%s0 + $0x470] sm:$0xff]
  %v163 = vld [vmem:[%s0 + $0x478] sm:$0xff]
  %v164 = vld [vmem:[%s0 + $0x480] sm:$0xff]
  %v165 = vld [vmem:[%s0 + $0x488] sm:$0xff]
  %v166 = vld [vmem:[%s0 + $0x490] sm:$0xff]
  %v167 = vld [vmem:[%s0 + $0x498] sm:$0xff]
  %v168 = vld [vmem:[%s0 + $0x4a0] sm:$0xff]
  %v169 = vld [vmem:[%s0 + $0x4a8] sm:$0xff]
  %v170 = vld [vmem:[%s0 + $0x4b0] sm:$0xff]
  %v171 = vld [vmem:[%s0 + $0x4b8] sm:$0xff]
  %v172 = vld [vmem:[%s0 + $0x4c0] sm:$0xff]
  %v173 = vld [vmem:[%s0 + $0x4c8] sm:$0xff]
  %v174 = vld [vmem:[%s0 + $0x4d0] sm:$0xff]
  %v175 = vld [vmem:[%s0 + $0x4d8] sm:$0xff]
  %v176 = vld [vmem:[%s0 + $0x4e0] sm:$0xff]
  %v177 = vld [vmem:[%s0 + $0x4e8] sm:$0xff]
  %v178 = vld [vmem:[%s0 + $0x4f0] sm:$0xff]
  %v179 = vld [vmem:[%s0 + $0x4f8] sm:$0xff]
  %v180 = vld [vmem:[%s0 + $0x500] sm:$0xff]
  %v181 = vld [vmem:[%s0 + $0x508] sm:$0xff]
  %v182 = vld [vmem:[%s0 + $0x510] sm:$0xff]
  %v183 = vld [vmem:[%s0 + $0x518] sm:$0xff]
  %v184 = vld [vmem:[%s0 + $0x520] sm:$0xff]
  %v185 = vld [vmem:[%s0 + $0x528] sm:$0xff]
  %v186 = vld [vmem:[%s0 + $0x530] sm:$0xff]
  %v187 = vld [vmem:[%s0 + $0x538] sm:$0xff]
  %v188 = vld [vmem:[%s0 + $0x540] sm:$0xff]
  %v189 = vld [vmem:[%s0 + $0x548] sm:$0xff]
  %v190 = vld [vmem:[%s0 + $0x550] sm:$0xff]
  %v191 = vld [vmem:[%s0 + $0x558] sm:$0xff]
  %v192 = vld [vmem:[%s0 + $0x560] sm:$0xff]
  %v193 = vld [vmem:[%s0 + $0x568] sm:$0xff]
  %v194 = vld [vmem:[%s0 + $0x570] sm:$0xff]
  %v195 = vld [vmem:[%s0 + $0x578] sm:$0xff]
  %v196 = vld [vmem:[%s0 + $0x580] sm:$0xff]
  %v197 = vld [vmem:[%s0 + $0x588] sm:$0xff]
  %v198 = vld [vmem:[%s0 + $0x590] sm:$0xff]
  %v199 = vld [vmem:[%s0 + $0x598] sm:$0xff]
  %v200 = vld [vmem:[%s0 + $0x5a0] sm:$0xff]
  %v201 = vld [vmem:[%s0 + $0x5a8] sm:$0xff]
  %v202 = vld [vmem:[%s0 + $0x5b0] sm:$0xff]
  %v203 = vld [vmem:[%s0 + $0x5b8] sm:$0xff]
  %v204 = vld [vmem:[%s0 + $0x5c0] sm:$0xff]
  %v205 = vld [vmem:[%s0 + $0x5c8] sm:$0xff]
  %v206 = vld [vmem:[%s0 + $0x5d0] sm:$0xff]
  %v207 = vld [vmem:[%s0 + $0x5d8] sm:$0xff]
  %v208 = vld [vmem:[%s0 + $0x5e0] sm:$0xff]
  %v209 = vld [vmem:[%s0 + $0x5e8] sm:$0xff]
  %v210 = vld [vmem:[%s0 + $0x5f0] sm:$0xff]
  %v211 = vld [vmem:[%s0 + $0x5f8] sm:$0xff]
  %v212 = vld [vmem:[%s0 + $0x600] sm:$0xff]
  %v213 = vld [vmem:[%s0 + $0x608] sm:$0xff]
  %v214 = vld [vmem:[%s0 + $0x610] sm:$0xff]
  %v215 = vld [vmem:[%s0 + $0x618] sm:$0xff]
  %v216 = vld [vmem:[%s0 + $0x620] sm:$0xff]
  %v217 = vld [vmem:[%s0 + $0x628] sm:$0xff]
  %v218 = vld [vmem:[%s0 + $0x630] sm:$0xff]
  %v219 = vld [vmem:[%s0 + $0x638] sm:$0xff]
  %v220 = vld [vmem:[%s0 + $0x640] sm:$0xff]
  %v221 = vld [vmem:[%s0 + $0x648] sm:$0xff]
  %v222 = vld [vmem:[%s0 + $0x650] sm:$0xff]
  %v223 = vld [vmem:[%s0 + $0x658] sm:$0xff]
  %v224 = vld [vmem:[%s0 + $0x660] sm:$0xff]
  %v225 = vld [vmem:[%s0 + $0x668] sm:$0xff]
  %v226 = vld [vmem:[%s0 + $0x670] sm:$0xff]
  %v227 = vld [vmem:[%s0 + $0x678] sm:$0xff]
  %v228 = vld [vmem:[%s0 + $0x680] sm:$0xff]
  %v229 = vld [vmem:[%s0 + $0x688] sm:$0xff]
  %v230 = vld [vmem:[%s0 + $0x690] sm:$0xff]
  %v231 = vld [vmem:[%s0 + $0x698] sm:$0xff]
  %v232 = vld [vmem:[%s0 + $0x6a0] sm:$0xff]
  %v233 = vld [vmem:[%s0 + $0x6a8] sm:$0xff]
  %v234 = vld [vmem:[%s0 + $0x6b0] sm:$0xff]
  %v235 = vld [vmem:[%s0 + $0x6b8] sm:$0xff]
  %v236 = vld [vmem:[%s0 + $0x6c0] sm:$0xff]
  %v237 = vld [vmem:[%s0 + $0x6c8] sm:$0xff]
  %v238 = vld [vmem:[%s0 + $0x6d0] sm:$0xff]
  %v239 = vld [vmem:[%s0 + $0x6d8] sm:$0xff]
  %v240 = vld [vmem:[%s0 + $0x6e0] sm:$0xff]
  %v241 = vld [vmem:[%s0 + $0x6e8] sm:$0xff]
  %v242 = vld [vmem:[%s0 + $0x6f0] sm:$0xff]
  %v243 = vld [vmem:[%s0 + $0x6f8] sm:$0xff]
  %v244 = vld [vmem:[%s0 + $0x700] sm:$0xff]
  %v245 = vld [vmem:[%s0 + $0x708] sm:$0xff]
  %v246 = vld [vmem:[%s0 + $0x710] sm:$0xff]
  %v247 = vld [vmem:[%s0 + $0x718] sm:$0xff]
  %v248 = vld [vmem:[%s0 + $0x720] sm:$0xff]
  %v249 = vld [vmem:[%s0 + $0x728] sm:$0xff]
  %v250 = vld [vmem:[%s0 + $0x730] sm:$0xff]
  %v251 = vld [vmem:[%s0 + $0x738] sm:$0xff]
  %v252 = vld [vmem:[%s0 + $0x740] sm:$0xff]
  %v253 = vld [vmem:[%s0 + $0x748] sm:$0xff]
  %v254 = vld [vmem:[%s0 + $0x750] sm:$0xff]
  %v255 = vld [vmem:[%s0 + $0x758] sm:$0xff]
  %v256 = vld [vmem:[%s0 + $0x760] sm:$0xff]
  %v257 = vld [vmem:[%s0 + $0x768] sm:$0xff]
  %v258 = vld [vmem:[%s0 + $0x770] sm:$0xff]
  %v259 = vld [vmem:[%s0 + $0x778] sm:$0xff]
  %v260 = vld [vmem:[%s0 + $0x780] sm:$0xff]
  %v261 = vld [vmem:[%s0 + $0x788] sm:$0xff]
  %v262 = vld [vmem:[%s0 + $0x790] sm:$0xff]
  %v263 = vld [vmem:[%s0 + $0x798] sm:$0xff]
  %v264 = vld [vmem:[%s0 + $0x7a0] sm:$0xff]
  %v265 = vld [vmem:[%s0 + $0x7a8] sm:$0xff]
  %v266 = vld [vmem:[%s0 + $0x7b0] sm:$0xff]
  %v267 = vld [vmem:[%s0 + $0x7b8] sm:$0xff]
  %v268 = vld [vmem:[%s0 + $0x7c0] sm:$0xff]
  %v269 = vld [vmem:[%s0 + $0x7c8] sm:$0xff]
  %v270 = vld [vmem:[%s0 + $0x7d0] sm:$0xff]
  %v271 = vld [vmem:[%s0 + $0x7d8] sm:$0xff]
  %v272 = vld [vmem:[%s0 + $0x7e0] sm:$0xff]
  %v273 = vld [vmem:[%s0 + $0x7e8] sm:$0xff]
  %v274 = vld [vmem:[%s0 + $0x7f0] sm:$0xff]
  %v275 = vld [vmem:[%s0 + $0x7f8] sm:$0xff]
  %v276 = vld [vmem:[%s1] sm:$0xff]
  %v277 = vld [vmem:[%s1 + $0x8] sm:$0xff]
  %v278 = vld [vmem:[%s1 + $0x10] sm:$0xff]
  %v279 = vld [vmem:[%s1 + $0x18] sm:$0xff]
  %v280 = vld [vmem:[%s1 + $0x20] sm:$0xff]
  %v281 = vld [vmem:[%s1 + $0x28] sm:$0xff]
  %v282 = vld [vmem:[%s1 + $0x30] sm:$0xff]
  %v283 = vld [vmem:[%s1 + $0x38] sm:$0xff]
  %v284 = vld [vmem:[%s1 + $0x40] sm:$0xff]
  %v285 = vld [vmem:[%s1 + $0x48] sm:$0xff]
  %v286 = vld [vmem:[%s1 + $0x50] sm:$0xff]
  %v287 = vld [vmem:[%s1 + $0x58] sm:$0xff]
  %v288 = vld [vmem:[%s1 + $0x60] sm:$0xff]
  %v289 = vld [vmem:[%s1 + $0x68] sm:$0xff]
  %v290 = vld [vmem:[%s1 + $0x70] sm:$0xff]
  %v291 = vld [vmem:[%s1 + $0x78] sm:$0xff]
  %v292 = vld [vmem:[%s1 + $0x80] sm:$0xff]
  %v293 = vld [vmem:[%s1 + $0x88] sm:$0xff]
  %v294 = vld [vmem:[%s1 + $0x90] sm:$0xff]
  %v295 = vld [vmem:[%s1 + $0x98] sm:$0xff]
  %v296 = vld [vmem:[%s1 + $0xa0] sm:$0xff]
  %v297 = vld [vmem:[%s1 + $0xa8] sm:$0xff]
  %v298 = vld [vmem:[%s1 + $0xb0] sm:$0xff]
  %v299 = vld [vmem:[%s1 + $0xb8] sm:$0xff]
  %v300 = vld [vmem:[%s1 + $0xc0] sm:$0xff]
  %v301 = vld [vmem:[%s1 + $0xc8] sm:$0xff]
  %v302 = vld [vmem:[%s1 + $0xd0] sm:$0xff]
  %v303 = vld [vmem:[%s1 + $0xd8] sm:$0xff]
  %v304 = vld [vmem:[%s1 + $0xe0] sm:$0xff]
  %v305 = vld [vmem:[%s1 + $0xe8] sm:$0xff]
  %v306 = vld [vmem:[%s1 + $0xf0] sm:$0xff]
  %v307 = vld [vmem:[%s1 + $0xf8] sm:$0xff]
  %v308 = vld [vmem:[%s1 + $0x100] sm:$0xff]
  %v309 = vld [vmem:[%s1 + $0x108] sm:$0xff]
  %v310 = vld [vmem:[%s1 + $0x110] sm:$0xff]
  %v311 = vld [vmem:[%s1 + $0x118] sm:$0xff]
  %v312 = vld [vmem:[%s1 + $0x120] sm:$0xff]
  %v313 = vld [vmem:[%s1 + $0x128] sm:$0xff]
  %v314 = vld [vmem:[%s1 + $0x130] sm:$0xff]
  %v315 = vld [vmem:[%s1 + $0x138] sm:$0xff]
  %v316 = vld [vmem:[%s1 + $0x140] sm:$0xff]
  %v317 = vld [vmem:[%s1 + $0x148] sm:$0xff]
  %v318 = vld [vmem:[%s1 + $0x150] sm:$0xff]
  %v319 = vld [vmem:[%s1 + $0x158] sm:$0xff]
  %v320 = vld [vmem:[%s1 + $0x160] sm:$0xff]
  %v321 = vld [vmem:[%s1 + $0x168] sm:$0xff]
  %v322 = vld [vmem:[%s1 + $0x170] sm:$0xff]
  %v323 = vld [vmem:[%s1 + $0x178] sm:$0xff]
  %v324 = vld [vmem:[%s1 + $0x180] sm:$0xff]
  %v325 = vld [vmem:[%s1 + $0x188] sm:$0xff]
  %v326 = vld [vmem:[%s1 + $0x190] sm:$0xff]
  %v327 = vld [vmem:[%s1 + $0x198] sm:$0xff]
  %v328 = vld [vmem:[%s1 + $0x1a0] sm:$0xff]
  %v329 = vld [vmem:[%s1 + $0x1a8] sm:$0xff]
  %v330 = vld [vmem:[%s1 + $0x1b0] sm:$0xff]
  %v331 = vld [vmem:[%s1 + $0x1b8] sm:$0xff]
  %v332 = vld [vmem:[%s1 + $0x1c0] sm:$0xff]
  %v333 = vld [vmem:[%s1 + $0x1c8] sm:$0xff]
  %v334 = vld [vmem:[%s1 + $0x1d0] sm:$0xff]
  %v335 = vld [vmem:[%s1 + $0x1d8] sm:$0xff]
  %v336 = vld [vmem:[%s1 + $0x1e0] sm:$0xff]
  %v337 = vld [vmem:[%s1 + $0x1e8] sm:$0xff]
  %v338 = vld [vmem:[%s1 + $0x1f0] sm:$0xff]
  %v339 = vld [vmem:[%s1 + $0x1f8] sm:$0xff]
  %v340 = vld [vmem:[%s1 + $0x200] sm:$0xff]
  %v341 = vld [vmem:[%s1 + $0x208] sm:$0xff]
  %v342 = vld [vmem:[%s1 + $0x210] sm:$0xff]
  %v343 = vld [vmem:[%s1 + $0x218] sm:$0xff]
  %v344 = vld [vmem:[%s1 + $0x220] sm:$0xff]
  %v345 = vld [vmem:[%s1 + $0x228] sm:$0xff]
  %v346 = vld [vmem:[%s1 + $0x230] sm:$0xff]
  %v347 = vld [vmem:[%s1 + $0x238] sm:$0xff]
  %v348 = vld [vmem:[%s1 + $0x240] sm:$0xff]
  %v349 = vld [vmem:[%s1 + $0x248] sm:$0xff]
  %v350 = vld [vmem:[%s1 + $0x250] sm:$0xff]
  %v351 = vld [vmem:[%s1 + $0x258] sm:$0xff]
  %v352 = vld [vmem:[%s1 + $0x260] sm:$0xff]
  %v353 = vld [vmem:[%s1 + $0x268] sm:$0xff]
  %v354 = vld [vmem:[%s1 + $0x270] sm:$0xff]
  %v355 = vld [vmem:[%s1 + $0x278] sm:$0xff]
  %v356 = vld [vmem:[%s1 + $0x280] sm:$0xff]
  %v357 = vld [vmem:[%s1 + $0x288] sm:$0xff]
  %v358 = vld [vmem:[%s1 + $0x290] sm:$0xff]
  %v359 = vld [vmem:[%s1 + $0x298] sm:$0xff]
  %v360 = vld [vmem:[%s1 + $0x2a0] sm:$0xff]
  %v361 = vld [vmem:[%s1 + $0x2a8] sm:$0xff]
  %v362 = vld [vmem:[%s1 + $0x2b0] sm:$0xff]
  %v363 = vld [vmem:[%s1 + $0x2b8] sm:$0xff]
  %v364 = vld [vmem:[%s1 + $0x2c0] sm:$0xff]
  %v365 = vld [vmem:[%s1 + $0x2c8] sm:$0xff]
  %v366 = vld [vmem:[%s1 + $0x2d0] sm:$0xff]
  %v367 = vld [vmem:[%s1 + $0x2d8] sm:$0xff]
  %v368 = vld [vmem:[%s1 + $0x2e0] sm:$0xff]
  %v369 = vld [vmem:[%s1 + $0x2e8] sm:$0xff]
  %v370 = vld [vmem:[%s1 + $0x2f0] sm:$0xff]
  %v371 = vld [vmem:[%s1 + $0x2f8] sm:$0xff]
  %v372 = vld [vmem:[%s1 + $0x300] sm:$0xff]
  %v373 = vld [vmem:[%s1 + $0x308] sm:$0xff]
  %v374 = vld [vmem:[%s1 + $0x310] sm:$0xff]
  %v375 = vld [vmem:[%s1 + $0x318] sm:$0xff]
  %v376 = vld [vmem:[%s1 + $0x320] sm:$0xff]
  %v377 = vld [vmem:[%s1 + $0x328] sm:$0xff]
  %v378 = vld [vmem:[%s1 + $0x330] sm:$0xff]
  %v379 = vld [vmem:[%s1 + $0x338] sm:$0xff]
  %v380 = vld [vmem:[%s1 + $0x340] sm:$0xff]
  %v381 = vld [vmem:[%s1 + $0x348] sm:$0xff]
  %v382 = vld [vmem:[%s1 + $0x350] sm:$0xff]
  %v383 = vld [vmem:[%s1 + $0x358] sm:$0xff]
  %v384 = vld [vmem:[%s1 + $0x360] sm:$0xff]
  %v385 = vld [vmem:[%s1 + $0x368] sm:$0xff]
  %v386 = vld [vmem:[%s1 + $0x370] sm:$0xff]
  %v387 = vld [vmem:[%s1 + $0x378] sm:$0xff]
  %v388 = vld [vmem:[%s1 + $0x380] sm:$0xff]
  %v389 = vld [vmem:[%s1 + $0x388] sm:$0xff]
  %v390 = vld [vmem:[%s1 + $0x390] sm:$0xff]
  %v391 = vld [vmem:[%s1 + $0x398] sm:$0xff]
  %v392 = vld [vmem:[%s1 + $0x3a0] sm:$0xff]
  %v393 = vld [vmem:[%s1 + $0x3a8] sm:$0xff]
  %v394 = vld [vmem:[%s1 + $0x3b0] sm:$0xff]
  %v395 = vld [vmem:[%s1 + $0x3b8] sm:$0xff]
  %v396 = vld [vmem:[%s1 + $0x3c0] sm:$0xff]
  %v397 = vld [vmem:[%s1 + $0x3c8] sm:$0xff]
  %v398 = vld [vmem:[%s1 + $0x3d0] sm:$0xff]
  %v399 = vld [vmem:[%s1 + $0x3d8] sm:$0xff]
  %v400 = vld [vmem:[%s1 + $0x3e0] sm:$0xff]
  %v401 = vld [vmem:[%s1 + $0x3e8] sm:$0xff]
  %v402 = vld [vmem:[%s1 + $0x3f0] sm:$0xff]
  %v403 = vld [vmem:[%s1 + $0x3f8] sm:$0xff]
  %v404 = vld [vmem:[%s1 + $0x400] sm:$0xff]
  %v405 = vld [vmem:[%s1 + $0x408] sm:$0xff]
  %v406 = vld [vmem:[%s1 + $0x410] sm:$0xff]
  %v407 = vld [vmem:[%s1 + $0x418] sm:$0xff]
  %v408 = vld [vmem:[%s1 + $0x420] sm:$0xff]
  %v409 = vld [vmem:[%s1 + $0x428] sm:$0xff]
  %v410 = vld [vmem:[%s1 + $0x430] sm:$0xff]
  %v411 = vld [vmem:[%s1 + $0x438] sm:$0xff]
  %v412 = vld [vmem:[%s1 + $0x440] sm:$0xff]
  %v413 = vld [vmem:[%s1 + $0x448] sm:$0xff]
  %v414 = vld [vmem:[%s1 + $0x450] sm:$0xff]
  %v415 = vld [vmem:[%s1 + $0x458] sm:$0xff]
  %v416 = vld [vmem:[%s1 + $0x460] sm:$0xff]
  %v417 = vld [vmem:[%s1 + $0x468] sm:$0xff]
  %v418 = vld [vmem:[%s1 + $0x470] sm:$0xff]
  %v419 = vld [vmem:[%s1 + $0x478] sm:$0xff]
  %v420 = vld [vmem:[%s2] sm:$0x1]
  %v421 = vld [vmem:[%s3] sm:$0x1]
  %v422 = vld [vmem:[%s4] sm:$0x1]
  %423 = vmatprep.subr.mxu0 0.0
  %424 = vmatpush1.msra.mxu0 %v307
  %425 = vmatprep.subr.mxu0 0.0
  %426 = vmatpush1.msra.mxu0 %v306
  %427 = vmatprep.subr.mxu0 0.0
  %428 = vmatpush1.msra.mxu0 %v305
  %429 = vmatprep.subr.mxu0 0.0
  %430 = vmatpush1.msra.mxu0 %v304
  %431 = vmatprep.subr.mxu0 0.0
  %432 = vmatpush1.msra.mxu0 %v303
  %433 = vmatprep.subr.mxu0 0.0
  %434 = vmatpush1.msra.mxu0 %v302
  %435 = vmatprep.subr.mxu0 0.0
  %436 = vmatpush1.msra.mxu0 %v301
  %437 = vmatprep.subr.mxu0 0.0
  %438 = vmatpush1.msra.mxu0 %v300
  %439 = vmatprep.subr.mxu0 0.0
  %440 = vmatpush1.msra.mxu0 %v299
  %441 = vmatprep.subr.mxu0 0.0
  %442 = vmatpush1.msra.mxu0 %v298
  %443 = vmatprep.subr.mxu0 0.0
  %444 = vmatpush1.msra.mxu0 %v297
  %445 = vmatprep.subr.mxu0 0.0
  %446 = vmatpush1.msra.mxu0 %v296
  %447 = vmatprep.subr.mxu0 0.0
  %448 = vmatpush1.msra.mxu0 %v295
  %449 = vmatprep.subr.mxu0 0.0
  %450 = vmatpush1.msra.mxu0 %v294
  %451 = vmatprep.subr.mxu0 0.0
  %452 = vmatpush1.msra.mxu0 %v293
  %453 = vmatprep.subr.mxu0 0.0
  %454 = vmatpush1.msra.mxu0 %v292
  %455 = vmatprep.subr.mxu0 0.0
  %456 = vmatpush2.msra.mxu0 0.0
  %457 = vmatprep.subr.mxu0 0.0
  %458 = vmatpush2.msra.mxu0 0.0
  %459 = vmatprep.subr.mxu0 0.0
  %460 = vmatpush2.msra.mxu0 0.0
  %461 = vmatprep.subr.mxu0 0.0
  %462 = vmatpush2.msra.mxu0 0.0
  %463 = vmatprep.subr.mxu0 0.0
  %464 = vmatpush2.msra.mxu0 0.0
  %465 = vmatprep.subr.mxu0 0.0
  %466 = vmatpush2.msra.mxu0 0.0
  %467 = vmatprep.subr.mxu0 0.0
  %468 = vmatpush2.msra.mxu0 0.0
  %469 = vmatprep.subr.mxu0 0.0
  %470 = vmatpush2.msra.mxu0 0.0
  %471 = vmatprep.subr.mxu0 0.0
  %472 = vmatpush2.msra.mxu0 0.0
  %473 = vmatprep.subr.mxu0 0.0
  %474 = vmatpush2.msra.mxu0 0.0
  %475 = vmatprep.subr.mxu0 0.0
  %476 = vmatpush2.msra.mxu0 0.0
  %477 = vmatprep.subr.mxu0 0.0
  %478 = vmatpush2.msra.mxu0 0.0
  %479 = vmatprep.subr.mxu0 0.0
  %480 = vmatpush2.msra.mxu0 0.0
  %481 = vmatprep.subr.mxu0 0.0
  %482 = vmatpush2.msra.mxu0 0.0
  %483 = vmatprep.subr.mxu0 0.0
  %484 = vmatpush2.msra.mxu0 0.0
  %485 = vmatprep.subr.mxu0 0.0
  %486 = vmatpush2.msra.mxu0 0.0
  %487 = vmatprep.mubr.f32.mxu0 0.0
  %488 = vmatmul.mubr.f32.gmra.mxu0 0.0
  %v489 = vpop.f32.mrf.mxu0
  %v490 = vadd.f32 0.0, %v489
  %v491 = vpop.f32.mrf.mxu0
  %492 = vmatprep.mubr.f32.mxu0 0.0
  %493 = vmatmul.mubr.f32.gmra.mxu0 0.0
  %v494 = vpop.f32.mrf.mxu0
  %v495 = vadd.f32 0.0, %v494
  %v496 = vpop.f32.mrf.mxu0
  %497 = vmatprep.mubr.f32.mxu0 0.0
  %498 = vmatmul.mubr.f32.gmra.mxu0 0.0
  %v499 = vpop.f32.mrf.mxu0
  %v500 = vadd.f32 0.0, %v499
  %v501 = vpop.f32.mrf.mxu0
  %502 = vmatprep.mubr.f32.mxu0 0.0
  %503 = vmatmul.mubr.f32.gmra.mxu0 0.0
  %v504 = vpop.f32.mrf.mxu0
  %v505 = vadd.f32 0.0, %v504
  %v506 = vpop.f32.mrf.mxu0
  %507 = vmatprep.mubr.f32.mxu0 0.0
  %508 = vmatmul.mubr.f32.gmra.mxu0 0.0
  %v509 = vpop.f32.mrf.mxu0
  %v510 = vadd.f32 0.0, %v509
  %v511 = vpop.f32.mrf.mxu0
  %512 = vmatprep.mubr.f32.mxu0 0.0
  %513 = vmatmul.mubr.f32.gmra.mxu0 0.0
  %v514 = vpop.f32.mrf.mxu0
  %v515 = vadd.f32 0.0, %v514
  %v516 = vpop.f32.mrf.mxu0
  %517 = vmatprep.mubr.f32.mxu0 0.0
  %518 = vmatmul.mubr.f32.gmra.mxu0 0.0
  %v519 = vpop.f32.mrf.mxu0
  %v520 = vadd.f32 0.0, %v519
  %v521 = vpop.f32.mrf.mxu0
  %522 = vmatprep.mubr.f32.mxu0 0.0
  %523 = vmatmul.mubr.f32.gmra.mxu0 0.0
  %v524 = vpop.f32.mrf.mxu0
  %v525 = vadd.f32 0.0, %v524
  %v526 = vpop.f32.mrf.mxu0
  %527 = vmatprep.mubr.f32.mxu0 0.0
  %528 = vmatmul.mubr.f32.gmra.mxu0 %v36
  %v529 = vpop.f32.mrf.mxu0
  %v530 = vadd.f32 0.0, %v529
  %v531 = vpop.f32.mrf.mxu0
  %532 = vmatprep.mubr.f32.mxu0 0.0
  %533 = vmatmul.mubr.f32.gmra.mxu0 %v38
  %v534 = vpop.f32.mrf.mxu0
  %v535 = vadd.f32 0.0, %v534
  %v536 = vpop.f32.mrf.mxu0
  %537 = vmatprep.mubr.f32.mxu0 0.0
  %538 = vmatmul.mubr.f32.gmra.mxu0 %v40
  %v539 = vpop.f32.mrf.mxu0
  %v540 = vadd.f32 0.0, %v539
  %v541 = vpop.f32.mrf.mxu0
  %542 = vmatprep.mubr.f32.mxu0 0.0
  %543 = vmatmul.mubr.f32.gmra.mxu0 %v42
  %v544 = vpop.f32.mrf.mxu0
  %v545 = vadd.f32 0.0, %v544
  %v546 = vpop.f32.mrf.mxu0
  %547 = vmatprep.mubr.f32.mxu0 0.0
  %548 = vmatmul.mubr.f32.gmra.mxu0 %v44
  %v549 = vpop.f32.mrf.mxu0
  %v550 = vadd.f32 0.0, %v549
  %v551 = vpop.f32.mrf.mxu0
  %552 = vmatprep.mubr.f32.mxu0 0.0
  %553 = vmatmul.mubr.f32.gmra.mxu0 %v46
  %v554 = vpop.f32.mrf.mxu0
  %v555 = vadd.f32 0.0, %v554
  %v556 = vpop.f32.mrf.mxu0
  %557 = vmatprep.mubr.f32.mxu0 0.0
  %558 = vmatmul.mubr.f32.gmra.mxu0 %v48
  %v559 = vpop.f32.mrf.mxu0
  %v560 = vadd.f32 0.0, %v559
  %v561 = vpop.f32.mrf.mxu0
  %562 = vmatprep.mubr.f32.mxu0 0.0
  %563 = vmatmul.mubr.f32.gmra.mxu0 %v50
  %v564 = vpop.f32.mrf.mxu0
  %v565 = vadd.f32 0.0, %v564
  %v566 = vpop.f32.mrf.mxu0
  %567 = vmatprep.mubr.f32.mxu0 0.0
  %568 = vmatmul.mubr.f32.gmra.mxu0 %v68
  %v569 = vpop.f32.mrf.mxu0
  %v570 = vadd.f32 0.0, %v569
  %v571 = vpop.f32.mrf.mxu0
  %572 = vmatprep.mubr.f32.mxu0 0.0
  %573 = vmatmul.mubr.f32.gmra.mxu0 %v70
  %v574 = vpop.f32.mrf.mxu0
  %v575 = vadd.f32 0.0, %v574
  %v576 = vpop.f32.mrf.mxu0
  %577 = vmatprep.mubr.f32.mxu0 0.0
  %578 = vmatmul.mubr.f32.gmra.mxu0 %v72
  %v579 = vpop.f32.mrf.mxu0
  %v580 = vadd.f32 0.0, %v579
  %v581 = vpop.f32.mrf.mxu0
  %582 = vmatprep.mubr.f32.mxu0 0.0
  %583 = vmatmul.mubr.f32.gmra.mxu0 %v74
  %v584 = vpop.f32.mrf.mxu0
  %v585 = vadd.f32 0.0, %v584
  %v586 = vpop.f32.mrf.mxu0
  %587 = vmatprep.mubr.f32.mxu0 0.0
  %588 = vmatmul.mubr.f32.gmra.mxu0 %v76
  %v589 = vpop.f32.mrf.mxu0
  %v590 = vadd.f32 0.0, %v589
  %v591 = vpop.f32.mrf.mxu0
  %592 = vmatprep.mubr.f32.mxu0 0.0
  %593 = vmatmul.mubr.f32.gmra.mxu0 %v78
  %v594 = vpop.f32.mrf.mxu0
  %v595 = vadd.f32 0.0, %v594
  %v596 = vpop.f32.mrf.mxu0
  %597 = vmatprep.mubr.f32.mxu0 0.0
  %598 = vmatmul.mubr.f32.gmra.mxu0 %v80
  %v599 = vpop.f32.mrf.mxu0
  %v600 = vadd.f32 0.0, %v599
  %v601 = vpop.f32.mrf.mxu0
  %602 = vmatprep.mubr.f32.mxu0 0.0
  %603 = vmatmul.mubr.f32.gmra.mxu0 %v82
  %v604 = vpop.f32.mrf.mxu0
  %v605 = vadd.f32 0.0, %v604
  %v606 = vpop.f32.mrf.mxu0
  %607 = vmatprep.mubr.f32.mxu0 0.0
  %608 = vmatmul.mubr.f32.gmra.mxu0 %v100
  %v609 = vpop.f32.mrf.mxu0
  %v610 = vadd.f32 0.0, %v609
  %v611 = vpop.f32.mrf.mxu0
  %612 = vmatprep.mubr.f32.mxu0 0.0
  %613 = vmatmul.mubr.f32.gmra.mxu0 %v102
  %v614 = vpop.f32.mrf.mxu0
  %v615 = vadd.f32 0.0, %v614
  %v616 = vpop.f32.mrf.mxu0
  %617 = vmatprep.mubr.f32.mxu0 0.0
  %618 = vmatmul.mubr.f32.gmra.mxu0 %v104
  %v619 = vpop.f32.mrf.mxu0
  %v620 = vadd.f32 0.0, %v619
  %v621 = vpop.f32.mrf.mxu0
  %622 = vmatprep.mubr.f32.mxu0 0.0
  %623 = vmatmul.mubr.f32.gmra.mxu0 %v106
  %v624 = vpop.f32.mrf.mxu0
  %v625 = vadd.f32 0.0, %v624
  %v626 = vpop.f32.mrf.mxu0
  %627 = vmatprep.mubr.f32.mxu0 0.0
  %628 = vmatmul.mubr.f32.gmra.mxu0 %v108
  %v629 = vpop.f32.mrf.mxu0
  %v630 = vadd.f32 0.0, %v629
  %v631 = vpop.f32.mrf.mxu0
  %632 = vmatprep.mubr.f32.mxu0 0.0
  %633 = vmatmul.mubr.f32.gmra.mxu0 %v110
  %v634 = vpop.f32.mrf.mxu0
  %v635 = vadd.f32 0.0, %v634
  %v636 = vpop.f32.mrf.mxu0
  %637 = vmatprep.mubr.f32.mxu0 0.0
  %638 = vmatmul.mubr.f32.gmra.mxu0 %v112
  %v639 = vpop.f32.mrf.mxu0
  %v640 = vadd.f32 0.0, %v639
  %v641 = vpop.f32.mrf.mxu0
  %642 = vmatprep.mubr.f32.mxu0 0.0
  %643 = vmatmul.mubr.f32.gmra.mxu0 %v114
  %v644 = vpop.f32.mrf.mxu0
  %v645 = vadd.f32 0.0, %v644
  %v646 = vpop.f32.mrf.mxu0
  %647 = vmatprep.mubr.f32.mxu0 0.0
  %648 = vmatmul.mubr.f32.gmra.mxu0 %v132
  %v649 = vpop.f32.mrf.mxu0
  %v650 = vadd.f32 0.0, %v649
  %v651 = vpop.f32.mrf.mxu0
  %652 = vmatprep.mubr.f32.mxu0 0.0
  %653 = vmatmul.mubr.f32.gmra.mxu0 %v134
  %v654 = vpop.f32.mrf.mxu0
  %v655 = vadd.f32 0.0, %v654
  %v656 = vpop.f32.mrf.mxu0
  %657 = vmatprep.mubr.f32.mxu0 0.0
  %658 = vmatmul.mubr.f32.gmra.mxu0 %v136
  %v659 = vpop.f32.mrf.mxu0
  %v660 = vadd.f32 0.0, %v659
  %v661 = vpop.f32.mrf.mxu0
  %662 = vmatprep.mubr.f32.mxu0 0.0
  %663 = vmatmul.mubr.f32.gmra.mxu0 %v138
  %v664 = vpop.f32.mrf.mxu0
  %v665 = vadd.f32 0.0, %v664
  %v666 = vpop.f32.mrf.mxu0
  %667 = vmatprep.mubr.f32.mxu0 0.0
  %668 = vmatmul.mubr.f32.gmra.mxu0 %v140
  %v669 = vpop.f32.mrf.mxu0
  %v670 = vadd.f32 0.0, %v669
  %v671 = vpop.f32.mrf.mxu0
  %672 = vmatprep.mubr.f32.mxu0 0.0
  %673 = vmatmul.mubr.f32.gmra.mxu0 %v142
  %v674 = vpop.f32.mrf.mxu0
  %v675 = vadd.f32 0.0, %v674
  %v676 = vpop.f32.mrf.mxu0
  %677 = vmatprep.mubr.f32.mxu0 0.0
  %678 = vmatmul.mubr.f32.gmra.mxu0 %v144
  %v679 = vpop.f32.mrf.mxu0
  %v680 = vadd.f32 0.0, %v679
  %v681 = vpop.f32.mrf.mxu0
  %682 = vmatprep.mubr.f32.mxu0 0.0
  %683 = vmatmul.mubr.f32.gmra.mxu0 %v146
  %v684 = vpop.f32.mrf.mxu0
  %v685 = vadd.f32 0.0, %v684
  %v686 = vpop.f32.mrf.mxu0
  %687 = vmatprep.mubr.f32.mxu0 0.0
  %688 = vmatmul.mubr.f32.gmra.mxu0 %v164
  %v689 = vpop.f32.mrf.mxu0
  %v690 = vadd.f32 0.0, %v689
  %v691 = vpop.f32.mrf.mxu0
  %692 = vmatprep.mubr.f32.mxu0 0.0
  %693 = vmatmul.mubr.f32.gmra.mxu0 %v166
  %v694 = vpop.f32.mrf.mxu0
  %v695 = vadd.f32 0.0, %v694
  %v696 = vpop.f32.mrf.mxu0
  %697 = vmatprep.mubr.f32.mxu0 0.0
  %698 = vmatmul.mubr.f32.gmra.mxu0 %v168
  %v699 = vpop.f32.mrf.mxu0
  %v700 = vadd.f32 0.0, %v699
  %v701 = vpop.f32.mrf.mxu0
  %702 = vmatprep.mubr.f32.mxu0 0.0
  %703 = vmatmul.mubr.f32.gmra.mxu0 %v170
  %v704 = vpop.f32.mrf.mxu0
  %v705 = vadd.f32 0.0, %v704
  %v706 = vpop.f32.mrf.mxu0
  %707 = vmatprep.mubr.f32.mxu0 0.0
  %708 = vmatmul.mubr.f32.gmra.mxu0 %v172
  %v709 = vpop.f32.mrf.mxu0
  %v710 = vadd.f32 0.0, %v709
  %v711 = vpop.f32.mrf.mxu0
  %712 = vmatprep.mubr.f32.mxu0 0.0
  %713 = vmatmul.mubr.f32.gmra.mxu0 %v174
  %v714 = vpop.f32.mrf.mxu0
  %v715 = vadd.f32 0.0, %v714
  %v716 = vpop.f32.mrf.mxu0
  %717 = vmatprep.mubr.f32.mxu0 0.0
  %718 = vmatmul.mubr.f32.gmra.mxu0 %v176
  %v719 = vpop.f32.mrf.mxu0
  %v720 = vadd.f32 0.0, %v719
  %v721 = vpop.f32.mrf.mxu0
  %722 = vmatprep.mubr.f32.mxu0 0.0
  %723 = vmatmul.mubr.f32.gmra.mxu0 %v178
  %v724 = vpop.f32.mrf.mxu0
  %v725 = vadd.f32 0.0, %v724
  %v726 = vpop.f32.mrf.mxu0
  %727 = vmatprep.mubr.f32.mxu0 0.0
  %728 = vmatmul.mubr.f32.gmra.mxu0 %v196
  %v729 = vpop.f32.mrf.mxu0
  %v730 = vadd.f32 0.0, %v729
  %v731 = vpop.f32.mrf.mxu0
  %732 = vmatprep.mubr.f32.mxu0 0.0
  %733 = vmatmul.mubr.f32.gmra.mxu0 %v198
  %v734 = vpop.f32.mrf.mxu0
  %v735 = vadd.f32 0.0, %v734
  %v736 = vpop.f32.mrf.mxu0
  %737 = vmatprep.mubr.f32.mxu0 0.0
  %738 = vmatmul.mubr.f32.gmra.mxu0 %v200
  %v739 = vpop.f32.mrf.mxu0
  %v740 = vadd.f32 0.0, %v739
  %v741 = vpop.f32.mrf.mxu0
  %742 = vmatprep.mubr.f32.mxu0 0.0
  %743 = vmatmul.mubr.f32.gmra.mxu0 %v202
  %v744 = vpop.f32.mrf.mxu0
  %v745 = vadd.f32 0.0, %v744
  %v746 = vpop.f32.mrf.mxu0
  %747 = vmatprep.mubr.f32.mxu0 0.0
  %748 = vmatmul.mubr.f32.gmra.mxu0 %v204
  %v749 = vpop.f32.mrf.mxu0
  %v750 = vadd.f32 0.0, %v749
  %v751 = vpop.f32.mrf.mxu0
  %752 = vmatprep.mubr.f32.mxu0 0.0
  %753 = vmatmul.mubr.f32.gmra.mxu0 %v206
  %v754 = vpop.f32.mrf.mxu0
  %v755 = vadd.f32 0.0, %v754
  %v756 = vpop.f32.mrf.mxu0
  %757 = vmatprep.mubr.f32.mxu0 0.0
  %758 = vmatmul.mubr.f32.gmra.mxu0 %v208
  %v759 = vpop.f32.mrf.mxu0
  %v760 = vadd.f32 0.0, %v759
  %v761 = vpop.f32.mrf.mxu0
  %762 = vmatprep.mubr.f32.mxu0 0.0
  %763 = vmatmul.mubr.f32.gmra.mxu0 %v210
  %v764 = vpop.f32.mrf.mxu0
  %v765 = vadd.f32 0.0, %v764
  %v766 = vpop.f32.mrf.mxu0
  %767 = vmatprep.mubr.f32.mxu0 0.0
  %768 = vmatmul.mubr.f32.gmra.mxu0 %v228
  %v769 = vpop.f32.mrf.mxu0
  %v770 = vadd.f32 0.0, %v769
  %v771 = vpop.f32.mrf.mxu0
  %772 = vmatprep.mubr.f32.mxu0 0.0
  %773 = vmatmul.mubr.f32.gmra.mxu0 %v230
  %v774 = vpop.f32.mrf.mxu0
  %v775 = vadd.f32 0.0, %v774
  %v776 = vpop.f32.mrf.mxu0
  %777 = vmatprep.mubr.f32.mxu0 0.0
  %778 = vmatmul.mubr.f32.gmra.mxu0 %v232
  %v779 = vpop.f32.mrf.mxu0
  %v780 = vadd.f32 0.0, %v779
  %v781 = vpop.f32.mrf.mxu0
  %782 = vmatprep.mubr.f32.mxu0 0.0
  %783 = vmatmul.mubr.f32.gmra.mxu0 %v234
  %v784 = vpop.f32.mrf.mxu0
  %v785 = vadd.f32 0.0, %v784
  %v786 = vpop.f32.mrf.mxu0
  %787 = vmatprep.mubr.f32.mxu0 0.0
  %788 = vmatmul.mubr.f32.gmra.mxu0 %v236
  %v789 = vpop.f32.mrf.mxu0
  %v790 = vadd.f32 0.0, %v789
  %v791 = vpop.f32.mrf.mxu0
  %792 = vmatprep.mubr.f32.mxu0 0.0
  %793 = vmatmul.mubr.f32.gmra.mxu0 %v238
  %v794 = vpop.f32.mrf.mxu0
  %v795 = vadd.f32 0.0, %v794
  %v796 = vpop.f32.mrf.mxu0
  %797 = vmatprep.mubr.f32.mxu0 0.0
  %798 = vmatmul.mubr.f32.gmra.mxu0 %v240
  %v799 = vpop.f32.mrf.mxu0
  %v800 = vadd.f32 0.0, %v799
  %v801 = vpop.f32.mrf.mxu0
  %802 = vmatprep.mubr.f32.mxu0 0.0
  %803 = vmatmul.mubr.f32.gmra.mxu0 %v242
  %v804 = vpop.f32.mrf.mxu0
  %v805 = vadd.f32 0.0, %v804
  %v806 = vpop.f32.mrf.mxu0
  %807 = vdwg.mxu0
  %808 = vmatprep.subr.mxu0 0.0
  %809 = vmatpush1.msra.mxu0 %v291
  %810 = vmatprep.subr.mxu0 0.0
  %811 = vmatpush1.msra.mxu0 %v290
  %812 = vmatprep.subr.mxu0 0.0
  %813 = vmatpush1.msra.mxu0 %v289
  %814 = vmatprep.subr.mxu0 0.0
  %815 = vmatpush1.msra.mxu0 %v288
  %816 = vmatprep.subr.mxu0 0.0
  %817 = vmatpush1.msra.mxu0 %v287
  %818 = vmatprep.subr.mxu0 0.0
  %819 = vmatpush1.msra.mxu0 %v286
  %820 = vmatprep.subr.mxu0 0.0
  %821 = vmatpush1.msra.mxu0 %v285
  %822 = vmatprep.subr.mxu0 0.0
  %823 = vmatpush1.msra.mxu0 %v284
  %824 = vmatprep.subr.mxu0 0.0
  %825 = vmatpush1.msra.mxu0 %v283
  %826 = vmatprep.subr.mxu0 0.0
  %827 = vmatpush1.msra.mxu0 %v282
  %828 = vmatprep.subr.mxu0 0.0
  %829 = vmatpush1.msra.mxu0 %v281
  %830 = vmatprep.subr.mxu0 0.0
  %831 = vmatpush1.msra.mxu0 %v280
  %832 = vmatprep.subr.mxu0 0.0
  %833 = vmatpush1.msra.mxu0 %v279
  %834 = vmatprep.subr.mxu0 0.0
  %835 = vmatpush1.msra.mxu0 %v278
  %836 = vmatprep.subr.mxu0 0.0
  %837 = vmatpush1.msra.mxu0 %v277
  %838 = vmatprep.subr.mxu0 0.0
  %839 = vmatpush1.msra.mxu0 %v276
  %840 = vmatprep.subr.mxu0 0.0
  %841 = vmatpush2.msra.mxu0 0.0
  %842 = vmatprep.subr.mxu0 0.0
  %843 = vmatpush2.msra.mxu0 0.0
  %844 = vmatprep.subr.mxu0 0.0
  %845 = vmatpush2.msra.mxu0 0.0
  %846 = vmatprep.subr.mxu0 0.0
  %847 = vmatpush2.msra.mxu0 0.0
  %848 = vmatprep.subr.mxu0 0.0
  %849 = vmatpush2.msra.mxu0 0.0
  %850 = vmatprep.subr.mxu0 0.0
  %851 = vmatpush2.msra.mxu0 0.0
  %852 = vmatprep.subr.mxu0 0.0
  %853 = vmatpush2.msra.mxu0 0.0
  %854 = vmatprep.subr.mxu0 0.0
  %855 = vmatpush2.msra.mxu0 0.0
  %856 = vmatprep.subr.mxu0 0.0
  %857 = vmatpush2.msra.mxu0 0.0
  %858 = vmatprep.subr.mxu0 0.0
  %859 = vmatpush2.msra.mxu0 0.0
  %860 = vmatprep.subr.mxu0 0.0
  %861 = vmatpush2.msra.mxu0 0.0
  %862 = vmatprep.subr.mxu0 0.0
  %863 = vmatpush2.msra.mxu0 0.0
  %864 = vmatprep.subr.mxu0 0.0
  %865 = vmatpush2.msra.mxu0 0.0
  %866 = vmatprep.subr.mxu0 0.0
  %867 = vmatpush2.msra.mxu0 0.0
  %868 = vmatprep.subr.mxu0 0.0
  %869 = vmatpush2.msra.mxu0 0.0
  %870 = vmatprep.subr.mxu0 0.0
  %871 = vmatpush2.msra.mxu0 0.0
  %872 = vmatprep.mubr.f32.mxu0 0.0
  %873 = vmatmul.mubr.f32.gmra.mxu0 0.0
  %v874 = vpop.f32.mrf.mxu0
  %v875 = vadd.f32 %v490, %v874
  %v876 = vpop.f32.mrf.mxu0
  %877 = vmatprep.mubr.f32.mxu0 0.0
  %878 = vmatmul.mubr.f32.gmra.mxu0 0.0
  %v879 = vpop.f32.mrf.mxu0
  %v880 = vadd.f32 %v495, %v879
  %v881 = vpop.f32.mrf.mxu0
  %882 = vmatprep.mubr.f32.mxu0 0.0
  %883 = vmatmul.mubr.f32.gmra.mxu0 0.0
  %v884 = vpop.f32.mrf.mxu0
  %v885 = vadd.f32 %v500, %v884
  %v886 = vpop.f32.mrf.mxu0
  %887 = vmatprep.mubr.f32.mxu0 0.0
  %888 = vmatmul.mubr.f32.gmra.mxu0 0.0
  %v889 = vpop.f32.mrf.mxu0
  %v890 = vadd.f32 %v505, %v889
  %v891 = vpop.f32.mrf.mxu0
  %892 = vmatprep.mubr.f32.mxu0 0.0
  %893 = vmatmul.mubr.f32.gmra.mxu0 0.0
  %v894 = vpop.f32.mrf.mxu0
  %v895 = vadd.f32 %v510, %v894
  %v896 = vpop.f32.mrf.mxu0
  %897 = vmatprep.mubr.f32.mxu0 0.0
  %898 = vmatmul.mubr.f32.gmra.mxu0 0.0
  %v899 = vpop.f32.mrf.mxu0
  %v900 = vadd.f32 %v515, %v899
  %v901 = vpop.f32.mrf.mxu0
  %902 = vmatprep.mubr.f32.mxu0 0.0
  %903 = vmatmul.mubr.f32.gmra.mxu0 0.0
  %v904 = vpop.f32.mrf.mxu0
  %v905 = vadd.f32 %v520, %v904
  %v906 = vpop.f32.mrf.mxu0
  %907 = vmatprep.mubr.f32.mxu0 0.0
  %908 = vmatmul.mubr.f32.gmra.mxu0 0.0
  %v909 = vpop.f32.mrf.mxu0
  %v910 = vadd.f32 %v525, %v909
  %v911 = vpop.f32.mrf.mxu0
  %912 = vmatprep.mubr.f32.mxu0 0.0
  %913 = vmatmul.mubr.f32.gmra.mxu0 0.0
  %v914 = vpop.f32.mrf.mxu0
  %v915 = vadd.f32 %v530, %v914
  %v916 = vpop.f32.mrf.mxu0
  %917 = vmatprep.mubr.f32.mxu0 0.0
  %918 = vmatmul.mubr.f32.gmra.mxu0 %v37
  %v919 = vpop.f32.mrf.mxu0
  %v920 = vadd.f32 %v535, %v919
  %v921 = vpop.f32.mrf.mxu0
  %922 = vmatprep.mubr.f32.mxu0 0.0
  %923 = vmatmul.mubr.f32.gmra.mxu0 %v39
  %v924 = vpop.f32.mrf.mxu0
  %v925 = vadd.f32 %v540, %v924
  %v926 = vpop.f32.mrf.mxu0
  %927 = vmatprep.mubr.f32.mxu0 0.0
  %928 = vmatmul.mubr.f32.gmra.mxu0 %v41
  %v929 = vpop.f32.mrf.mxu0
  %v930 = vadd.f32 %v545, %v929
  %v931 = vpop.f32.mrf.mxu0
  %932 = vmatprep.mubr.f32.mxu0 0.0
  %933 = vmatmul.mubr.f32.gmra.mxu0 %v43
  %v934 = vpop.f32.mrf.mxu0
  %v935 = vadd.f32 %v550, %v934
  %v936 = vpop.f32.mrf.mxu0
  %937 = vmatprep.mubr.f32.mxu0 0.0
  %938 = vmatmul.mubr.f32.gmra.mxu0 %v45
  %v939 = vpop.f32.mrf.mxu0
  %v940 = vadd.f32 %v555, %v939
  %v941 = vpop.f32.mrf.mxu0
  %942 = vmatprep.mubr.f32.mxu0 0.0
  %943 = vmatmul.mubr.f32.gmra.mxu0 %v47
  %v944 = vpop.f32.mrf.mxu0
  %v945 = vadd.f32 %v560, %v944
  %v946 = vpop.f32.mrf.mxu0
  %947 = vmatprep.mubr.f32.mxu0 0.0
  %948 = vmatmul.mubr.f32.gmra.mxu0 %v49
  %v949 = vpop.f32.mrf.mxu0
  %v950 = vadd.f32 %v565, %v949
  %v951 = vpop.f32.mrf.mxu0
  %952 = vmatprep.mubr.f32.mxu0 0.0
  %953 = vmatmul.mubr.f32.gmra.mxu0 0.0
  %v954 = vpop.f32.mrf.mxu0
  %v955 = vadd.f32 %v570, %v954
  %v956 = vpop.f32.mrf.mxu0
  %957 = vmatprep.mubr.f32.mxu0 0.0
  %958 = vmatmul.mubr.f32.gmra.mxu0 %v69
  %v959 = vpop.f32.mrf.mxu0
  %v960 = vadd.f32 %v575, %v959
  %v961 = vpop.f32.mrf.mxu0
  %962 = vmatprep.mubr.f32.mxu0 0.0
  %963 = vmatmul.mubr.f32.gmra.mxu0 %v71
  %v964 = vpop.f32.mrf.mxu0
  %v965 = vadd.f32 %v580, %v964
  %v966 = vpop.f32.mrf.mxu0
  %967 = vmatprep.mubr.f32.mxu0 0.0
  %968 = vmatmul.mubr.f32.gmra.mxu0 %v73
  %v969 = vpop.f32.mrf.mxu0
  %v970 = vadd.f32 %v585, %v969
  %v971 = vpop.f32.mrf.mxu0
  %972 = vmatprep.mubr.f32.mxu0 0.0
  %973 = vmatmul.mubr.f32.gmra.mxu0 %v75
  %v974 = vpop.f32.mrf.mxu0
  %v975 = vadd.f32 %v590, %v974
  %v976 = vpop.f32.mrf.mxu0
  %977 = vmatprep.mubr.f32.mxu0 0.0
  %978 = vmatmul.mubr.f32.gmra.mxu0 %v77
  %v979 = vpop.f32.mrf.mxu0
  %v980 = vadd.f32 %v595, %v979
  %v981 = vpop.f32.mrf.mxu0
  %982 = vmatprep.mubr.f32.mxu0 0.0
  %983 = vmatmul.mubr.f32.gmra.mxu0 %v79
  %v984 = vpop.f32.mrf.mxu0
  %v985 = vadd.f32 %v600, %v984
  %v986 = vpop.f32.mrf.mxu0
  %987 = vmatprep.mubr.f32.mxu0 0.0
  %988 = vmatmul.mubr.f32.gmra.mxu0 %v81
  %v989 = vpop.f32.mrf.mxu0
  %v990 = vadd.f32 %v605, %v989
  %v991 = vpop.f32.mrf.mxu0
  %992 = vmatprep.mubr.f32.mxu0 0.0
  %993 = vmatmul.mubr.f32.gmra.mxu0 0.0
  %v994 = vpop.f32.mrf.mxu0
  %v995 = vadd.f32 %v610, %v994
  %v996 = vpop.f32.mrf.mxu0
  %997 = vmatprep.mubr.f32.mxu0 0.0
  %998 = vmatmul.mubr.f32.gmra.mxu0 %v101
  %v999 = vpop.f32.mrf.mxu0
  %v1000 = vadd.f32 %v615, %v999
  %v1001 = vpop.f32.mrf.mxu0
  %1002 = vmatprep.mubr.f32.mxu0 0.0
  %1003 = vmatmul.mubr.f32.gmra.mxu0 %v103
  %v1004 = vpop.f32.mrf.mxu0
  %v1005 = vadd.f32 %v620, %v1004
  %v1006 = vpop.f32.mrf.mxu0
  %1007 = vmatprep.mubr.f32.mxu0 0.0
  %1008 = vmatmul.mubr.f32.gmra.mxu0 %v105
  %v1009 = vpop.f32.mrf.mxu0
  %v1010 = vadd.f32 %v625, %v1009
  %v1011 = vpop.f32.mrf.mxu0
  %1012 = vmatprep.mubr.f32.mxu0 0.0
  %1013 = vmatmul.mubr.f32.gmra.mxu0 %v107
  %v1014 = vpop.f32.mrf.mxu0
  %v1015 = vadd.f32 %v630, %v1014
  %v1016 = vpop.f32.mrf.mxu0
  %1017 = vmatprep.mubr.f32.mxu0 0.0
  %1018 = vmatmul.mubr.f32.gmra.mxu0 %v109
  %v1019 = vpop.f32.mrf.mxu0
  %v1020 = vadd.f32 %v635, %v1019
  %v1021 = vpop.f32.mrf.mxu0
  %1022 = vmatprep.mubr.f32.mxu0 0.0
  %1023 = vmatmul.mubr.f32.gmra.mxu0 %v111
  %v1024 = vpop.f32.mrf.mxu0
  %v1025 = vadd.f32 %v640, %v1024
  %v1026 = vpop.f32.mrf.mxu0
  %1027 = vmatprep.mubr.f32.mxu0 0.0
  %1028 = vmatmul.mubr.f32.gmra.mxu0 %v113
  %v1029 = vpop.f32.mrf.mxu0
  %v1030 = vadd.f32 %v645, %v1029
  %v1031 = vpop.f32.mrf.mxu0
  %1032 = vmatprep.mubr.f32.mxu0 0.0
  %1033 = vmatmul.mubr.f32.gmra.mxu0 0.0
  %v1034 = vpop.f32.mrf.mxu0
  %v1035 = vadd.f32 %v650, %v1034
  %v1036 = vpop.f32.mrf.mxu0
  %1037 = vmatprep.mubr.f32.mxu0 0.0
  %1038 = vmatmul.mubr.f32.gmra.mxu0 %v133
  %v1039 = vpop.f32.mrf.mxu0
  %v1040 = vadd.f32 %v655, %v1039
  %v1041 = vpop.f32.mrf.mxu0
  %1042 = vmatprep.mubr.f32.mxu0 0.0
  %1043 = vmatmul.mubr.f32.gmra.mxu0 %v135
  %v1044 = vpop.f32.mrf.mxu0
  %v1045 = vadd.f32 %v660, %v1044
  %v1046 = vpop.f32.mrf.mxu0
  %1047 = vmatprep.mubr.f32.mxu0 0.0
  %1048 = vmatmul.mubr.f32.gmra.mxu0 %v137
  %v1049 = vpop.f32.mrf.mxu0
  %v1050 = vadd.f32 %v665, %v1049
  %v1051 = vpop.f32.mrf.mxu0
  %1052 = vmatprep.mubr.f32.mxu0 0.0
  %1053 = vmatmul.mubr.f32.gmra.mxu0 %v139
  %v1054 = vpop.f32.mrf.mxu0
  %v1055 = vadd.f32 %v670, %v1054
  %v1056 = vpop.f32.mrf.mxu0
  %1057 = vmatprep.mubr.f32.mxu0 0.0
  %1058 = vmatmul.mubr.f32.gmra.mxu0 %v141
  %v1059 = vpop.f32.mrf.mxu0
  %v1060 = vadd.f32 %v675, %v1059
  %v1061 = vpop.f32.mrf.mxu0
  %1062 = vmatprep.mubr.f32.mxu0 0.0
  %1063 = vmatmul.mubr.f32.gmra.mxu0 %v143
  %v1064 = vpop.f32.mrf.mxu0
  %v1065 = vadd.f32 %v680, %v1064
  %v1066 = vpop.f32.mrf.mxu0
  %1067 = vmatprep.mubr.f32.mxu0 0.0
  %1068 = vmatmul.mubr.f32.gmra.mxu0 %v145
  %v1069 = vpop.f32.mrf.mxu0
  %v1070 = vadd.f32 %v685, %v1069
  %v1071 = vpop.f32.mrf.mxu0
  %1072 = vmatprep.mubr.f32.mxu0 0.0
  %1073 = vmatmul.mubr.f32.gmra.mxu0 0.0
  %v1074 = vpop.f32.mrf.mxu0
  %v1075 = vadd.f32 %v690, %v1074
  %v1076 = vpop.f32.mrf.mxu0
  %1077 = vmatprep.mubr.f32.mxu0 0.0
  %1078 = vmatmul.mubr.f32.gmra.mxu0 %v165
  %v1079 = vpop.f32.mrf.mxu0
  %v1080 = vadd.f32 %v695, %v1079
  %v1081 = vpop.f32.mrf.mxu0
  %1082 = vmatprep.mubr.f32.mxu0 0.0
  %1083 = vmatmul.mubr.f32.gmra.mxu0 %v167
  %v1084 = vpop.f32.mrf.mxu0
  %v1085 = vadd.f32 %v700, %v1084
  %v1086 = vpop.f32.mrf.mxu0
  %1087 = vmatprep.mubr.f32.mxu0 0.0
  %1088 = vmatmul.mubr.f32.gmra.mxu0 %v169
  %v1089 = vpop.f32.mrf.mxu0
  %v1090 = vadd.f32 %v705, %v1089
  %v1091 = vpop.f32.mrf.mxu0
  %1092 = vmatprep.mubr.f32.mxu0 0.0
  %1093 = vmatmul.mubr.f32.gmra.mxu0 %v171
  %v1094 = vpop.f32.mrf.mxu0
  %v1095 = vadd.f32 %v710, %v1094
  %v1096 = vpop.f32.mrf.mxu0
  %1097 = vmatprep.mubr.f32.mxu0 0.0
  %1098 = vmatmul.mubr.f32.gmra.mxu0 %v173
  %v1099 = vpop.f32.mrf.mxu0
  %v1100 = vadd.f32 %v715, %v1099
  %v1101 = vpop.f32.mrf.mxu0
  %1102 = vmatprep.mubr.f32.mxu0 0.0
  %1103 = vmatmul.mubr.f32.gmra.mxu0 %v175
  %v1104 = vpop.f32.mrf.mxu0
  %v1105 = vadd.f32 %v720, %v1104
  %v1106 = vpop.f32.mrf.mxu0
  %1107 = vmatprep.mubr.f32.mxu0 0.0
  %1108 = vmatmul.mubr.f32.gmra.mxu0 %v177
  %v1109 = vpop.f32.mrf.mxu0
  %v1110 = vadd.f32 %v725, %v1109
  %v1111 = vpop.f32.mrf.mxu0
  %1112 = vmatprep.mubr.f32.mxu0 0.0
  %1113 = vmatmul.mubr.f32.gmra.mxu0 0.0
  %v1114 = vpop.f32.mrf.mxu0
  %v1115 = vadd.f32 %v730, %v1114
  %v1116 = vpop.f32.mrf.mxu0
  %1117 = vmatprep.mubr.f32.mxu0 0.0
  %1118 = vmatmul.mubr.f32.gmra.mxu0 %v197
  %v1119 = vpop.f32.mrf.mxu0
  %v1120 = vadd.f32 %v735, %v1119
  %v1121 = vpop.f32.mrf.mxu0
  %1122 = vmatprep.mubr.f32.mxu0 0.0
  %1123 = vmatmul.mubr.f32.gmra.mxu0 %v199
  %v1124 = vpop.f32.mrf.mxu0
  %v1125 = vadd.f32 %v740, %v1124
  %v1126 = vpop.f32.mrf.mxu0
  %1127 = vmatprep.mubr.f32.mxu0 0.0
  %1128 = vmatmul.mubr.f32.gmra.mxu0 %v201
  %v1129 = vpop.f32.mrf.mxu0
  %v1130 = vadd.f32 %v745, %v1129
  %v1131 = vpop.f32.mrf.mxu0
  %1132 = vmatprep.mubr.f32.mxu0 0.0
  %1133 = vmatmul.mubr.f32.gmra.mxu0 %v203
  %v1134 = vpop.f32.mrf.mxu0
  %v1135 = vadd.f32 %v750, %v1134
  %v1136 = vpop.f32.mrf.mxu0
  %1137 = vmatprep.mubr.f32.mxu0 0.0
  %1138 = vmatmul.mubr.f32.gmra.mxu0 %v205
  %v1139 = vpop.f32.mrf.mxu0
  %v1140 = vadd.f32 %v755, %v1139
  %v1141 = vpop.f32.mrf.mxu0
  %1142 = vmatprep.mubr.f32.mxu0 0.0
  %1143 = vmatmul.mubr.f32.gmra.mxu0 %v207
  %v1144 = vpop.f32.mrf.mxu0
  %v1145 = vadd.f32 %v760, %v1144
  %v1146 = vpop.f32.mrf.mxu0
  %1147 = vmatprep.mubr.f32.mxu0 0.0
  %1148 = vmatmul.mubr.f32.gmra.mxu0 %v209
  %v1149 = vpop.f32.mrf.mxu0
  %v1150 = vadd.f32 %v765, %v1149
  %v1151 = vpop.f32.mrf.mxu0
  %1152 = vmatprep.mubr.f32.mxu0 0.0
  %1153 = vmatmul.mubr.f32.gmra.mxu0 0.0
  %v1154 = vpop.f32.mrf.mxu0
  %v1155 = vadd.f32 %v770, %v1154
  %v1156 = vpop.f32.mrf.mxu0
  %1157 = vmatprep.mubr.f32.mxu0 0.0
  %1158 = vmatmul.mubr.f32.gmra.mxu0 %v229
  %v1159 = vpop.f32.mrf.mxu0
  %v1160 = vadd.f32 %v775, %v1159
  %v1161 = vpop.f32.mrf.mxu0
  %1162 = vmatprep.mubr.f32.mxu0 0.0
  %1163 = vmatmul.mubr.f32.gmra.mxu0 %v231
  %v1164 = vpop.f32.mrf.mxu0
  %v1165 = vadd.f32 %v780, %v1164
  %v1166 = vpop.f32.mrf.mxu0
  %1167 = vmatprep.mubr.f32.mxu0 0.0
  %1168 = vmatmul.mubr.f32.gmra.mxu0 %v233
  %v1169 = vpop.f32.mrf.mxu0
  %v1170 = vadd.f32 %v785, %v1169
  %v1171 = vpop.f32.mrf.mxu0
  %1172 = vmatprep.mubr.f32.mxu0 0.0
  %1173 = vmatmul.mubr.f32.gmra.mxu0 %v235
  %v1174 = vpop.f32.mrf.mxu0
  %v1175 = vadd.f32 %v790, %v1174
  %v1176 = vpop.f32.mrf.mxu0
  %1177 = vmatprep.mubr.f32.mxu0 0.0
  %1178 = vmatmul.mubr.f32.gmra.mxu0 %v237
  %v1179 = vpop.f32.mrf.mxu0
  %v1180 = vadd.f32 %v795, %v1179
  %v1181 = vpop.f32.mrf.mxu0
  %1182 = vmatprep.mubr.f32.mxu0 0.0
  %1183 = vmatmul.mubr.f32.gmra.mxu0 %v239
  %v1184 = vpop.f32.mrf.mxu0
  %v1185 = vadd.f32 %v800, %v1184
  %v1186 = vpop.f32.mrf.mxu0
  %1187 = vmatprep.mubr.f32.mxu0 0.0
  %1188 = vmatmul.mubr.f32.gmra.mxu0 %v241
  %v1189 = vpop.f32.mrf.mxu0
  %v1190 = vadd.f32 %v805, %v1189
  %v1191 = vpop.f32.mrf.mxu0
  %1192 = vdwg.mxu0
  %1193 = vmatprep.subr.mxu0 0.0
  %1194 = vmatpush1.msra.mxu0 %v323
  %1195 = vmatprep.subr.mxu0 0.0
  %1196 = vmatpush1.msra.mxu0 %v322
  %1197 = vmatprep.subr.mxu0 0.0
  %1198 = vmatpush1.msra.mxu0 %v321
  %1199 = vmatprep.subr.mxu0 0.0
  %1200 = vmatpush1.msra.mxu0 %v320
  %1201 = vmatprep.subr.mxu0 0.0
  %1202 = vmatpush1.msra.mxu0 %v319
  %1203 = vmatprep.subr.mxu0 0.0
  %1204 = vmatpush1.msra.mxu0 %v318
  %1205 = vmatprep.subr.mxu0 0.0
  %1206 = vmatpush1.msra.mxu0 %v317
  %1207 = vmatprep.subr.mxu0 0.0
  %1208 = vmatpush1.msra.mxu0 %v316
  %1209 = vmatprep.subr.mxu0 0.0
  %1210 = vmatpush1.msra.mxu0 %v315
  %1211 = vmatprep.subr.mxu0 0.0
  %1212 = vmatpush1.msra.mxu0 %v314
  %1213 = vmatprep.subr.mxu0 0.0
  %1214 = vmatpush1.msra.mxu0 %v313
  %1215 = vmatprep.subr.mxu0 0.0
  %1216 = vmatpush1.msra.mxu0 %v312
  %1217 = vmatprep.subr.mxu0 0.0
  %1218 = vmatpush1.msra.mxu0 %v311
  %1219 = vmatprep.subr.mxu0 0.0
  %1220 = vmatpush1.msra.mxu0 %v310
  %1221 = vmatprep.subr.mxu0 0.0
  %1222 = vmatpush1.msra.mxu0 %v309
  %1223 = vmatprep.subr.mxu0 0.0
  %1224 = vmatpush1.msra.mxu0 %v308
  %1225 = vmatprep.subr.mxu0 0.0
  %1226 = vmatpush2.msra.mxu0 0.0
  %1227 = vmatprep.subr.mxu0 0.0
  %1228 = vmatpush2.msra.mxu0 0.0
  %1229 = vmatprep.subr.mxu0 0.0
  %1230 = vmatpush2.msra.mxu0 0.0
  %1231 = vmatprep.subr.mxu0 0.0
  %1232 = vmatpush2.msra.mxu0 0.0
  %1233 = vmatprep.subr.mxu0 0.0
  %1234 = vmatpush2.msra.mxu0 0.0
  %1235 = vmatprep.subr.mxu0 0.0
  %1236 = vmatpush2.msra.mxu0 0.0
  %1237 = vmatprep.subr.mxu0 0.0
  %1238 = vmatpush2.msra.mxu0 0.0
  %1239 = vmatprep.subr.mxu0 0.0
  %1240 = vmatpush2.msra.mxu0 0.0
  %1241 = vmatprep.subr.mxu0 0.0
  %1242 = vmatpush2.msra.mxu0 0.0
  %1243 = vmatprep.subr.mxu0 0.0
  %1244 = vmatpush2.msra.mxu0 0.0
  %1245 = vmatprep.subr.mxu0 0.0
  %1246 = vmatpush2.msra.mxu0 0.0
  %1247 = vmatprep.subr.mxu0 0.0
  %1248 = vmatpush2.msra.mxu0 0.0
  %1249 = vmatprep.subr.mxu0 0.0
  %1250 = vmatpush2.msra.mxu0 0.0
  %1251 = vmatprep.subr.mxu0 0.0
  %1252 = vmatpush2.msra.mxu0 0.0
  %1253 = vmatprep.subr.mxu0 0.0
  %1254 = vmatpush2.msra.mxu0 0.0
  %1255 = vmatprep.subr.mxu0 0.0
  %1256 = vmatpush2.msra.mxu0 0.0
  %1257 = vmatprep.mubr.f32.mxu0 0.0
  %1258 = vmatmul.mubr.f32.gmra.mxu0 0.0
  %v1259 = vpop.f32.mrf.mxu0
  %v1260 = vadd.f32 0.0, %v1259
  %v1261 = vpop.f32.mrf.mxu0
  %1262 = vmatprep.mubr.f32.mxu0 0.0
  %1263 = vmatmul.mubr.f32.gmra.mxu0 0.0
  %v1264 = vpop.f32.mrf.mxu0
  %v1265 = vadd.f32 0.0, %v1264
  %v1266 = vpop.f32.mrf.mxu0
  %1267 = vmatprep.mubr.f32.mxu0 0.0
  %1268 = vmatmul.mubr.f32.gmra.mxu0 0.0
  %v1269 = vpop.f32.mrf.mxu0
  %v1270 = vadd.f32 0.0, %v1269
  %v1271 = vpop.f32.mrf.mxu0
  %1272 = vmatprep.mubr.f32.mxu0 0.0
  %1273 = vmatmul.mubr.f32.gmra.mxu0 0.0
  %v1274 = vpop.f32.mrf.mxu0
  %v1275 = vadd.f32 0.0, %v1274
  %v1276 = vpop.f32.mrf.mxu0
  %1277 = vmatprep.mubr.f32.mxu0 0.0
  %1278 = vmatmul.mubr.f32.gmra.mxu0 0.0
  %v1279 = vpop.f32.mrf.mxu0
  %v1280 = vadd.f32 0.0, %v1279
  %v1281 = vpop.f32.mrf.mxu0
  %1282 = vmatprep.mubr.f32.mxu0 0.0
  %1283 = vmatmul.mubr.f32.gmra.mxu0 0.0
  %v1284 = vpop.f32.mrf.mxu0
  %v1285 = vadd.f32 0.0, %v1284
  %v1286 = vpop.f32.mrf.mxu0
  %1287 = vmatprep.mubr.f32.mxu0 0.0
  %1288 = vmatmul.mubr.f32.gmra.mxu0 0.0
  %v1289 = vpop.f32.mrf.mxu0
  %v1290 = vadd.f32 0.0, %v1289
  %v1291 = vpop.f32.mrf.mxu0
  %1292 = vmatprep.mubr.f32.mxu0 0.0
  %1293 = vmatmul.mubr.f32.gmra.mxu0 0.0
  %v1294 = vpop.f32.mrf.mxu0
  %v1295 = vadd.f32 0.0, %v1294
  %v1296 = vpop.f32.mrf.mxu0
  %1297 = vmatprep.mubr.f32.mxu0 0.0
  %1298 = vmatmul.mubr.f32.gmra.mxu0 %v37
  %v1299 = vpop.f32.mrf.mxu0
  %v1300 = vadd.f32 0.0, %v1299
  %v1301 = vpop.f32.mrf.mxu0
  %1302 = vmatprep.mubr.f32.mxu0 0.0
  %1303 = vmatmul.mubr.f32.gmra.mxu0 %v39
  %v1304 = vpop.f32.mrf.mxu0
  %v1305 = vadd.f32 0.0, %v1304
  %v1306 = vpop.f32.mrf.mxu0
  %1307 = vmatprep.mubr.f32.mxu0 0.0
  %1308 = vmatmul.mubr.f32.gmra.mxu0 %v41
  %v1309 = vpop.f32.mrf.mxu0
  %v1310 = vadd.f32 0.0, %v1309
  %v1311 = vpop.f32.mrf.mxu0
  %1312 = vmatprep.mubr.f32.mxu0 0.0
  %1313 = vmatmul.mubr.f32.gmra.mxu0 %v43
  %v1314 = vpop.f32.mrf.mxu0
  %v1315 = vadd.f32 0.0, %v1314
  %v1316 = vpop.f32.mrf.mxu0
  %1317 = vmatprep.mubr.f32.mxu0 0.0
  %1318 = vmatmul.mubr.f32.gmra.mxu0 %v45
  %v1319 = vpop.f32.mrf.mxu0
  %v1320 = vadd.f32 0.0, %v1319
  %v1321 = vpop.f32.mrf.mxu0
  %1322 = vmatprep.mubr.f32.mxu0 0.0
  %1323 = vmatmul.mubr.f32.gmra.mxu0 %v47
  %v1324 = vpop.f32.mrf.mxu0
  %v1325 = vadd.f32 0.0, %v1324
  %v1326 = vpop.f32.mrf.mxu0
  %1327 = vmatprep.mubr.f32.mxu0 0.0
  %1328 = vmatmul.mubr.f32.gmra.mxu0 %v49
  %v1329 = vpop.f32.mrf.mxu0
  %v1330 = vadd.f32 0.0, %v1329
  %v1331 = vpop.f32.mrf.mxu0
  %1332 = vmatprep.mubr.f32.mxu0 0.0
  %1333 = vmatmul.mubr.f32.gmra.mxu0 %v51
  %v1334 = vpop.f32.mrf.mxu0
  %v1335 = vadd.f32 0.0, %v1334
  %v1336 = vpop.f32.mrf.mxu0
  %1337 = vmatprep.mubr.f32.mxu0 0.0
  %1338 = vmatmul.mubr.f32.gmra.mxu0 %v69
  %v1339 = vpop.f32.mrf.mxu0
  %v1340 = vadd.f32 0.0, %v1339
  %v1341 = vpop.f32.mrf.mxu0
  %1342 = vmatprep.mubr.f32.mxu0 0.0
  %1343 = vmatmul.mubr.f32.gmra.mxu0 %v71
  %v1344 = vpop.f32.mrf.mxu0
  %v1345 = vadd.f32 0.0, %v1344
  %v1346 = vpop.f32.mrf.mxu0
  %1347 = vmatprep.mubr.f32.mxu0 0.0
  %1348 = vmatmul.mubr.f32.gmra.mxu0 %v73
  %v1349 = vpop.f32.mrf.mxu0
  %v1350 = vadd.f32 0.0, %v1349
  %v1351 = vpop.f32.mrf.mxu0
  %1352 = vmatprep.mubr.f32.mxu0 0.0
  %1353 = vmatmul.mubr.f32.gmra.mxu0 %v75
  %v1354 = vpop.f32.mrf.mxu0
  %v1355 = vadd.f32 0.0, %v1354
  %v1356 = vpop.f32.mrf.mxu0
  %1357 = vmatprep.mubr.f32.mxu0 0.0
  %1358 = vmatmul.mubr.f32.gmra.mxu0 %v77
  %v1359 = vpop.f32.mrf.mxu0
  %v1360 = vadd.f32 0.0, %v1359
  %v1361 = vpop.f32.mrf.mxu0
  %1362 = vmatprep.mubr.f32.mxu0 0.0
  %1363 = vmatmul.mubr.f32.gmra.mxu0 %v79
  %v1364 = vpop.f32.mrf.mxu0
  %v1365 = vadd.f32 0.0, %v1364
  %v1366 = vpop.f32.mrf.mxu0
  %1367 = vmatprep.mubr.f32.mxu0 0.0
  %1368 = vmatmul.mubr.f32.gmra.mxu0 %v81
  %v1369 = vpop.f32.mrf.mxu0
  %v1370 = vadd.f32 0.0, %v1369
  %v1371 = vpop.f32.mrf.mxu0
  %1372 = vmatprep.mubr.f32.mxu0 0.0
  %1373 = vmatmul.mubr.f32.gmra.mxu0 %v83
  %v1374 = vpop.f32.mrf.mxu0
  %v1375 = vadd.f32 0.0, %v1374
  %v1376 = vpop.f32.mrf.mxu0
  %1377 = vmatprep.mubr.f32.mxu0 0.0
  %1378 = vmatmul.mubr.f32.gmra.mxu0 %v101
  %v1379 = vpop.f32.mrf.mxu0
  %v1380 = vadd.f32 0.0, %v1379
  %v1381 = vpop.f32.mrf.mxu0
  %1382 = vmatprep.mubr.f32.mxu0 0.0
  %1383 = vmatmul.mubr.f32.gmra.mxu0 %v103
  %v1384 = vpop.f32.mrf.mxu0
  %v1385 = vadd.f32 0.0, %v1384
  %v1386 = vpop.f32.mrf.mxu0
  %1387 = vmatprep.mubr.f32.mxu0 0.0
  %1388 = vmatmul.mubr.f32.gmra.mxu0 %v105
  %v1389 = vpop.f32.mrf.mxu0
  %v1390 = vadd.f32 0.0, %v1389
  %v1391 = vpop.f32.mrf.mxu0
  %1392 = vmatprep.mubr.f32.mxu0 0.0
  %1393 = vmatmul.mubr.f32.gmra.mxu0 %v107
  %v1394 = vpop.f32.mrf.mxu0
  %v1395 = vadd.f32 0.0, %v1394
  %v1396 = vpop.f32.mrf.mxu0
  %1397 = vmatprep.mubr.f32.mxu0 0.0
  %1398 = vmatmul.mubr.f32.gmra.mxu0 %v109
  %v1399 = vpop.f32.mrf.mxu0
  %v1400 = vadd.f32 0.0, %v1399
  %v1401 = vpop.f32.mrf.mxu0
  %1402 = vmatprep.mubr.f32.mxu0 0.0
  %1403 = vmatmul.mubr.f32.gmra.mxu0 %v111
  %v1404 = vpop.f32.mrf.mxu0
  %v1405 = vadd.f32 0.0, %v1404
  %v1406 = vpop.f32.mrf.mxu0
  %1407 = vmatprep.mubr.f32.mxu0 0.0
  %1408 = vmatmul.mubr.f32.gmra.mxu0 %v113
  %v1409 = vpop.f32.mrf.mxu0
  %v1410 = vadd.f32 0.0, %v1409
  %v1411 = vpop.f32.mrf.mxu0
  %1412 = vmatprep.mubr.f32.mxu0 0.0
  %1413 = vmatmul.mubr.f32.gmra.mxu0 %v115
  %v1414 = vpop.f32.mrf.mxu0
  %v1415 = vadd.f32 0.0, %v1414
  %v1416 = vpop.f32.mrf.mxu0
  %1417 = vmatprep.mubr.f32.mxu0 0.0
  %1418 = vmatmul.mubr.f32.gmra.mxu0 %v133
  %v1419 = vpop.f32.mrf.mxu0
  %v1420 = vadd.f32 0.0, %v1419
  %v1421 = vpop.f32.mrf.mxu0
  %1422 = vmatprep.mubr.f32.mxu0 0.0
  %1423 = vmatmul.mubr.f32.gmra.mxu0 %v135
  %v1424 = vpop.f32.mrf.mxu0
  %v1425 = vadd.f32 0.0, %v1424
  %v1426 = vpop.f32.mrf.mxu0
  %1427 = vmatprep.mubr.f32.mxu0 0.0
  %1428 = vmatmul.mubr.f32.gmra.mxu0 %v137
  %v1429 = vpop.f32.mrf.mxu0
  %v1430 = vadd.f32 0.0, %v1429
  %v1431 = vpop.f32.mrf.mxu0
  %1432 = vmatprep.mubr.f32.mxu0 0.0
  %1433 = vmatmul.mubr.f32.gmra.mxu0 %v139
  %v1434 = vpop.f32.mrf.mxu0
  %v1435 = vadd.f32 0.0, %v1434
  %v1436 = vpop.f32.mrf.mxu0
  %1437 = vmatprep.mubr.f32.mxu0 0.0
  %1438 = vmatmul.mubr.f32.gmra.mxu0 %v141
  %v1439 = vpop.f32.mrf.mxu0
  %v1440 = vadd.f32 0.0, %v1439
  %v1441 = vpop.f32.mrf.mxu0
  %1442 = vmatprep.mubr.f32.mxu0 0.0
  %1443 = vmatmul.mubr.f32.gmra.mxu0 %v143
  %v1444 = vpop.f32.mrf.mxu0
  %v1445 = vadd.f32 0.0, %v1444
  %v1446 = vpop.f32.mrf.mxu0
  %1447 = vmatprep.mubr.f32.mxu0 0.0
  %1448 = vmatmul.mubr.f32.gmra.mxu0 %v145
  %v1449 = vpop.f32.mrf.mxu0
  %v1450 = vadd.f32 0.0, %v1449
  %v1451 = vpop.f32.mrf.mxu0
  %1452 = vmatprep.mubr.f32.mxu0 0.0
  %1453 = vmatmul.mubr.f32.gmra.mxu0 %v147
  %v1454 = vpop.f32.mrf.mxu0
  %v1455 = vadd.f32 0.0, %v1454
  %v1456 = vpop.f32.mrf.mxu0
  %1457 = vmatprep.mubr.f32.mxu0 0.0
  %1458 = vmatmul.mubr.f32.gmra.mxu0 %v165
  %v1459 = vpop.f32.mrf.mxu0
  %v1460 = vadd.f32 0.0, %v1459
  %v1461 = vpop.f32.mrf.mxu0
  %1462 = vmatprep.mubr.f32.mxu0 0.0
  %1463 = vmatmul.mubr.f32.gmra.mxu0 %v167
  %v1464 = vpop.f32.mrf.mxu0
  %v1465 = vadd.f32 0.0, %v1464
  %v1466 = vpop.f32.mrf.mxu0
  %1467 = vmatprep.mubr.f32.mxu0 0.0
  %1468 = vmatmul.mubr.f32.gmra.mxu0 %v169
  %v1469 = vpop.f32.mrf.mxu0
  %v1470 = vadd.f32 0.0, %v1469
  %v1471 = vpop.f32.mrf.mxu0
  %1472 = vmatprep.mubr.f32.mxu0 0.0
  %1473 = vmatmul.mubr.f32.gmra.mxu0 %v171
  %v1474 = vpop.f32.mrf.mxu0
  %v1475 = vadd.f32 0.0, %v1474
  %v1476 = vpop.f32.mrf.mxu0
  %1477 = vmatprep.mubr.f32.mxu0 0.0
  %1478 = vmatmul.mubr.f32.gmra.mxu0 %v173
  %v1479 = vpop.f32.mrf.mxu0
  %v1480 = vadd.f32 0.0, %v1479
  %v1481 = vpop.f32.mrf.mxu0
  %1482 = vmatprep.mubr.f32.mxu0 0.0
  %1483 = vmatmul.mubr.f32.gmra.mxu0 %v175
  %v1484 = vpop.f32.mrf.mxu0
  %v1485 = vadd.f32 0.0, %v1484
  %v1486 = vpop.f32.mrf.mxu0
  %1487 = vmatprep.mubr.f32.mxu0 0.0
  %1488 = vmatmul.mubr.f32.gmra.mxu0 %v177
  %v1489 = vpop.f32.mrf.mxu0
  %v1490 = vadd.f32 0.0, %v1489
  %v1491 = vpop.f32.mrf.mxu0
  %1492 = vmatprep.mubr.f32.mxu0 0.0
  %1493 = vmatmul.mubr.f32.gmra.mxu0 %v179
  %v1494 = vpop.f32.mrf.mxu0
  %v1495 = vadd.f32 0.0, %v1494
  %v1496 = vpop.f32.mrf.mxu0
  %1497 = vmatprep.mubr.f32.mxu0 0.0
  %1498 = vmatmul.mubr.f32.gmra.mxu0 %v197
  %v1499 = vpop.f32.mrf.mxu0
  %v1500 = vadd.f32 0.0, %v1499
  %v1501 = vpop.f32.mrf.mxu0
  %1502 = vmatprep.mubr.f32.mxu0 0.0
  %1503 = vmatmul.mubr.f32.gmra.mxu0 %v199
  %v1504 = vpop.f32.mrf.mxu0
  %v1505 = vadd.f32 0.0, %v1504
  %v1506 = vpop.f32.mrf.mxu0
  %1507 = vmatprep.mubr.f32.mxu0 0.0
  %1508 = vmatmul.mubr.f32.gmra.mxu0 %v201
  %v1509 = vpop.f32.mrf.mxu0
  %v1510 = vadd.f32 0.0, %v1509
  %v1511 = vpop.f32.mrf.mxu0
  %1512 = vmatprep.mubr.f32.mxu0 0.0
  %1513 = vmatmul.mubr.f32.gmra.mxu0 %v203
  %v1514 = vpop.f32.mrf.mxu0
  %v1515 = vadd.f32 0.0, %v1514
  %v1516 = vpop.f32.mrf.mxu0
  %1517 = vmatprep.mubr.f32.mxu0 0.0
  %1518 = vmatmul.mubr.f32.gmra.mxu0 %v205
  %v1519 = vpop.f32.mrf.mxu0
  %v1520 = vadd.f32 0.0, %v1519
  %v1521 = vpop.f32.mrf.mxu0
  %1522 = vmatprep.mubr.f32.mxu0 0.0
  %1523 = vmatmul.mubr.f32.gmra.mxu0 %v207
  %v1524 = vpop.f32.mrf.mxu0
  %v1525 = vadd.f32 0.0, %v1524
  %v1526 = vpop.f32.mrf.mxu0
  %1527 = vmatprep.mubr.f32.mxu0 0.0
  %1528 = vmatmul.mubr.f32.gmra.mxu0 %v209
  %v1529 = vpop.f32.mrf.mxu0
  %v1530 = vadd.f32 0.0, %v1529
  %v1531 = vpop.f32.mrf.mxu0
  %1532 = vmatprep.mubr.f32.mxu0 0.0
  %1533 = vmatmul.mubr.f32.gmra.mxu0 %v211
  %v1534 = vpop.f32.mrf.mxu0
  %v1535 = vadd.f32 0.0, %v1534
  %v1536 = vpop.f32.mrf.mxu0
  %1537 = vmatprep.mubr.f32.mxu0 0.0
  %1538 = vmatmul.mubr.f32.gmra.mxu0 %v229
  %v1539 = vpop.f32.mrf.mxu0
  %v1540 = vadd.f32 0.0, %v1539
  %v1541 = vpop.f32.mrf.mxu0
  %1542 = vmatprep.mubr.f32.mxu0 0.0
  %1543 = vmatmul.mubr.f32.gmra.mxu0 %v231
  %v1544 = vpop.f32.mrf.mxu0
  %v1545 = vadd.f32 0.0, %v1544
  %v1546 = vpop.f32.mrf.mxu0
  %1547 = vmatprep.mubr.f32.mxu0 0.0
  %1548 = vmatmul.mubr.f32.gmra.mxu0 %v233
  %v1549 = vpop.f32.mrf.mxu0
  %v1550 = vadd.f32 0.0, %v1549
  %v1551 = vpop.f32.mrf.mxu0
  %1552 = vmatprep.mubr.f32.mxu0 0.0
  %1553 = vmatmul.mubr.f32.gmra.mxu0 %v235
  %v1554 = vpop.f32.mrf.mxu0
  %v1555 = vadd.f32 0.0, %v1554
  %v1556 = vpop.f32.mrf.mxu0
  %1557 = vmatprep.mubr.f32.mxu0 0.0
  %1558 = vmatmul.mubr.f32.gmra.mxu0 %v237
  %v1559 = vpop.f32.mrf.mxu0
  %v1560 = vadd.f32 0.0, %v1559
  %v1561 = vpop.f32.mrf.mxu0
  %1562 = vmatprep.mubr.f32.mxu0 0.0
  %1563 = vmatmul.mubr.f32.gmra.mxu0 %v239
  %v1564 = vpop.f32.mrf.mxu0
  %v1565 = vadd.f32 0.0, %v1564
  %v1566 = vpop.f32.mrf.mxu0
  %1567 = vmatprep.mubr.f32.mxu0 0.0
  %1568 = vmatmul.mubr.f32.gmra.mxu0 %v241
  %v1569 = vpop.f32.mrf.mxu0
  %v1570 = vadd.f32 0.0, %v1569
  %v1571 = vpop.f32.mrf.mxu0
  %1572 = vmatprep.mubr.f32.mxu0 0.0
  %1573 = vmatmul.mubr.f32.gmra.mxu0 %v243
  %v1574 = vpop.f32.mrf.mxu0
  %v1575 = vadd.f32 0.0, %v1574
  %v1576 = vpop.f32.mrf.mxu0
  %1577 = vdwg.mxu0
  %v1578 = vadd.f32 %v875, %v1260
  %v1579 = vadd.f32 %v880, %v1265
  %v1580 = vadd.f32 %v885, %v1270
  %v1581 = vadd.f32 %v890, %v1275
  %v1582 = vadd.f32 %v895, %v1280
  %v1583 = vadd.f32 %v900, %v1285
  %v1584 = vadd.f32 %v905, %v1290
  %v1585 = vadd.f32 %v910, %v1295
  %v1586 = vadd.f32 %v915, %v1300
  %v1587 = vadd.f32 %v920, %v1305
  %v1588 = vadd.f32 %v925, %v1310
  %v1589 = vadd.f32 %v930, %v1315
  %v1590 = vadd.f32 %v935, %v1320
  %v1591 = vadd.f32 %v940, %v1325
  %v1592 = vadd.f32 %v945, %v1330
  %v1593 = vadd.f32 %v950, %v1335
  %v1594 = vadd.f32 %v955, %v1340
  %v1595 = vadd.f32 %v960, %v1345
  %v1596 = vadd.f32 %v965, %v1350
  %v1597 = vadd.f32 %v970, %v1355
  %v1598 = vadd.f32 %v975, %v1360
  %v1599 = vadd.f32 %v980, %v1365
  %v1600 = vadd.f32 %v985, %v1370
  %v1601 = vadd.f32 %v990, %v1375
  %v1602 = vadd.f32 %v995, %v1380
  %v1603 = vadd.f32 %v1000, %v1385
  %v1604 = vadd.f32 %v1005, %v1390
  %v1605 = vadd.f32 %v1010, %v1395
  %v1606 = vadd.f32 %v1015, %v1400
  %v1607 = vadd.f32 %v1020, %v1405
  %v1608 = vadd.f32 %v1025, %v1410
  %v1609 = vadd.f32 %v1030, %v1415
  %v1610 = vadd.f32 %v1035, %v1420
  %v1611 = vadd.f32 %v1040, %v1425
  %v1612 = vadd.f32 %v1045, %v1430
  %v1613 = vadd.f32 %v1050, %v1435
  %v1614 = vadd.f32 %v1055, %v1440
  %v1615 = vadd.f32 %v1060, %v1445
  %v1616 = vadd.f32 %v1065, %v1450
  %v1617 = vadd.f32 %v1070, %v1455
  %v1618 = vadd.f32 %v1075, %v1460
  %v1619 = vadd.f32 %v1080, %v1465
  %v1620 = vadd.f32 %v1085, %v1470
  %v1621 = vadd.f32 %v1090, %v1475
  %v1622 = vadd.f32 %v1095, %v1480
  %v1623 = vadd.f32 %v1100, %v1485
  %v1624 = vadd.f32 %v1105, %v1490
  %v1625 = vadd.f32 %v1110, %v1495
  %v1626 = vadd.f32 %v1115, %v1500
  %v1627 = vadd.f32 %v1120, %v1505
  %v1628 = vadd.f32 %v1125, %v1510
  %v1629 = vadd.f32 %v1130, %v1515
  %v1630 = vadd.f32 %v1135, %v1520
  %v1631 = vadd.f32 %v1140, %v1525
  %v1632 = vadd.f32 %v1145, %v1530
  %v1633 = vadd.f32 %v1150, %v1535
  %v1634 = vadd.f32 %v1155, %v1540
  %v1635 = vadd.f32 %v1160, %v1545
  %v1636 = vadd.f32 %v1165, %v1550
  %v1637 = vadd.f32 %v1170, %v1555
  %v1638 = vadd.f32 %v1175, %v1560
  %v1639 = vadd.f32 %v1180, %v1565
  %v1640 = vadd.f32 %v1185, %v1570
  %v1641 = vadd.f32 %v1190, %v1575
  %1642 = vmatprep.subr.mxu0 0.0
  %1643 = vmatpush1.msra.mxu0 %v339
  %1644 = vmatprep.subr.mxu0 0.0
  %1645 = vmatpush1.msra.mxu0 %v338
  %1646 = vmatprep.subr.mxu0 0.0
  %1647 = vmatpush1.msra.mxu0 %v337
  %1648 = vmatprep.subr.mxu0 0.0
  %1649 = vmatpush1.msra.mxu0 %v336
  %1650 = vmatprep.subr.mxu0 0.0
  %1651 = vmatpush1.msra.mxu0 %v335
  %1652 = vmatprep.subr.mxu0 0.0
  %1653 = vmatpush1.msra.mxu0 %v334
  %1654 = vmatprep.subr.mxu0 0.0
  %1655 = vmatpush1.msra.mxu0 %v333
  %1656 = vmatprep.subr.mxu0 0.0
  %1657 = vmatpush1.msra.mxu0 %v332
  %1658 = vmatprep.subr.mxu0 0.0
  %1659 = vmatpush1.msra.mxu0 %v331
  %1660 = vmatprep.subr.mxu0 0.0
  %1661 = vmatpush1.msra.mxu0 %v330
  %1662 = vmatprep.subr.mxu0 0.0
  %1663 = vmatpush1.msra.mxu0 %v329
  %1664 = vmatprep.subr.mxu0 0.0
  %1665 = vmatpush1.msra.mxu0 %v328
  %1666 = vmatprep.subr.mxu0 0.0
  %1667 = vmatpush1.msra.mxu0 %v327
  %1668 = vmatprep.subr.mxu0 0.0
  %1669 = vmatpush1.msra.mxu0 %v326
  %1670 = vmatprep.subr.mxu0 0.0
  %1671 = vmatpush1.msra.mxu0 %v325
  %1672 = vmatprep.subr.mxu0 0.0
  %1673 = vmatpush1.msra.mxu0 %v324
  %1674 = vmatprep.subr.mxu0 0.0
  %1675 = vmatpush2.msra.mxu0 0.0
  %1676 = vmatprep.subr.mxu0 0.0
  %1677 = vmatpush2.msra.mxu0 0.0
  %1678 = vmatprep.subr.mxu0 0.0
  %1679 = vmatpush2.msra.mxu0 0.0
  %1680 = vmatprep.subr.mxu0 0.0
  %1681 = vmatpush2.msra.mxu0 0.0
  %1682 = vmatprep.subr.mxu0 0.0
  %1683 = vmatpush2.msra.mxu0 0.0
  %1684 = vmatprep.subr.mxu0 0.0
  %1685 = vmatpush2.msra.mxu0 0.0
  %1686 = vmatprep.subr.mxu0 0.0
  %1687 = vmatpush2.msra.mxu0 0.0
  %1688 = vmatprep.subr.mxu0 0.0
  %1689 = vmatpush2.msra.mxu0 0.0
  %1690 = vmatprep.subr.mxu0 0.0
  %1691 = vmatpush2.msra.mxu0 0.0
  %1692 = vmatprep.subr.mxu0 0.0
  %1693 = vmatpush2.msra.mxu0 0.0
  %1694 = vmatprep.subr.mxu0 0.0
  %1695 = vmatpush2.msra.mxu0 0.0
  %1696 = vmatprep.subr.mxu0 0.0
  %1697 = vmatpush2.msra.mxu0 0.0
  %1698 = vmatprep.subr.mxu0 0.0
  %1699 = vmatpush2.msra.mxu0 0.0
  %1700 = vmatprep.subr.mxu0 0.0
  %1701 = vmatpush2.msra.mxu0 0.0
  %1702 = vmatprep.subr.mxu0 0.0
  %1703 = vmatpush2.msra.mxu0 0.0
  %1704 = vmatprep.subr.mxu0 0.0
  %1705 = vmatpush2.msra.mxu0 0.0
  %1706 = vmatprep.mubr.f32.mxu0 0.0
  %1707 = vmatmul.mubr.f32.gmra.mxu0 0.0
  %v1708 = vpop.f32.mrf.mxu0
  %v1709 = vadd.f32 0.0, %v1708
  %v1710 = vpop.f32.mrf.mxu0
  %1711 = vmatprep.mubr.f32.mxu0 0.0
  %1712 = vmatmul.mubr.f32.gmra.mxu0 %v21
  %v1713 = vpop.f32.mrf.mxu0
  %v1714 = vadd.f32 0.0, %v1713
  %v1715 = vpop.f32.mrf.mxu0
  %1716 = vmatprep.mubr.f32.mxu0 0.0
  %1717 = vmatmul.mubr.f32.gmra.mxu0 %v23
  %v1718 = vpop.f32.mrf.mxu0
  %v1719 = vadd.f32 0.0, %v1718
  %v1720 = vpop.f32.mrf.mxu0
  %1721 = vmatprep.mubr.f32.mxu0 0.0
  %1722 = vmatmul.mubr.f32.gmra.mxu0 %v25
  %v1723 = vpop.f32.mrf.mxu0
  %v1724 = vadd.f32 0.0, %v1723
  %v1725 = vpop.f32.mrf.mxu0
  %1726 = vmatprep.mubr.f32.mxu0 0.0
  %1727 = vmatmul.mubr.f32.gmra.mxu0 %v27
  %v1728 = vpop.f32.mrf.mxu0
  %v1729 = vadd.f32 0.0, %v1728
  %v1730 = vpop.f32.mrf.mxu0
  %1731 = vmatprep.mubr.f32.mxu0 0.0
  %1732 = vmatmul.mubr.f32.gmra.mxu0 %v29
  %v1733 = vpop.f32.mrf.mxu0
  %v1734 = vadd.f32 0.0, %v1733
  %v1735 = vpop.f32.mrf.mxu0
  %1736 = vmatprep.mubr.f32.mxu0 0.0
  %1737 = vmatmul.mubr.f32.gmra.mxu0 %v31
  %v1738 = vpop.f32.mrf.mxu0
  %v1739 = vadd.f32 0.0, %v1738
  %v1740 = vpop.f32.mrf.mxu0
  %1741 = vmatprep.mubr.f32.mxu0 0.0
  %1742 = vmatmul.mubr.f32.gmra.mxu0 %v33
  %v1743 = vpop.f32.mrf.mxu0
  %v1744 = vadd.f32 0.0, %v1743
  %v1745 = vpop.f32.mrf.mxu0
  %1746 = vmatprep.mubr.f32.mxu0 0.0
  %1747 = vmatmul.mubr.f32.gmra.mxu0 0.0
  %v1748 = vpop.f32.mrf.mxu0
  %v1749 = vadd.f32 0.0, %v1748
  %v1750 = vpop.f32.mrf.mxu0
  %1751 = vmatprep.mubr.f32.mxu0 0.0
  %1752 = vmatmul.mubr.f32.gmra.mxu0 %v53
  %v1753 = vpop.f32.mrf.mxu0
  %v1754 = vadd.f32 0.0, %v1753
  %v1755 = vpop.f32.mrf.mxu0
  %1756 = vmatprep.mubr.f32.mxu0 0.0
  %1757 = vmatmul.mubr.f32.gmra.mxu0 %v55
  %v1758 = vpop.f32.mrf.mxu0
  %v1759 = vadd.f32 0.0, %v1758
  %v1760 = vpop.f32.mrf.mxu0
  %1761 = vmatprep.mubr.f32.mxu0 0.0
  %1762 = vmatmul.mubr.f32.gmra.mxu0 %v57
  %v1763 = vpop.f32.mrf.mxu0
  %v1764 = vadd.f32 0.0, %v1763
  %v1765 = vpop.f32.mrf.mxu0
  %1766 = vmatprep.mubr.f32.mxu0 0.0
  %1767 = vmatmul.mubr.f32.gmra.mxu0 %v59
  %v1768 = vpop.f32.mrf.mxu0
  %v1769 = vadd.f32 0.0, %v1768
  %v1770 = vpop.f32.mrf.mxu0
  %1771 = vmatprep.mubr.f32.mxu0 0.0
  %1772 = vmatmul.mubr.f32.gmra.mxu0 %v61
  %v1773 = vpop.f32.mrf.mxu0
  %v1774 = vadd.f32 0.0, %v1773
  %v1775 = vpop.f32.mrf.mxu0
  %1776 = vmatprep.mubr.f32.mxu0 0.0
  %1777 = vmatmul.mubr.f32.gmra.mxu0 %v63
  %v1778 = vpop.f32.mrf.mxu0
  %v1779 = vadd.f32 0.0, %v1778
  %v1780 = vpop.f32.mrf.mxu0
  %1781 = vmatprep.mubr.f32.mxu0 0.0
  %1782 = vmatmul.mubr.f32.gmra.mxu0 %v65
  %v1783 = vpop.f32.mrf.mxu0
  %v1784 = vadd.f32 0.0, %v1783
  %v1785 = vpop.f32.mrf.mxu0
  %1786 = vmatprep.mubr.f32.mxu0 0.0
  %1787 = vmatmul.mubr.f32.gmra.mxu0 0.0
  %v1788 = vpop.f32.mrf.mxu0
  %v1789 = vadd.f32 0.0, %v1788
  %v1790 = vpop.f32.mrf.mxu0
  %1791 = vmatprep.mubr.f32.mxu0 0.0
  %1792 = vmatmul.mubr.f32.gmra.mxu0 %v85
  %v1793 = vpop.f32.mrf.mxu0
  %v1794 = vadd.f32 0.0, %v1793
  %v1795 = vpop.f32.mrf.mxu0
  %1796 = vmatprep.mubr.f32.mxu0 0.0
  %1797 = vmatmul.mubr.f32.gmra.mxu0 %v87
  %v1798 = vpop.f32.mrf.mxu0
  %v1799 = vadd.f32 0.0, %v1798
  %v1800 = vpop.f32.mrf.mxu0
  %1801 = vmatprep.mubr.f32.mxu0 0.0
  %1802 = vmatmul.mubr.f32.gmra.mxu0 %v89
  %v1803 = vpop.f32.mrf.mxu0
  %v1804 = vadd.f32 0.0, %v1803
  %v1805 = vpop.f32.mrf.mxu0
  %1806 = vmatprep.mubr.f32.mxu0 0.0
  %1807 = vmatmul.mubr.f32.gmra.mxu0 %v91
  %v1808 = vpop.f32.mrf.mxu0
  %v1809 = vadd.f32 0.0, %v1808
  %v1810 = vpop.f32.mrf.mxu0
  %1811 = vmatprep.mubr.f32.mxu0 0.0
  %1812 = vmatmul.mubr.f32.gmra.mxu0 %v93
  %v1813 = vpop.f32.mrf.mxu0
  %v1814 = vadd.f32 0.0, %v1813
  %v1815 = vpop.f32.mrf.mxu0
  %1816 = vmatprep.mubr.f32.mxu0 0.0
  %1817 = vmatmul.mubr.f32.gmra.mxu0 %v95
  %v1818 = vpop.f32.mrf.mxu0
  %v1819 = vadd.f32 0.0, %v1818
  %v1820 = vpop.f32.mrf.mxu0
  %1821 = vmatprep.mubr.f32.mxu0 0.0
  %1822 = vmatmul.mubr.f32.gmra.mxu0 %v97
  %v1823 = vpop.f32.mrf.mxu0
  %v1824 = vadd.f32 0.0, %v1823
  %v1825 = vpop.f32.mrf.mxu0
  %1826 = vmatprep.mubr.f32.mxu0 0.0
  %1827 = vmatmul.mubr.f32.gmra.mxu0 0.0
  %v1828 = vpop.f32.mrf.mxu0
  %v1829 = vadd.f32 0.0, %v1828
  %v1830 = vpop.f32.mrf.mxu0
  %1831 = vmatprep.mubr.f32.mxu0 0.0
  %1832 = vmatmul.mubr.f32.gmra.mxu0 %v117
  %v1833 = vpop.f32.mrf.mxu0
  %v1834 = vadd.f32 0.0, %v1833
  %v1835 = vpop.f32.mrf.mxu0
  %1836 = vmatprep.mubr.f32.mxu0 0.0
  %1837 = vmatmul.mubr.f32.gmra.mxu0 %v119
  %v1838 = vpop.f32.mrf.mxu0
  %v1839 = vadd.f32 0.0, %v1838
  %v1840 = vpop.f32.mrf.mxu0
  %1841 = vmatprep.mubr.f32.mxu0 0.0
  %1842 = vmatmul.mubr.f32.gmra.mxu0 %v121
  %v1843 = vpop.f32.mrf.mxu0
  %v1844 = vadd.f32 0.0, %v1843
  %v1845 = vpop.f32.mrf.mxu0
  %1846 = vmatprep.mubr.f32.mxu0 0.0
  %1847 = vmatmul.mubr.f32.gmra.mxu0 %v123
  %v1848 = vpop.f32.mrf.mxu0
  %v1849 = vadd.f32 0.0, %v1848
  %v1850 = vpop.f32.mrf.mxu0
  %1851 = vmatprep.mubr.f32.mxu0 0.0
  %1852 = vmatmul.mubr.f32.gmra.mxu0 %v125
  %v1853 = vpop.f32.mrf.mxu0
  %v1854 = vadd.f32 0.0, %v1853
  %v1855 = vpop.f32.mrf.mxu0
  %1856 = vmatprep.mubr.f32.mxu0 0.0
  %1857 = vmatmul.mubr.f32.gmra.mxu0 %v127
  %v1858 = vpop.f32.mrf.mxu0
  %v1859 = vadd.f32 0.0, %v1858
  %v1860 = vpop.f32.mrf.mxu0
  %1861 = vmatprep.mubr.f32.mxu0 0.0
  %1862 = vmatmul.mubr.f32.gmra.mxu0 %v129
  %v1863 = vpop.f32.mrf.mxu0
  %v1864 = vadd.f32 0.0, %v1863
  %v1865 = vpop.f32.mrf.mxu0
  %1866 = vmatprep.mubr.f32.mxu0 0.0
  %1867 = vmatmul.mubr.f32.gmra.mxu0 0.0
  %v1868 = vpop.f32.mrf.mxu0
  %v1869 = vadd.f32 0.0, %v1868
  %v1870 = vpop.f32.mrf.mxu0
  %1871 = vmatprep.mubr.f32.mxu0 0.0
  %1872 = vmatmul.mubr.f32.gmra.mxu0 %v149
  %v1873 = vpop.f32.mrf.mxu0
  %v1874 = vadd.f32 0.0, %v1873
  %v1875 = vpop.f32.mrf.mxu0
  %1876 = vmatprep.mubr.f32.mxu0 0.0
  %1877 = vmatmul.mubr.f32.gmra.mxu0 %v151
  %v1878 = vpop.f32.mrf.mxu0
  %v1879 = vadd.f32 0.0, %v1878
  %v1880 = vpop.f32.mrf.mxu0
  %1881 = vmatprep.mubr.f32.mxu0 0.0
  %1882 = vmatmul.mubr.f32.gmra.mxu0 %v153
  %v1883 = vpop.f32.mrf.mxu0
  %v1884 = vadd.f32 0.0, %v1883
  %v1885 = vpop.f32.mrf.mxu0
  %1886 = vmatprep.mubr.f32.mxu0 0.0
  %1887 = vmatmul.mubr.f32.gmra.mxu0 %v155
  %v1888 = vpop.f32.mrf.mxu0
  %v1889 = vadd.f32 0.0, %v1888
  %v1890 = vpop.f32.mrf.mxu0
  %1891 = vmatprep.mubr.f32.mxu0 0.0
  %1892 = vmatmul.mubr.f32.gmra.mxu0 %v157
  %v1893 = vpop.f32.mrf.mxu0
  %v1894 = vadd.f32 0.0, %v1893
  %v1895 = vpop.f32.mrf.mxu0
  %1896 = vmatprep.mubr.f32.mxu0 0.0
  %1897 = vmatmul.mubr.f32.gmra.mxu0 %v159
  %v1898 = vpop.f32.mrf.mxu0
  %v1899 = vadd.f32 0.0, %v1898
  %v1900 = vpop.f32.mrf.mxu0
  %1901 = vmatprep.mubr.f32.mxu0 0.0
  %1902 = vmatmul.mubr.f32.gmra.mxu0 %v161
  %v1903 = vpop.f32.mrf.mxu0
  %v1904 = vadd.f32 0.0, %v1903
  %v1905 = vpop.f32.mrf.mxu0
  %1906 = vmatprep.mubr.f32.mxu0 0.0
  %1907 = vmatmul.mubr.f32.gmra.mxu0 0.0
  %v1908 = vpop.f32.mrf.mxu0
  %v1909 = vadd.f32 0.0, %v1908
  %v1910 = vpop.f32.mrf.mxu0
  %1911 = vmatprep.mubr.f32.mxu0 0.0
  %1912 = vmatmul.mubr.f32.gmra.mxu0 %v181
  %v1913 = vpop.f32.mrf.mxu0
  %v1914 = vadd.f32 0.0, %v1913
  %v1915 = vpop.f32.mrf.mxu0
  %1916 = vmatprep.mubr.f32.mxu0 0.0
  %1917 = vmatmul.mubr.f32.gmra.mxu0 %v183
  %v1918 = vpop.f32.mrf.mxu0
  %v1919 = vadd.f32 0.0, %v1918
  %v1920 = vpop.f32.mrf.mxu0
  %1921 = vmatprep.mubr.f32.mxu0 0.0
  %1922 = vmatmul.mubr.f32.gmra.mxu0 %v185
  %v1923 = vpop.f32.mrf.mxu0
  %v1924 = vadd.f32 0.0, %v1923
  %v1925 = vpop.f32.mrf.mxu0
  %1926 = vmatprep.mubr.f32.mxu0 0.0
  %1927 = vmatmul.mubr.f32.gmra.mxu0 %v187
  %v1928 = vpop.f32.mrf.mxu0
  %v1929 = vadd.f32 0.0, %v1928
  %v1930 = vpop.f32.mrf.mxu0
  %1931 = vmatprep.mubr.f32.mxu0 0.0
  %1932 = vmatmul.mubr.f32.gmra.mxu0 %v189
  %v1933 = vpop.f32.mrf.mxu0
  %v1934 = vadd.f32 0.0, %v1933
  %v1935 = vpop.f32.mrf.mxu0
  %1936 = vmatprep.mubr.f32.mxu0 0.0
  %1937 = vmatmul.mubr.f32.gmra.mxu0 %v191
  %v1938 = vpop.f32.mrf.mxu0
  %v1939 = vadd.f32 0.0, %v1938
  %v1940 = vpop.f32.mrf.mxu0
  %1941 = vmatprep.mubr.f32.mxu0 0.0
  %1942 = vmatmul.mubr.f32.gmra.mxu0 %v193
  %v1943 = vpop.f32.mrf.mxu0
  %v1944 = vadd.f32 0.0, %v1943
  %v1945 = vpop.f32.mrf.mxu0
  %1946 = vmatprep.mubr.f32.mxu0 0.0
  %1947 = vmatmul.mubr.f32.gmra.mxu0 0.0
  %v1948 = vpop.f32.mrf.mxu0
  %v1949 = vadd.f32 0.0, %v1948
  %v1950 = vpop.f32.mrf.mxu0
  %1951 = vmatprep.mubr.f32.mxu0 0.0
  %1952 = vmatmul.mubr.f32.gmra.mxu0 %v213
  %v1953 = vpop.f32.mrf.mxu0
  %v1954 = vadd.f32 0.0, %v1953
  %v1955 = vpop.f32.mrf.mxu0
  %1956 = vmatprep.mubr.f32.mxu0 0.0
  %1957 = vmatmul.mubr.f32.gmra.mxu0 %v215
  %v1958 = vpop.f32.mrf.mxu0
  %v1959 = vadd.f32 0.0, %v1958
  %v1960 = vpop.f32.mrf.mxu0
  %1961 = vmatprep.mubr.f32.mxu0 0.0
  %1962 = vmatmul.mubr.f32.gmra.mxu0 %v217
  %v1963 = vpop.f32.mrf.mxu0
  %v1964 = vadd.f32 0.0, %v1963
  %v1965 = vpop.f32.mrf.mxu0
  %1966 = vmatprep.mubr.f32.mxu0 0.0
  %1967 = vmatmul.mubr.f32.gmra.mxu0 %v219
  %v1968 = vpop.f32.mrf.mxu0
  %v1969 = vadd.f32 0.0, %v1968
  %v1970 = vpop.f32.mrf.mxu0
  %1971 = vmatprep.mubr.f32.mxu0 0.0
  %1972 = vmatmul.mubr.f32.gmra.mxu0 %v221
  %v1973 = vpop.f32.mrf.mxu0
  %v1974 = vadd.f32 0.0, %v1973
  %v1975 = vpop.f32.mrf.mxu0
  %1976 = vmatprep.mubr.f32.mxu0 0.0
  %1977 = vmatmul.mubr.f32.gmra.mxu0 %v223
  %v1978 = vpop.f32.mrf.mxu0
  %v1979 = vadd.f32 0.0, %v1978
  %v1980 = vpop.f32.mrf.mxu0
  %1981 = vmatprep.mubr.f32.mxu0 0.0
  %1982 = vmatmul.mubr.f32.gmra.mxu0 %v225
  %v1983 = vpop.f32.mrf.mxu0
  %v1984 = vadd.f32 0.0, %v1983
  %v1985 = vpop.f32.mrf.mxu0
  %1986 = vmatprep.mubr.f32.mxu0 0.0
  %1987 = vmatmul.mubr.f32.gmra.mxu0 0.0
  %v1988 = vpop.f32.mrf.mxu0
  %v1989 = vadd.f32 0.0, %v1988
  %v1990 = vpop.f32.mrf.mxu0
  %1991 = vmatprep.mubr.f32.mxu0 0.0
  %1992 = vmatmul.mubr.f32.gmra.mxu0 %v245
  %v1993 = vpop.f32.mrf.mxu0
  %v1994 = vadd.f32 0.0, %v1993
  %v1995 = vpop.f32.mrf.mxu0
  %1996 = vmatprep.mubr.f32.mxu0 0.0
  %1997 = vmatmul.mubr.f32.gmra.mxu0 %v247
  %v1998 = vpop.f32.mrf.mxu0
  %v1999 = vadd.f32 0.0, %v1998
  %v2000 = vpop.f32.mrf.mxu0
  %2001 = vmatprep.mubr.f32.mxu0 0.0
  %2002 = vmatmul.mubr.f32.gmra.mxu0 %v249
  %v2003 = vpop.f32.mrf.mxu0
  %v2004 = vadd.f32 0.0, %v2003
  %v2005 = vpop.f32.mrf.mxu0
  %2006 = vmatprep.mubr.f32.mxu0 0.0
  %2007 = vmatmul.mubr.f32.gmra.mxu0 %v251
  %v2008 = vpop.f32.mrf.mxu0
  %v2009 = vadd.f32 0.0, %v2008
  %v2010 = vpop.f32.mrf.mxu0
  %2011 = vmatprep.mubr.f32.mxu0 0.0
  %2012 = vmatmul.mubr.f32.gmra.mxu0 %v253
  %v2013 = vpop.f32.mrf.mxu0
  %v2014 = vadd.f32 0.0, %v2013
  %v2015 = vpop.f32.mrf.mxu0
  %2016 = vmatprep.mubr.f32.mxu0 0.0
  %2017 = vmatmul.mubr.f32.gmra.mxu0 %v255
  %v2018 = vpop.f32.mrf.mxu0
  %v2019 = vadd.f32 0.0, %v2018
  %v2020 = vpop.f32.mrf.mxu0
  %2021 = vmatprep.mubr.f32.mxu0 0.0
  %2022 = vmatmul.mubr.f32.gmra.mxu0 %v257
  %v2023 = vpop.f32.mrf.mxu0
  %v2024 = vadd.f32 0.0, %v2023
  %v2025 = vpop.f32.mrf.mxu0
  %2026 = vdwg.mxu0
  %v2027 = vadd.f32 %v1578, %v1709
  %v2028 = vadd.f32 %v1579, %v1714
  %v2029 = vadd.f32 %v1580, %v1719
  %v2030 = vadd.f32 %v1581, %v1724
  %v2031 = vadd.f32 %v1582, %v1729
  %v2032 = vadd.f32 %v1583, %v1734
  %v2033 = vadd.f32 %v1584, %v1739
  %v2034 = vadd.f32 %v1585, %v1744
  %v2035 = vadd.f32 %v1586, %v1749
  %v2036 = vadd.f32 %v1587, %v1754
  %v2037 = vadd.f32 %v1588, %v1759
  %v2038 = vadd.f32 %v1589, %v1764
  %v2039 = vadd.f32 %v1590, %v1769
  %v2040 = vadd.f32 %v1591, %v1774
  %v2041 = vadd.f32 %v1592, %v1779
  %v2042 = vadd.f32 %v1593, %v1784
  %v2043 = vadd.f32 %v1594, %v1789
  %v2044 = vadd.f32 %v1595, %v1794
  %v2045 = vadd.f32 %v1596, %v1799
  %v2046 = vadd.f32 %v1597, %v1804
  %v2047 = vadd.f32 %v1598, %v1809
  %v2048 = vadd.f32 %v1599, %v1814
  %v2049 = vadd.f32 %v1600, %v1819
  %v2050 = vadd.f32 %v1601, %v1824
  %v2051 = vadd.f32 %v1602, %v1829
  %v2052 = vadd.f32 %v1603, %v1834
  %v2053 = vadd.f32 %v1604, %v1839
  %v2054 = vadd.f32 %v1605, %v1844
  %v2055 = vadd.f32 %v1606, %v1849
  %v2056 = vadd.f32 %v1607, %v1854
  %v2057 = vadd.f32 %v1608, %v1859
  %v2058 = vadd.f32 %v1609, %v1864
  %v2059 = vadd.f32 %v1610, %v1869
  %v2060 = vadd.f32 %v1611, %v1874
  %v2061 = vadd.f32 %v1612, %v1879
  %v2062 = vadd.f32 %v1613, %v1884
  %v2063 = vadd.f32 %v1614, %v1889
  %v2064 = vadd.f32 %v1615, %v1894
  %v2065 = vadd.f32 %v1616, %v1899
  %v2066 = vadd.f32 %v1617, %v1904
  %v2067 = vadd.f32 %v1618, %v1909
  %v2068 = vadd.f32 %v1619, %v1914
  %v2069 = vadd.f32 %v1620, %v1919
  %v2070 = vadd.f32 %v1621, %v1924
  %v2071 = vadd.f32 %v1622, %v1929
  %v2072 = vadd.f32 %v1623, %v1934
  %v2073 = vadd.f32 %v1624, %v1939
  %v2074 = vadd.f32 %v1625, %v1944
  %v2075 = vadd.f32 %v1626, %v1949
  %v2076 = vadd.f32 %v1627, %v1954
  %v2077 = vadd.f32 %v1628, %v1959
  %v2078 = vadd.f32 %v1629, %v1964
  %v2079 = vadd.f32 %v1630, %v1969
  %v2080 = vadd.f32 %v1631, %v1974
  %v2081 = vadd.f32 %v1632, %v1979
  %v2082 = vadd.f32 %v1633, %v1984
  %v2083 = vadd.f32 %v1634, %v1989
  %v2084 = vadd.f32 %v1635, %v1994
  %v2085 = vadd.f32 %v1636, %v1999
  %v2086 = vadd.f32 %v1637, %v2004
  %v2087 = vadd.f32 %v1638, %v2009
  %v2088 = vadd.f32 %v1639, %v2014
  %v2089 = vadd.f32 %v1640, %v2019
  %v2090 = vadd.f32 %v1641, %v2024
  %2091 = vmatprep.subr.mxu0 0.0
  %2092 = vmatpush1.msra.mxu0 %v355
  %2093 = vmatprep.subr.mxu0 0.0
  %2094 = vmatpush1.msra.mxu0 %v354
  %2095 = vmatprep.subr.mxu0 0.0
  %2096 = vmatpush1.msra.mxu0 %v353
  %2097 = vmatprep.subr.mxu0 0.0
  %2098 = vmatpush1.msra.mxu0 %v352
  %2099 = vmatprep.subr.mxu0 0.0
  %2100 = vmatpush1.msra.mxu0 %v351
  %2101 = vmatprep.subr.mxu0 0.0
  %2102 = vmatpush1.msra.mxu0 %v350
  %2103 = vmatprep.subr.mxu0 0.0
  %2104 = vmatpush1.msra.mxu0 %v349
  %2105 = vmatprep.subr.mxu0 0.0
  %2106 = vmatpush1.msra.mxu0 %v348
  %2107 = vmatprep.subr.mxu0 0.0
  %2108 = vmatpush1.msra.mxu0 %v347
  %2109 = vmatprep.subr.mxu0 0.0
  %2110 = vmatpush1.msra.mxu0 %v346
  %2111 = vmatprep.subr.mxu0 0.0
  %2112 = vmatpush1.msra.mxu0 %v345
  %2113 = vmatprep.subr.mxu0 0.0
  %2114 = vmatpush1.msra.mxu0 %v344
  %2115 = vmatprep.subr.mxu0 0.0
  %2116 = vmatpush1.msra.mxu0 %v343
  %2117 = vmatprep.subr.mxu0 0.0
  %2118 = vmatpush1.msra.mxu0 %v342
  %2119 = vmatprep.subr.mxu0 0.0
  %2120 = vmatpush1.msra.mxu0 %v341
  %2121 = vmatprep.subr.mxu0 0.0
  %2122 = vmatpush1.msra.mxu0 %v340
  %2123 = vmatprep.subr.mxu0 0.0
  %2124 = vmatpush2.msra.mxu0 0.0
  %2125 = vmatprep.subr.mxu0 0.0
  %2126 = vmatpush2.msra.mxu0 0.0
  %2127 = vmatprep.subr.mxu0 0.0
  %2128 = vmatpush2.msra.mxu0 0.0
  %2129 = vmatprep.subr.mxu0 0.0
  %2130 = vmatpush2.msra.mxu0 0.0
  %2131 = vmatprep.subr.mxu0 0.0
  %2132 = vmatpush2.msra.mxu0 0.0
  %2133 = vmatprep.subr.mxu0 0.0
  %2134 = vmatpush2.msra.mxu0 0.0
  %2135 = vmatprep.subr.mxu0 0.0
  %2136 = vmatpush2.msra.mxu0 0.0
  %2137 = vmatprep.subr.mxu0 0.0
  %2138 = vmatpush2.msra.mxu0 0.0
  %2139 = vmatprep.subr.mxu0 0.0
  %2140 = vmatpush2.msra.mxu0 0.0
  %2141 = vmatprep.subr.mxu0 0.0
  %2142 = vmatpush2.msra.mxu0 0.0
  %2143 = vmatprep.subr.mxu0 0.0
  %2144 = vmatpush2.msra.mxu0 0.0
  %2145 = vmatprep.subr.mxu0 0.0
  %2146 = vmatpush2.msra.mxu0 0.0
  %2147 = vmatprep.subr.mxu0 0.0
  %2148 = vmatpush2.msra.mxu0 0.0
  %2149 = vmatprep.subr.mxu0 0.0
  %2150 = vmatpush2.msra.mxu0 0.0
  %2151 = vmatprep.subr.mxu0 0.0
  %2152 = vmatpush2.msra.mxu0 0.0
  %2153 = vmatprep.subr.mxu0 0.0
  %2154 = vmatpush2.msra.mxu0 0.0
  %2155 = vmatprep.mubr.f32.mxu0 0.0
  %2156 = vmatmul.mubr.f32.gmra.mxu0 %v20
  %v2157 = vpop.f32.mrf.mxu0
  %v2158 = vadd.f32 0.0, %v2157
  %v2159 = vpop.f32.mrf.mxu0
  %2160 = vmatprep.mubr.f32.mxu0 0.0
  %2161 = vmatmul.mubr.f32.gmra.mxu0 %v22
  %v2162 = vpop.f32.mrf.mxu0
  %v2163 = vadd.f32 0.0, %v2162
  %v2164 = vpop.f32.mrf.mxu0
  %2165 = vmatprep.mubr.f32.mxu0 0.0
  %2166 = vmatmul.mubr.f32.gmra.mxu0 %v24
  %v2167 = vpop.f32.mrf.mxu0
  %v2168 = vadd.f32 0.0, %v2167
  %v2169 = vpop.f32.mrf.mxu0
  %2170 = vmatprep.mubr.f32.mxu0 0.0
  %2171 = vmatmul.mubr.f32.gmra.mxu0 %v26
  %v2172 = vpop.f32.mrf.mxu0
  %v2173 = vadd.f32 0.0, %v2172
  %v2174 = vpop.f32.mrf.mxu0
  %2175 = vmatprep.mubr.f32.mxu0 0.0
  %2176 = vmatmul.mubr.f32.gmra.mxu0 %v28
  %v2177 = vpop.f32.mrf.mxu0
  %v2178 = vadd.f32 0.0, %v2177
  %v2179 = vpop.f32.mrf.mxu0
  %2180 = vmatprep.mubr.f32.mxu0 0.0
  %2181 = vmatmul.mubr.f32.gmra.mxu0 %v30
  %v2182 = vpop.f32.mrf.mxu0
  %v2183 = vadd.f32 0.0, %v2182
  %v2184 = vpop.f32.mrf.mxu0
  %2185 = vmatprep.mubr.f32.mxu0 0.0
  %2186 = vmatmul.mubr.f32.gmra.mxu0 %v32
  %v2187 = vpop.f32.mrf.mxu0
  %v2188 = vadd.f32 0.0, %v2187
  %v2189 = vpop.f32.mrf.mxu0
  %2190 = vmatprep.mubr.f32.mxu0 0.0
  %2191 = vmatmul.mubr.f32.gmra.mxu0 %v34
  %v2192 = vpop.f32.mrf.mxu0
  %v2193 = vadd.f32 0.0, %v2192
  %v2194 = vpop.f32.mrf.mxu0
  %2195 = vmatprep.mubr.f32.mxu0 0.0
  %2196 = vmatmul.mubr.f32.gmra.mxu0 %v52
  %v2197 = vpop.f32.mrf.mxu0
  %v2198 = vadd.f32 0.0, %v2197
  %v2199 = vpop.f32.mrf.mxu0
  %2200 = vmatprep.mubr.f32.mxu0 0.0
  %2201 = vmatmul.mubr.f32.gmra.mxu0 %v54
  %v2202 = vpop.f32.mrf.mxu0
  %v2203 = vadd.f32 0.0, %v2202
  %v2204 = vpop.f32.mrf.mxu0
  %2205 = vmatprep.mubr.f32.mxu0 0.0
  %2206 = vmatmul.mubr.f32.gmra.mxu0 %v56
  %v2207 = vpop.f32.mrf.mxu0
  %v2208 = vadd.f32 0.0, %v2207
  %v2209 = vpop.f32.mrf.mxu0
  %2210 = vmatprep.mubr.f32.mxu0 0.0
  %2211 = vmatmul.mubr.f32.gmra.mxu0 %v58
  %v2212 = vpop.f32.mrf.mxu0
  %v2213 = vadd.f32 0.0, %v2212
  %v2214 = vpop.f32.mrf.mxu0
  %2215 = vmatprep.mubr.f32.mxu0 0.0
  %2216 = vmatmul.mubr.f32.gmra.mxu0 %v60
  %v2217 = vpop.f32.mrf.mxu0
  %v2218 = vadd.f32 0.0, %v2217
  %v2219 = vpop.f32.mrf.mxu0
  %2220 = vmatprep.mubr.f32.mxu0 0.0
  %2221 = vmatmul.mubr.f32.gmra.mxu0 %v62
  %v2222 = vpop.f32.mrf.mxu0
  %v2223 = vadd.f32 0.0, %v2222
  %v2224 = vpop.f32.mrf.mxu0
  %2225 = vmatprep.mubr.f32.mxu0 0.0
  %2226 = vmatmul.mubr.f32.gmra.mxu0 %v64
  %v2227 = vpop.f32.mrf.mxu0
  %v2228 = vadd.f32 0.0, %v2227
  %v2229 = vpop.f32.mrf.mxu0
  %2230 = vmatprep.mubr.f32.mxu0 0.0
  %2231 = vmatmul.mubr.f32.gmra.mxu0 %v66
  %v2232 = vpop.f32.mrf.mxu0
  %v2233 = vadd.f32 0.0, %v2232
  %v2234 = vpop.f32.mrf.mxu0
  %2235 = vmatprep.mubr.f32.mxu0 0.0
  %2236 = vmatmul.mubr.f32.gmra.mxu0 %v84
  %v2237 = vpop.f32.mrf.mxu0
  %v2238 = vadd.f32 0.0, %v2237
  %v2239 = vpop.f32.mrf.mxu0
  %2240 = vmatprep.mubr.f32.mxu0 0.0
  %2241 = vmatmul.mubr.f32.gmra.mxu0 %v86
  %v2242 = vpop.f32.mrf.mxu0
  %v2243 = vadd.f32 0.0, %v2242
  %v2244 = vpop.f32.mrf.mxu0
  %2245 = vmatprep.mubr.f32.mxu0 0.0
  %2246 = vmatmul.mubr.f32.gmra.mxu0 %v88
  %v2247 = vpop.f32.mrf.mxu0
  %v2248 = vadd.f32 0.0, %v2247
  %v2249 = vpop.f32.mrf.mxu0
  %2250 = vmatprep.mubr.f32.mxu0 0.0
  %2251 = vmatmul.mubr.f32.gmra.mxu0 %v90
  %v2252 = vpop.f32.mrf.mxu0
  %v2253 = vadd.f32 0.0, %v2252
  %v2254 = vpop.f32.mrf.mxu0
  %2255 = vmatprep.mubr.f32.mxu0 0.0
  %2256 = vmatmul.mubr.f32.gmra.mxu0 %v92
  %v2257 = vpop.f32.mrf.mxu0
  %v2258 = vadd.f32 0.0, %v2257
  %v2259 = vpop.f32.mrf.mxu0
  %2260 = vmatprep.mubr.f32.mxu0 0.0
  %2261 = vmatmul.mubr.f32.gmra.mxu0 %v94
  %v2262 = vpop.f32.mrf.mxu0
  %v2263 = vadd.f32 0.0, %v2262
  %v2264 = vpop.f32.mrf.mxu0
  %2265 = vmatprep.mubr.f32.mxu0 0.0
  %2266 = vmatmul.mubr.f32.gmra.mxu0 %v96
  %v2267 = vpop.f32.mrf.mxu0
  %v2268 = vadd.f32 0.0, %v2267
  %v2269 = vpop.f32.mrf.mxu0
  %2270 = vmatprep.mubr.f32.mxu0 0.0
  %2271 = vmatmul.mubr.f32.gmra.mxu0 %v98
  %v2272 = vpop.f32.mrf.mxu0
  %v2273 = vadd.f32 0.0, %v2272
  %v2274 = vpop.f32.mrf.mxu0
  %2275 = vmatprep.mubr.f32.mxu0 0.0
  %2276 = vmatmul.mubr.f32.gmra.mxu0 %v116
  %v2277 = vpop.f32.mrf.mxu0
  %v2278 = vadd.f32 0.0, %v2277
  %v2279 = vpop.f32.mrf.mxu0
  %2280 = vmatprep.mubr.f32.mxu0 0.0
  %2281 = vmatmul.mubr.f32.gmra.mxu0 %v118
  %v2282 = vpop.f32.mrf.mxu0
  %v2283 = vadd.f32 0.0, %v2282
  %v2284 = vpop.f32.mrf.mxu0
  %2285 = vmatprep.mubr.f32.mxu0 0.0
  %2286 = vmatmul.mubr.f32.gmra.mxu0 %v120
  %v2287 = vpop.f32.mrf.mxu0
  %v2288 = vadd.f32 0.0, %v2287
  %v2289 = vpop.f32.mrf.mxu0
  %2290 = vmatprep.mubr.f32.mxu0 0.0
  %2291 = vmatmul.mubr.f32.gmra.mxu0 %v122
  %v2292 = vpop.f32.mrf.mxu0
  %v2293 = vadd.f32 0.0, %v2292
  %v2294 = vpop.f32.mrf.mxu0
  %2295 = vmatprep.mubr.f32.mxu0 0.0
  %2296 = vmatmul.mubr.f32.gmra.mxu0 %v124
  %v2297 = vpop.f32.mrf.mxu0
  %v2298 = vadd.f32 0.0, %v2297
  %v2299 = vpop.f32.mrf.mxu0
  %2300 = vmatprep.mubr.f32.mxu0 0.0
  %2301 = vmatmul.mubr.f32.gmra.mxu0 %v126
  %v2302 = vpop.f32.mrf.mxu0
  %v2303 = vadd.f32 0.0, %v2302
  %v2304 = vpop.f32.mrf.mxu0
  %2305 = vmatprep.mubr.f32.mxu0 0.0
  %2306 = vmatmul.mubr.f32.gmra.mxu0 %v128
  %v2307 = vpop.f32.mrf.mxu0
  %v2308 = vadd.f32 0.0, %v2307
  %v2309 = vpop.f32.mrf.mxu0
  %2310 = vmatprep.mubr.f32.mxu0 0.0
  %2311 = vmatmul.mubr.f32.gmra.mxu0 %v130
  %v2312 = vpop.f32.mrf.mxu0
  %v2313 = vadd.f32 0.0, %v2312
  %v2314 = vpop.f32.mrf.mxu0
  %2315 = vmatprep.mubr.f32.mxu0 0.0
  %2316 = vmatmul.mubr.f32.gmra.mxu0 %v148
  %v2317 = vpop.f32.mrf.mxu0
  %v2318 = vadd.f32 0.0, %v2317
  %v2319 = vpop.f32.mrf.mxu0
  %2320 = vmatprep.mubr.f32.mxu0 0.0
  %2321 = vmatmul.mubr.f32.gmra.mxu0 %v150
  %v2322 = vpop.f32.mrf.mxu0
  %v2323 = vadd.f32 0.0, %v2322
  %v2324 = vpop.f32.mrf.mxu0
  %2325 = vmatprep.mubr.f32.mxu0 0.0
  %2326 = vmatmul.mubr.f32.gmra.mxu0 %v152
  %v2327 = vpop.f32.mrf.mxu0
  %v2328 = vadd.f32 0.0, %v2327
  %v2329 = vpop.f32.mrf.mxu0
  %2330 = vmatprep.mubr.f32.mxu0 0.0
  %2331 = vmatmul.mubr.f32.gmra.mxu0 %v154
  %v2332 = vpop.f32.mrf.mxu0
  %v2333 = vadd.f32 0.0, %v2332
  %v2334 = vpop.f32.mrf.mxu0
  %2335 = vmatprep.mubr.f32.mxu0 0.0
  %2336 = vmatmul.mubr.f32.gmra.mxu0 %v156
  %v2337 = vpop.f32.mrf.mxu0
  %v2338 = vadd.f32 0.0, %v2337
  %v2339 = vpop.f32.mrf.mxu0
  %2340 = vmatprep.mubr.f32.mxu0 0.0
  %2341 = vmatmul.mubr.f32.gmra.mxu0 %v158
  %v2342 = vpop.f32.mrf.mxu0
  %v2343 = vadd.f32 0.0, %v2342
  %v2344 = vpop.f32.mrf.mxu0
  %2345 = vmatprep.mubr.f32.mxu0 0.0
  %2346 = vmatmul.mubr.f32.gmra.mxu0 %v160
  %v2347 = vpop.f32.mrf.mxu0
  %v2348 = vadd.f32 0.0, %v2347
  %v2349 = vpop.f32.mrf.mxu0
  %2350 = vmatprep.mubr.f32.mxu0 0.0
  %2351 = vmatmul.mubr.f32.gmra.mxu0 %v162
  %v2352 = vpop.f32.mrf.mxu0
  %v2353 = vadd.f32 0.0, %v2352
  %v2354 = vpop.f32.mrf.mxu0
  %2355 = vmatprep.mubr.f32.mxu0 0.0
  %2356 = vmatmul.mubr.f32.gmra.mxu0 %v180
  %v2357 = vpop.f32.mrf.mxu0
  %v2358 = vadd.f32 0.0, %v2357
  %v2359 = vpop.f32.mrf.mxu0
  %2360 = vmatprep.mubr.f32.mxu0 0.0
  %2361 = vmatmul.mubr.f32.gmra.mxu0 %v182
  %v2362 = vpop.f32.mrf.mxu0
  %v2363 = vadd.f32 0.0, %v2362
  %v2364 = vpop.f32.mrf.mxu0
  %2365 = vmatprep.mubr.f32.mxu0 0.0
  %2366 = vmatmul.mubr.f32.gmra.mxu0 %v184
  %v2367 = vpop.f32.mrf.mxu0
  %v2368 = vadd.f32 0.0, %v2367
  %v2369 = vpop.f32.mrf.mxu0
  %2370 = vmatprep.mubr.f32.mxu0 0.0
  %2371 = vmatmul.mubr.f32.gmra.mxu0 %v186
  %v2372 = vpop.f32.mrf.mxu0
  %v2373 = vadd.f32 0.0, %v2372
  %v2374 = vpop.f32.mrf.mxu0
  %2375 = vmatprep.mubr.f32.mxu0 0.0
  %2376 = vmatmul.mubr.f32.gmra.mxu0 %v188
  %v2377 = vpop.f32.mrf.mxu0
  %v2378 = vadd.f32 0.0, %v2377
  %v2379 = vpop.f32.mrf.mxu0
  %2380 = vmatprep.mubr.f32.mxu0 0.0
  %2381 = vmatmul.mubr.f32.gmra.mxu0 %v190
  %v2382 = vpop.f32.mrf.mxu0
  %v2383 = vadd.f32 0.0, %v2382
  %v2384 = vpop.f32.mrf.mxu0
  %2385 = vmatprep.mubr.f32.mxu0 0.0
  %2386 = vmatmul.mubr.f32.gmra.mxu0 %v192
  %v2387 = vpop.f32.mrf.mxu0
  %v2388 = vadd.f32 0.0, %v2387
  %v2389 = vpop.f32.mrf.mxu0
  %2390 = vmatprep.mubr.f32.mxu0 0.0
  %2391 = vmatmul.mubr.f32.gmra.mxu0 %v194
  %v2392 = vpop.f32.mrf.mxu0
  %v2393 = vadd.f32 0.0, %v2392
  %v2394 = vpop.f32.mrf.mxu0
  %2395 = vmatprep.mubr.f32.mxu0 0.0
  %2396 = vmatmul.mubr.f32.gmra.mxu0 %v212
  %v2397 = vpop.f32.mrf.mxu0
  %v2398 = vadd.f32 0.0, %v2397
  %v2399 = vpop.f32.mrf.mxu0
  %2400 = vmatprep.mubr.f32.mxu0 0.0
  %2401 = vmatmul.mubr.f32.gmra.mxu0 %v214
  %v2402 = vpop.f32.mrf.mxu0
  %v2403 = vadd.f32 0.0, %v2402
  %v2404 = vpop.f32.mrf.mxu0
  %2405 = vmatprep.mubr.f32.mxu0 0.0
  %2406 = vmatmul.mubr.f32.gmra.mxu0 %v216
  %v2407 = vpop.f32.mrf.mxu0
  %v2408 = vadd.f32 0.0, %v2407
  %v2409 = vpop.f32.mrf.mxu0
  %2410 = vmatprep.mubr.f32.mxu0 0.0
  %2411 = vmatmul.mubr.f32.gmra.mxu0 %v218
  %v2412 = vpop.f32.mrf.mxu0
  %v2413 = vadd.f32 0.0, %v2412
  %v2414 = vpop.f32.mrf.mxu0
  %2415 = vmatprep.mubr.f32.mxu0 0.0
  %2416 = vmatmul.mubr.f32.gmra.mxu0 %v220
  %v2417 = vpop.f32.mrf.mxu0
  %v2418 = vadd.f32 0.0, %v2417
  %v2419 = vpop.f32.mrf.mxu0
  %2420 = vmatprep.mubr.f32.mxu0 0.0
  %2421 = vmatmul.mubr.f32.gmra.mxu0 %v222
  %v2422 = vpop.f32.mrf.mxu0
  %v2423 = vadd.f32 0.0, %v2422
  %v2424 = vpop.f32.mrf.mxu0
  %2425 = vmatprep.mubr.f32.mxu0 0.0
  %2426 = vmatmul.mubr.f32.gmra.mxu0 %v224
  %v2427 = vpop.f32.mrf.mxu0
  %v2428 = vadd.f32 0.0, %v2427
  %v2429 = vpop.f32.mrf.mxu0
  %2430 = vmatprep.mubr.f32.mxu0 0.0
  %2431 = vmatmul.mubr.f32.gmra.mxu0 %v226
  %v2432 = vpop.f32.mrf.mxu0
  %v2433 = vadd.f32 0.0, %v2432
  %v2434 = vpop.f32.mrf.mxu0
  %2435 = vmatprep.mubr.f32.mxu0 0.0
  %2436 = vmatmul.mubr.f32.gmra.mxu0 %v244
  %v2437 = vpop.f32.mrf.mxu0
  %v2438 = vadd.f32 0.0, %v2437
  %v2439 = vpop.f32.mrf.mxu0
  %2440 = vmatprep.mubr.f32.mxu0 0.0
  %2441 = vmatmul.mubr.f32.gmra.mxu0 %v246
  %v2442 = vpop.f32.mrf.mxu0
  %v2443 = vadd.f32 0.0, %v2442
  %v2444 = vpop.f32.mrf.mxu0
  %2445 = vmatprep.mubr.f32.mxu0 0.0
  %2446 = vmatmul.mubr.f32.gmra.mxu0 %v248
  %v2447 = vpop.f32.mrf.mxu0
  %v2448 = vadd.f32 0.0, %v2447
  %v2449 = vpop.f32.mrf.mxu0
  %2450 = vmatprep.mubr.f32.mxu0 0.0
  %2451 = vmatmul.mubr.f32.gmra.mxu0 %v250
  %v2452 = vpop.f32.mrf.mxu0
  %v2453 = vadd.f32 0.0, %v2452
  %v2454 = vpop.f32.mrf.mxu0
  %2455 = vmatprep.mubr.f32.mxu0 0.0
  %2456 = vmatmul.mubr.f32.gmra.mxu0 %v252
  %v2457 = vpop.f32.mrf.mxu0
  %v2458 = vadd.f32 0.0, %v2457
  %v2459 = vpop.f32.mrf.mxu0
  %2460 = vmatprep.mubr.f32.mxu0 0.0
  %2461 = vmatmul.mubr.f32.gmra.mxu0 %v254
  %v2462 = vpop.f32.mrf.mxu0
  %v2463 = vadd.f32 0.0, %v2462
  %v2464 = vpop.f32.mrf.mxu0
  %2465 = vmatprep.mubr.f32.mxu0 0.0
  %2466 = vmatmul.mubr.f32.gmra.mxu0 %v256
  %v2467 = vpop.f32.mrf.mxu0
  %v2468 = vadd.f32 0.0, %v2467
  %v2469 = vpop.f32.mrf.mxu0
  %2470 = vmatprep.mubr.f32.mxu0 0.0
  %2471 = vmatmul.mubr.f32.gmra.mxu0 %v258
  %v2472 = vpop.f32.mrf.mxu0
  %v2473 = vadd.f32 0.0, %v2472
  %v2474 = vpop.f32.mrf.mxu0
  %2475 = vdwg.mxu0
  %v2476 = vadd.f32 %v2027, %v2158
  %v2477 = vadd.f32 %v2028, %v2163
  %v2478 = vadd.f32 %v2029, %v2168
  %v2479 = vadd.f32 %v2030, %v2173
  %v2480 = vadd.f32 %v2031, %v2178
  %v2481 = vadd.f32 %v2032, %v2183
  %v2482 = vadd.f32 %v2033, %v2188
  %v2483 = vadd.f32 %v2034, %v2193
  %v2484 = vadd.f32 %v2035, %v2198
  %v2485 = vadd.f32 %v2036, %v2203
  %v2486 = vadd.f32 %v2037, %v2208
  %v2487 = vadd.f32 %v2038, %v2213
  %v2488 = vadd.f32 %v2039, %v2218
  %v2489 = vadd.f32 %v2040, %v2223
  %v2490 = vadd.f32 %v2041, %v2228
  %v2491 = vadd.f32 %v2042, %v2233
  %v2492 = vadd.f32 %v2043, %v2238
  %v2493 = vadd.f32 %v2044, %v2243
  %v2494 = vadd.f32 %v2045, %v2248
  %v2495 = vadd.f32 %v2046, %v2253
  %v2496 = vadd.f32 %v2047, %v2258
  %v2497 = vadd.f32 %v2048, %v2263
  %v2498 = vadd.f32 %v2049, %v2268
  %v2499 = vadd.f32 %v2050, %v2273
  %v2500 = vadd.f32 %v2051, %v2278
  %v2501 = vadd.f32 %v2052, %v2283
  %v2502 = vadd.f32 %v2053, %v2288
  %v2503 = vadd.f32 %v2054, %v2293
  %v2504 = vadd.f32 %v2055, %v2298
  %v2505 = vadd.f32 %v2056, %v2303
  %v2506 = vadd.f32 %v2057, %v2308
  %v2507 = vadd.f32 %v2058, %v2313
  %v2508 = vadd.f32 %v2059, %v2318
  %v2509 = vadd.f32 %v2060, %v2323
  %v2510 = vadd.f32 %v2061, %v2328
  %v2511 = vadd.f32 %v2062, %v2333
  %v2512 = vadd.f32 %v2063, %v2338
  %v2513 = vadd.f32 %v2064, %v2343
  %v2514 = vadd.f32 %v2065, %v2348
  %v2515 = vadd.f32 %v2066, %v2353
  %v2516 = vadd.f32 %v2067, %v2358
  %v2517 = vadd.f32 %v2068, %v2363
  %v2518 = vadd.f32 %v2069, %v2368
  %v2519 = vadd.f32 %v2070, %v2373
  %v2520 = vadd.f32 %v2071, %v2378
  %v2521 = vadd.f32 %v2072, %v2383
  %v2522 = vadd.f32 %v2073, %v2388
  %v2523 = vadd.f32 %v2074, %v2393
  %v2524 = vadd.f32 %v2075, %v2398
  %v2525 = vadd.f32 %v2076, %v2403
  %v2526 = vadd.f32 %v2077, %v2408
  %v2527 = vadd.f32 %v2078, %v2413
  %v2528 = vadd.f32 %v2079, %v2418
  %v2529 = vadd.f32 %v2080, %v2423
  %v2530 = vadd.f32 %v2081, %v2428
  %v2531 = vadd.f32 %v2082, %v2433
  %v2532 = vadd.f32 %v2083, %v2438
  %v2533 = vadd.f32 %v2084, %v2443
  %v2534 = vadd.f32 %v2085, %v2448
  %v2535 = vadd.f32 %v2086, %v2453
  %v2536 = vadd.f32 %v2087, %v2458
  %v2537 = vadd.f32 %v2088, %v2463
  %v2538 = vadd.f32 %v2089, %v2468
  %v2539 = vadd.f32 %v2090, %v2473
  %2540 = vmatprep.subr.mxu0 0.0
  %2541 = vmatpush1.msra.mxu0 %v371
  %2542 = vmatprep.subr.mxu0 0.0
  %2543 = vmatpush1.msra.mxu0 %v370
  %2544 = vmatprep.subr.mxu0 0.0
  %2545 = vmatpush1.msra.mxu0 %v369
  %2546 = vmatprep.subr.mxu0 0.0
  %2547 = vmatpush1.msra.mxu0 %v368
  %2548 = vmatprep.subr.mxu0 0.0
  %2549 = vmatpush1.msra.mxu0 %v367
  %2550 = vmatprep.subr.mxu0 0.0
  %2551 = vmatpush1.msra.mxu0 %v366
  %2552 = vmatprep.subr.mxu0 0.0
  %2553 = vmatpush1.msra.mxu0 %v365
  %2554 = vmatprep.subr.mxu0 0.0
  %2555 = vmatpush1.msra.mxu0 %v364
  %2556 = vmatprep.subr.mxu0 0.0
  %2557 = vmatpush1.msra.mxu0 %v363
  %2558 = vmatprep.subr.mxu0 0.0
  %2559 = vmatpush1.msra.mxu0 %v362
  %2560 = vmatprep.subr.mxu0 0.0
  %2561 = vmatpush1.msra.mxu0 %v361
  %2562 = vmatprep.subr.mxu0 0.0
  %2563 = vmatpush1.msra.mxu0 %v360
  %2564 = vmatprep.subr.mxu0 0.0
  %2565 = vmatpush1.msra.mxu0 %v359
  %2566 = vmatprep.subr.mxu0 0.0
  %2567 = vmatpush1.msra.mxu0 %v358
  %2568 = vmatprep.subr.mxu0 0.0
  %2569 = vmatpush1.msra.mxu0 %v357
  %2570 = vmatprep.subr.mxu0 0.0
  %2571 = vmatpush1.msra.mxu0 %v356
  %2572 = vmatprep.subr.mxu0 0.0
  %2573 = vmatpush2.msra.mxu0 0.0
  %2574 = vmatprep.subr.mxu0 0.0
  %2575 = vmatpush2.msra.mxu0 0.0
  %2576 = vmatprep.subr.mxu0 0.0
  %2577 = vmatpush2.msra.mxu0 0.0
  %2578 = vmatprep.subr.mxu0 0.0
  %2579 = vmatpush2.msra.mxu0 0.0
  %2580 = vmatprep.subr.mxu0 0.0
  %2581 = vmatpush2.msra.mxu0 0.0
  %2582 = vmatprep.subr.mxu0 0.0
  %2583 = vmatpush2.msra.mxu0 0.0
  %2584 = vmatprep.subr.mxu0 0.0
  %2585 = vmatpush2.msra.mxu0 0.0
  %2586 = vmatprep.subr.mxu0 0.0
  %2587 = vmatpush2.msra.mxu0 0.0
  %2588 = vmatprep.subr.mxu0 0.0
  %2589 = vmatpush2.msra.mxu0 0.0
  %2590 = vmatprep.subr.mxu0 0.0
  %2591 = vmatpush2.msra.mxu0 0.0
  %2592 = vmatprep.subr.mxu0 0.0
  %2593 = vmatpush2.msra.mxu0 0.0
  %2594 = vmatprep.subr.mxu0 0.0
  %2595 = vmatpush2.msra.mxu0 0.0
  %2596 = vmatprep.subr.mxu0 0.0
  %2597 = vmatpush2.msra.mxu0 0.0
  %2598 = vmatprep.subr.mxu0 0.0
  %2599 = vmatpush2.msra.mxu0 0.0
  %2600 = vmatprep.subr.mxu0 0.0
  %2601 = vmatpush2.msra.mxu0 0.0
  %2602 = vmatprep.subr.mxu0 0.0
  %2603 = vmatpush2.msra.mxu0 0.0
  %2604 = vmatprep.mubr.f32.mxu0 0.0
  %2605 = vmatmul.mubr.f32.gmra.mxu0 %v21
  %v2606 = vpop.f32.mrf.mxu0
  %v2607 = vadd.f32 0.0, %v2606
  %v2608 = vpop.f32.mrf.mxu0
  %2609 = vmatprep.mubr.f32.mxu0 0.0
  %2610 = vmatmul.mubr.f32.gmra.mxu0 %v23
  %v2611 = vpop.f32.mrf.mxu0
  %v2612 = vadd.f32 0.0, %v2611
  %v2613 = vpop.f32.mrf.mxu0
  %2614 = vmatprep.mubr.f32.mxu0 0.0
  %2615 = vmatmul.mubr.f32.gmra.mxu0 %v25
  %v2616 = vpop.f32.mrf.mxu0
  %v2617 = vadd.f32 0.0, %v2616
  %v2618 = vpop.f32.mrf.mxu0
  %2619 = vmatprep.mubr.f32.mxu0 0.0
  %2620 = vmatmul.mubr.f32.gmra.mxu0 %v27
  %v2621 = vpop.f32.mrf.mxu0
  %v2622 = vadd.f32 0.0, %v2621
  %v2623 = vpop.f32.mrf.mxu0
  %2624 = vmatprep.mubr.f32.mxu0 0.0
  %2625 = vmatmul.mubr.f32.gmra.mxu0 %v29
  %v2626 = vpop.f32.mrf.mxu0
  %v2627 = vadd.f32 0.0, %v2626
  %v2628 = vpop.f32.mrf.mxu0
  %2629 = vmatprep.mubr.f32.mxu0 0.0
  %2630 = vmatmul.mubr.f32.gmra.mxu0 %v31
  %v2631 = vpop.f32.mrf.mxu0
  %v2632 = vadd.f32 0.0, %v2631
  %v2633 = vpop.f32.mrf.mxu0
  %2634 = vmatprep.mubr.f32.mxu0 0.0
  %2635 = vmatmul.mubr.f32.gmra.mxu0 %v33
  %v2636 = vpop.f32.mrf.mxu0
  %v2637 = vadd.f32 0.0, %v2636
  %v2638 = vpop.f32.mrf.mxu0
  %2639 = vmatprep.mubr.f32.mxu0 0.0
  %2640 = vmatmul.mubr.f32.gmra.mxu0 %v35
  %v2641 = vpop.f32.mrf.mxu0
  %v2642 = vadd.f32 0.0, %v2641
  %v2643 = vpop.f32.mrf.mxu0
  %2644 = vmatprep.mubr.f32.mxu0 0.0
  %2645 = vmatmul.mubr.f32.gmra.mxu0 %v53
  %v2646 = vpop.f32.mrf.mxu0
  %v2647 = vadd.f32 0.0, %v2646
  %v2648 = vpop.f32.mrf.mxu0
  %2649 = vmatprep.mubr.f32.mxu0 0.0
  %2650 = vmatmul.mubr.f32.gmra.mxu0 %v55
  %v2651 = vpop.f32.mrf.mxu0
  %v2652 = vadd.f32 0.0, %v2651
  %v2653 = vpop.f32.mrf.mxu0
  %2654 = vmatprep.mubr.f32.mxu0 0.0
  %2655 = vmatmul.mubr.f32.gmra.mxu0 %v57
  %v2656 = vpop.f32.mrf.mxu0
  %v2657 = vadd.f32 0.0, %v2656
  %v2658 = vpop.f32.mrf.mxu0
  %2659 = vmatprep.mubr.f32.mxu0 0.0
  %2660 = vmatmul.mubr.f32.gmra.mxu0 %v59
  %v2661 = vpop.f32.mrf.mxu0
  %v2662 = vadd.f32 0.0, %v2661
  %v2663 = vpop.f32.mrf.mxu0
  %2664 = vmatprep.mubr.f32.mxu0 0.0
  %2665 = vmatmul.mubr.f32.gmra.mxu0 %v61
  %v2666 = vpop.f32.mrf.mxu0
  %v2667 = vadd.f32 0.0, %v2666
  %v2668 = vpop.f32.mrf.mxu0
  %2669 = vmatprep.mubr.f32.mxu0 0.0
  %2670 = vmatmul.mubr.f32.gmra.mxu0 %v63
  %v2671 = vpop.f32.mrf.mxu0
  %v2672 = vadd.f32 0.0, %v2671
  %v2673 = vpop.f32.mrf.mxu0
  %2674 = vmatprep.mubr.f32.mxu0 0.0
  %2675 = vmatmul.mubr.f32.gmra.mxu0 %v65
  %v2676 = vpop.f32.mrf.mxu0
  %v2677 = vadd.f32 0.0, %v2676
  %v2678 = vpop.f32.mrf.mxu0
  %2679 = vmatprep.mubr.f32.mxu0 0.0
  %2680 = vmatmul.mubr.f32.gmra.mxu0 %v67
  %v2681 = vpop.f32.mrf.mxu0
  %v2682 = vadd.f32 0.0, %v2681
  %v2683 = vpop.f32.mrf.mxu0
  %2684 = vmatprep.mubr.f32.mxu0 0.0
  %2685 = vmatmul.mubr.f32.gmra.mxu0 %v85
  %v2686 = vpop.f32.mrf.mxu0
  %v2687 = vadd.f32 0.0, %v2686
  %v2688 = vpop.f32.mrf.mxu0
  %2689 = vmatprep.mubr.f32.mxu0 0.0
  %2690 = vmatmul.mubr.f32.gmra.mxu0 %v87
  %v2691 = vpop.f32.mrf.mxu0
  %v2692 = vadd.f32 0.0, %v2691
  %v2693 = vpop.f32.mrf.mxu0
  %2694 = vmatprep.mubr.f32.mxu0 0.0
  %2695 = vmatmul.mubr.f32.gmra.mxu0 %v89
  %v2696 = vpop.f32.mrf.mxu0
  %v2697 = vadd.f32 0.0, %v2696
  %v2698 = vpop.f32.mrf.mxu0
  %2699 = vmatprep.mubr.f32.mxu0 0.0
  %2700 = vmatmul.mubr.f32.gmra.mxu0 %v91
  %v2701 = vpop.f32.mrf.mxu0
  %v2702 = vadd.f32 0.0, %v2701
  %v2703 = vpop.f32.mrf.mxu0
  %2704 = vmatprep.mubr.f32.mxu0 0.0
  %2705 = vmatmul.mubr.f32.gmra.mxu0 %v93
  %v2706 = vpop.f32.mrf.mxu0
  %v2707 = vadd.f32 0.0, %v2706
  %v2708 = vpop.f32.mrf.mxu0
  %2709 = vmatprep.mubr.f32.mxu0 0.0
  %2710 = vmatmul.mubr.f32.gmra.mxu0 %v95
  %v2711 = vpop.f32.mrf.mxu0
  %v2712 = vadd.f32 0.0, %v2711
  %v2713 = vpop.f32.mrf.mxu0
  %2714 = vmatprep.mubr.f32.mxu0 0.0
  %2715 = vmatmul.mubr.f32.gmra.mxu0 %v97
  %v2716 = vpop.f32.mrf.mxu0
  %v2717 = vadd.f32 0.0, %v2716
  %v2718 = vpop.f32.mrf.mxu0
  %2719 = vmatprep.mubr.f32.mxu0 0.0
  %2720 = vmatmul.mubr.f32.gmra.mxu0 %v99
  %v2721 = vpop.f32.mrf.mxu0
  %v2722 = vadd.f32 0.0, %v2721
  %v2723 = vpop.f32.mrf.mxu0
  %2724 = vmatprep.mubr.f32.mxu0 0.0
  %2725 = vmatmul.mubr.f32.gmra.mxu0 %v117
  %v2726 = vpop.f32.mrf.mxu0
  %v2727 = vadd.f32 0.0, %v2726
  %v2728 = vpop.f32.mrf.mxu0
  %2729 = vmatprep.mubr.f32.mxu0 0.0
  %2730 = vmatmul.mubr.f32.gmra.mxu0 %v119
  %v2731 = vpop.f32.mrf.mxu0
  %v2732 = vadd.f32 0.0, %v2731
  %v2733 = vpop.f32.mrf.mxu0
  %2734 = vmatprep.mubr.f32.mxu0 0.0
  %2735 = vmatmul.mubr.f32.gmra.mxu0 %v121
  %v2736 = vpop.f32.mrf.mxu0
  %v2737 = vadd.f32 0.0, %v2736
  %v2738 = vpop.f32.mrf.mxu0
  %2739 = vmatprep.mubr.f32.mxu0 0.0
  %2740 = vmatmul.mubr.f32.gmra.mxu0 %v123
  %v2741 = vpop.f32.mrf.mxu0
  %v2742 = vadd.f32 0.0, %v2741
  %v2743 = vpop.f32.mrf.mxu0
  %2744 = vmatprep.mubr.f32.mxu0 0.0
  %2745 = vmatmul.mubr.f32.gmra.mxu0 %v125
  %v2746 = vpop.f32.mrf.mxu0
  %v2747 = vadd.f32 0.0, %v2746
  %v2748 = vpop.f32.mrf.mxu0
  %2749 = vmatprep.mubr.f32.mxu0 0.0
  %2750 = vmatmul.mubr.f32.gmra.mxu0 %v127
  %v2751 = vpop.f32.mrf.mxu0
  %v2752 = vadd.f32 0.0, %v2751
  %v2753 = vpop.f32.mrf.mxu0
  %2754 = vmatprep.mubr.f32.mxu0 0.0
  %2755 = vmatmul.mubr.f32.gmra.mxu0 %v129
  %v2756 = vpop.f32.mrf.mxu0
  %v2757 = vadd.f32 0.0, %v2756
  %v2758 = vpop.f32.mrf.mxu0
  %2759 = vmatprep.mubr.f32.mxu0 0.0
  %2760 = vmatmul.mubr.f32.gmra.mxu0 %v131
  %v2761 = vpop.f32.mrf.mxu0
  %v2762 = vadd.f32 0.0, %v2761
  %v2763 = vpop.f32.mrf.mxu0
  %2764 = vmatprep.mubr.f32.mxu0 0.0
  %2765 = vmatmul.mubr.f32.gmra.mxu0 %v149
  %v2766 = vpop.f32.mrf.mxu0
  %v2767 = vadd.f32 0.0, %v2766
  %v2768 = vpop.f32.mrf.mxu0
  %2769 = vmatprep.mubr.f32.mxu0 0.0
  %2770 = vmatmul.mubr.f32.gmra.mxu0 %v151
  %v2771 = vpop.f32.mrf.mxu0
  %v2772 = vadd.f32 0.0, %v2771
  %v2773 = vpop.f32.mrf.mxu0
  %2774 = vmatprep.mubr.f32.mxu0 0.0
  %2775 = vmatmul.mubr.f32.gmra.mxu0 %v153
  %v2776 = vpop.f32.mrf.mxu0
  %v2777 = vadd.f32 0.0, %v2776
  %v2778 = vpop.f32.mrf.mxu0
  %2779 = vmatprep.mubr.f32.mxu0 0.0
  %2780 = vmatmul.mubr.f32.gmra.mxu0 %v155
  %v2781 = vpop.f32.mrf.mxu0
  %v2782 = vadd.f32 0.0, %v2781
  %v2783 = vpop.f32.mrf.mxu0
  %2784 = vmatprep.mubr.f32.mxu0 0.0
  %2785 = vmatmul.mubr.f32.gmra.mxu0 %v157
  %v2786 = vpop.f32.mrf.mxu0
  %v2787 = vadd.f32 0.0, %v2786
  %v2788 = vpop.f32.mrf.mxu0
  %2789 = vmatprep.mubr.f32.mxu0 0.0
  %2790 = vmatmul.mubr.f32.gmra.mxu0 %v159
  %v2791 = vpop.f32.mrf.mxu0
  %v2792 = vadd.f32 0.0, %v2791
  %v2793 = vpop.f32.mrf.mxu0
  %2794 = vmatprep.mubr.f32.mxu0 0.0
  %2795 = vmatmul.mubr.f32.gmra.mxu0 %v161
  %v2796 = vpop.f32.mrf.mxu0
  %v2797 = vadd.f32 0.0, %v2796
  %v2798 = vpop.f32.mrf.mxu0
  %2799 = vmatprep.mubr.f32.mxu0 0.0
  %2800 = vmatmul.mubr.f32.gmra.mxu0 %v163
  %v2801 = vpop.f32.mrf.mxu0
  %v2802 = vadd.f32 0.0, %v2801
  %v2803 = vpop.f32.mrf.mxu0
  %2804 = vmatprep.mubr.f32.mxu0 0.0
  %2805 = vmatmul.mubr.f32.gmra.mxu0 %v181
  %v2806 = vpop.f32.mrf.mxu0
  %v2807 = vadd.f32 0.0, %v2806
  %v2808 = vpop.f32.mrf.mxu0
  %2809 = vmatprep.mubr.f32.mxu0 0.0
  %2810 = vmatmul.mubr.f32.gmra.mxu0 %v183
  %v2811 = vpop.f32.mrf.mxu0
  %v2812 = vadd.f32 0.0, %v2811
  %v2813 = vpop.f32.mrf.mxu0
  %2814 = vmatprep.mubr.f32.mxu0 0.0
  %2815 = vmatmul.mubr.f32.gmra.mxu0 %v185
  %v2816 = vpop.f32.mrf.mxu0
  %v2817 = vadd.f32 0.0, %v2816
  %v2818 = vpop.f32.mrf.mxu0
  %2819 = vmatprep.mubr.f32.mxu0 0.0
  %2820 = vmatmul.mubr.f32.gmra.mxu0 %v187
  %v2821 = vpop.f32.mrf.mxu0
  %v2822 = vadd.f32 0.0, %v2821
  %v2823 = vpop.f32.mrf.mxu0
  %2824 = vmatprep.mubr.f32.mxu0 0.0
  %2825 = vmatmul.mubr.f32.gmra.mxu0 %v189
  %v2826 = vpop.f32.mrf.mxu0
  %v2827 = vadd.f32 0.0, %v2826
  %v2828 = vpop.f32.mrf.mxu0
  %2829 = vmatprep.mubr.f32.mxu0 0.0
  %2830 = vmatmul.mubr.f32.gmra.mxu0 %v191
  %v2831 = vpop.f32.mrf.mxu0
  %v2832 = vadd.f32 0.0, %v2831
  %v2833 = vpop.f32.mrf.mxu0
  %2834 = vmatprep.mubr.f32.mxu0 0.0
  %2835 = vmatmul.mubr.f32.gmra.mxu0 %v193
  %v2836 = vpop.f32.mrf.mxu0
  %v2837 = vadd.f32 0.0, %v2836
  %v2838 = vpop.f32.mrf.mxu0
  %2839 = vmatprep.mubr.f32.mxu0 0.0
  %2840 = vmatmul.mubr.f32.gmra.mxu0 %v195
  %v2841 = vpop.f32.mrf.mxu0
  %v2842 = vadd.f32 0.0, %v2841
  %v2843 = vpop.f32.mrf.mxu0
  %2844 = vmatprep.mubr.f32.mxu0 0.0
  %2845 = vmatmul.mubr.f32.gmra.mxu0 %v213
  %v2846 = vpop.f32.mrf.mxu0
  %v2847 = vadd.f32 0.0, %v2846
  %v2848 = vpop.f32.mrf.mxu0
  %2849 = vmatprep.mubr.f32.mxu0 0.0
  %2850 = vmatmul.mubr.f32.gmra.mxu0 %v215
  %v2851 = vpop.f32.mrf.mxu0
  %v2852 = vadd.f32 0.0, %v2851
  %v2853 = vpop.f32.mrf.mxu0
  %2854 = vmatprep.mubr.f32.mxu0 0.0
  %2855 = vmatmul.mubr.f32.gmra.mxu0 %v217
  %v2856 = vpop.f32.mrf.mxu0
  %v2857 = vadd.f32 0.0, %v2856
  %v2858 = vpop.f32.mrf.mxu0
  %2859 = vmatprep.mubr.f32.mxu0 0.0
  %2860 = vmatmul.mubr.f32.gmra.mxu0 %v219
  %v2861 = vpop.f32.mrf.mxu0
  %v2862 = vadd.f32 0.0, %v2861
  %v2863 = vpop.f32.mrf.mxu0
  %2864 = vmatprep.mubr.f32.mxu0 0.0
  %2865 = vmatmul.mubr.f32.gmra.mxu0 %v221
  %v2866 = vpop.f32.mrf.mxu0
  %v2867 = vadd.f32 0.0, %v2866
  %v2868 = vpop.f32.mrf.mxu0
  %2869 = vmatprep.mubr.f32.mxu0 0.0
  %2870 = vmatmul.mubr.f32.gmra.mxu0 %v223
  %v2871 = vpop.f32.mrf.mxu0
  %v2872 = vadd.f32 0.0, %v2871
  %v2873 = vpop.f32.mrf.mxu0
  %2874 = vmatprep.mubr.f32.mxu0 0.0
  %2875 = vmatmul.mubr.f32.gmra.mxu0 %v225
  %v2876 = vpop.f32.mrf.mxu0
  %v2877 = vadd.f32 0.0, %v2876
  %v2878 = vpop.f32.mrf.mxu0
  %2879 = vmatprep.mubr.f32.mxu0 0.0
  %2880 = vmatmul.mubr.f32.gmra.mxu0 %v227
  %v2881 = vpop.f32.mrf.mxu0
  %v2882 = vadd.f32 0.0, %v2881
  %v2883 = vpop.f32.mrf.mxu0
  %2884 = vmatprep.mubr.f32.mxu0 0.0
  %2885 = vmatmul.mubr.f32.gmra.mxu0 %v245
  %v2886 = vpop.f32.mrf.mxu0
  %v2887 = vadd.f32 0.0, %v2886
  %v2888 = vpop.f32.mrf.mxu0
  %2889 = vmatprep.mubr.f32.mxu0 0.0
  %2890 = vmatmul.mubr.f32.gmra.mxu0 %v247
  %v2891 = vpop.f32.mrf.mxu0
  %v2892 = vadd.f32 0.0, %v2891
  %v2893 = vpop.f32.mrf.mxu0
  %2894 = vmatprep.mubr.f32.mxu0 0.0
  %2895 = vmatmul.mubr.f32.gmra.mxu0 %v249
  %v2896 = vpop.f32.mrf.mxu0
  %v2897 = vadd.f32 0.0, %v2896
  %v2898 = vpop.f32.mrf.mxu0
  %2899 = vmatprep.mubr.f32.mxu0 0.0
  %2900 = vmatmul.mubr.f32.gmra.mxu0 %v251
  %v2901 = vpop.f32.mrf.mxu0
  %v2902 = vadd.f32 0.0, %v2901
  %v2903 = vpop.f32.mrf.mxu0
  %2904 = vmatprep.mubr.f32.mxu0 0.0
  %2905 = vmatmul.mubr.f32.gmra.mxu0 %v253
  %v2906 = vpop.f32.mrf.mxu0
  %v2907 = vadd.f32 0.0, %v2906
  %v2908 = vpop.f32.mrf.mxu0
  %2909 = vmatprep.mubr.f32.mxu0 0.0
  %2910 = vmatmul.mubr.f32.gmra.mxu0 %v255
  %v2911 = vpop.f32.mrf.mxu0
  %v2912 = vadd.f32 0.0, %v2911
  %v2913 = vpop.f32.mrf.mxu0
  %2914 = vmatprep.mubr.f32.mxu0 0.0
  %2915 = vmatmul.mubr.f32.gmra.mxu0 %v257
  %v2916 = vpop.f32.mrf.mxu0
  %v2917 = vadd.f32 0.0, %v2916
  %v2918 = vpop.f32.mrf.mxu0
  %2919 = vmatprep.mubr.f32.mxu0 0.0
  %2920 = vmatmul.mubr.f32.gmra.mxu0 %v259
  %v2921 = vpop.f32.mrf.mxu0
  %v2922 = vadd.f32 0.0, %v2921
  %v2923 = vpop.f32.mrf.mxu0
  %2924 = vdwg.mxu0
  %v2925 = vadd.f32 %v2476, %v2607
  %v2926 = vadd.f32 %v2477, %v2612
  %v2927 = vadd.f32 %v2478, %v2617
  %v2928 = vadd.f32 %v2479, %v2622
  %v2929 = vadd.f32 %v2480, %v2627
  %v2930 = vadd.f32 %v2481, %v2632
  %v2931 = vadd.f32 %v2482, %v2637
  %v2932 = vadd.f32 %v2483, %v2642
  %v2933 = vadd.f32 %v2484, %v2647
  %v2934 = vadd.f32 %v2485, %v2652
  %v2935 = vadd.f32 %v2486, %v2657
  %v2936 = vadd.f32 %v2487, %v2662
  %v2937 = vadd.f32 %v2488, %v2667
  %v2938 = vadd.f32 %v2489, %v2672
  %v2939 = vadd.f32 %v2490, %v2677
  %v2940 = vadd.f32 %v2491, %v2682
  %v2941 = vadd.f32 %v2492, %v2687
  %v2942 = vadd.f32 %v2493, %v2692
  %v2943 = vadd.f32 %v2494, %v2697
  %v2944 = vadd.f32 %v2495, %v2702
  %v2945 = vadd.f32 %v2496, %v2707
  %v2946 = vadd.f32 %v2497, %v2712
  %v2947 = vadd.f32 %v2498, %v2717
  %v2948 = vadd.f32 %v2499, %v2722
  %v2949 = vadd.f32 %v2500, %v2727
  %v2950 = vadd.f32 %v2501, %v2732
  %v2951 = vadd.f32 %v2502, %v2737
  %v2952 = vadd.f32 %v2503, %v2742
  %v2953 = vadd.f32 %v2504, %v2747
  %v2954 = vadd.f32 %v2505, %v2752
  %v2955 = vadd.f32 %v2506, %v2757
  %v2956 = vadd.f32 %v2507, %v2762
  %v2957 = vadd.f32 %v2508, %v2767
  %v2958 = vadd.f32 %v2509, %v2772
  %v2959 = vadd.f32 %v2510, %v2777
  %v2960 = vadd.f32 %v2511, %v2782
  %v2961 = vadd.f32 %v2512, %v2787
  %v2962 = vadd.f32 %v2513, %v2792
  %v2963 = vadd.f32 %v2514, %v2797
  %v2964 = vadd.f32 %v2515, %v2802
  %v2965 = vadd.f32 %v2516, %v2807
  %v2966 = vadd.f32 %v2517, %v2812
  %v2967 = vadd.f32 %v2518, %v2817
  %v2968 = vadd.f32 %v2519, %v2822
  %v2969 = vadd.f32 %v2520, %v2827
  %v2970 = vadd.f32 %v2521, %v2832
  %v2971 = vadd.f32 %v2522, %v2837
  %v2972 = vadd.f32 %v2523, %v2842
  %v2973 = vadd.f32 %v2524, %v2847
  %v2974 = vadd.f32 %v2525, %v2852
  %v2975 = vadd.f32 %v2526, %v2857
  %v2976 = vadd.f32 %v2527, %v2862
  %v2977 = vadd.f32 %v2528, %v2867
  %v2978 = vadd.f32 %v2529, %v2872
  %v2979 = vadd.f32 %v2530, %v2877
  %v2980 = vadd.f32 %v2531, %v2882
  %v2981 = vadd.f32 %v2532, %v2887
  %v2982 = vadd.f32 %v2533, %v2892
  %v2983 = vadd.f32 %v2534, %v2897
  %v2984 = vadd.f32 %v2535, %v2902
  %v2985 = vadd.f32 %v2536, %v2907
  %v2986 = vadd.f32 %v2537, %v2912
  %v2987 = vadd.f32 %v2538, %v2917
  %v2988 = vadd.f32 %v2539, %v2922
  %2989 = vmatprep.subr.mxu0 0.0
  %2990 = vmatpush1.msra.mxu0 %v387
  %2991 = vmatprep.subr.mxu0 0.0
  %2992 = vmatpush1.msra.mxu0 %v386
  %2993 = vmatprep.subr.mxu0 0.0
  %2994 = vmatpush1.msra.mxu0 %v385
  %2995 = vmatprep.subr.mxu0 0.0
  %2996 = vmatpush1.msra.mxu0 %v384
  %2997 = vmatprep.subr.mxu0 0.0
  %2998 = vmatpush1.msra.mxu0 %v383
  %2999 = vmatprep.subr.mxu0 0.0
  %3000 = vmatpush1.msra.mxu0 %v382
  %3001 = vmatprep.subr.mxu0 0.0
  %3002 = vmatpush1.msra.mxu0 %v381
  %3003 = vmatprep.subr.mxu0 0.0
  %3004 = vmatpush1.msra.mxu0 %v380
  %3005 = vmatprep.subr.mxu0 0.0
  %3006 = vmatpush1.msra.mxu0 %v379
  %3007 = vmatprep.subr.mxu0 0.0
  %3008 = vmatpush1.msra.mxu0 %v378
  %3009 = vmatprep.subr.mxu0 0.0
  %3010 = vmatpush1.msra.mxu0 %v377
  %3011 = vmatprep.subr.mxu0 0.0
  %3012 = vmatpush1.msra.mxu0 %v376
  %3013 = vmatprep.subr.mxu0 0.0
  %3014 = vmatpush1.msra.mxu0 %v375
  %3015 = vmatprep.subr.mxu0 0.0
  %3016 = vmatpush1.msra.mxu0 %v374
  %3017 = vmatprep.subr.mxu0 0.0
  %3018 = vmatpush1.msra.mxu0 %v373
  %3019 = vmatprep.subr.mxu0 0.0
  %3020 = vmatpush1.msra.mxu0 %v372
  %3021 = vmatprep.subr.mxu0 0.0
  %3022 = vmatpush2.msra.mxu0 0.0
  %3023 = vmatprep.subr.mxu0 0.0
  %3024 = vmatpush2.msra.mxu0 0.0
  %3025 = vmatprep.subr.mxu0 0.0
  %3026 = vmatpush2.msra.mxu0 0.0
  %3027 = vmatprep.subr.mxu0 0.0
  %3028 = vmatpush2.msra.mxu0 0.0
  %3029 = vmatprep.subr.mxu0 0.0
  %3030 = vmatpush2.msra.mxu0 0.0
  %3031 = vmatprep.subr.mxu0 0.0
  %3032 = vmatpush2.msra.mxu0 0.0
  %3033 = vmatprep.subr.mxu0 0.0
  %3034 = vmatpush2.msra.mxu0 0.0
  %3035 = vmatprep.subr.mxu0 0.0
  %3036 = vmatpush2.msra.mxu0 0.0
  %3037 = vmatprep.subr.mxu0 0.0
  %3038 = vmatpush2.msra.mxu0 0.0
  %3039 = vmatprep.subr.mxu0 0.0
  %3040 = vmatpush2.msra.mxu0 0.0
  %3041 = vmatprep.subr.mxu0 0.0
  %3042 = vmatpush2.msra.mxu0 0.0
  %3043 = vmatprep.subr.mxu0 0.0
  %3044 = vmatpush2.msra.mxu0 0.0
  %3045 = vmatprep.subr.mxu0 0.0
  %3046 = vmatpush2.msra.mxu0 0.0
  %3047 = vmatprep.subr.mxu0 0.0
  %3048 = vmatpush2.msra.mxu0 0.0
  %3049 = vmatprep.subr.mxu0 0.0
  %3050 = vmatpush2.msra.mxu0 0.0
  %3051 = vmatprep.subr.mxu0 0.0
  %3052 = vmatpush2.msra.mxu0 0.0
  %3053 = vmatprep.mubr.f32.mxu0 0.0
  %3054 = vmatmul.mubr.f32.gmra.mxu0 0.0
  %v3055 = vpop.f32.mrf.mxu0
  %v3056 = vadd.f32 0.0, %v3055
  %v3057 = vpop.f32.mrf.mxu0
  %3058 = vmatprep.mubr.f32.mxu0 0.0
  %3059 = vmatmul.mubr.f32.gmra.mxu0 %v37
  %v3060 = vpop.f32.mrf.mxu0
  %v3061 = vadd.f32 0.0, %v3060
  %v3062 = vpop.f32.mrf.mxu0
  %3063 = vmatprep.mubr.f32.mxu0 0.0
  %3064 = vmatmul.mubr.f32.gmra.mxu0 %v39
  %v3065 = vpop.f32.mrf.mxu0
  %v3066 = vadd.f32 0.0, %v3065
  %v3067 = vpop.f32.mrf.mxu0
  %3068 = vmatprep.mubr.f32.mxu0 0.0
  %3069 = vmatmul.mubr.f32.gmra.mxu0 %v41
  %v3070 = vpop.f32.mrf.mxu0
  %v3071 = vadd.f32 0.0, %v3070
  %v3072 = vpop.f32.mrf.mxu0
  %3073 = vmatprep.mubr.f32.mxu0 0.0
  %3074 = vmatmul.mubr.f32.gmra.mxu0 %v43
  %v3075 = vpop.f32.mrf.mxu0
  %v3076 = vadd.f32 0.0, %v3075
  %v3077 = vpop.f32.mrf.mxu0
  %3078 = vmatprep.mubr.f32.mxu0 0.0
  %3079 = vmatmul.mubr.f32.gmra.mxu0 %v45
  %v3080 = vpop.f32.mrf.mxu0
  %v3081 = vadd.f32 0.0, %v3080
  %v3082 = vpop.f32.mrf.mxu0
  %3083 = vmatprep.mubr.f32.mxu0 0.0
  %3084 = vmatmul.mubr.f32.gmra.mxu0 %v47
  %v3085 = vpop.f32.mrf.mxu0
  %v3086 = vadd.f32 0.0, %v3085
  %v3087 = vpop.f32.mrf.mxu0
  %3088 = vmatprep.mubr.f32.mxu0 0.0
  %3089 = vmatmul.mubr.f32.gmra.mxu0 %v49
  %v3090 = vpop.f32.mrf.mxu0
  %v3091 = vadd.f32 0.0, %v3090
  %v3092 = vpop.f32.mrf.mxu0
  %3093 = vmatprep.mubr.f32.mxu0 0.0
  %3094 = vmatmul.mubr.f32.gmra.mxu0 0.0
  %v3095 = vpop.f32.mrf.mxu0
  %v3096 = vadd.f32 0.0, %v3095
  %v3097 = vpop.f32.mrf.mxu0
  %3098 = vmatprep.mubr.f32.mxu0 0.0
  %3099 = vmatmul.mubr.f32.gmra.mxu0 %v69
  %v3100 = vpop.f32.mrf.mxu0
  %v3101 = vadd.f32 0.0, %v3100
  %v3102 = vpop.f32.mrf.mxu0
  %3103 = vmatprep.mubr.f32.mxu0 0.0
  %3104 = vmatmul.mubr.f32.gmra.mxu0 %v71
  %v3105 = vpop.f32.mrf.mxu0
  %v3106 = vadd.f32 0.0, %v3105
  %v3107 = vpop.f32.mrf.mxu0
  %3108 = vmatprep.mubr.f32.mxu0 0.0
  %3109 = vmatmul.mubr.f32.gmra.mxu0 %v73
  %v3110 = vpop.f32.mrf.mxu0
  %v3111 = vadd.f32 0.0, %v3110
  %v3112 = vpop.f32.mrf.mxu0
  %3113 = vmatprep.mubr.f32.mxu0 0.0
  %3114 = vmatmul.mubr.f32.gmra.mxu0 %v75
  %v3115 = vpop.f32.mrf.mxu0
  %v3116 = vadd.f32 0.0, %v3115
  %v3117 = vpop.f32.mrf.mxu0
  %3118 = vmatprep.mubr.f32.mxu0 0.0
  %3119 = vmatmul.mubr.f32.gmra.mxu0 %v77
  %v3120 = vpop.f32.mrf.mxu0
  %v3121 = vadd.f32 0.0, %v3120
  %v3122 = vpop.f32.mrf.mxu0
  %3123 = vmatprep.mubr.f32.mxu0 0.0
  %3124 = vmatmul.mubr.f32.gmra.mxu0 %v79
  %v3125 = vpop.f32.mrf.mxu0
  %v3126 = vadd.f32 0.0, %v3125
  %v3127 = vpop.f32.mrf.mxu0
  %3128 = vmatprep.mubr.f32.mxu0 0.0
  %3129 = vmatmul.mubr.f32.gmra.mxu0 %v81
  %v3130 = vpop.f32.mrf.mxu0
  %v3131 = vadd.f32 0.0, %v3130
  %v3132 = vpop.f32.mrf.mxu0
  %3133 = vmatprep.mubr.f32.mxu0 0.0
  %3134 = vmatmul.mubr.f32.gmra.mxu0 0.0
  %v3135 = vpop.f32.mrf.mxu0
  %v3136 = vadd.f32 0.0, %v3135
  %v3137 = vpop.f32.mrf.mxu0
  %3138 = vmatprep.mubr.f32.mxu0 0.0
  %3139 = vmatmul.mubr.f32.gmra.mxu0 %v101
  %v3140 = vpop.f32.mrf.mxu0
  %v3141 = vadd.f32 0.0, %v3140
  %v3142 = vpop.f32.mrf.mxu0
  %3143 = vmatprep.mubr.f32.mxu0 0.0
  %3144 = vmatmul.mubr.f32.gmra.mxu0 %v103
  %v3145 = vpop.f32.mrf.mxu0
  %v3146 = vadd.f32 0.0, %v3145
  %v3147 = vpop.f32.mrf.mxu0
  %3148 = vmatprep.mubr.f32.mxu0 0.0
  %3149 = vmatmul.mubr.f32.gmra.mxu0 %v105
  %v3150 = vpop.f32.mrf.mxu0
  %v3151 = vadd.f32 0.0, %v3150
  %v3152 = vpop.f32.mrf.mxu0
  %3153 = vmatprep.mubr.f32.mxu0 0.0
  %3154 = vmatmul.mubr.f32.gmra.mxu0 %v107
  %v3155 = vpop.f32.mrf.mxu0
  %v3156 = vadd.f32 0.0, %v3155
  %v3157 = vpop.f32.mrf.mxu0
  %3158 = vmatprep.mubr.f32.mxu0 0.0
  %3159 = vmatmul.mubr.f32.gmra.mxu0 %v109
  %v3160 = vpop.f32.mrf.mxu0
  %v3161 = vadd.f32 0.0, %v3160
  %v3162 = vpop.f32.mrf.mxu0
  %3163 = vmatprep.mubr.f32.mxu0 0.0
  %3164 = vmatmul.mubr.f32.gmra.mxu0 %v111
  %v3165 = vpop.f32.mrf.mxu0
  %v3166 = vadd.f32 0.0, %v3165
  %v3167 = vpop.f32.mrf.mxu0
  %3168 = vmatprep.mubr.f32.mxu0 0.0
  %3169 = vmatmul.mubr.f32.gmra.mxu0 %v113
  %v3170 = vpop.f32.mrf.mxu0
  %v3171 = vadd.f32 0.0, %v3170
  %v3172 = vpop.f32.mrf.mxu0
  %3173 = vmatprep.mubr.f32.mxu0 0.0
  %3174 = vmatmul.mubr.f32.gmra.mxu0 0.0
  %v3175 = vpop.f32.mrf.mxu0
  %v3176 = vadd.f32 0.0, %v3175
  %v3177 = vpop.f32.mrf.mxu0
  %3178 = vmatprep.mubr.f32.mxu0 0.0
  %3179 = vmatmul.mubr.f32.gmra.mxu0 %v133
  %v3180 = vpop.f32.mrf.mxu0
  %v3181 = vadd.f32 0.0, %v3180
  %v3182 = vpop.f32.mrf.mxu0
  %3183 = vmatprep.mubr.f32.mxu0 0.0
  %3184 = vmatmul.mubr.f32.gmra.mxu0 %v135
  %v3185 = vpop.f32.mrf.mxu0
  %v3186 = vadd.f32 0.0, %v3185
  %v3187 = vpop.f32.mrf.mxu0
  %3188 = vmatprep.mubr.f32.mxu0 0.0
  %3189 = vmatmul.mubr.f32.gmra.mxu0 %v137
  %v3190 = vpop.f32.mrf.mxu0
  %v3191 = vadd.f32 0.0, %v3190
  %v3192 = vpop.f32.mrf.mxu0
  %3193 = vmatprep.mubr.f32.mxu0 0.0
  %3194 = vmatmul.mubr.f32.gmra.mxu0 %v139
  %v3195 = vpop.f32.mrf.mxu0
  %v3196 = vadd.f32 0.0, %v3195
  %v3197 = vpop.f32.mrf.mxu0
  %3198 = vmatprep.mubr.f32.mxu0 0.0
  %3199 = vmatmul.mubr.f32.gmra.mxu0 %v141
  %v3200 = vpop.f32.mrf.mxu0
  %v3201 = vadd.f32 0.0, %v3200
  %v3202 = vpop.f32.mrf.mxu0
  %3203 = vmatprep.mubr.f32.mxu0 0.0
  %3204 = vmatmul.mubr.f32.gmra.mxu0 %v143
  %v3205 = vpop.f32.mrf.mxu0
  %v3206 = vadd.f32 0.0, %v3205
  %v3207 = vpop.f32.mrf.mxu0
  %3208 = vmatprep.mubr.f32.mxu0 0.0
  %3209 = vmatmul.mubr.f32.gmra.mxu0 %v145
  %v3210 = vpop.f32.mrf.mxu0
  %v3211 = vadd.f32 0.0, %v3210
  %v3212 = vpop.f32.mrf.mxu0
  %3213 = vmatprep.mubr.f32.mxu0 0.0
  %3214 = vmatmul.mubr.f32.gmra.mxu0 0.0
  %v3215 = vpop.f32.mrf.mxu0
  %v3216 = vadd.f32 0.0, %v3215
  %v3217 = vpop.f32.mrf.mxu0
  %3218 = vmatprep.mubr.f32.mxu0 0.0
  %3219 = vmatmul.mubr.f32.gmra.mxu0 %v165
  %v3220 = vpop.f32.mrf.mxu0
  %v3221 = vadd.f32 0.0, %v3220
  %v3222 = vpop.f32.mrf.mxu0
  %3223 = vmatprep.mubr.f32.mxu0 0.0
  %3224 = vmatmul.mubr.f32.gmra.mxu0 %v167
  %v3225 = vpop.f32.mrf.mxu0
  %v3226 = vadd.f32 0.0, %v3225
  %v3227 = vpop.f32.mrf.mxu0
  %3228 = vmatprep.mubr.f32.mxu0 0.0
  %3229 = vmatmul.mubr.f32.gmra.mxu0 %v169
  %v3230 = vpop.f32.mrf.mxu0
  %v3231 = vadd.f32 0.0, %v3230
  %v3232 = vpop.f32.mrf.mxu0
  %3233 = vmatprep.mubr.f32.mxu0 0.0
  %3234 = vmatmul.mubr.f32.gmra.mxu0 %v171
  %v3235 = vpop.f32.mrf.mxu0
  %v3236 = vadd.f32 0.0, %v3235
  %v3237 = vpop.f32.mrf.mxu0
  %3238 = vmatprep.mubr.f32.mxu0 0.0
  %3239 = vmatmul.mubr.f32.gmra.mxu0 %v173
  %v3240 = vpop.f32.mrf.mxu0
  %v3241 = vadd.f32 0.0, %v3240
  %v3242 = vpop.f32.mrf.mxu0
  %3243 = vmatprep.mubr.f32.mxu0 0.0
  %3244 = vmatmul.mubr.f32.gmra.mxu0 %v175
  %v3245 = vpop.f32.mrf.mxu0
  %v3246 = vadd.f32 0.0, %v3245
  %v3247 = vpop.f32.mrf.mxu0
  %3248 = vmatprep.mubr.f32.mxu0 0.0
  %3249 = vmatmul.mubr.f32.gmra.mxu0 %v177
  %v3250 = vpop.f32.mrf.mxu0
  %v3251 = vadd.f32 0.0, %v3250
  %v3252 = vpop.f32.mrf.mxu0
  %3253 = vmatprep.mubr.f32.mxu0 0.0
  %3254 = vmatmul.mubr.f32.gmra.mxu0 0.0
  %v3255 = vpop.f32.mrf.mxu0
  %v3256 = vadd.f32 0.0, %v3255
  %v3257 = vpop.f32.mrf.mxu0
  %3258 = vmatprep.mubr.f32.mxu0 0.0
  %3259 = vmatmul.mubr.f32.gmra.mxu0 %v197
  %v3260 = vpop.f32.mrf.mxu0
  %v3261 = vadd.f32 0.0, %v3260
  %v3262 = vpop.f32.mrf.mxu0
  %3263 = vmatprep.mubr.f32.mxu0 0.0
  %3264 = vmatmul.mubr.f32.gmra.mxu0 %v199
  %v3265 = vpop.f32.mrf.mxu0
  %v3266 = vadd.f32 0.0, %v3265
  %v3267 = vpop.f32.mrf.mxu0
  %3268 = vmatprep.mubr.f32.mxu0 0.0
  %3269 = vmatmul.mubr.f32.gmra.mxu0 %v201
  %v3270 = vpop.f32.mrf.mxu0
  %v3271 = vadd.f32 0.0, %v3270
  %v3272 = vpop.f32.mrf.mxu0
  %3273 = vmatprep.mubr.f32.mxu0 0.0
  %3274 = vmatmul.mubr.f32.gmra.mxu0 %v203
  %v3275 = vpop.f32.mrf.mxu0
  %v3276 = vadd.f32 0.0, %v3275
  %v3277 = vpop.f32.mrf.mxu0
  %3278 = vmatprep.mubr.f32.mxu0 0.0
  %3279 = vmatmul.mubr.f32.gmra.mxu0 %v205
  %v3280 = vpop.f32.mrf.mxu0
  %v3281 = vadd.f32 0.0, %v3280
  %v3282 = vpop.f32.mrf.mxu0
  %3283 = vmatprep.mubr.f32.mxu0 0.0
  %3284 = vmatmul.mubr.f32.gmra.mxu0 %v207
  %v3285 = vpop.f32.mrf.mxu0
  %v3286 = vadd.f32 0.0, %v3285
  %v3287 = vpop.f32.mrf.mxu0
  %3288 = vmatprep.mubr.f32.mxu0 0.0
  %3289 = vmatmul.mubr.f32.gmra.mxu0 %v209
  %v3290 = vpop.f32.mrf.mxu0
  %v3291 = vadd.f32 0.0, %v3290
  %v3292 = vpop.f32.mrf.mxu0
  %3293 = vmatprep.mubr.f32.mxu0 0.0
  %3294 = vmatmul.mubr.f32.gmra.mxu0 0.0
  %v3295 = vpop.f32.mrf.mxu0
  %v3296 = vadd.f32 0.0, %v3295
  %v3297 = vpop.f32.mrf.mxu0
  %3298 = vmatprep.mubr.f32.mxu0 0.0
  %3299 = vmatmul.mubr.f32.gmra.mxu0 %v229
  %v3300 = vpop.f32.mrf.mxu0
  %v3301 = vadd.f32 0.0, %v3300
  %v3302 = vpop.f32.mrf.mxu0
  %3303 = vmatprep.mubr.f32.mxu0 0.0
  %3304 = vmatmul.mubr.f32.gmra.mxu0 %v231
  %v3305 = vpop.f32.mrf.mxu0
  %v3306 = vadd.f32 0.0, %v3305
  %v3307 = vpop.f32.mrf.mxu0
  %3308 = vmatprep.mubr.f32.mxu0 0.0
  %3309 = vmatmul.mubr.f32.gmra.mxu0 %v233
  %v3310 = vpop.f32.mrf.mxu0
  %v3311 = vadd.f32 0.0, %v3310
  %v3312 = vpop.f32.mrf.mxu0
  %3313 = vmatprep.mubr.f32.mxu0 0.0
  %3314 = vmatmul.mubr.f32.gmra.mxu0 %v235
  %v3315 = vpop.f32.mrf.mxu0
  %v3316 = vadd.f32 0.0, %v3315
  %v3317 = vpop.f32.mrf.mxu0
  %3318 = vmatprep.mubr.f32.mxu0 0.0
  %3319 = vmatmul.mubr.f32.gmra.mxu0 %v237
  %v3320 = vpop.f32.mrf.mxu0
  %v3321 = vadd.f32 0.0, %v3320
  %v3322 = vpop.f32.mrf.mxu0
  %3323 = vmatprep.mubr.f32.mxu0 0.0
  %3324 = vmatmul.mubr.f32.gmra.mxu0 %v239
  %v3325 = vpop.f32.mrf.mxu0
  %v3326 = vadd.f32 0.0, %v3325
  %v3327 = vpop.f32.mrf.mxu0
  %3328 = vmatprep.mubr.f32.mxu0 0.0
  %3329 = vmatmul.mubr.f32.gmra.mxu0 %v241
  %v3330 = vpop.f32.mrf.mxu0
  %v3331 = vadd.f32 0.0, %v3330
  %v3332 = vpop.f32.mrf.mxu0
  %3333 = vmatprep.mubr.f32.mxu0 0.0
  %3334 = vmatmul.mubr.f32.gmra.mxu0 0.0
  %v3335 = vpop.f32.mrf.mxu0
  %v3336 = vadd.f32 0.0, %v3335
  %v3337 = vpop.f32.mrf.mxu0
  %3338 = vmatprep.mubr.f32.mxu0 0.0
  %3339 = vmatmul.mubr.f32.gmra.mxu0 %v261
  %v3340 = vpop.f32.mrf.mxu0
  %v3341 = vadd.f32 0.0, %v3340
  %v3342 = vpop.f32.mrf.mxu0
  %3343 = vmatprep.mubr.f32.mxu0 0.0
  %3344 = vmatmul.mubr.f32.gmra.mxu0 %v263
  %v3345 = vpop.f32.mrf.mxu0
  %v3346 = vadd.f32 0.0, %v3345
  %v3347 = vpop.f32.mrf.mxu0
  %3348 = vmatprep.mubr.f32.mxu0 0.0
  %3349 = vmatmul.mubr.f32.gmra.mxu0 %v265
  %v3350 = vpop.f32.mrf.mxu0
  %v3351 = vadd.f32 0.0, %v3350
  %v3352 = vpop.f32.mrf.mxu0
  %3353 = vmatprep.mubr.f32.mxu0 0.0
  %3354 = vmatmul.mubr.f32.gmra.mxu0 %v267
  %v3355 = vpop.f32.mrf.mxu0
  %v3356 = vadd.f32 0.0, %v3355
  %v3357 = vpop.f32.mrf.mxu0
  %3358 = vmatprep.mubr.f32.mxu0 0.0
  %3359 = vmatmul.mubr.f32.gmra.mxu0 %v269
  %v3360 = vpop.f32.mrf.mxu0
  %v3361 = vadd.f32 0.0, %v3360
  %v3362 = vpop.f32.mrf.mxu0
  %3363 = vmatprep.mubr.f32.mxu0 0.0
  %3364 = vmatmul.mubr.f32.gmra.mxu0 %v271
  %v3365 = vpop.f32.mrf.mxu0
  %v3366 = vadd.f32 0.0, %v3365
  %v3367 = vpop.f32.mrf.mxu0
  %3368 = vmatprep.mubr.f32.mxu0 0.0
  %3369 = vmatmul.mubr.f32.gmra.mxu0 %v273
  %v3370 = vpop.f32.mrf.mxu0
  %v3371 = vadd.f32 0.0, %v3370
  %v3372 = vpop.f32.mrf.mxu0
  %3373 = vdwg.mxu0
  %v3374 = vadd.f32 %v2925, %v3056
  %v3375 = vadd.f32 %v2926, %v3061
  %v3376 = vadd.f32 %v2927, %v3066
  %v3377 = vadd.f32 %v2928, %v3071
  %v3378 = vadd.f32 %v2929, %v3076
  %v3379 = vadd.f32 %v2930, %v3081
  %v3380 = vadd.f32 %v2931, %v3086
  %v3381 = vadd.f32 %v2932, %v3091
  %v3382 = vadd.f32 %v2933, %v3096
  %v3383 = vadd.f32 %v2934, %v3101
  %v3384 = vadd.f32 %v2935, %v3106
  %v3385 = vadd.f32 %v2936, %v3111
  %v3386 = vadd.f32 %v2937, %v3116
  %v3387 = vadd.f32 %v2938, %v3121
  %v3388 = vadd.f32 %v2939, %v3126
  %v3389 = vadd.f32 %v2940, %v3131
  %v3390 = vadd.f32 %v2941, %v3136
  %v3391 = vadd.f32 %v2942, %v3141
  %v3392 = vadd.f32 %v2943, %v3146
  %v3393 = vadd.f32 %v2944, %v3151
  %v3394 = vadd.f32 %v2945, %v3156
  %v3395 = vadd.f32 %v2946, %v3161
  %v3396 = vadd.f32 %v2947, %v3166
  %v3397 = vadd.f32 %v2948, %v3171
  %v3398 = vadd.f32 %v2949, %v3176
  %v3399 = vadd.f32 %v2950, %v3181
  %v3400 = vadd.f32 %v2951, %v3186
  %v3401 = vadd.f32 %v2952, %v3191
  %v3402 = vadd.f32 %v2953, %v3196
  %v3403 = vadd.f32 %v2954, %v3201
  %v3404 = vadd.f32 %v2955, %v3206
  %v3405 = vadd.f32 %v2956, %v3211
  %v3406 = vadd.f32 %v2957, %v3216
  %v3407 = vadd.f32 %v2958, %v3221
  %v3408 = vadd.f32 %v2959, %v3226
  %v3409 = vadd.f32 %v2960, %v3231
  %v3410 = vadd.f32 %v2961, %v3236
  %v3411 = vadd.f32 %v2962, %v3241
  %v3412 = vadd.f32 %v2963, %v3246
  %v3413 = vadd.f32 %v2964, %v3251
  %v3414 = vadd.f32 %v2965, %v3256
  %v3415 = vadd.f32 %v2966, %v3261
  %v3416 = vadd.f32 %v2967, %v3266
  %v3417 = vadd.f32 %v2968, %v3271
  %v3418 = vadd.f32 %v2969, %v3276
  %v3419 = vadd.f32 %v2970, %v3281
  %v3420 = vadd.f32 %v2971, %v3286
  %v3421 = vadd.f32 %v2972, %v3291
  %v3422 = vadd.f32 %v2973, %v3296
  %v3423 = vadd.f32 %v2974, %v3301
  %v3424 = vadd.f32 %v2975, %v3306
  %v3425 = vadd.f32 %v2976, %v3311
  %v3426 = vadd.f32 %v2977, %v3316
  %v3427 = vadd.f32 %v2978, %v3321
  %v3428 = vadd.f32 %v2979, %v3326
  %v3429 = vadd.f32 %v2980, %v3331
  %v3430 = vadd.f32 %v2981, %v3336
  %v3431 = vadd.f32 %v2982, %v3341
  %v3432 = vadd.f32 %v2983, %v3346
  %v3433 = vadd.f32 %v2984, %v3351
  %v3434 = vadd.f32 %v2985, %v3356
  %v3435 = vadd.f32 %v2986, %v3361
  %v3436 = vadd.f32 %v2987, %v3366
  %v3437 = vadd.f32 %v2988, %v3371
  %3438 = vmatprep.subr.mxu0 0.0
  %3439 = vmatpush1.msra.mxu0 %v403
  %3440 = vmatprep.subr.mxu0 0.0
  %3441 = vmatpush1.msra.mxu0 %v402
  %3442 = vmatprep.subr.mxu0 0.0
  %3443 = vmatpush1.msra.mxu0 %v401
  %3444 = vmatprep.subr.mxu0 0.0
  %3445 = vmatpush1.msra.mxu0 %v400
  %3446 = vmatprep.subr.mxu0 0.0
  %3447 = vmatpush1.msra.mxu0 %v399
  %3448 = vmatprep.subr.mxu0 0.0
  %3449 = vmatpush1.msra.mxu0 %v398
  %3450 = vmatprep.subr.mxu0 0.0
  %3451 = vmatpush1.msra.mxu0 %v397
  %3452 = vmatprep.subr.mxu0 0.0
  %3453 = vmatpush1.msra.mxu0 %v396
  %3454 = vmatprep.subr.mxu0 0.0
  %3455 = vmatpush1.msra.mxu0 %v395
  %3456 = vmatprep.subr.mxu0 0.0
  %3457 = vmatpush1.msra.mxu0 %v394
  %3458 = vmatprep.subr.mxu0 0.0
  %3459 = vmatpush1.msra.mxu0 %v393
  %3460 = vmatprep.subr.mxu0 0.0
  %3461 = vmatpush1.msra.mxu0 %v392
  %3462 = vmatprep.subr.mxu0 0.0
  %3463 = vmatpush1.msra.mxu0 %v391
  %3464 = vmatprep.subr.mxu0 0.0
  %3465 = vmatpush1.msra.mxu0 %v390
  %3466 = vmatprep.subr.mxu0 0.0
  %3467 = vmatpush1.msra.mxu0 %v389
  %3468 = vmatprep.subr.mxu0 0.0
  %3469 = vmatpush1.msra.mxu0 %v388
  %3470 = vmatprep.subr.mxu0 0.0
  %3471 = vmatpush2.msra.mxu0 0.0
  %3472 = vmatprep.subr.mxu0 0.0
  %3473 = vmatpush2.msra.mxu0 0.0
  %3474 = vmatprep.subr.mxu0 0.0
  %3475 = vmatpush2.msra.mxu0 0.0
  %3476 = vmatprep.subr.mxu0 0.0
  %3477 = vmatpush2.msra.mxu0 0.0
  %3478 = vmatprep.subr.mxu0 0.0
  %3479 = vmatpush2.msra.mxu0 0.0
  %3480 = vmatprep.subr.mxu0 0.0
  %3481 = vmatpush2.msra.mxu0 0.0
  %3482 = vmatprep.subr.mxu0 0.0
  %3483 = vmatpush2.msra.mxu0 0.0
  %3484 = vmatprep.subr.mxu0 0.0
  %3485 = vmatpush2.msra.mxu0 0.0
  %3486 = vmatprep.subr.mxu0 0.0
  %3487 = vmatpush2.msra.mxu0 0.0
  %3488 = vmatprep.subr.mxu0 0.0
  %3489 = vmatpush2.msra.mxu0 0.0
  %3490 = vmatprep.subr.mxu0 0.0
  %3491 = vmatpush2.msra.mxu0 0.0
  %3492 = vmatprep.subr.mxu0 0.0
  %3493 = vmatpush2.msra.mxu0 0.0
  %3494 = vmatprep.subr.mxu0 0.0
  %3495 = vmatpush2.msra.mxu0 0.0
  %3496 = vmatprep.subr.mxu0 0.0
  %3497 = vmatpush2.msra.mxu0 0.0
  %3498 = vmatprep.subr.mxu0 0.0
  %3499 = vmatpush2.msra.mxu0 0.0
  %3500 = vmatprep.subr.mxu0 0.0
  %3501 = vmatpush2.msra.mxu0 0.0
  %3502 = vmatprep.mubr.f32.mxu0 0.0
  %3503 = vmatmul.mubr.f32.gmra.mxu0 %v36
  %v3504 = vpop.f32.mrf.mxu0
  %v3505 = vadd.f32 0.0, %v3504
  %v3506 = vpop.f32.mrf.mxu0
  %3507 = vmatprep.mubr.f32.mxu0 0.0
  %3508 = vmatmul.mubr.f32.gmra.mxu0 %v38
  %v3509 = vpop.f32.mrf.mxu0
  %v3510 = vadd.f32 0.0, %v3509
  %v3511 = vpop.f32.mrf.mxu0
  %3512 = vmatprep.mubr.f32.mxu0 0.0
  %3513 = vmatmul.mubr.f32.gmra.mxu0 %v40
  %v3514 = vpop.f32.mrf.mxu0
  %v3515 = vadd.f32 0.0, %v3514
  %v3516 = vpop.f32.mrf.mxu0
  %3517 = vmatprep.mubr.f32.mxu0 0.0
  %3518 = vmatmul.mubr.f32.gmra.mxu0 %v42
  %v3519 = vpop.f32.mrf.mxu0
  %v3520 = vadd.f32 0.0, %v3519
  %v3521 = vpop.f32.mrf.mxu0
  %3522 = vmatprep.mubr.f32.mxu0 0.0
  %3523 = vmatmul.mubr.f32.gmra.mxu0 %v44
  %v3524 = vpop.f32.mrf.mxu0
  %v3525 = vadd.f32 0.0, %v3524
  %v3526 = vpop.f32.mrf.mxu0
  %3527 = vmatprep.mubr.f32.mxu0 0.0
  %3528 = vmatmul.mubr.f32.gmra.mxu0 %v46
  %v3529 = vpop.f32.mrf.mxu0
  %v3530 = vadd.f32 0.0, %v3529
  %v3531 = vpop.f32.mrf.mxu0
  %3532 = vmatprep.mubr.f32.mxu0 0.0
  %3533 = vmatmul.mubr.f32.gmra.mxu0 %v48
  %v3534 = vpop.f32.mrf.mxu0
  %v3535 = vadd.f32 0.0, %v3534
  %v3536 = vpop.f32.mrf.mxu0
  %3537 = vmatprep.mubr.f32.mxu0 0.0
  %3538 = vmatmul.mubr.f32.gmra.mxu0 %v50
  %v3539 = vpop.f32.mrf.mxu0
  %v3540 = vadd.f32 0.0, %v3539
  %v3541 = vpop.f32.mrf.mxu0
  %3542 = vmatprep.mubr.f32.mxu0 0.0
  %3543 = vmatmul.mubr.f32.gmra.mxu0 %v68
  %v3544 = vpop.f32.mrf.mxu0
  %v3545 = vadd.f32 0.0, %v3544
  %v3546 = vpop.f32.mrf.mxu0
  %3547 = vmatprep.mubr.f32.mxu0 0.0
  %3548 = vmatmul.mubr.f32.gmra.mxu0 %v70
  %v3549 = vpop.f32.mrf.mxu0
  %v3550 = vadd.f32 0.0, %v3549
  %v3551 = vpop.f32.mrf.mxu0
  %3552 = vmatprep.mubr.f32.mxu0 0.0
  %3553 = vmatmul.mubr.f32.gmra.mxu0 %v72
  %v3554 = vpop.f32.mrf.mxu0
  %v3555 = vadd.f32 0.0, %v3554
  %v3556 = vpop.f32.mrf.mxu0
  %3557 = vmatprep.mubr.f32.mxu0 0.0
  %3558 = vmatmul.mubr.f32.gmra.mxu0 %v74
  %v3559 = vpop.f32.mrf.mxu0
  %v3560 = vadd.f32 0.0, %v3559
  %v3561 = vpop.f32.mrf.mxu0
  %3562 = vmatprep.mubr.f32.mxu0 0.0
  %3563 = vmatmul.mubr.f32.gmra.mxu0 %v76
  %v3564 = vpop.f32.mrf.mxu0
  %v3565 = vadd.f32 0.0, %v3564
  %v3566 = vpop.f32.mrf.mxu0
  %3567 = vmatprep.mubr.f32.mxu0 0.0
  %3568 = vmatmul.mubr.f32.gmra.mxu0 %v78
  %v3569 = vpop.f32.mrf.mxu0
  %v3570 = vadd.f32 0.0, %v3569
  %v3571 = vpop.f32.mrf.mxu0
  %3572 = vmatprep.mubr.f32.mxu0 0.0
  %3573 = vmatmul.mubr.f32.gmra.mxu0 %v80
  %v3574 = vpop.f32.mrf.mxu0
  %v3575 = vadd.f32 0.0, %v3574
  %v3576 = vpop.f32.mrf.mxu0
  %3577 = vmatprep.mubr.f32.mxu0 0.0
  %3578 = vmatmul.mubr.f32.gmra.mxu0 %v82
  %v3579 = vpop.f32.mrf.mxu0
  %v3580 = vadd.f32 0.0, %v3579
  %v3581 = vpop.f32.mrf.mxu0
  %3582 = vmatprep.mubr.f32.mxu0 0.0
  %3583 = vmatmul.mubr.f32.gmra.mxu0 %v100
  %v3584 = vpop.f32.mrf.mxu0
  %v3585 = vadd.f32 0.0, %v3584
  %v3586 = vpop.f32.mrf.mxu0
  %3587 = vmatprep.mubr.f32.mxu0 0.0
  %3588 = vmatmul.mubr.f32.gmra.mxu0 %v102
  %v3589 = vpop.f32.mrf.mxu0
  %v3590 = vadd.f32 0.0, %v3589
  %v3591 = vpop.f32.mrf.mxu0
  %3592 = vmatprep.mubr.f32.mxu0 0.0
  %3593 = vmatmul.mubr.f32.gmra.mxu0 %v104
  %v3594 = vpop.f32.mrf.mxu0
  %v3595 = vadd.f32 0.0, %v3594
  %v3596 = vpop.f32.mrf.mxu0
  %3597 = vmatprep.mubr.f32.mxu0 0.0
  %3598 = vmatmul.mubr.f32.gmra.mxu0 %v106
  %v3599 = vpop.f32.mrf.mxu0
  %v3600 = vadd.f32 0.0, %v3599
  %v3601 = vpop.f32.mrf.mxu0
  %3602 = vmatprep.mubr.f32.mxu0 0.0
  %3603 = vmatmul.mubr.f32.gmra.mxu0 %v108
  %v3604 = vpop.f32.mrf.mxu0
  %v3605 = vadd.f32 0.0, %v3604
  %v3606 = vpop.f32.mrf.mxu0
  %3607 = vmatprep.mubr.f32.mxu0 0.0
  %3608 = vmatmul.mubr.f32.gmra.mxu0 %v110
  %v3609 = vpop.f32.mrf.mxu0
  %v3610 = vadd.f32 0.0, %v3609
  %v3611 = vpop.f32.mrf.mxu0
  %3612 = vmatprep.mubr.f32.mxu0 0.0
  %3613 = vmatmul.mubr.f32.gmra.mxu0 %v112
  %v3614 = vpop.f32.mrf.mxu0
  %v3615 = vadd.f32 0.0, %v3614
  %v3616 = vpop.f32.mrf.mxu0
  %3617 = vmatprep.mubr.f32.mxu0 0.0
  %3618 = vmatmul.mubr.f32.gmra.mxu0 %v114
  %v3619 = vpop.f32.mrf.mxu0
  %v3620 = vadd.f32 0.0, %v3619
  %v3621 = vpop.f32.mrf.mxu0
  %3622 = vmatprep.mubr.f32.mxu0 0.0
  %3623 = vmatmul.mubr.f32.gmra.mxu0 %v132
  %v3624 = vpop.f32.mrf.mxu0
  %v3625 = vadd.f32 0.0, %v3624
  %v3626 = vpop.f32.mrf.mxu0
  %3627 = vmatprep.mubr.f32.mxu0 0.0
  %3628 = vmatmul.mubr.f32.gmra.mxu0 %v134
  %v3629 = vpop.f32.mrf.mxu0
  %v3630 = vadd.f32 0.0, %v3629
  %v3631 = vpop.f32.mrf.mxu0
  %3632 = vmatprep.mubr.f32.mxu0 0.0
  %3633 = vmatmul.mubr.f32.gmra.mxu0 %v136
  %v3634 = vpop.f32.mrf.mxu0
  %v3635 = vadd.f32 0.0, %v3634
  %v3636 = vpop.f32.mrf.mxu0
  %3637 = vmatprep.mubr.f32.mxu0 0.0
  %3638 = vmatmul.mubr.f32.gmra.mxu0 %v138
  %v3639 = vpop.f32.mrf.mxu0
  %v3640 = vadd.f32 0.0, %v3639
  %v3641 = vpop.f32.mrf.mxu0
  %3642 = vmatprep.mubr.f32.mxu0 0.0
  %3643 = vmatmul.mubr.f32.gmra.mxu0 %v140
  %v3644 = vpop.f32.mrf.mxu0
  %v3645 = vadd.f32 0.0, %v3644
  %v3646 = vpop.f32.mrf.mxu0
  %3647 = vmatprep.mubr.f32.mxu0 0.0
  %3648 = vmatmul.mubr.f32.gmra.mxu0 %v142
  %v3649 = vpop.f32.mrf.mxu0
  %v3650 = vadd.f32 0.0, %v3649
  %v3651 = vpop.f32.mrf.mxu0
  %3652 = vmatprep.mubr.f32.mxu0 0.0
  %3653 = vmatmul.mubr.f32.gmra.mxu0 %v144
  %v3654 = vpop.f32.mrf.mxu0
  %v3655 = vadd.f32 0.0, %v3654
  %v3656 = vpop.f32.mrf.mxu0
  %3657 = vmatprep.mubr.f32.mxu0 0.0
  %3658 = vmatmul.mubr.f32.gmra.mxu0 %v146
  %v3659 = vpop.f32.mrf.mxu0
  %v3660 = vadd.f32 0.0, %v3659
  %v3661 = vpop.f32.mrf.mxu0
  %3662 = vmatprep.mubr.f32.mxu0 0.0
  %3663 = vmatmul.mubr.f32.gmra.mxu0 %v164
  %v3664 = vpop.f32.mrf.mxu0
  %v3665 = vadd.f32 0.0, %v3664
  %v3666 = vpop.f32.mrf.mxu0
  %3667 = vmatprep.mubr.f32.mxu0 0.0
  %3668 = vmatmul.mubr.f32.gmra.mxu0 %v166
  %v3669 = vpop.f32.mrf.mxu0
  %v3670 = vadd.f32 0.0, %v3669
  %v3671 = vpop.f32.mrf.mxu0
  %3672 = vmatprep.mubr.f32.mxu0 0.0
  %3673 = vmatmul.mubr.f32.gmra.mxu0 %v168
  %v3674 = vpop.f32.mrf.mxu0
  %v3675 = vadd.f32 0.0, %v3674
  %v3676 = vpop.f32.mrf.mxu0
  %3677 = vmatprep.mubr.f32.mxu0 0.0
  %3678 = vmatmul.mubr.f32.gmra.mxu0 %v170
  %v3679 = vpop.f32.mrf.mxu0
  %v3680 = vadd.f32 0.0, %v3679
  %v3681 = vpop.f32.mrf.mxu0
  %3682 = vmatprep.mubr.f32.mxu0 0.0
  %3683 = vmatmul.mubr.f32.gmra.mxu0 %v172
  %v3684 = vpop.f32.mrf.mxu0
  %v3685 = vadd.f32 0.0, %v3684
  %v3686 = vpop.f32.mrf.mxu0
  %3687 = vmatprep.mubr.f32.mxu0 0.0
  %3688 = vmatmul.mubr.f32.gmra.mxu0 %v174
  %v3689 = vpop.f32.mrf.mxu0
  %v3690 = vadd.f32 0.0, %v3689
  %v3691 = vpop.f32.mrf.mxu0
  %3692 = vmatprep.mubr.f32.mxu0 0.0
  %3693 = vmatmul.mubr.f32.gmra.mxu0 %v176
  %v3694 = vpop.f32.mrf.mxu0
  %v3695 = vadd.f32 0.0, %v3694
  %v3696 = vpop.f32.mrf.mxu0
  %3697 = vmatprep.mubr.f32.mxu0 0.0
  %3698 = vmatmul.mubr.f32.gmra.mxu0 %v178
  %v3699 = vpop.f32.mrf.mxu0
  %v3700 = vadd.f32 0.0, %v3699
  %v3701 = vpop.f32.mrf.mxu0
  %3702 = vmatprep.mubr.f32.mxu0 0.0
  %3703 = vmatmul.mubr.f32.gmra.mxu0 %v196
  %v3704 = vpop.f32.mrf.mxu0
  %v3705 = vadd.f32 0.0, %v3704
  %v3706 = vpop.f32.mrf.mxu0
  %3707 = vmatprep.mubr.f32.mxu0 0.0
  %3708 = vmatmul.mubr.f32.gmra.mxu0 %v198
  %v3709 = vpop.f32.mrf.mxu0
  %v3710 = vadd.f32 0.0, %v3709
  %v3711 = vpop.f32.mrf.mxu0
  %3712 = vmatprep.mubr.f32.mxu0 0.0
  %3713 = vmatmul.mubr.f32.gmra.mxu0 %v200
  %v3714 = vpop.f32.mrf.mxu0
  %v3715 = vadd.f32 0.0, %v3714
  %v3716 = vpop.f32.mrf.mxu0
  %3717 = vmatprep.mubr.f32.mxu0 0.0
  %3718 = vmatmul.mubr.f32.gmra.mxu0 %v202
  %v3719 = vpop.f32.mrf.mxu0
  %v3720 = vadd.f32 0.0, %v3719
  %v3721 = vpop.f32.mrf.mxu0
  %3722 = vmatprep.mubr.f32.mxu0 0.0
  %3723 = vmatmul.mubr.f32.gmra.mxu0 %v204
  %v3724 = vpop.f32.mrf.mxu0
  %v3725 = vadd.f32 0.0, %v3724
  %v3726 = vpop.f32.mrf.mxu0
  %3727 = vmatprep.mubr.f32.mxu0 0.0
  %3728 = vmatmul.mubr.f32.gmra.mxu0 %v206
  %v3729 = vpop.f32.mrf.mxu0
  %v3730 = vadd.f32 0.0, %v3729
  %v3731 = vpop.f32.mrf.mxu0
  %3732 = vmatprep.mubr.f32.mxu0 0.0
  %3733 = vmatmul.mubr.f32.gmra.mxu0 %v208
  %v3734 = vpop.f32.mrf.mxu0
  %v3735 = vadd.f32 0.0, %v3734
  %v3736 = vpop.f32.mrf.mxu0
  %3737 = vmatprep.mubr.f32.mxu0 0.0
  %3738 = vmatmul.mubr.f32.gmra.mxu0 %v210
  %v3739 = vpop.f32.mrf.mxu0
  %v3740 = vadd.f32 0.0, %v3739
  %v3741 = vpop.f32.mrf.mxu0
  %3742 = vmatprep.mubr.f32.mxu0 0.0
  %3743 = vmatmul.mubr.f32.gmra.mxu0 %v228
  %v3744 = vpop.f32.mrf.mxu0
  %v3745 = vadd.f32 0.0, %v3744
  %v3746 = vpop.f32.mrf.mxu0
  %3747 = vmatprep.mubr.f32.mxu0 0.0
  %3748 = vmatmul.mubr.f32.gmra.mxu0 %v230
  %v3749 = vpop.f32.mrf.mxu0
  %v3750 = vadd.f32 0.0, %v3749
  %v3751 = vpop.f32.mrf.mxu0
  %3752 = vmatprep.mubr.f32.mxu0 0.0
  %3753 = vmatmul.mubr.f32.gmra.mxu0 %v232
  %v3754 = vpop.f32.mrf.mxu0
  %v3755 = vadd.f32 0.0, %v3754
  %v3756 = vpop.f32.mrf.mxu0
  %3757 = vmatprep.mubr.f32.mxu0 0.0
  %3758 = vmatmul.mubr.f32.gmra.mxu0 %v234
  %v3759 = vpop.f32.mrf.mxu0
  %v3760 = vadd.f32 0.0, %v3759
  %v3761 = vpop.f32.mrf.mxu0
  %3762 = vmatprep.mubr.f32.mxu0 0.0
  %3763 = vmatmul.mubr.f32.gmra.mxu0 %v236
  %v3764 = vpop.f32.mrf.mxu0
  %v3765 = vadd.f32 0.0, %v3764
  %v3766 = vpop.f32.mrf.mxu0
  %3767 = vmatprep.mubr.f32.mxu0 0.0
  %3768 = vmatmul.mubr.f32.gmra.mxu0 %v238
  %v3769 = vpop.f32.mrf.mxu0
  %v3770 = vadd.f32 0.0, %v3769
  %v3771 = vpop.f32.mrf.mxu0
  %3772 = vmatprep.mubr.f32.mxu0 0.0
  %3773 = vmatmul.mubr.f32.gmra.mxu0 %v240
  %v3774 = vpop.f32.mrf.mxu0
  %v3775 = vadd.f32 0.0, %v3774
  %v3776 = vpop.f32.mrf.mxu0
  %3777 = vmatprep.mubr.f32.mxu0 0.0
  %3778 = vmatmul.mubr.f32.gmra.mxu0 %v242
  %v3779 = vpop.f32.mrf.mxu0
  %v3780 = vadd.f32 0.0, %v3779
  %v3781 = vpop.f32.mrf.mxu0
  %3782 = vmatprep.mubr.f32.mxu0 0.0
  %3783 = vmatmul.mubr.f32.gmra.mxu0 %v260
  %v3784 = vpop.f32.mrf.mxu0
  %v3785 = vadd.f32 0.0, %v3784
  %v3786 = vpop.f32.mrf.mxu0
  %3787 = vmatprep.mubr.f32.mxu0 0.0
  %3788 = vmatmul.mubr.f32.gmra.mxu0 %v262
  %v3789 = vpop.f32.mrf.mxu0
  %v3790 = vadd.f32 0.0, %v3789
  %v3791 = vpop.f32.mrf.mxu0
  %3792 = vmatprep.mubr.f32.mxu0 0.0
  %3793 = vmatmul.mubr.f32.gmra.mxu0 %v264
  %v3794 = vpop.f32.mrf.mxu0
  %v3795 = vadd.f32 0.0, %v3794
  %v3796 = vpop.f32.mrf.mxu0
  %3797 = vmatprep.mubr.f32.mxu0 0.0
  %3798 = vmatmul.mubr.f32.gmra.mxu0 %v266
  %v3799 = vpop.f32.mrf.mxu0
  %v3800 = vadd.f32 0.0, %v3799
  %v3801 = vpop.f32.mrf.mxu0
  %3802 = vmatprep.mubr.f32.mxu0 0.0
  %3803 = vmatmul.mubr.f32.gmra.mxu0 %v268
  %v3804 = vpop.f32.mrf.mxu0
  %v3805 = vadd.f32 0.0, %v3804
  %v3806 = vpop.f32.mrf.mxu0
  %3807 = vmatprep.mubr.f32.mxu0 0.0
  %3808 = vmatmul.mubr.f32.gmra.mxu0 %v270
  %v3809 = vpop.f32.mrf.mxu0
  %v3810 = vadd.f32 0.0, %v3809
  %v3811 = vpop.f32.mrf.mxu0
  %3812 = vmatprep.mubr.f32.mxu0 0.0
  %3813 = vmatmul.mubr.f32.gmra.mxu0 %v272
  %v3814 = vpop.f32.mrf.mxu0
  %v3815 = vadd.f32 0.0, %v3814
  %v3816 = vpop.f32.mrf.mxu0
  %3817 = vmatprep.mubr.f32.mxu0 0.0
  %3818 = vmatmul.mubr.f32.gmra.mxu0 %v274
  %v3819 = vpop.f32.mrf.mxu0
  %v3820 = vadd.f32 0.0, %v3819
  %v3821 = vpop.f32.mrf.mxu0
  %3822 = vdwg.mxu0
  %v3823 = vadd.f32 %v3374, %v3505
  %v3824 = vadd.f32 %v3375, %v3510
  %v3825 = vadd.f32 %v3376, %v3515
  %v3826 = vadd.f32 %v3377, %v3520
  %v3827 = vadd.f32 %v3378, %v3525
  %v3828 = vadd.f32 %v3379, %v3530
  %v3829 = vadd.f32 %v3380, %v3535
  %v3830 = vadd.f32 %v3381, %v3540
  %v3831 = vadd.f32 %v3382, %v3545
  %v3832 = vadd.f32 %v3383, %v3550
  %v3833 = vadd.f32 %v3384, %v3555
  %v3834 = vadd.f32 %v3385, %v3560
  %v3835 = vadd.f32 %v3386, %v3565
  %v3836 = vadd.f32 %v3387, %v3570
  %v3837 = vadd.f32 %v3388, %v3575
  %v3838 = vadd.f32 %v3389, %v3580
  %v3839 = vadd.f32 %v3390, %v3585
  %v3840 = vadd.f32 %v3391, %v3590
  %v3841 = vadd.f32 %v3392, %v3595
  %v3842 = vadd.f32 %v3393, %v3600
  %v3843 = vadd.f32 %v3394, %v3605
  %v3844 = vadd.f32 %v3395, %v3610
  %v3845 = vadd.f32 %v3396, %v3615
  %v3846 = vadd.f32 %v3397, %v3620
  %v3847 = vadd.f32 %v3398, %v3625
  %v3848 = vadd.f32 %v3399, %v3630
  %v3849 = vadd.f32 %v3400, %v3635
  %v3850 = vadd.f32 %v3401, %v3640
  %v3851 = vadd.f32 %v3402, %v3645
  %v3852 = vadd.f32 %v3403, %v3650
  %v3853 = vadd.f32 %v3404, %v3655
  %v3854 = vadd.f32 %v3405, %v3660
  %v3855 = vadd.f32 %v3406, %v3665
  %v3856 = vadd.f32 %v3407, %v3670
  %v3857 = vadd.f32 %v3408, %v3675
  %v3858 = vadd.f32 %v3409, %v3680
  %v3859 = vadd.f32 %v3410, %v3685
  %v3860 = vadd.f32 %v3411, %v3690
  %v3861 = vadd.f32 %v3412, %v3695
  %v3862 = vadd.f32 %v3413, %v3700
  %v3863 = vadd.f32 %v3414, %v3705
  %v3864 = vadd.f32 %v3415, %v3710
  %v3865 = vadd.f32 %v3416, %v3715
  %v3866 = vadd.f32 %v3417, %v3720
  %v3867 = vadd.f32 %v3418, %v3725
  %v3868 = vadd.f32 %v3419, %v3730
  %v3869 = vadd.f32 %v3420, %v3735
  %v3870 = vadd.f32 %v3421, %v3740
  %v3871 = vadd.f32 %v3422, %v3745
  %v3872 = vadd.f32 %v3423, %v3750
  %v3873 = vadd.f32 %v3424, %v3755
  %v3874 = vadd.f32 %v3425, %v3760
  %v3875 = vadd.f32 %v3426, %v3765
  %v3876 = vadd.f32 %v3427, %v3770
  %v3877 = vadd.f32 %v3428, %v3775
  %v3878 = vadd.f32 %v3429, %v3780
  %v3879 = vadd.f32 %v3430, %v3785
  %v3880 = vadd.f32 %v3431, %v3790
  %v3881 = vadd.f32 %v3432, %v3795
  %v3882 = vadd.f32 %v3433, %v3800
  %v3883 = vadd.f32 %v3434, %v3805
  %v3884 = vadd.f32 %v3435, %v3810
  %v3885 = vadd.f32 %v3436, %v3815
  %v3886 = vadd.f32 %v3437, %v3820
  %3887 = vmatprep.subr.mxu0 0.0
  %3888 = vmatpush1.msra.mxu0 %v419
  %3889 = vmatprep.subr.mxu0 0.0
  %3890 = vmatpush1.msra.mxu0 %v418
  %3891 = vmatprep.subr.mxu0 0.0
  %3892 = vmatpush1.msra.mxu0 %v417
  %3893 = vmatprep.subr.mxu0 0.0
  %3894 = vmatpush1.msra.mxu0 %v416
  %3895 = vmatprep.subr.mxu0 0.0
  %3896 = vmatpush1.msra.mxu0 %v415
  %3897 = vmatprep.subr.mxu0 0.0
  %3898 = vmatpush1.msra.mxu0 %v414
  %3899 = vmatprep.subr.mxu0 0.0
  %3900 = vmatpush1.msra.mxu0 %v413
  %3901 = vmatprep.subr.mxu0 0.0
  %3902 = vmatpush1.msra.mxu0 %v412
  %3903 = vmatprep.subr.mxu0 0.0
  %3904 = vmatpush1.msra.mxu0 %v411
  %3905 = vmatprep.subr.mxu0 0.0
  %3906 = vmatpush1.msra.mxu0 %v410
  %3907 = vmatprep.subr.mxu0 0.0
  %3908 = vmatpush1.msra.mxu0 %v409
  %3909 = vmatprep.subr.mxu0 0.0
  %3910 = vmatpush1.msra.mxu0 %v408
  %3911 = vmatprep.subr.mxu0 0.0
  %3912 = vmatpush1.msra.mxu0 %v407
  %3913 = vmatprep.subr.mxu0 0.0
  %3914 = vmatpush1.msra.mxu0 %v406
  %3915 = vmatprep.subr.mxu0 0.0
  %3916 = vmatpush1.msra.mxu0 %v405
  %3917 = vmatprep.subr.mxu0 0.0
  %3918 = vmatpush1.msra.mxu0 %v404
  %3919 = vmatprep.subr.mxu0 0.0
  %3920 = vmatpush2.msra.mxu0 0.0
  %3921 = vmatprep.subr.mxu0 0.0
  %3922 = vmatpush2.msra.mxu0 0.0
  %3923 = vmatprep.subr.mxu0 0.0
  %3924 = vmatpush2.msra.mxu0 0.0
  %3925 = vmatprep.subr.mxu0 0.0
  %3926 = vmatpush2.msra.mxu0 0.0
  %3927 = vmatprep.subr.mxu0 0.0
  %3928 = vmatpush2.msra.mxu0 0.0
  %3929 = vmatprep.subr.mxu0 0.0
  %3930 = vmatpush2.msra.mxu0 0.0
  %3931 = vmatprep.subr.mxu0 0.0
  %3932 = vmatpush2.msra.mxu0 0.0
  %3933 = vmatprep.subr.mxu0 0.0
  %3934 = vmatpush2.msra.mxu0 0.0
  %3935 = vmatprep.subr.mxu0 0.0
  %3936 = vmatpush2.msra.mxu0 0.0
  %3937 = vmatprep.subr.mxu0 0.0
  %3938 = vmatpush2.msra.mxu0 0.0
  %3939 = vmatprep.subr.mxu0 0.0
  %3940 = vmatpush2.msra.mxu0 0.0
  %3941 = vmatprep.subr.mxu0 0.0
  %3942 = vmatpush2.msra.mxu0 0.0
  %3943 = vmatprep.subr.mxu0 0.0
  %3944 = vmatpush2.msra.mxu0 0.0
  %3945 = vmatprep.subr.mxu0 0.0
  %3946 = vmatpush2.msra.mxu0 0.0
  %3947 = vmatprep.subr.mxu0 0.0
  %3948 = vmatpush2.msra.mxu0 0.0
  %3949 = vmatprep.subr.mxu0 0.0
  %3950 = vmatpush2.msra.mxu0 0.0
  %3951 = vmatprep.mubr.f32.mxu0 0.0
  %3952 = vmatmul.mubr.f32.gmra.mxu0 %v37
  %v3953 = vpop.f32.mrf.mxu0
  %v3954 = vadd.f32 0.0, %v3953
  %v3955 = vpop.f32.mrf.mxu0
  %3956 = vmatprep.mubr.f32.mxu0 0.0
  %3957 = vmatmul.mubr.f32.gmra.mxu0 %v39
  %v3958 = vpop.f32.mrf.mxu0
  %v3959 = vadd.f32 0.0, %v3958
  %v3960 = vpop.f32.mrf.mxu0
  %3961 = vmatprep.mubr.f32.mxu0 0.0
  %3962 = vmatmul.mubr.f32.gmra.mxu0 %v41
  %v3963 = vpop.f32.mrf.mxu0
  %v3964 = vadd.f32 0.0, %v3963
  %v3965 = vpop.f32.mrf.mxu0
  %3966 = vmatprep.mubr.f32.mxu0 0.0
  %3967 = vmatmul.mubr.f32.gmra.mxu0 %v43
  %v3968 = vpop.f32.mrf.mxu0
  %v3969 = vadd.f32 0.0, %v3968
  %v3970 = vpop.f32.mrf.mxu0
  %3971 = vmatprep.mubr.f32.mxu0 0.0
  %3972 = vmatmul.mubr.f32.gmra.mxu0 %v45
  %v3973 = vpop.f32.mrf.mxu0
  %v3974 = vadd.f32 0.0, %v3973
  %v3975 = vpop.f32.mrf.mxu0
  %3976 = vmatprep.mubr.f32.mxu0 0.0
  %3977 = vmatmul.mubr.f32.gmra.mxu0 %v47
  %v3978 = vpop.f32.mrf.mxu0
  %v3979 = vadd.f32 0.0, %v3978
  %v3980 = vpop.f32.mrf.mxu0
  %3981 = vmatprep.mubr.f32.mxu0 0.0
  %3982 = vmatmul.mubr.f32.gmra.mxu0 %v49
  %v3983 = vpop.f32.mrf.mxu0
  %v3984 = vadd.f32 0.0, %v3983
  %v3985 = vpop.f32.mrf.mxu0
  %3986 = vmatprep.mubr.f32.mxu0 0.0
  %3987 = vmatmul.mubr.f32.gmra.mxu0 %v51
  %v3988 = vpop.f32.mrf.mxu0
  %v3989 = vadd.f32 0.0, %v3988
  %v3990 = vpop.f32.mrf.mxu0
  %3991 = vmatprep.mubr.f32.mxu0 0.0
  %3992 = vmatmul.mubr.f32.gmra.mxu0 %v69
  %v3993 = vpop.f32.mrf.mxu0
  %v3994 = vadd.f32 0.0, %v3993
  %v3995 = vpop.f32.mrf.mxu0
  %3996 = vmatprep.mubr.f32.mxu0 0.0
  %3997 = vmatmul.mubr.f32.gmra.mxu0 %v71
  %v3998 = vpop.f32.mrf.mxu0
  %v3999 = vadd.f32 0.0, %v3998
  %v4000 = vpop.f32.mrf.mxu0
  %4001 = vmatprep.mubr.f32.mxu0 0.0
  %4002 = vmatmul.mubr.f32.gmra.mxu0 %v73
  %v4003 = vpop.f32.mrf.mxu0
  %v4004 = vadd.f32 0.0, %v4003
  %v4005 = vpop.f32.mrf.mxu0
  %4006 = vmatprep.mubr.f32.mxu0 0.0
  %4007 = vmatmul.mubr.f32.gmra.mxu0 %v75
  %v4008 = vpop.f32.mrf.mxu0
  %v4009 = vadd.f32 0.0, %v4008
  %v4010 = vpop.f32.mrf.mxu0
  %4011 = vmatprep.mubr.f32.mxu0 0.0
  %4012 = vmatmul.mubr.f32.gmra.mxu0 %v77
  %v4013 = vpop.f32.mrf.mxu0
  %v4014 = vadd.f32 0.0, %v4013
  %v4015 = vpop.f32.mrf.mxu0
  %4016 = vmatprep.mubr.f32.mxu0 0.0
  %4017 = vmatmul.mubr.f32.gmra.mxu0 %v79
  %v4018 = vpop.f32.mrf.mxu0
  %v4019 = vadd.f32 0.0, %v4018
  %v4020 = vpop.f32.mrf.mxu0
  %4021 = vmatprep.mubr.f32.mxu0 0.0
  %4022 = vmatmul.mubr.f32.gmra.mxu0 %v81
  %v4023 = vpop.f32.mrf.mxu0
  %v4024 = vadd.f32 0.0, %v4023
  %v4025 = vpop.f32.mrf.mxu0
  %4026 = vmatprep.mubr.f32.mxu0 0.0
  %4027 = vmatmul.mubr.f32.gmra.mxu0 %v83
  %v4028 = vpop.f32.mrf.mxu0
  %v4029 = vadd.f32 0.0, %v4028
  %v4030 = vpop.f32.mrf.mxu0
  %4031 = vmatprep.mubr.f32.mxu0 0.0
  %4032 = vmatmul.mubr.f32.gmra.mxu0 %v101
  %v4033 = vpop.f32.mrf.mxu0
  %v4034 = vadd.f32 0.0, %v4033
  %v4035 = vpop.f32.mrf.mxu0
  %4036 = vmatprep.mubr.f32.mxu0 0.0
  %4037 = vmatmul.mubr.f32.gmra.mxu0 %v103
  %v4038 = vpop.f32.mrf.mxu0
  %v4039 = vadd.f32 0.0, %v4038
  %v4040 = vpop.f32.mrf.mxu0
  %4041 = vmatprep.mubr.f32.mxu0 0.0
  %4042 = vmatmul.mubr.f32.gmra.mxu0 %v105
  %v4043 = vpop.f32.mrf.mxu0
  %v4044 = vadd.f32 0.0, %v4043
  %v4045 = vpop.f32.mrf.mxu0
  %4046 = vmatprep.mubr.f32.mxu0 0.0
  %4047 = vmatmul.mubr.f32.gmra.mxu0 %v107
  %v4048 = vpop.f32.mrf.mxu0
  %v4049 = vadd.f32 0.0, %v4048
  %v4050 = vpop.f32.mrf.mxu0
  %4051 = vmatprep.mubr.f32.mxu0 0.0
  %4052 = vmatmul.mubr.f32.gmra.mxu0 %v109
  %v4053 = vpop.f32.mrf.mxu0
  %v4054 = vadd.f32 0.0, %v4053
  %v4055 = vpop.f32.mrf.mxu0
  %4056 = vmatprep.mubr.f32.mxu0 0.0
  %4057 = vmatmul.mubr.f32.gmra.mxu0 %v111
  %v4058 = vpop.f32.mrf.mxu0
  %v4059 = vadd.f32 0.0, %v4058
  %v4060 = vpop.f32.mrf.mxu0
  %4061 = vmatprep.mubr.f32.mxu0 0.0
  %4062 = vmatmul.mubr.f32.gmra.mxu0 %v113
  %v4063 = vpop.f32.mrf.mxu0
  %v4064 = vadd.f32 0.0, %v4063
  %v4065 = vpop.f32.mrf.mxu0
  %4066 = vmatprep.mubr.f32.mxu0 0.0
  %4067 = vmatmul.mubr.f32.gmra.mxu0 %v115
  %v4068 = vpop.f32.mrf.mxu0
  %v4069 = vadd.f32 0.0, %v4068
  %v4070 = vpop.f32.mrf.mxu0
  %4071 = vmatprep.mubr.f32.mxu0 0.0
  %4072 = vmatmul.mubr.f32.gmra.mxu0 %v133
  %v4073 = vpop.f32.mrf.mxu0
  %v4074 = vadd.f32 0.0, %v4073
  %v4075 = vpop.f32.mrf.mxu0
  %4076 = vmatprep.mubr.f32.mxu0 0.0
  %4077 = vmatmul.mubr.f32.gmra.mxu0 %v135
  %v4078 = vpop.f32.mrf.mxu0
  %v4079 = vadd.f32 0.0, %v4078
  %v4080 = vpop.f32.mrf.mxu0
  %4081 = vmatprep.mubr.f32.mxu0 0.0
  %4082 = vmatmul.mubr.f32.gmra.mxu0 %v137
  %v4083 = vpop.f32.mrf.mxu0
  %v4084 = vadd.f32 0.0, %v4083
  %v4085 = vpop.f32.mrf.mxu0
  %4086 = vmatprep.mubr.f32.mxu0 0.0
  %4087 = vmatmul.mubr.f32.gmra.mxu0 %v139
  %v4088 = vpop.f32.mrf.mxu0
  %v4089 = vadd.f32 0.0, %v4088
  %v4090 = vpop.f32.mrf.mxu0
  %4091 = vmatprep.mubr.f32.mxu0 0.0
  %4092 = vmatmul.mubr.f32.gmra.mxu0 %v141
  %v4093 = vpop.f32.mrf.mxu0
  %v4094 = vadd.f32 0.0, %v4093
  %v4095 = vpop.f32.mrf.mxu0
  %4096 = vmatprep.mubr.f32.mxu0 0.0
  %4097 = vmatmul.mubr.f32.gmra.mxu0 %v143
  %v4098 = vpop.f32.mrf.mxu0
  %v4099 = vadd.f32 0.0, %v4098
  %v4100 = vpop.f32.mrf.mxu0
  %4101 = vmatprep.mubr.f32.mxu0 0.0
  %4102 = vmatmul.mubr.f32.gmra.mxu0 %v145
  %v4103 = vpop.f32.mrf.mxu0
  %v4104 = vadd.f32 0.0, %v4103
  %v4105 = vpop.f32.mrf.mxu0
  %4106 = vmatprep.mubr.f32.mxu0 0.0
  %4107 = vmatmul.mubr.f32.gmra.mxu0 %v147
  %v4108 = vpop.f32.mrf.mxu0
  %v4109 = vadd.f32 0.0, %v4108
  %v4110 = vpop.f32.mrf.mxu0
  %4111 = vmatprep.mubr.f32.mxu0 0.0
  %4112 = vmatmul.mubr.f32.gmra.mxu0 %v165
  %v4113 = vpop.f32.mrf.mxu0
  %v4114 = vadd.f32 0.0, %v4113
  %v4115 = vpop.f32.mrf.mxu0
  %4116 = vmatprep.mubr.f32.mxu0 0.0
  %4117 = vmatmul.mubr.f32.gmra.mxu0 %v167
  %v4118 = vpop.f32.mrf.mxu0
  %v4119 = vadd.f32 0.0, %v4118
  %v4120 = vpop.f32.mrf.mxu0
  %4121 = vmatprep.mubr.f32.mxu0 0.0
  %4122 = vmatmul.mubr.f32.gmra.mxu0 %v169
  %v4123 = vpop.f32.mrf.mxu0
  %v4124 = vadd.f32 0.0, %v4123
  %v4125 = vpop.f32.mrf.mxu0
  %4126 = vmatprep.mubr.f32.mxu0 0.0
  %4127 = vmatmul.mubr.f32.gmra.mxu0 %v171
  %v4128 = vpop.f32.mrf.mxu0
  %v4129 = vadd.f32 0.0, %v4128
  %v4130 = vpop.f32.mrf.mxu0
  %4131 = vmatprep.mubr.f32.mxu0 0.0
  %4132 = vmatmul.mubr.f32.gmra.mxu0 %v173
  %v4133 = vpop.f32.mrf.mxu0
  %v4134 = vadd.f32 0.0, %v4133
  %v4135 = vpop.f32.mrf.mxu0
  %4136 = vmatprep.mubr.f32.mxu0 0.0
  %4137 = vmatmul.mubr.f32.gmra.mxu0 %v175
  %v4138 = vpop.f32.mrf.mxu0
  %v4139 = vadd.f32 0.0, %v4138
  %v4140 = vpop.f32.mrf.mxu0
  %4141 = vmatprep.mubr.f32.mxu0 0.0
  %4142 = vmatmul.mubr.f32.gmra.mxu0 %v177
  %v4143 = vpop.f32.mrf.mxu0
  %v4144 = vadd.f32 0.0, %v4143
  %v4145 = vpop.f32.mrf.mxu0
  %4146 = vmatprep.mubr.f32.mxu0 0.0
  %4147 = vmatmul.mubr.f32.gmra.mxu0 %v179
  %v4148 = vpop.f32.mrf.mxu0
  %v4149 = vadd.f32 0.0, %v4148
  %v4150 = vpop.f32.mrf.mxu0
  %4151 = vmatprep.mubr.f32.mxu0 0.0
  %4152 = vmatmul.mubr.f32.gmra.mxu0 %v197
  %v4153 = vpop.f32.mrf.mxu0
  %v4154 = vadd.f32 0.0, %v4153
  %v4155 = vpop.f32.mrf.mxu0
  %4156 = vmatprep.mubr.f32.mxu0 0.0
  %4157 = vmatmul.mubr.f32.gmra.mxu0 %v199
  %v4158 = vpop.f32.mrf.mxu0
  %v4159 = vadd.f32 0.0, %v4158
  %v4160 = vpop.f32.mrf.mxu0
  %4161 = vmatprep.mubr.f32.mxu0 0.0
  %4162 = vmatmul.mubr.f32.gmra.mxu0 %v201
  %v4163 = vpop.f32.mrf.mxu0
  %v4164 = vadd.f32 0.0, %v4163
  %v4165 = vpop.f32.mrf.mxu0
  %4166 = vmatprep.mubr.f32.mxu0 0.0
  %4167 = vmatmul.mubr.f32.gmra.mxu0 %v203
  %v4168 = vpop.f32.mrf.mxu0
  %v4169 = vadd.f32 0.0, %v4168
  %v4170 = vpop.f32.mrf.mxu0
  %4171 = vmatprep.mubr.f32.mxu0 0.0
  %4172 = vmatmul.mubr.f32.gmra.mxu0 %v205
  %v4173 = vpop.f32.mrf.mxu0
  %v4174 = vadd.f32 0.0, %v4173
  %v4175 = vpop.f32.mrf.mxu0
  %4176 = vmatprep.mubr.f32.mxu0 0.0
  %4177 = vmatmul.mubr.f32.gmra.mxu0 %v207
  %v4178 = vpop.f32.mrf.mxu0
  %v4179 = vadd.f32 0.0, %v4178
  %v4180 = vpop.f32.mrf.mxu0
  %4181 = vmatprep.mubr.f32.mxu0 0.0
  %4182 = vmatmul.mubr.f32.gmra.mxu0 %v209
  %v4183 = vpop.f32.mrf.mxu0
  %v4184 = vadd.f32 0.0, %v4183
  %v4185 = vpop.f32.mrf.mxu0
  %4186 = vmatprep.mubr.f32.mxu0 0.0
  %4187 = vmatmul.mubr.f32.gmra.mxu0 %v211
  %v4188 = vpop.f32.mrf.mxu0
  %v4189 = vadd.f32 0.0, %v4188
  %v4190 = vpop.f32.mrf.mxu0
  %4191 = vmatprep.mubr.f32.mxu0 0.0
  %4192 = vmatmul.mubr.f32.gmra.mxu0 %v229
  %v4193 = vpop.f32.mrf.mxu0
  %v4194 = vadd.f32 0.0, %v4193
  %v4195 = vpop.f32.mrf.mxu0
  %4196 = vmatprep.mubr.f32.mxu0 0.0
  %4197 = vmatmul.mubr.f32.gmra.mxu0 %v231
  %v4198 = vpop.f32.mrf.mxu0
  %v4199 = vadd.f32 0.0, %v4198
  %v4200 = vpop.f32.mrf.mxu0
  %4201 = vmatprep.mubr.f32.mxu0 0.0
  %4202 = vmatmul.mubr.f32.gmra.mxu0 %v233
  %v4203 = vpop.f32.mrf.mxu0
  %v4204 = vadd.f32 0.0, %v4203
  %v4205 = vpop.f32.mrf.mxu0
  %4206 = vmatprep.mubr.f32.mxu0 0.0
  %4207 = vmatmul.mubr.f32.gmra.mxu0 %v235
  %v4208 = vpop.f32.mrf.mxu0
  %v4209 = vadd.f32 0.0, %v4208
  %v4210 = vpop.f32.mrf.mxu0
  %4211 = vmatprep.mubr.f32.mxu0 0.0
  %4212 = vmatmul.mubr.f32.gmra.mxu0 %v237
  %v4213 = vpop.f32.mrf.mxu0
  %v4214 = vadd.f32 0.0, %v4213
  %v4215 = vpop.f32.mrf.mxu0
  %4216 = vmatprep.mubr.f32.mxu0 0.0
  %4217 = vmatmul.mubr.f32.gmra.mxu0 %v239
  %v4218 = vpop.f32.mrf.mxu0
  %v4219 = vadd.f32 0.0, %v4218
  %v4220 = vpop.f32.mrf.mxu0
  %4221 = vmatprep.mubr.f32.mxu0 0.0
  %4222 = vmatmul.mubr.f32.gmra.mxu0 %v241
  %v4223 = vpop.f32.mrf.mxu0
  %v4224 = vadd.f32 0.0, %v4223
  %v4225 = vpop.f32.mrf.mxu0
  %4226 = vmatprep.mubr.f32.mxu0 0.0
  %4227 = vmatmul.mubr.f32.gmra.mxu0 %v243
  %v4228 = vpop.f32.mrf.mxu0
  %v4229 = vadd.f32 0.0, %v4228
  %v4230 = vpop.f32.mrf.mxu0
  %4231 = vmatprep.mubr.f32.mxu0 0.0
  %4232 = vmatmul.mubr.f32.gmra.mxu0 %v261
  %v4233 = vpop.f32.mrf.mxu0
  %v4234 = vadd.f32 0.0, %v4233
  %v4235 = vpop.f32.mrf.mxu0
  %4236 = vmatprep.mubr.f32.mxu0 0.0
  %4237 = vmatmul.mubr.f32.gmra.mxu0 %v263
  %v4238 = vpop.f32.mrf.mxu0
  %v4239 = vadd.f32 0.0, %v4238
  %v4240 = vpop.f32.mrf.mxu0
  %4241 = vmatprep.mubr.f32.mxu0 0.0
  %4242 = vmatmul.mubr.f32.gmra.mxu0 %v265
  %v4243 = vpop.f32.mrf.mxu0
  %v4244 = vadd.f32 0.0, %v4243
  %v4245 = vpop.f32.mrf.mxu0
  %4246 = vmatprep.mubr.f32.mxu0 0.0
  %4247 = vmatmul.mubr.f32.gmra.mxu0 %v267
  %v4248 = vpop.f32.mrf.mxu0
  %v4249 = vadd.f32 0.0, %v4248
  %v4250 = vpop.f32.mrf.mxu0
  %4251 = vmatprep.mubr.f32.mxu0 0.0
  %4252 = vmatmul.mubr.f32.gmra.mxu0 %v269
  %v4253 = vpop.f32.mrf.mxu0
  %v4254 = vadd.f32 0.0, %v4253
  %v4255 = vpop.f32.mrf.mxu0
  %4256 = vmatprep.mubr.f32.mxu0 0.0
  %4257 = vmatmul.mubr.f32.gmra.mxu0 %v271
  %v4258 = vpop.f32.mrf.mxu0
  %v4259 = vadd.f32 0.0, %v4258
  %v4260 = vpop.f32.mrf.mxu0
  %4261 = vmatprep.mubr.f32.mxu0 0.0
  %4262 = vmatmul.mubr.f32.gmra.mxu0 %v273
  %v4263 = vpop.f32.mrf.mxu0
  %v4264 = vadd.f32 0.0, %v4263
  %v4265 = vpop.f32.mrf.mxu0
  %4266 = vmatprep.mubr.f32.mxu0 0.0
  %4267 = vmatmul.mubr.f32.gmra.mxu0 %v275
  %v4268 = vpop.f32.mrf.mxu0
  %v4269 = vadd.f32 0.0, %v4268
  %v4270 = vpop.f32.mrf.mxu0
  %4271 = vdwg.mxu0
  %v4272 = vadd.f32 %v3823, %v3954
  %v4273 = vadd.f32 %v3824, %v3959
  %v4274 = vadd.f32 %v3825, %v3964
  %v4275 = vadd.f32 %v3826, %v3969
  %v4276 = vadd.f32 %v3827, %v3974
  %v4277 = vadd.f32 %v3828, %v3979
  %v4278 = vadd.f32 %v3829, %v3984
  %v4279 = vadd.f32 %v3830, %v3989
  %v4280 = vadd.f32 %v3831, %v3994
  %v4281 = vadd.f32 %v3832, %v3999
  %v4282 = vadd.f32 %v3833, %v4004
  %v4283 = vadd.f32 %v3834, %v4009
  %v4284 = vadd.f32 %v3835, %v4014
  %v4285 = vadd.f32 %v3836, %v4019
  %v4286 = vadd.f32 %v3837, %v4024
  %v4287 = vadd.f32 %v3838, %v4029
  %v4288 = vadd.f32 %v3839, %v4034
  %v4289 = vadd.f32 %v3840, %v4039
  %v4290 = vadd.f32 %v3841, %v4044
  %v4291 = vadd.f32 %v3842, %v4049
  %v4292 = vadd.f32 %v3843, %v4054
  %v4293 = vadd.f32 %v3844, %v4059
  %v4294 = vadd.f32 %v3845, %v4064
  %v4295 = vadd.f32 %v3846, %v4069
  %v4296 = vadd.f32 %v3847, %v4074
  %v4297 = vadd.f32 %v3848, %v4079
  %v4298 = vadd.f32 %v3849, %v4084
  %v4299 = vadd.f32 %v3850, %v4089
  %v4300 = vadd.f32 %v3851, %v4094
  %v4301 = vadd.f32 %v3852, %v4099
  %v4302 = vadd.f32 %v3853, %v4104
  %v4303 = vadd.f32 %v3854, %v4109
  %v4304 = vadd.f32 %v3855, %v4114
  %v4305 = vadd.f32 %v3856, %v4119
  %v4306 = vadd.f32 %v3857, %v4124
  %v4307 = vadd.f32 %v3858, %v4129
  %v4308 = vadd.f32 %v3859, %v4134
  %v4309 = vadd.f32 %v3860, %v4139
  %v4310 = vadd.f32 %v3861, %v4144
  %v4311 = vadd.f32 %v3862, %v4149
  %v4312 = vadd.f32 %v3863, %v4154
  %v4313 = vadd.f32 %v3864, %v4159
  %v4314 = vadd.f32 %v3865, %v4164
  %v4315 = vadd.f32 %v3866, %v4169
  %v4316 = vadd.f32 %v3867, %v4174
  %v4317 = vadd.f32 %v3868, %v4179
  %v4318 = vadd.f32 %v3869, %v4184
  %v4319 = vadd.f32 %v3870, %v4189
  %v4320 = vadd.f32 %v3871, %v4194
  %v4321 = vadd.f32 %v3872, %v4199
  %v4322 = vadd.f32 %v3873, %v4204
  %v4323 = vadd.f32 %v3874, %v4209
  %v4324 = vadd.f32 %v3875, %v4214
  %v4325 = vadd.f32 %v3876, %v4219
  %v4326 = vadd.f32 %v3877, %v4224
  %v4327 = vadd.f32 %v3878, %v4229
  %v4328 = vadd.f32 %v3879, %v4234
  %v4329 = vadd.f32 %v3880, %v4239
  %v4330 = vadd.f32 %v3881, %v4244
  %v4331 = vadd.f32 %v3882, %v4249
  %v4332 = vadd.f32 %v3883, %v4254
  %v4333 = vadd.f32 %v3884, %v4259
  %v4334 = vadd.f32 %v3885, %v4264
  %v4335 = vadd.f32 %v3886, %v4269
  %v4337 = vlaneseq
  %v4338 = vshrl.u32 %v4337, 7
  %v4339 = vsub.s32 0, %v4338
  %v4340 = vrot.slane %v420, %v4339
  %v4342 = vadd.f32 %v4272, %v4340
  %v4343 = vadd.f32 %v4273, %v4340
  %v4344 = vadd.f32 %v4274, %v4340
  %v4345 = vadd.f32 %v4275, %v4340
  %v4346 = vadd.f32 %v4276, %v4340
  %v4347 = vadd.f32 %v4277, %v4340
  %v4348 = vadd.f32 %v4278, %v4340
  %v4349 = vadd.f32 %v4279, %v4340
  %v4350 = vadd.f32 %v4280, %v4340
  %v4351 = vadd.f32 %v4281, %v4340
  %v4352 = vadd.f32 %v4282, %v4340
  %v4353 = vadd.f32 %v4283, %v4340
  %v4354 = vadd.f32 %v4284, %v4340
  %v4355 = vadd.f32 %v4285, %v4340
  %v4356 = vadd.f32 %v4286, %v4340
  %v4357 = vadd.f32 %v4287, %v4340
  %v4358 = vadd.f32 %v4288, %v4340
  %v4359 = vadd.f32 %v4289, %v4340
  %v4360 = vadd.f32 %v4290, %v4340
  %v4361 = vadd.f32 %v4291, %v4340
  %v4362 = vadd.f32 %v4292, %v4340
  %v4363 = vadd.f32 %v4293, %v4340
  %v4364 = vadd.f32 %v4294, %v4340
  %v4365 = vadd.f32 %v4295, %v4340
  %v4366 = vadd.f32 %v4296, %v4340
  %v4367 = vadd.f32 %v4297, %v4340
  %v4368 = vadd.f32 %v4298, %v4340
  %v4369 = vadd.f32 %v4299, %v4340
  %v4370 = vadd.f32 %v4300, %v4340
  %v4371 = vadd.f32 %v4301, %v4340
  %v4372 = vadd.f32 %v4302, %v4340
  %v4373 = vadd.f32 %v4303, %v4340
  %v4374 = vadd.f32 %v4304, %v4340
  %v4375 = vadd.f32 %v4305, %v4340
  %v4376 = vadd.f32 %v4306, %v4340
  %v4377 = vadd.f32 %v4307, %v4340
  %v4378 = vadd.f32 %v4308, %v4340
  %v4379 = vadd.f32 %v4309, %v4340
  %v4380 = vadd.f32 %v4310, %v4340
  %v4381 = vadd.f32 %v4311, %v4340
  %v4382 = vadd.f32 %v4312, %v4340
  %v4383 = vadd.f32 %v4313, %v4340
  %v4384 = vadd.f32 %v4314, %v4340
  %v4385 = vadd.f32 %v4315, %v4340
  %v4386 = vadd.f32 %v4316, %v4340
  %v4387 = vadd.f32 %v4317, %v4340
  %v4388 = vadd.f32 %v4318, %v4340
  %v4389 = vadd.f32 %v4319, %v4340
  %v4390 = vadd.f32 %v4320, %v4340
  %v4391 = vadd.f32 %v4321, %v4340
  %v4392 = vadd.f32 %v4322, %v4340
  %v4393 = vadd.f32 %v4323, %v4340
  %v4394 = vadd.f32 %v4324, %v4340
  %v4395 = vadd.f32 %v4325, %v4340
  %v4396 = vadd.f32 %v4326, %v4340
  %v4397 = vadd.f32 %v4327, %v4340
  %v4398 = vadd.f32 %v4328, %v4340
  %v4399 = vadd.f32 %v4329, %v4340
  %v4400 = vadd.f32 %v4330, %v4340
  %v4401 = vadd.f32 %v4331, %v4340
  %v4402 = vadd.f32 %v4332, %v4340
  %v4403 = vadd.f32 %v4333, %v4340
  %v4404 = vadd.f32 %v4334, %v4340
  %v4405 = vadd.f32 %v4335, %v4340
  %v4406 = vmax.f32 %v4342, 0.0
  %v4407 = vmax.f32 %v4343, 0.0
  %v4408 = vmax.f32 %v4344, 0.0
  %v4409 = vmax.f32 %v4345, 0.0
  %v4410 = vmax.f32 %v4346, 0.0
  %v4411 = vmax.f32 %v4347, 0.0
  %v4412 = vmax.f32 %v4348, 0.0
  %v4413 = vmax.f32 %v4349, 0.0
  %v4414 = vmax.f32 %v4350, 0.0
  %v4415 = vmax.f32 %v4351, 0.0
  %v4416 = vmax.f32 %v4352, 0.0
  %v4417 = vmax.f32 %v4353, 0.0
  %v4418 = vmax.f32 %v4354, 0.0
  %v4419 = vmax.f32 %v4355, 0.0
  %v4420 = vmax.f32 %v4356, 0.0
  %v4421 = vmax.f32 %v4357, 0.0
  %v4422 = vmax.f32 %v4358, 0.0
  %v4423 = vmax.f32 %v4359, 0.0
  %v4424 = vmax.f32 %v4360, 0.0
  %v4425 = vmax.f32 %v4361, 0.0
  %v4426 = vmax.f32 %v4362, 0.0
  %v4427 = vmax.f32 %v4363, 0.0
  %v4428 = vmax.f32 %v4364, 0.0
  %v4429 = vmax.f32 %v4365, 0.0
  %v4430 = vmax.f32 %v4366, 0.0
  %v4431 = vmax.f32 %v4367, 0.0
  %v4432 = vmax.f32 %v4368, 0.0
  %v4433 = vmax.f32 %v4369, 0.0
  %v4434 = vmax.f32 %v4370, 0.0
  %v4435 = vmax.f32 %v4371, 0.0
  %v4436 = vmax.f32 %v4372, 0.0
  %v4437 = vmax.f32 %v4373, 0.0
  %v4438 = vmax.f32 %v4374, 0.0
  %v4439 = vmax.f32 %v4375, 0.0
  %v4440 = vmax.f32 %v4376, 0.0
  %v4441 = vmax.f32 %v4377, 0.0
  %v4442 = vmax.f32 %v4378, 0.0
  %v4443 = vmax.f32 %v4379, 0.0
  %v4444 = vmax.f32 %v4380, 0.0
  %v4445 = vmax.f32 %v4381, 0.0
  %v4446 = vmax.f32 %v4382, 0.0
  %v4447 = vmax.f32 %v4383, 0.0
  %v4448 = vmax.f32 %v4384, 0.0
  %v4449 = vmax.f32 %v4385, 0.0
  %v4450 = vmax.f32 %v4386, 0.0
  %v4451 = vmax.f32 %v4387, 0.0
  %v4452 = vmax.f32 %v4388, 0.0
  %v4453 = vmax.f32 %v4389, 0.0
  %v4454 = vmax.f32 %v4390, 0.0
  %v4455 = vmax.f32 %v4391, 0.0
  %v4456 = vmax.f32 %v4392, 0.0
  %v4457 = vmax.f32 %v4393, 0.0
  %v4458 = vmax.f32 %v4394, 0.0
  %v4459 = vmax.f32 %v4395, 0.0
  %v4460 = vmax.f32 %v4396, 0.0
  %v4461 = vmax.f32 %v4397, 0.0
  %v4462 = vmax.f32 %v4398, 0.0
  %v4463 = vmax.f32 %v4399, 0.0
  %v4464 = vmax.f32 %v4400, 0.0
  %v4465 = vmax.f32 %v4401, 0.0
  %v4466 = vmax.f32 %v4402, 0.0
  %v4467 = vmax.f32 %v4403, 0.0
  %v4468 = vmax.f32 %v4404, 0.0
  %v4469 = vmax.f32 %v4405, 0.0
  %v4470 = vlaneseq
  %v4471 = vshrl.u32 %v4470, 7
  %v4472 = vadd.s32 %v4471, 8
  %v4473 = vadd.s32 %v4471, 16
  %v4474 = vadd.s32 %v4471, 24
  %v4475 = vadd.s32 %v4471, 32
  %v4476 = vadd.s32 %v4471, 40
  %v4477 = vadd.s32 %v4471, 48
  %v4478 = vadd.s32 %v4471, 56
  %v4479 = vadd.s32 %v4471, 64
  %v4480 = vadd.s32 %v4471, 72
  %v4481 = vadd.s32 %v4471, 80
  %v4482 = vadd.s32 %v4471, 88
  %v4483 = vadd.s32 %v4471, 96
  %v4484 = vadd.s32 %v4471, 104
  %v4485 = vadd.s32 %v4471, 112
  %v4486 = vadd.s32 %v4471, 120
  %v4487 = vadd.s32 %v4471, 128
  %v4488 = vadd.s32 %v4471, 136
  %v4489 = vadd.s32 %v4471, 144
  %v4490 = vadd.s32 %v4471, 152
  %v4491 = vadd.s32 %v4471, 160
  %v4492 = vadd.s32 %v4471, 168
  %v4493 = vadd.s32 %v4471, 176
  %v4494 = vadd.s32 %v4471, 184
  %v4495 = vadd.s32 %v4471, 192
  %v4496 = vadd.s32 %v4471, 200
  %v4497 = vadd.s32 %v4471, 208
  %v4498 = vadd.s32 %v4471, 216
  %v4499 = vadd.s32 %v4471, 224
  %v4500 = vadd.s32 %v4471, 232
  %v4501 = vadd.s32 %v4471, 240
  %v4502 = vadd.s32 %v4471, 248
  %v4503 = vadd.s32 %v4471, 256
  %v4504 = vadd.s32 %v4471, 264
  %v4505 = vadd.s32 %v4471, 272
  %v4506 = vadd.s32 %v4471, 280
  %v4507 = vadd.s32 %v4471, 288
  %v4508 = vadd.s32 %v4471, 296
  %v4509 = vadd.s32 %v4471, 304
  %v4510 = vadd.s32 %v4471, 312
  %v4511 = vadd.s32 %v4471, 320
  %v4512 = vadd.s32 %v4471, 328
  %v4513 = vadd.s32 %v4471, 336
  %v4514 = vadd.s32 %v4471, 344
  %v4515 = vadd.s32 %v4471, 352
  %v4516 = vadd.s32 %v4471, 360
  %v4517 = vadd.s32 %v4471, 368
  %v4518 = vadd.s32 %v4471, 376
  %v4519 = vadd.s32 %v4471, 384
  %v4520 = vadd.s32 %v4471, 392
  %v4521 = vadd.s32 %v4471, 400
  %v4522 = vadd.s32 %v4471, 408
  %v4523 = vadd.s32 %v4471, 416
  %v4524 = vadd.s32 %v4471, 424
  %v4525 = vadd.s32 %v4471, 432
  %v4526 = vadd.s32 %v4471, 440
  %v4527 = vadd.s32 %v4471, 448
  %v4528 = vadd.s32 %v4471, 456
  %v4529 = vadd.s32 %v4471, 464
  %v4530 = vadd.s32 %v4471, 472
  %v4531 = vadd.s32 %v4471, 480
  %v4532 = vadd.s32 %v4471, 488
  %v4533 = vadd.s32 %v4471, 496
  %v4534 = vadd.s32 %v4471, 504
  %v4535 = vand.u32 %v4471, 7
  %v4536 = vand.u32 %v4472, 7
  %v4537 = vand.u32 %v4473, 7
  %v4538 = vand.u32 %v4474, 7
  %v4539 = vand.u32 %v4475, 7
  %v4540 = vand.u32 %v4476, 7
  %v4541 = vand.u32 %v4477, 7
  %v4542 = vand.u32 %v4478, 7
  %v4543 = vand.u32 %v4479, 7
  %v4544 = vand.u32 %v4480, 7
  %v4545 = vand.u32 %v4481, 7
  %v4546 = vand.u32 %v4482, 7
  %v4547 = vand.u32 %v4483, 7
  %v4548 = vand.u32 %v4484, 7
  %v4549 = vand.u32 %v4485, 7
  %v4550 = vand.u32 %v4486, 7
  %v4551 = vand.u32 %v4487, 7
  %v4552 = vand.u32 %v4488, 7
  %v4553 = vand.u32 %v4489, 7
  %v4554 = vand.u32 %v4490, 7
  %v4555 = vand.u32 %v4491, 7
  %v4556 = vand.u32 %v4492, 7
  %v4557 = vand.u32 %v4493, 7
  %v4558 = vand.u32 %v4494, 7
  %v4559 = vand.u32 %v4495, 7
  %v4560 = vand.u32 %v4496, 7
  %v4561 = vand.u32 %v4497, 7
  %v4562 = vand.u32 %v4498, 7
  %v4563 = vand.u32 %v4499, 7
  %v4564 = vand.u32 %v4500, 7
  %v4565 = vand.u32 %v4501, 7
  %v4566 = vand.u32 %v4502, 7
  %v4567 = vand.u32 %v4503, 7
  %v4568 = vand.u32 %v4504, 7
  %v4569 = vand.u32 %v4505, 7
  %v4570 = vand.u32 %v4506, 7
  %v4571 = vand.u32 %v4507, 7
  %v4572 = vand.u32 %v4508, 7
  %v4573 = vand.u32 %v4509, 7
  %v4574 = vand.u32 %v4510, 7
  %v4575 = vand.u32 %v4511, 7
  %v4576 = vand.u32 %v4512, 7
  %v4577 = vand.u32 %v4513, 7
  %v4578 = vand.u32 %v4514, 7
  %v4579 = vand.u32 %v4515, 7
  %v4580 = vand.u32 %v4516, 7
  %v4581 = vand.u32 %v4517, 7
  %v4582 = vand.u32 %v4518, 7
  %v4583 = vand.u32 %v4519, 7
  %v4584 = vand.u32 %v4520, 7
  %v4585 = vand.u32 %v4521, 7
  %v4586 = vand.u32 %v4522, 7
  %v4587 = vand.u32 %v4523, 7
  %v4588 = vand.u32 %v4524, 7
  %v4589 = vand.u32 %v4525, 7
  %v4590 = vand.u32 %v4526, 7
  %v4591 = vand.u32 %v4527, 7
  %v4592 = vand.u32 %v4528, 7
  %v4593 = vand.u32 %v4529, 7
  %v4594 = vand.u32 %v4530, 7
  %v4595 = vand.u32 %v4531, 7
  %v4596 = vand.u32 %v4532, 7
  %v4597 = vand.u32 %v4533, 7
  %v4598 = vand.u32 %v4534, 7
  %vm4599 = vcmp.lt.s32.totalorder %v4535, 2
  %vm4600 = vcmp.lt.s32.totalorder %v4536, 2
  %vm4601 = vcmp.lt.s32.totalorder %v4537, 2
  %vm4602 = vcmp.lt.s32.totalorder %v4538, 2
  %vm4603 = vcmp.lt.s32.totalorder %v4539, 2
  %vm4604 = vcmp.lt.s32.totalorder %v4540, 2
  %vm4605 = vcmp.lt.s32.totalorder %v4541, 2
  %vm4606 = vcmp.lt.s32.totalorder %v4542, 2
  %vm4607 = vcmp.lt.s32.totalorder %v4543, 2
  %vm4608 = vcmp.lt.s32.totalorder %v4544, 2
  %vm4609 = vcmp.lt.s32.totalorder %v4545, 2
  %vm4610 = vcmp.lt.s32.totalorder %v4546, 2
  %vm4611 = vcmp.lt.s32.totalorder %v4547, 2
  %vm4612 = vcmp.lt.s32.totalorder %v4548, 2
  %vm4613 = vcmp.lt.s32.totalorder %v4549, 2
  %vm4614 = vcmp.lt.s32.totalorder %v4550, 2
  %vm4615 = vcmp.lt.s32.totalorder %v4551, 2
  %vm4616 = vcmp.lt.s32.totalorder %v4552, 2
  %vm4617 = vcmp.lt.s32.totalorder %v4553, 2
  %vm4618 = vcmp.lt.s32.totalorder %v4554, 2
  %vm4619 = vcmp.lt.s32.totalorder %v4555, 2
  %vm4620 = vcmp.lt.s32.totalorder %v4556, 2
  %vm4621 = vcmp.lt.s32.totalorder %v4557, 2
  %vm4622 = vcmp.lt.s32.totalorder %v4558, 2
  %vm4623 = vcmp.lt.s32.totalorder %v4559, 2
  %vm4624 = vcmp.lt.s32.totalorder %v4560, 2
  %vm4625 = vcmp.lt.s32.totalorder %v4561, 2
  %vm4626 = vcmp.lt.s32.totalorder %v4562, 2
  %vm4627 = vcmp.lt.s32.totalorder %v4563, 2
  %vm4628 = vcmp.lt.s32.totalorder %v4564, 2
  %vm4629 = vcmp.lt.s32.totalorder %v4565, 2
  %vm4630 = vcmp.lt.s32.totalorder %v4566, 2
  %vm4631 = vcmp.lt.s32.totalorder %v4567, 2
  %vm4632 = vcmp.lt.s32.totalorder %v4568, 2
  %vm4633 = vcmp.lt.s32.totalorder %v4569, 2
  %vm4634 = vcmp.lt.s32.totalorder %v4570, 2
  %vm4635 = vcmp.lt.s32.totalorder %v4571, 2
  %vm4636 = vcmp.lt.s32.totalorder %v4572, 2
  %vm4637 = vcmp.lt.s32.totalorder %v4573, 2
  %vm4638 = vcmp.lt.s32.totalorder %v4574, 2
  %vm4639 = vcmp.lt.s32.totalorder %v4575, 2
  %vm4640 = vcmp.lt.s32.totalorder %v4576, 2
  %vm4641 = vcmp.lt.s32.totalorder %v4577, 2
  %vm4642 = vcmp.lt.s32.totalorder %v4578, 2
  %vm4643 = vcmp.lt.s32.totalorder %v4579, 2
  %vm4644 = vcmp.lt.s32.totalorder %v4580, 2
  %vm4645 = vcmp.lt.s32.totalorder %v4581, 2
  %vm4646 = vcmp.lt.s32.totalorder %v4582, 2
  %vm4647 = vcmp.lt.s32.totalorder %v4583, 2
  %vm4648 = vcmp.lt.s32.totalorder %v4584, 2
  %vm4649 = vcmp.lt.s32.totalorder %v4585, 2
  %vm4650 = vcmp.lt.s32.totalorder %v4586, 2
  %vm4651 = vcmp.lt.s32.totalorder %v4587, 2
  %vm4652 = vcmp.lt.s32.totalorder %v4588, 2
  %vm4653 = vcmp.lt.s32.totalorder %v4589, 2
  %vm4654 = vcmp.lt.s32.totalorder %v4590, 2
  %vm4655 = vcmp.lt.s32.totalorder %v4591, 2
  %vm4656 = vcmp.lt.s32.totalorder %v4592, 2
  %vm4657 = vcmp.lt.s32.totalorder %v4593, 2
  %vm4658 = vcmp.lt.s32.totalorder %v4594, 2
  %vm4659 = vcmp.lt.s32.totalorder %v4595, 2
  %vm4660 = vcmp.lt.s32.totalorder %v4596, 2
  %vm4661 = vcmp.lt.s32.totalorder %v4597, 2
  %vm4662 = vcmp.lt.s32.totalorder %v4598, 2
  %v4663 = vsel %vm4599, 1, 0
  %v4664 = vsel %vm4600, 1, 0
  %v4665 = vsel %vm4601, 1, 0
  %v4666 = vsel %vm4602, 1, 0
  %v4667 = vsel %vm4603, 1, 0
  %v4668 = vsel %vm4604, 1, 0
  %v4669 = vsel %vm4605, 1, 0
  %v4670 = vsel %vm4606, 1, 0
  %v4671 = vsel %vm4607, 1, 0
  %v4672 = vsel %vm4608, 1, 0
  %v4673 = vsel %vm4609, 1, 0
  %v4674 = vsel %vm4610, 1, 0
  %v4675 = vsel %vm4611, 1, 0
  %v4676 = vsel %vm4612, 1, 0
  %v4677 = vsel %vm4613, 1, 0
  %v4678 = vsel %vm4614, 1, 0
  %v4679 = vsel %vm4615, 1, 0
  %v4680 = vsel %vm4616, 1, 0
  %v4681 = vsel %vm4617, 1, 0
  %v4682 = vsel %vm4618, 1, 0
  %v4683 = vsel %vm4619, 1, 0
  %v4684 = vsel %vm4620, 1, 0
  %v4685 = vsel %vm4621, 1, 0
  %v4686 = vsel %vm4622, 1, 0
  %v4687 = vsel %vm4623, 1, 0
  %v4688 = vsel %vm4624, 1, 0
  %v4689 = vsel %vm4625, 1, 0
  %v4690 = vsel %vm4626, 1, 0
  %v4691 = vsel %vm4627, 1, 0
  %v4692 = vsel %vm4628, 1, 0
  %v4693 = vsel %vm4629, 1, 0
  %v4694 = vsel %vm4630, 1, 0
  %v4695 = vsel %vm4631, 1, 0
  %v4696 = vsel %vm4632, 1, 0
  %v4697 = vsel %vm4633, 1, 0
  %v4698 = vsel %vm4634, 1, 0
  %v4699 = vsel %vm4635, 1, 0
  %v4700 = vsel %vm4636, 1, 0
  %v4701 = vsel %vm4637, 1, 0
  %v4702 = vsel %vm4638, 1, 0
  %v4703 = vsel %vm4639, 1, 0
  %v4704 = vsel %vm4640, 1, 0
  %v4705 = vsel %vm4641, 1, 0
  %v4706 = vsel %vm4642, 1, 0
  %v4707 = vsel %vm4643, 1, 0
  %v4708 = vsel %vm4644, 1, 0
  %v4709 = vsel %vm4645, 1, 0
  %v4710 = vsel %vm4646, 1, 0
  %v4711 = vsel %vm4647, 1, 0
  %v4712 = vsel %vm4648, 1, 0
  %v4713 = vsel %vm4649, 1, 0
  %v4714 = vsel %vm4650, 1, 0
  %v4715 = vsel %vm4651, 1, 0
  %v4716 = vsel %vm4652, 1, 0
  %v4717 = vsel %vm4653, 1, 0
  %v4718 = vsel %vm4654, 1, 0
  %v4719 = vsel %vm4655, 1, 0
  %v4720 = vsel %vm4656, 1, 0
  %v4721 = vsel %vm4657, 1, 0
  %v4722 = vsel %vm4658, 1, 0
  %v4723 = vsel %vm4659, 1, 0
  %v4724 = vsel %vm4660, 1, 0
  %v4725 = vsel %vm4661, 1, 0
  %v4726 = vsel %vm4662, 1, 0
  %v4727 = vcvt.s32.f32 %v4663
  %v4728 = vcvt.s32.f32 %v4664
  %v4729 = vcvt.s32.f32 %v4665
  %v4730 = vcvt.s32.f32 %v4666
  %v4731 = vcvt.s32.f32 %v4667
  %v4732 = vcvt.s32.f32 %v4668
  %v4733 = vcvt.s32.f32 %v4669
  %v4734 = vcvt.s32.f32 %v4670
  %v4735 = vcvt.s32.f32 %v4671
  %v4736 = vcvt.s32.f32 %v4672
  %v4737 = vcvt.s32.f32 %v4673
  %v4738 = vcvt.s32.f32 %v4674
  %v4739 = vcvt.s32.f32 %v4675
  %v4740 = vcvt.s32.f32 %v4676
  %v4741 = vcvt.s32.f32 %v4677
  %v4742 = vcvt.s32.f32 %v4678
  %v4743 = vcvt.s32.f32 %v4679
  %v4744 = vcvt.s32.f32 %v4680
  %v4745 = vcvt.s32.f32 %v4681
  %v4746 = vcvt.s32.f32 %v4682
  %v4747 = vcvt.s32.f32 %v4683
  %v4748 = vcvt.s32.f32 %v4684
  %v4749 = vcvt.s32.f32 %v4685
  %v4750 = vcvt.s32.f32 %v4686
  %v4751 = vcvt.s32.f32 %v4687
  %v4752 = vcvt.s32.f32 %v4688
  %v4753 = vcvt.s32.f32 %v4689
  %v4754 = vcvt.s32.f32 %v4690
  %v4755 = vcvt.s32.f32 %v4691
  %v4756 = vcvt.s32.f32 %v4692
  %v4757 = vcvt.s32.f32 %v4693
  %v4758 = vcvt.s32.f32 %v4694
  %v4759 = vcvt.s32.f32 %v4695
  %v4760 = vcvt.s32.f32 %v4696
  %v4761 = vcvt.s32.f32 %v4697
  %v4762 = vcvt.s32.f32 %v4698
  %v4763 = vcvt.s32.f32 %v4699
  %v4764 = vcvt.s32.f32 %v4700
  %v4765 = vcvt.s32.f32 %v4701
  %v4766 = vcvt.s32.f32 %v4702
  %v4767 = vcvt.s32.f32 %v4703
  %v4768 = vcvt.s32.f32 %v4704
  %v4769 = vcvt.s32.f32 %v4705
  %v4770 = vcvt.s32.f32 %v4706
  %v4771 = vcvt.s32.f32 %v4707
  %v4772 = vcvt.s32.f32 %v4708
  %v4773 = vcvt.s32.f32 %v4709
  %v4774 = vcvt.s32.f32 %v4710
  %v4775 = vcvt.s32.f32 %v4711
  %v4776 = vcvt.s32.f32 %v4712
  %v4777 = vcvt.s32.f32 %v4713
  %v4778 = vcvt.s32.f32 %v4714
  %v4779 = vcvt.s32.f32 %v4715
  %v4780 = vcvt.s32.f32 %v4716
  %v4781 = vcvt.s32.f32 %v4717
  %v4782 = vcvt.s32.f32 %v4718
  %v4783 = vcvt.s32.f32 %v4719
  %v4784 = vcvt.s32.f32 %v4720
  %v4785 = vcvt.s32.f32 %v4721
  %v4786 = vcvt.s32.f32 %v4722
  %v4787 = vcvt.s32.f32 %v4723
  %v4788 = vcvt.s32.f32 %v4724
  %v4789 = vcvt.s32.f32 %v4725
  %v4790 = vcvt.s32.f32 %v4726
  %v4791 = vmul.f32 %v4406, %v4727
  %v4792 = vmul.f32 %v4407, %v4728
  %v4793 = vmul.f32 %v4408, %v4729
  %v4794 = vmul.f32 %v4409, %v4730
  %v4795 = vmul.f32 %v4410, %v4731
  %v4796 = vmul.f32 %v4411, %v4732
  %v4797 = vmul.f32 %v4412, %v4733
  %v4798 = vmul.f32 %v4413, %v4734
  %v4799 = vmul.f32 %v4414, %v4735
  %v4800 = vmul.f32 %v4415, %v4736
  %v4801 = vmul.f32 %v4416, %v4737
  %v4802 = vmul.f32 %v4417, %v4738
  %v4803 = vmul.f32 %v4418, %v4739
  %v4804 = vmul.f32 %v4419, %v4740
  %v4805 = vmul.f32 %v4420, %v4741
  %v4806 = vmul.f32 %v4421, %v4742
  %v4807 = vmul.f32 %v4422, %v4743
  %v4808 = vmul.f32 %v4423, %v4744
  %v4809 = vmul.f32 %v4424, %v4745
  %v4810 = vmul.f32 %v4425, %v4746
  %v4811 = vmul.f32 %v4426, %v4747
  %v4812 = vmul.f32 %v4427, %v4748
  %v4813 = vmul.f32 %v4428, %v4749
  %v4814 = vmul.f32 %v4429, %v4750
  %v4815 = vmul.f32 %v4430, %v4751
  %v4816 = vmul.f32 %v4431, %v4752
  %v4817 = vmul.f32 %v4432, %v4753
  %v4818 = vmul.f32 %v4433, %v4754
  %v4819 = vmul.f32 %v4434, %v4755
  %v4820 = vmul.f32 %v4435, %v4756
  %v4821 = vmul.f32 %v4436, %v4757
  %v4822 = vmul.f32 %v4437, %v4758
  %v4823 = vmul.f32 %v4438, %v4759
  %v4824 = vmul.f32 %v4439, %v4760
  %v4825 = vmul.f32 %v4440, %v4761
  %v4826 = vmul.f32 %v4441, %v4762
  %v4827 = vmul.f32 %v4442, %v4763
  %v4828 = vmul.f32 %v4443, %v4764
  %v4829 = vmul.f32 %v4444, %v4765
  %v4830 = vmul.f32 %v4445, %v4766
  %v4831 = vmul.f32 %v4446, %v4767
  %v4832 = vmul.f32 %v4447, %v4768
  %v4833 = vmul.f32 %v4448, %v4769
  %v4834 = vmul.f32 %v4449, %v4770
  %v4835 = vmul.f32 %v4450, %v4771
  %v4836 = vmul.f32 %v4451, %v4772
  %v4837 = vmul.f32 %v4452, %v4773
  %v4838 = vmul.f32 %v4453, %v4774
  %v4839 = vmul.f32 %v4454, %v4775
  %v4840 = vmul.f32 %v4455, %v4776
  %v4841 = vmul.f32 %v4456, %v4777
  %v4842 = vmul.f32 %v4457, %v4778
  %v4843 = vmul.f32 %v4458, %v4779
  %v4844 = vmul.f32 %v4459, %v4780
  %v4845 = vmul.f32 %v4460, %v4781
  %v4846 = vmul.f32 %v4461, %v4782
  %v4847 = vmul.f32 %v4462, %v4783
  %v4848 = vmul.f32 %v4463, %v4784
  %v4849 = vmul.f32 %v4464, %v4785
  %v4850 = vmul.f32 %v4465, %v4786
  %v4851 = vmul.f32 %v4466, %v4787
  %v4852 = vmul.f32 %v4467, %v4788
  %v4853 = vmul.f32 %v4468, %v4789
  %v4854 = vmul.f32 %v4469, %v4790
  %v4855 = vadd.f32 %v4791, %v4792
  %v4856 = vadd.f32 %v4855, %v4793
  %v4857 = vadd.f32 %v4856, %v4794
  %v4858 = vadd.f32 %v4857, %v4795
  %v4859 = vadd.f32 %v4858, %v4796
  %v4860 = vadd.f32 %v4859, %v4797
  %v4861 = vadd.f32 %v4860, %v4798
  %v4862 = vadd.f32 %v4861, %v4799
  %v4863 = vadd.f32 %v4862, %v4800
  %v4864 = vadd.f32 %v4863, %v4801
  %v4865 = vadd.f32 %v4864, %v4802
  %v4866 = vadd.f32 %v4865, %v4803
  %v4867 = vadd.f32 %v4866, %v4804
  %v4868 = vadd.f32 %v4867, %v4805
  %v4869 = vadd.f32 %v4868, %v4806
  %v4870 = vadd.f32 %v4869, %v4807
  %v4871 = vadd.f32 %v4870, %v4808
  %v4872 = vadd.f32 %v4871, %v4809
  %v4873 = vadd.f32 %v4872, %v4810
  %v4874 = vadd.f32 %v4873, %v4811
  %v4875 = vadd.f32 %v4874, %v4812
  %v4876 = vadd.f32 %v4875, %v4813
  %v4877 = vadd.f32 %v4876, %v4814
  %v4878 = vadd.f32 %v4877, %v4815
  %v4879 = vadd.f32 %v4878, %v4816
  %v4880 = vadd.f32 %v4879, %v4817
  %v4881 = vadd.f32 %v4880, %v4818
  %v4882 = vadd.f32 %v4881, %v4819
  %v4883 = vadd.f32 %v4882, %v4820
  %v4884 = vadd.f32 %v4883, %v4821
  %v4885 = vadd.f32 %v4884, %v4822
  %v4886 = vadd.f32 %v4885, %v4823
  %v4887 = vadd.f32 %v4886, %v4824
  %v4888 = vadd.f32 %v4887, %v4825
  %v4889 = vadd.f32 %v4888, %v4826
  %v4890 = vadd.f32 %v4889, %v4827
  %v4891 = vadd.f32 %v4890, %v4828
  %v4892 = vadd.f32 %v4891, %v4829
  %v4893 = vadd.f32 %v4892, %v4830
  %v4894 = vadd.f32 %v4893, %v4831
  %v4895 = vadd.f32 %v4894, %v4832
  %v4896 = vadd.f32 %v4895, %v4833
  %v4897 = vadd.f32 %v4896, %v4834
  %v4898 = vadd.f32 %v4897, %v4835
  %v4899 = vadd.f32 %v4898, %v4836
  %v4900 = vadd.f32 %v4899, %v4837
  %v4901 = vadd.f32 %v4900, %v4838
  %v4902 = vadd.f32 %v4901, %v4839
  %v4903 = vadd.f32 %v4902, %v4840
  %v4904 = vadd.f32 %v4903, %v4841
  %v4905 = vadd.f32 %v4904, %v4842
  %v4906 = vadd.f32 %v4905, %v4843
  %v4907 = vadd.f32 %v4906, %v4844
  %v4908 = vadd.f32 %v4907, %v4845
  %v4909 = vadd.f32 %v4908, %v4846
  %v4910 = vadd.f32 %v4909, %v4847
  %v4911 = vadd.f32 %v4910, %v4848
  %v4912 = vadd.f32 %v4911, %v4849
  %v4913 = vadd.f32 %v4912, %v4850
  %v4914 = vadd.f32 %v4913, %v4851
  %v4915 = vadd.f32 %v4914, %v4852
  %v4916 = vadd.f32 %v4915, %v4853
  %v4917 = vadd.f32 %v4916, %v4854
  %v4918 = vrot.slane %v4917, 4
  %v4919 = vadd.f32 %v4917, %v4918
  %v4920 = vrot.slane %v4919, 2
  %v4921 = vadd.f32 %v4919, %v4920
  %v4922 = vrot.slane %v4921, 1
  %v4923 = vadd.f32 %v4921, %v4922
  %v4924 = vmul.f32 %v4406, %v4406
  %v4925 = vmul.f32 %v4407, %v4407
  %v4926 = vmul.f32 %v4408, %v4408
  %v4927 = vmul.f32 %v4409, %v4409
  %v4928 = vmul.f32 %v4410, %v4410
  %v4929 = vmul.f32 %v4411, %v4411
  %v4930 = vmul.f32 %v4412, %v4412
  %v4931 = vmul.f32 %v4413, %v4413
  %v4932 = vmul.f32 %v4414, %v4414
  %v4933 = vmul.f32 %v4415, %v4415
  %v4934 = vmul.f32 %v4416, %v4416
  %v4935 = vmul.f32 %v4417, %v4417
  %v4936 = vmul.f32 %v4418, %v4418
  %v4937 = vmul.f32 %v4419, %v4419
  %v4938 = vmul.f32 %v4420, %v4420
  %v4939 = vmul.f32 %v4421, %v4421
  %v4940 = vmul.f32 %v4422, %v4422
  %v4941 = vmul.f32 %v4423, %v4423
  %v4942 = vmul.f32 %v4424, %v4424
  %v4943 = vmul.f32 %v4425, %v4425
  %v4944 = vmul.f32 %v4426, %v4426
  %v4945 = vmul.f32 %v4427, %v4427
  %v4946 = vmul.f32 %v4428, %v4428
  %v4947 = vmul.f32 %v4429, %v4429
  %v4948 = vmul.f32 %v4430, %v4430
  %v4949 = vmul.f32 %v4431, %v4431
  %v4950 = vmul.f32 %v4432, %v4432
  %v4951 = vmul.f32 %v4433, %v4433
  %v4952 = vmul.f32 %v4434, %v4434
  %v4953 = vmul.f32 %v4435, %v4435
  %v4954 = vmul.f32 %v4436, %v4436
  %v4955 = vmul.f32 %v4437, %v4437
  %v4956 = vmul.f32 %v4438, %v4438
  %v4957 = vmul.f32 %v4439, %v4439
  %v4958 = vmul.f32 %v4440, %v4440
  %v4959 = vmul.f32 %v4441, %v4441
  %v4960 = vmul.f32 %v4442, %v4442
  %v4961 = vmul.f32 %v4443, %v4443
  %v4962 = vmul.f32 %v4444, %v4444
  %v4963 = vmul.f32 %v4445, %v4445
  %v4964 = vmul.f32 %v4446, %v4446
  %v4965 = vmul.f32 %v4447, %v4447
  %v4966 = vmul.f32 %v4448, %v4448
  %v4967 = vmul.f32 %v4449, %v4449
  %v4968 = vmul.f32 %v4450, %v4450
  %v4969 = vmul.f32 %v4451, %v4451
  %v4970 = vmul.f32 %v4452, %v4452
  %v4971 = vmul.f32 %v4453, %v4453
  %v4972 = vmul.f32 %v4454, %v4454
  %v4973 = vmul.f32 %v4455, %v4455
  %v4974 = vmul.f32 %v4456, %v4456
  %v4975 = vmul.f32 %v4457, %v4457
  %v4976 = vmul.f32 %v4458, %v4458
  %v4977 = vmul.f32 %v4459, %v4459
  %v4978 = vmul.f32 %v4460, %v4460
  %v4979 = vmul.f32 %v4461, %v4461
  %v4980 = vmul.f32 %v4462, %v4462
  %v4981 = vmul.f32 %v4463, %v4463
  %v4982 = vmul.f32 %v4464, %v4464
  %v4983 = vmul.f32 %v4465, %v4465
  %v4984 = vmul.f32 %v4466, %v4466
  %v4985 = vmul.f32 %v4467, %v4467
  %v4986 = vmul.f32 %v4468, %v4468
  %v4987 = vmul.f32 %v4469, %v4469
  %v4988 = vmul.f32 %v4924, %v4727
  %v4989 = vmul.f32 %v4925, %v4728
  %v4990 = vmul.f32 %v4926, %v4729
  %v4991 = vmul.f32 %v4927, %v4730
  %v4992 = vmul.f32 %v4928, %v4731
  %v4993 = vmul.f32 %v4929, %v4732
  %v4994 = vmul.f32 %v4930, %v4733
  %v4995 = vmul.f32 %v4931, %v4734
  %v4996 = vmul.f32 %v4932, %v4735
  %v4997 = vmul.f32 %v4933, %v4736
  %v4998 = vmul.f32 %v4934, %v4737
  %v4999 = vmul.f32 %v4935, %v4738
  %v5000 = vmul.f32 %v4936, %v4739
  %v5001 = vmul.f32 %v4937, %v4740
  %v5002 = vmul.f32 %v4938, %v4741
  %v5003 = vmul.f32 %v4939, %v4742
  %v5004 = vmul.f32 %v4940, %v4743
  %v5005 = vmul.f32 %v4941, %v4744
  %v5006 = vmul.f32 %v4942, %v4745
  %v5007 = vmul.f32 %v4943, %v4746
  %v5008 = vmul.f32 %v4944, %v4747
  %v5009 = vmul.f32 %v4945, %v4748
  %v5010 = vmul.f32 %v4946, %v4749
  %v5011 = vmul.f32 %v4947, %v4750
  %v5012 = vmul.f32 %v4948, %v4751
  %v5013 = vmul.f32 %v4949, %v4752
  %v5014 = vmul.f32 %v4950, %v4753
  %v5015 = vmul.f32 %v4951, %v4754
  %v5016 = vmul.f32 %v4952, %v4755
  %v5017 = vmul.f32 %v4953, %v4756
  %v5018 = vmul.f32 %v4954, %v4757
  %v5019 = vmul.f32 %v4955, %v4758
  %v5020 = vmul.f32 %v4956, %v4759
  %v5021 = vmul.f32 %v4957, %v4760
  %v5022 = vmul.f32 %v4958, %v4761
  %v5023 = vmul.f32 %v4959, %v4762
  %v5024 = vmul.f32 %v4960, %v4763
  %v5025 = vmul.f32 %v4961, %v4764
  %v5026 = vmul.f32 %v4962, %v4765
  %v5027 = vmul.f32 %v4963, %v4766
  %v5028 = vmul.f32 %v4964, %v4767
  %v5029 = vmul.f32 %v4965, %v4768
  %v5030 = vmul.f32 %v4966, %v4769
  %v5031 = vmul.f32 %v4967, %v4770
  %v5032 = vmul.f32 %v4968, %v4771
  %v5033 = vmul.f32 %v4969, %v4772
  %v5034 = vmul.f32 %v4970, %v4773
  %v5035 = vmul.f32 %v4971, %v4774
  %v5036 = vmul.f32 %v4972, %v4775
  %v5037 = vmul.f32 %v4973, %v4776
  %v5038 = vmul.f32 %v4974, %v4777
  %v5039 = vmul.f32 %v4975, %v4778
  %v5040 = vmul.f32 %v4976, %v4779
  %v5041 = vmul.f32 %v4977, %v4780
  %v5042 = vmul.f32 %v4978, %v4781
  %v5043 = vmul.f32 %v4979, %v4782
  %v5044 = vmul.f32 %v4980, %v4783
  %v5045 = vmul.f32 %v4981, %v4784
  %v5046 = vmul.f32 %v4982, %v4785
  %v5047 = vmul.f32 %v4983, %v4786
  %v5048 = vmul.f32 %v4984, %v4787
  %v5049 = vmul.f32 %v4985, %v4788
  %v5050 = vmul.f32 %v4986, %v4789
  %v5051 = vmul.f32 %v4987, %v4790
  %v5052 = vadd.f32 %v4988, %v4989
  %v5053 = vadd.f32 %v5052, %v4990
  %v5054 = vadd.f32 %v5053, %v4991
  %v5055 = vadd.f32 %v5054, %v4992
  %v5056 = vadd.f32 %v5055, %v4993
  %v5057 = vadd.f32 %v5056, %v4994
  %v5058 = vadd.f32 %v5057, %v4995
  %v5059 = vadd.f32 %v5058, %v4996
  %v5060 = vadd.f32 %v5059, %v4997
  %v5061 = vadd.f32 %v5060, %v4998
  %v5062 = vadd.f32 %v5061, %v4999
  %v5063 = vadd.f32 %v5062, %v5000
  %v5064 = vadd.f32 %v5063, %v5001
  %v5065 = vadd.f32 %v5064, %v5002
  %v5066 = vadd.f32 %v5065, %v5003
  %v5067 = vadd.f32 %v5066, %v5004
  %v5068 = vadd.f32 %v5067, %v5005
  %v5069 = vadd.f32 %v5068, %v5006
  %v5070 = vadd.f32 %v5069, %v5007
  %v5071 = vadd.f32 %v5070, %v5008
  %v5072 = vadd.f32 %v5071, %v5009
  %v5073 = vadd.f32 %v5072, %v5010
  %v5074 = vadd.f32 %v5073, %v5011
  %v5075 = vadd.f32 %v5074, %v5012
  %v5076 = vadd.f32 %v5075, %v5013
  %v5077 = vadd.f32 %v5076, %v5014
  %v5078 = vadd.f32 %v5077, %v5015
  %v5079 = vadd.f32 %v5078, %v5016
  %v5080 = vadd.f32 %v5079, %v5017
  %v5081 = vadd.f32 %v5080, %v5018
  %v5082 = vadd.f32 %v5081, %v5019
  %v5083 = vadd.f32 %v5082, %v5020
  %v5084 = vadd.f32 %v5083, %v5021
  %v5085 = vadd.f32 %v5084, %v5022
  %v5086 = vadd.f32 %v5085, %v5023
  %v5087 = vadd.f32 %v5086, %v5024
  %v5088 = vadd.f32 %v5087, %v5025
  %v5089 = vadd.f32 %v5088, %v5026
  %v5090 = vadd.f32 %v5089, %v5027
  %v5091 = vadd.f32 %v5090, %v5028
  %v5092 = vadd.f32 %v5091, %v5029
  %v5093 = vadd.f32 %v5092, %v5030
  %v5094 = vadd.f32 %v5093, %v5031
  %v5095 = vadd.f32 %v5094, %v5032
  %v5096 = vadd.f32 %v5095, %v5033
  %v5097 = vadd.f32 %v5096, %v5034
  %v5098 = vadd.f32 %v5097, %v5035
  %v5099 = vadd.f32 %v5098, %v5036
  %v5100 = vadd.f32 %v5099, %v5037
  %v5101 = vadd.f32 %v5100, %v5038
  %v5102 = vadd.f32 %v5101, %v5039
  %v5103 = vadd.f32 %v5102, %v5040
  %v5104 = vadd.f32 %v5103, %v5041
  %v5105 = vadd.f32 %v5104, %v5042
  %v5106 = vadd.f32 %v5105, %v5043
  %v5107 = vadd.f32 %v5106, %v5044
  %v5108 = vadd.f32 %v5107, %v5045
  %v5109 = vadd.f32 %v5108, %v5046
  %v5110 = vadd.f32 %v5109, %v5047
  %v5111 = vadd.f32 %v5110, %v5048
  %v5112 = vadd.f32 %v5111, %v5049
  %v5113 = vadd.f32 %v5112, %v5050
  %v5114 = vadd.f32 %v5113, %v5051
  %v5115 = vrot.slane %v5114, 4
  %v5116 = vadd.f32 %v5114, %v5115
  %v5117 = vrot.slane %v5116, 2
  %v5118 = vadd.f32 %v5116, %v5117
  %v5119 = vrot.slane %v5118, 1
  %v5120 = vadd.f32 %v5118, %v5119
  %v5121 = vmul.f32 %v4923, 0.0078125
  %v5122 = vmul.f32 %v5120, 0.0078125
  %v5123 = vmul.f32 %v5121, %v5121
  %v5124 = vsub.f32 %v5122, %v5123
  %v5125 = vmax.f32 %v5124, 0.0
  %v5126 = vadd.f32 %v5125, 1e-05
  %v5127 = vrsqrt.pop %v5126
  %v5128 = vmul.f32 %v421, %v5127
  %v5129 = vmul.f32 %v5121, %v5128
  %v5130 = vsub.f32 %v422, %v5129
  %v5132 = vlaneseq
  %v5133 = vshrl.u32 %v5132, 7
  %v5134 = vsub.s32 0, %v5133
  %v5135 = vrot.slane %v5128, %v5134
  %v5137 = vmul.f32 %v4406, %v5135
  %v5138 = vmul.f32 %v4407, %v5135
  %v5139 = vmul.f32 %v4408, %v5135
  %v5140 = vmul.f32 %v4409, %v5135
  %v5141 = vmul.f32 %v4410, %v5135
  %v5142 = vmul.f32 %v4411, %v5135
  %v5143 = vmul.f32 %v4412, %v5135
  %v5144 = vmul.f32 %v4413, %v5135
  %v5145 = vmul.f32 %v4414, %v5135
  %v5146 = vmul.f32 %v4415, %v5135
  %v5147 = vmul.f32 %v4416, %v5135
  %v5148 = vmul.f32 %v4417, %v5135
  %v5149 = vmul.f32 %v4418, %v5135
  %v5150 = vmul.f32 %v4419, %v5135
  %v5151 = vmul.f32 %v4420, %v5135
  %v5152 = vmul.f32 %v4421, %v5135
  %v5153 = vmul.f32 %v4422, %v5135
  %v5154 = vmul.f32 %v4423, %v5135
  %v5155 = vmul.f32 %v4424, %v5135
  %v5156 = vmul.f32 %v4425, %v5135
  %v5157 = vmul.f32 %v4426, %v5135
  %v5158 = vmul.f32 %v4427, %v5135
  %v5159 = vmul.f32 %v4428, %v5135
  %v5160 = vmul.f32 %v4429, %v5135
  %v5161 = vmul.f32 %v4430, %v5135
  %v5162 = vmul.f32 %v4431, %v5135
  %v5163 = vmul.f32 %v4432, %v5135
  %v5164 = vmul.f32 %v4433, %v5135
  %v5165 = vmul.f32 %v4434, %v5135
  %v5166 = vmul.f32 %v4435, %v5135
  %v5167 = vmul.f32 %v4436, %v5135
  %v5168 = vmul.f32 %v4437, %v5135
  %v5169 = vmul.f32 %v4438, %v5135
  %v5170 = vmul.f32 %v4439, %v5135
  %v5171 = vmul.f32 %v4440, %v5135
  %v5172 = vmul.f32 %v4441, %v5135
  %v5173 = vmul.f32 %v4442, %v5135
  %v5174 = vmul.f32 %v4443, %v5135
  %v5175 = vmul.f32 %v4444, %v5135
  %v5176 = vmul.f32 %v4445, %v5135
  %v5177 = vmul.f32 %v4446, %v5135
  %v5178 = vmul.f32 %v4447, %v5135
  %v5179 = vmul.f32 %v4448, %v5135
  %v5180 = vmul.f32 %v4449, %v5135
  %v5181 = vmul.f32 %v4450, %v5135
  %v5182 = vmul.f32 %v4451, %v5135
  %v5183 = vmul.f32 %v4452, %v5135
  %v5184 = vmul.f32 %v4453, %v5135
  %v5185 = vmul.f32 %v4454, %v5135
  %v5186 = vmul.f32 %v4455, %v5135
  %v5187 = vmul.f32 %v4456, %v5135
  %v5188 = vmul.f32 %v4457, %v5135
  %v5189 = vmul.f32 %v4458, %v5135
  %v5190 = vmul.f32 %v4459, %v5135
  %v5191 = vmul.f32 %v4460, %v5135
  %v5192 = vmul.f32 %v4461, %v5135
  %v5193 = vmul.f32 %v4462, %v5135
  %v5194 = vmul.f32 %v4463, %v5135
  %v5195 = vmul.f32 %v4464, %v5135
  %v5196 = vmul.f32 %v4465, %v5135
  %v5197 = vmul.f32 %v4466, %v5135
  %v5198 = vmul.f32 %v4467, %v5135
  %v5199 = vmul.f32 %v4468, %v5135
  %v5200 = vmul.f32 %v4469, %v5135
  %v5202 = vlaneseq
  %v5203 = vshrl.u32 %v5202, 7
  %v5204 = vsub.s32 0, %v5203
  %v5205 = vrot.slane %v5130, %v5204
  %v5207 = vadd.f32 %v5137, %v5205
  %v5208 = vadd.f32 %v5138, %v5205
  %v5209 = vadd.f32 %v5139, %v5205
  %v5210 = vadd.f32 %v5140, %v5205
  %v5211 = vadd.f32 %v5141, %v5205
  %v5212 = vadd.f32 %v5142, %v5205
  %v5213 = vadd.f32 %v5143, %v5205
  %v5214 = vadd.f32 %v5144, %v5205
  %v5215 = vadd.f32 %v5145, %v5205
  %v5216 = vadd.f32 %v5146, %v5205
  %v5217 = vadd.f32 %v5147, %v5205
  %v5218 = vadd.f32 %v5148, %v5205
  %v5219 = vadd.f32 %v5149, %v5205
  %v5220 = vadd.f32 %v5150, %v5205
  %v5221 = vadd.f32 %v5151, %v5205
  %v5222 = vadd.f32 %v5152, %v5205
  %v5223 = vadd.f32 %v5153, %v5205
  %v5224 = vadd.f32 %v5154, %v5205
  %v5225 = vadd.f32 %v5155, %v5205
  %v5226 = vadd.f32 %v5156, %v5205
  %v5227 = vadd.f32 %v5157, %v5205
  %v5228 = vadd.f32 %v5158, %v5205
  %v5229 = vadd.f32 %v5159, %v5205
  %v5230 = vadd.f32 %v5160, %v5205
  %v5231 = vadd.f32 %v5161, %v5205
  %v5232 = vadd.f32 %v5162, %v5205
  %v5233 = vadd.f32 %v5163, %v5205
  %v5234 = vadd.f32 %v5164, %v5205
  %v5235 = vadd.f32 %v5165, %v5205
  %v5236 = vadd.f32 %v5166, %v5205
  %v5237 = vadd.f32 %v5167, %v5205
  %v5238 = vadd.f32 %v5168, %v5205
  %v5239 = vadd.f32 %v5169, %v5205
  %v5240 = vadd.f32 %v5170, %v5205
  %v5241 = vadd.f32 %v5171, %v5205
  %v5242 = vadd.f32 %v5172, %v5205
  %v5243 = vadd.f32 %v5173, %v5205
  %v5244 = vadd.f32 %v5174, %v5205
  %v5245 = vadd.f32 %v5175, %v5205
  %v5246 = vadd.f32 %v5176, %v5205
  %v5247 = vadd.f32 %v5177, %v5205
  %v5248 = vadd.f32 %v5178, %v5205
  %v5249 = vadd.f32 %v5179, %v5205
  %v5250 = vadd.f32 %v5180, %v5205
  %v5251 = vadd.f32 %v5181, %v5205
  %v5252 = vadd.f32 %v5182, %v5205
  %v5253 = vadd.f32 %v5183, %v5205
  %v5254 = vadd.f32 %v5184, %v5205
  %v5255 = vadd.f32 %v5185, %v5205
  %v5256 = vadd.f32 %v5186, %v5205
  %v5257 = vadd.f32 %v5187, %v5205
  %v5258 = vadd.f32 %v5188, %v5205
  %v5259 = vadd.f32 %v5189, %v5205
  %v5260 = vadd.f32 %v5190, %v5205
  %v5261 = vadd.f32 %v5191, %v5205
  %v5262 = vadd.f32 %v5192, %v5205
  %v5263 = vadd.f32 %v5193, %v5205
  %v5264 = vadd.f32 %v5194, %v5205
  %v5265 = vadd.f32 %v5195, %v5205
  %v5266 = vadd.f32 %v5196, %v5205
  %v5267 = vadd.f32 %v5197, %v5205
  %v5268 = vadd.f32 %v5198, %v5205
  %v5269 = vadd.f32 %v5199, %v5205
  %v5270 = vadd.f32 %v5200, %v5205
  %s5271 = scalar_lea.vmem %s1, 1152
  %v5272 = vld [vmem:[%s5271] sm:$0xff]
  %v5273 = vld [vmem:[%s5271 + $0x8] sm:$0xff]
  %v5274 = vld [vmem:[%s5271 + $0x10] sm:$0xff]
  %v5275 = vld [vmem:[%s5271 + $0x18] sm:$0xff]
  %v5276 = vld [vmem:[%s5271 + $0x20] sm:$0xff]
  %v5277 = vld [vmem:[%s5271 + $0x28] sm:$0xff]
  %v5278 = vld [vmem:[%s5271 + $0x30] sm:$0xff]
  %v5279 = vld [vmem:[%s5271 + $0x38] sm:$0xff]
  %v5280 = vld [vmem:[%s5271 + $0x40] sm:$0xff]
  %v5281 = vld [vmem:[%s5271 + $0x48] sm:$0xff]
  %v5282 = vld [vmem:[%s5271 + $0x50] sm:$0xff]
  %v5283 = vld [vmem:[%s5271 + $0x58] sm:$0xff]
  %v5284 = vld [vmem:[%s5271 + $0x60] sm:$0xff]
  %v5285 = vld [vmem:[%s5271 + $0x68] sm:$0xff]
  %v5286 = vld [vmem:[%s5271 + $0x70] sm:$0xff]
  %v5287 = vld [vmem:[%s5271 + $0x78] sm:$0xff]
  %v5288 = vld [vmem:[%s5271 + $0x80] sm:$0xff]
  %v5289 = vld [vmem:[%s5271 + $0x88] sm:$0xff]
  %v5290 = vld [vmem:[%s5271 + $0x90] sm:$0xff]
  %v5291 = vld [vmem:[%s5271 + $0x98] sm:$0xff]
  %v5292 = vld [vmem:[%s5271 + $0xa0] sm:$0xff]
  %v5293 = vld [vmem:[%s5271 + $0xa8] sm:$0xff]
  %v5294 = vld [vmem:[%s5271 + $0xb0] sm:$0xff]
  %v5295 = vld [vmem:[%s5271 + $0xb8] sm:$0xff]
  %v5296 = vld [vmem:[%s5271 + $0xc0] sm:$0xff]
  %v5297 = vld [vmem:[%s5271 + $0xc8] sm:$0xff]
  %v5298 = vld [vmem:[%s5271 + $0xd0] sm:$0xff]
  %v5299 = vld [vmem:[%s5271 + $0xd8] sm:$0xff]
  %v5300 = vld [vmem:[%s5271 + $0xe0] sm:$0xff]
  %v5301 = vld [vmem:[%s5271 + $0xe8] sm:$0xff]
  %v5302 = vld [vmem:[%s5271 + $0xf0] sm:$0xff]
  %v5303 = vld [vmem:[%s5271 + $0xf8] sm:$0xff]
  %v5304 = vld [vmem:[%s5271 + $0x100] sm:$0xff]
  %v5305 = vld [vmem:[%s5271 + $0x108] sm:$0xff]
  %v5306 = vld [vmem:[%s5271 + $0x110] sm:$0xff]
  %v5307 = vld [vmem:[%s5271 + $0x118] sm:$0xff]
  %v5308 = vld [vmem:[%s5271 + $0x120] sm:$0xff]
  %v5309 = vld [vmem:[%s5271 + $0x128] sm:$0xff]
  %v5310 = vld [vmem:[%s5271 + $0x130] sm:$0xff]
  %v5311 = vld [vmem:[%s5271 + $0x138] sm:$0xff]
  %v5312 = vld [vmem:[%s5271 + $0x140] sm:$0xff]
  %v5313 = vld [vmem:[%s5271 + $0x148] sm:$0xff]
  %v5314 = vld [vmem:[%s5271 + $0x150] sm:$0xff]
  %v5315 = vld [vmem:[%s5271 + $0x158] sm:$0xff]
  %v5316 = vld [vmem:[%s5271 + $0x160] sm:$0xff]
  %v5317 = vld [vmem:[%s5271 + $0x168] sm:$0xff]
  %v5318 = vld [vmem:[%s5271 + $0x170] sm:$0xff]
  %v5319 = vld [vmem:[%s5271 + $0x178] sm:$0xff]
  %v5320 = vld [vmem:[%s5271 + $0x180] sm:$0xff]
  %v5321 = vld [vmem:[%s5271 + $0x188] sm:$0xff]
  %v5322 = vld [vmem:[%s5271 + $0x190] sm:$0xff]
  %v5323 = vld [vmem:[%s5271 + $0x198] sm:$0xff]
  %v5324 = vld [vmem:[%s5271 + $0x1a0] sm:$0xff]
  %v5325 = vld [vmem:[%s5271 + $0x1a8] sm:$0xff]
  %v5326 = vld [vmem:[%s5271 + $0x1b0] sm:$0xff]
  %v5327 = vld [vmem:[%s5271 + $0x1b8] sm:$0xff]
  %v5328 = vld [vmem:[%s5271 + $0x1c0] sm:$0xff]
  %v5329 = vld [vmem:[%s5271 + $0x1c8] sm:$0xff]
  %v5330 = vld [vmem:[%s5271 + $0x1d0] sm:$0xff]
  %v5331 = vld [vmem:[%s5271 + $0x1d8] sm:$0xff]
  %v5332 = vld [vmem:[%s5271 + $0x1e0] sm:$0xff]
  %v5333 = vld [vmem:[%s5271 + $0x1e8] sm:$0xff]
  %v5334 = vld [vmem:[%s5271 + $0x1f0] sm:$0xff]
  %v5335 = vld [vmem:[%s5271 + $0x1f8] sm:$0xff]
  %v5336 = vld [vmem:[%s5271 + $0x200] sm:$0xff]
  %v5337 = vld [vmem:[%s5271 + $0x208] sm:$0xff]
  %v5338 = vld [vmem:[%s5271 + $0x210] sm:$0xff]
  %v5339 = vld [vmem:[%s5271 + $0x218] sm:$0xff]
  %v5340 = vld [vmem:[%s5271 + $0x220] sm:$0xff]
  %v5341 = vld [vmem:[%s5271 + $0x228] sm:$0xff]
  %v5342 = vld [vmem:[%s5271 + $0x230] sm:$0xff]
  %v5343 = vld [vmem:[%s5271 + $0x238] sm:$0xff]
  %v5344 = vld [vmem:[%s5271 + $0x240] sm:$0xff]
  %v5345 = vld [vmem:[%s5271 + $0x248] sm:$0xff]
  %v5346 = vld [vmem:[%s5271 + $0x250] sm:$0xff]
  %v5347 = vld [vmem:[%s5271 + $0x258] sm:$0xff]
  %v5348 = vld [vmem:[%s5271 + $0x260] sm:$0xff]
  %v5349 = vld [vmem:[%s5271 + $0x268] sm:$0xff]
  %v5350 = vld [vmem:[%s5271 + $0x270] sm:$0xff]
  %v5351 = vld [vmem:[%s5271 + $0x278] sm:$0xff]
  %v5352 = vld [vmem:[%s5271 + $0x280] sm:$0xff]
  %v5353 = vld [vmem:[%s5271 + $0x288] sm:$0xff]
  %v5354 = vld [vmem:[%s5271 + $0x290] sm:$0xff]
  %v5355 = vld [vmem:[%s5271 + $0x298] sm:$0xff]
  %v5356 = vld [vmem:[%s5271 + $0x2a0] sm:$0xff]
  %v5357 = vld [vmem:[%s5271 + $0x2a8] sm:$0xff]
  %v5358 = vld [vmem:[%s5271 + $0x2b0] sm:$0xff]
  %v5359 = vld [vmem:[%s5271 + $0x2b8] sm:$0xff]
  %v5360 = vld [vmem:[%s5271 + $0x2c0] sm:$0xff]
  %v5361 = vld [vmem:[%s5271 + $0x2c8] sm:$0xff]
  %v5362 = vld [vmem:[%s5271 + $0x2d0] sm:$0xff]
  %v5363 = vld [vmem:[%s5271 + $0x2d8] sm:$0xff]
  %v5364 = vld [vmem:[%s5271 + $0x2e0] sm:$0xff]
  %v5365 = vld [vmem:[%s5271 + $0x2e8] sm:$0xff]
  %v5366 = vld [vmem:[%s5271 + $0x2f0] sm:$0xff]
  %v5367 = vld [vmem:[%s5271 + $0x2f8] sm:$0xff]
  %v5368 = vld [vmem:[%s5271 + $0x300] sm:$0xff]
  %v5369 = vld [vmem:[%s5271 + $0x308] sm:$0xff]
  %v5370 = vld [vmem:[%s5271 + $0x310] sm:$0xff]
  %v5371 = vld [vmem:[%s5271 + $0x318] sm:$0xff]
  %v5372 = vld [vmem:[%s5271 + $0x320] sm:$0xff]
  %v5373 = vld [vmem:[%s5271 + $0x328] sm:$0xff]
  %v5374 = vld [vmem:[%s5271 + $0x330] sm:$0xff]
  %v5375 = vld [vmem:[%s5271 + $0x338] sm:$0xff]
  %v5376 = vld [vmem:[%s5271 + $0x340] sm:$0xff]
  %v5377 = vld [vmem:[%s5271 + $0x348] sm:$0xff]
  %v5378 = vld [vmem:[%s5271 + $0x350] sm:$0xff]
  %v5379 = vld [vmem:[%s5271 + $0x358] sm:$0xff]
  %v5380 = vld [vmem:[%s5271 + $0x360] sm:$0xff]
  %v5381 = vld [vmem:[%s5271 + $0x368] sm:$0xff]
  %v5382 = vld [vmem:[%s5271 + $0x370] sm:$0xff]
  %v5383 = vld [vmem:[%s5271 + $0x378] sm:$0xff]
  %v5384 = vld [vmem:[%s5271 + $0x380] sm:$0xff]
  %v5385 = vld [vmem:[%s5271 + $0x388] sm:$0xff]
  %v5386 = vld [vmem:[%s5271 + $0x390] sm:$0xff]
  %v5387 = vld [vmem:[%s5271 + $0x398] sm:$0xff]
  %v5388 = vld [vmem:[%s5271 + $0x3a0] sm:$0xff]
  %v5389 = vld [vmem:[%s5271 + $0x3a8] sm:$0xff]
  %v5390 = vld [vmem:[%s5271 + $0x3b0] sm:$0xff]
  %v5391 = vld [vmem:[%s5271 + $0x3b8] sm:$0xff]
  %v5392 = vld [vmem:[%s5271 + $0x3c0] sm:$0xff]
  %v5393 = vld [vmem:[%s5271 + $0x3c8] sm:$0xff]
  %v5394 = vld [vmem:[%s5271 + $0x3d0] sm:$0xff]
  %v5395 = vld [vmem:[%s5271 + $0x3d8] sm:$0xff]
  %v5396 = vld [vmem:[%s5271 + $0x3e0] sm:$0xff]
  %v5397 = vld [vmem:[%s5271 + $0x3e8] sm:$0xff]
  %v5398 = vld [vmem:[%s5271 + $0x3f0] sm:$0xff]
  %v5399 = vld [vmem:[%s5271 + $0x3f8] sm:$0xff]
  %v5400 = vld [vmem:[%s5271 + $0x400] sm:$0xff]
  %v5401 = vld [vmem:[%s5271 + $0x408] sm:$0xff]
  %v5402 = vld [vmem:[%s5271 + $0x410] sm:$0xff]
  %v5403 = vld [vmem:[%s5271 + $0x418] sm:$0xff]
  %v5404 = vld [vmem:[%s5271 + $0x420] sm:$0xff]
  %v5405 = vld [vmem:[%s5271 + $0x428] sm:$0xff]
  %v5406 = vld [vmem:[%s5271 + $0x430] sm:$0xff]
  %v5407 = vld [vmem:[%s5271 + $0x438] sm:$0xff]
  %v5408 = vld [vmem:[%s5271 + $0x440] sm:$0xff]
  %v5409 = vld [vmem:[%s5271 + $0x448] sm:$0xff]
  %v5410 = vld [vmem:[%s5271 + $0x450] sm:$0xff]
  %v5411 = vld [vmem:[%s5271 + $0x458] sm:$0xff]
  %v5412 = vld [vmem:[%s5271 + $0x460] sm:$0xff]
  %v5413 = vld [vmem:[%s5271 + $0x468] sm:$0xff]
  %v5414 = vld [vmem:[%s5271 + $0x470] sm:$0xff]
  %v5415 = vld [vmem:[%s5271 + $0x478] sm:$0xff]
  %s5416 = scalar_lea.vmem %s2, 1
  %v5417 = vld [vmem:[%s5416] sm:$0x1]
  %s5418 = scalar_lea.vmem %s3, 1
  %v5419 = vld [vmem:[%s5418] sm:$0x1]
  %s5420 = scalar_lea.vmem %s4, 1
  %v5421 = vld [vmem:[%s5420] sm:$0x1]
  %5422 = vmatprep.subr.mxu0 0.0
  %5423 = vmatpush1.msra.mxu0 %v5303
  %5424 = vmatprep.subr.mxu0 0.0
  %5425 = vmatpush1.msra.mxu0 %v5302
  %5426 = vmatprep.subr.mxu0 0.0
  %5427 = vmatpush1.msra.mxu0 %v5301
  %5428 = vmatprep.subr.mxu0 0.0
  %5429 = vmatpush1.msra.mxu0 %v5300
  %5430 = vmatprep.subr.mxu0 0.0
  %5431 = vmatpush1.msra.mxu0 %v5299
  %5432 = vmatprep.subr.mxu0 0.0
  %5433 = vmatpush1.msra.mxu0 %v5298
  %5434 = vmatprep.subr.mxu0 0.0
  %5435 = vmatpush1.msra.mxu0 %v5297
  %5436 = vmatprep.subr.mxu0 0.0
  %5437 = vmatpush1.msra.mxu0 %v5296
  %5438 = vmatprep.subr.mxu0 0.0
  %5439 = vmatpush1.msra.mxu0 %v5295
  %5440 = vmatprep.subr.mxu0 0.0
  %5441 = vmatpush1.msra.mxu0 %v5294
  %5442 = vmatprep.subr.mxu0 0.0
  %5443 = vmatpush1.msra.mxu0 %v5293
  %5444 = vmatprep.subr.mxu0 0.0
  %5445 = vmatpush1.msra.mxu0 %v5292
  %5446 = vmatprep.subr.mxu0 0.0
  %5447 = vmatpush1.msra.mxu0 %v5291
  %5448 = vmatprep.subr.mxu0 0.0
  %5449 = vmatpush1.msra.mxu0 %v5290
  %5450 = vmatprep.subr.mxu0 0.0
  %5451 = vmatpush1.msra.mxu0 %v5289
  %5452 = vmatprep.subr.mxu0 0.0
  %5453 = vmatpush1.msra.mxu0 %v5288
  %5454 = vmatprep.subr.mxu0 0.0
  %5455 = vmatpush2.msra.mxu0 0.0
  %5456 = vmatprep.subr.mxu0 0.0
  %5457 = vmatpush2.msra.mxu0 0.0
  %5458 = vmatprep.subr.mxu0 0.0
  %5459 = vmatpush2.msra.mxu0 0.0
  %5460 = vmatprep.subr.mxu0 0.0
  %5461 = vmatpush2.msra.mxu0 0.0
  %5462 = vmatprep.subr.mxu0 0.0
  %5463 = vmatpush2.msra.mxu0 0.0
  %5464 = vmatprep.subr.mxu0 0.0
  %5465 = vmatpush2.msra.mxu0 0.0
  %5466 = vmatprep.subr.mxu0 0.0
  %5467 = vmatpush2.msra.mxu0 0.0
  %5468 = vmatprep.subr.mxu0 0.0
  %5469 = vmatpush2.msra.mxu0 0.0
  %5470 = vmatprep.subr.mxu0 0.0
  %5471 = vmatpush2.msra.mxu0 0.0
  %5472 = vmatprep.subr.mxu0 0.0
  %5473 = vmatpush2.msra.mxu0 0.0
  %5474 = vmatprep.subr.mxu0 0.0
  %5475 = vmatpush2.msra.mxu0 0.0
  %5476 = vmatprep.subr.mxu0 0.0
  %5477 = vmatpush2.msra.mxu0 0.0
  %5478 = vmatprep.subr.mxu0 0.0
  %5479 = vmatpush2.msra.mxu0 0.0
  %5480 = vmatprep.subr.mxu0 0.0
  %5481 = vmatpush2.msra.mxu0 0.0
  %5482 = vmatprep.subr.mxu0 0.0
  %5483 = vmatpush2.msra.mxu0 0.0
  %5484 = vmatprep.subr.mxu0 0.0
  %5485 = vmatpush2.msra.mxu0 0.0
  %5486 = vmatprep.mubr.f32.mxu0 0.0
  %5487 = vmatmul.mubr.f32.gmra.mxu0 0.0
  %v5488 = vpop.f32.mrf.mxu0
  %v5489 = vadd.f32 0.0, %v5488
  %v5490 = vpop.f32.mrf.mxu0
  %5491 = vmatprep.mubr.f32.mxu0 0.0
  %5492 = vmatmul.mubr.f32.gmra.mxu0 0.0
  %v5493 = vpop.f32.mrf.mxu0
  %v5494 = vadd.f32 0.0, %v5493
  %v5495 = vpop.f32.mrf.mxu0
  %5496 = vmatprep.mubr.f32.mxu0 0.0
  %5497 = vmatmul.mubr.f32.gmra.mxu0 0.0
  %v5498 = vpop.f32.mrf.mxu0
  %v5499 = vadd.f32 0.0, %v5498
  %v5500 = vpop.f32.mrf.mxu0
  %5501 = vmatprep.mubr.f32.mxu0 0.0
  %5502 = vmatmul.mubr.f32.gmra.mxu0 0.0
  %v5503 = vpop.f32.mrf.mxu0
  %v5504 = vadd.f32 0.0, %v5503
  %v5505 = vpop.f32.mrf.mxu0
  %5506 = vmatprep.mubr.f32.mxu0 0.0
  %5507 = vmatmul.mubr.f32.gmra.mxu0 %v5215
  %v5508 = vpop.f32.mrf.mxu0
  %v5509 = vadd.f32 0.0, %v5508
  %v5510 = vpop.f32.mrf.mxu0
  %5511 = vmatprep.mubr.f32.mxu0 0.0
  %5512 = vmatmul.mubr.f32.gmra.mxu0 %v5217
  %v5513 = vpop.f32.mrf.mxu0
  %v5514 = vadd.f32 0.0, %v5513
  %v5515 = vpop.f32.mrf.mxu0
  %5516 = vmatprep.mubr.f32.mxu0 0.0
  %5517 = vmatmul.mubr.f32.gmra.mxu0 %v5219
  %v5518 = vpop.f32.mrf.mxu0
  %v5519 = vadd.f32 0.0, %v5518
  %v5520 = vpop.f32.mrf.mxu0
  %5521 = vmatprep.mubr.f32.mxu0 0.0
  %5522 = vmatmul.mubr.f32.gmra.mxu0 %v5221
  %v5523 = vpop.f32.mrf.mxu0
  %v5524 = vadd.f32 0.0, %v5523
  %v5525 = vpop.f32.mrf.mxu0
  %5526 = vmatprep.mubr.f32.mxu0 0.0
  %5527 = vmatmul.mubr.f32.gmra.mxu0 %v5231
  %v5528 = vpop.f32.mrf.mxu0
  %v5529 = vadd.f32 0.0, %v5528
  %v5530 = vpop.f32.mrf.mxu0
  %5531 = vmatprep.mubr.f32.mxu0 0.0
  %5532 = vmatmul.mubr.f32.gmra.mxu0 %v5233
  %v5533 = vpop.f32.mrf.mxu0
  %v5534 = vadd.f32 0.0, %v5533
  %v5535 = vpop.f32.mrf.mxu0
  %5536 = vmatprep.mubr.f32.mxu0 0.0
  %5537 = vmatmul.mubr.f32.gmra.mxu0 %v5235
  %v5538 = vpop.f32.mrf.mxu0
  %v5539 = vadd.f32 0.0, %v5538
  %v5540 = vpop.f32.mrf.mxu0
  %5541 = vmatprep.mubr.f32.mxu0 0.0
  %5542 = vmatmul.mubr.f32.gmra.mxu0 %v5237
  %v5543 = vpop.f32.mrf.mxu0
  %v5544 = vadd.f32 0.0, %v5543
  %v5545 = vpop.f32.mrf.mxu0
  %5546 = vmatprep.mubr.f32.mxu0 0.0
  %5547 = vmatmul.mubr.f32.gmra.mxu0 %v5247
  %v5548 = vpop.f32.mrf.mxu0
  %v5549 = vadd.f32 0.0, %v5548
  %v5550 = vpop.f32.mrf.mxu0
  %5551 = vmatprep.mubr.f32.mxu0 0.0
  %5552 = vmatmul.mubr.f32.gmra.mxu0 %v5249
  %v5553 = vpop.f32.mrf.mxu0
  %v5554 = vadd.f32 0.0, %v5553
  %v5555 = vpop.f32.mrf.mxu0
  %5556 = vmatprep.mubr.f32.mxu0 0.0
  %5557 = vmatmul.mubr.f32.gmra.mxu0 %v5251
  %v5558 = vpop.f32.mrf.mxu0
  %v5559 = vadd.f32 0.0, %v5558
  %v5560 = vpop.f32.mrf.mxu0
  %5561 = vmatprep.mubr.f32.mxu0 0.0
  %5562 = vmatmul.mubr.f32.gmra.mxu0 %v5253
  %v5563 = vpop.f32.mrf.mxu0
  %v5564 = vadd.f32 0.0, %v5563
  %v5565 = vpop.f32.mrf.mxu0
  %5566 = vdwg.mxu0
  %5567 = vmatprep.subr.mxu0 0.0
  %5568 = vmatpush1.msra.mxu0 %v5287
  %5569 = vmatprep.subr.mxu0 0.0
  %5570 = vmatpush1.msra.mxu0 %v5286
  %5571 = vmatprep.subr.mxu0 0.0
  %5572 = vmatpush1.msra.mxu0 %v5285
  %5573 = vmatprep.subr.mxu0 0.0
  %5574 = vmatpush1.msra.mxu0 %v5284
  %5575 = vmatprep.subr.mxu0 0.0
  %5576 = vmatpush1.msra.mxu0 %v5283
  %5577 = vmatprep.subr.mxu0 0.0
  %5578 = vmatpush1.msra.mxu0 %v5282
  %5579 = vmatprep.subr.mxu0 0.0
  %5580 = vmatpush1.msra.mxu0 %v5281
  %5581 = vmatprep.subr.mxu0 0.0
  %5582 = vmatpush1.msra.mxu0 %v5280
  %5583 = vmatprep.subr.mxu0 0.0
  %5584 = vmatpush1.msra.mxu0 %v5279
  %5585 = vmatprep.subr.mxu0 0.0
  %5586 = vmatpush1.msra.mxu0 %v5278
  %5587 = vmatprep.subr.mxu0 0.0
  %5588 = vmatpush1.msra.mxu0 %v5277
  %5589 = vmatprep.subr.mxu0 0.0
  %5590 = vmatpush1.msra.mxu0 %v5276
  %5591 = vmatprep.subr.mxu0 0.0
  %5592 = vmatpush1.msra.mxu0 %v5275
  %5593 = vmatprep.subr.mxu0 0.0
  %5594 = vmatpush1.msra.mxu0 %v5274
  %5595 = vmatprep.subr.mxu0 0.0
  %5596 = vmatpush1.msra.mxu0 %v5273
  %5597 = vmatprep.subr.mxu0 0.0
  %5598 = vmatpush1.msra.mxu0 %v5272
  %5599 = vmatprep.subr.mxu0 0.0
  %5600 = vmatpush2.msra.mxu0 0.0
  %5601 = vmatprep.subr.mxu0 0.0
  %5602 = vmatpush2.msra.mxu0 0.0
  %5603 = vmatprep.subr.mxu0 0.0
  %5604 = vmatpush2.msra.mxu0 0.0
  %5605 = vmatprep.subr.mxu0 0.0
  %5606 = vmatpush2.msra.mxu0 0.0
  %5607 = vmatprep.subr.mxu0 0.0
  %5608 = vmatpush2.msra.mxu0 0.0
  %5609 = vmatprep.subr.mxu0 0.0
  %5610 = vmatpush2.msra.mxu0 0.0
  %5611 = vmatprep.subr.mxu0 0.0
  %5612 = vmatpush2.msra.mxu0 0.0
  %5613 = vmatprep.subr.mxu0 0.0
  %5614 = vmatpush2.msra.mxu0 0.0
  %5615 = vmatprep.subr.mxu0 0.0
  %5616 = vmatpush2.msra.mxu0 0.0
  %5617 = vmatprep.subr.mxu0 0.0
  %5618 = vmatpush2.msra.mxu0 0.0
  %5619 = vmatprep.subr.mxu0 0.0
  %5620 = vmatpush2.msra.mxu0 0.0
  %5621 = vmatprep.subr.mxu0 0.0
  %5622 = vmatpush2.msra.mxu0 0.0
  %5623 = vmatprep.subr.mxu0 0.0
  %5624 = vmatpush2.msra.mxu0 0.0
  %5625 = vmatprep.subr.mxu0 0.0
  %5626 = vmatpush2.msra.mxu0 0.0
  %5627 = vmatprep.subr.mxu0 0.0
  %5628 = vmatpush2.msra.mxu0 0.0
  %5629 = vmatprep.subr.mxu0 0.0
  %5630 = vmatpush2.msra.mxu0 0.0
  %5631 = vmatprep.mubr.f32.mxu0 0.0
  %5632 = vmatmul.mubr.f32.gmra.mxu0 0.0
  %v5633 = vpop.f32.mrf.mxu0
  %v5634 = vadd.f32 %v5489, %v5633
  %v5635 = vpop.f32.mrf.mxu0
  %5636 = vmatprep.mubr.f32.mxu0 0.0
  %5637 = vmatmul.mubr.f32.gmra.mxu0 0.0
  %v5638 = vpop.f32.mrf.mxu0
  %v5639 = vadd.f32 %v5494, %v5638
  %v5640 = vpop.f32.mrf.mxu0
  %5641 = vmatprep.mubr.f32.mxu0 0.0
  %5642 = vmatmul.mubr.f32.gmra.mxu0 0.0
  %v5643 = vpop.f32.mrf.mxu0
  %v5644 = vadd.f32 %v5499, %v5643
  %v5645 = vpop.f32.mrf.mxu0
  %5646 = vmatprep.mubr.f32.mxu0 0.0
  %5647 = vmatmul.mubr.f32.gmra.mxu0 0.0
  %v5648 = vpop.f32.mrf.mxu0
  %v5649 = vadd.f32 %v5504, %v5648
  %v5650 = vpop.f32.mrf.mxu0
  %5651 = vmatprep.mubr.f32.mxu0 0.0
  %5652 = vmatmul.mubr.f32.gmra.mxu0 0.0
  %v5653 = vpop.f32.mrf.mxu0
  %v5654 = vadd.f32 %v5509, %v5653
  %v5655 = vpop.f32.mrf.mxu0
  %5656 = vmatprep.mubr.f32.mxu0 0.0
  %5657 = vmatmul.mubr.f32.gmra.mxu0 %v5216
  %v5658 = vpop.f32.mrf.mxu0
  %v5659 = vadd.f32 %v5514, %v5658
  %v5660 = vpop.f32.mrf.mxu0
  %5661 = vmatprep.mubr.f32.mxu0 0.0
  %5662 = vmatmul.mubr.f32.gmra.mxu0 %v5218
  %v5663 = vpop.f32.mrf.mxu0
  %v5664 = vadd.f32 %v5519, %v5663
  %v5665 = vpop.f32.mrf.mxu0
  %5666 = vmatprep.mubr.f32.mxu0 0.0
  %5667 = vmatmul.mubr.f32.gmra.mxu0 %v5220
  %v5668 = vpop.f32.mrf.mxu0
  %v5669 = vadd.f32 %v5524, %v5668
  %v5670 = vpop.f32.mrf.mxu0
  %5671 = vmatprep.mubr.f32.mxu0 0.0
  %5672 = vmatmul.mubr.f32.gmra.mxu0 0.0
  %v5673 = vpop.f32.mrf.mxu0
  %v5674 = vadd.f32 %v5529, %v5673
  %v5675 = vpop.f32.mrf.mxu0
  %5676 = vmatprep.mubr.f32.mxu0 0.0
  %5677 = vmatmul.mubr.f32.gmra.mxu0 %v5232
  %v5678 = vpop.f32.mrf.mxu0
  %v5679 = vadd.f32 %v5534, %v5678
  %v5680 = vpop.f32.mrf.mxu0
  %5681 = vmatprep.mubr.f32.mxu0 0.0
  %5682 = vmatmul.mubr.f32.gmra.mxu0 %v5234
  %v5683 = vpop.f32.mrf.mxu0
  %v5684 = vadd.f32 %v5539, %v5683
  %v5685 = vpop.f32.mrf.mxu0
  %5686 = vmatprep.mubr.f32.mxu0 0.0
  %5687 = vmatmul.mubr.f32.gmra.mxu0 %v5236
  %v5688 = vpop.f32.mrf.mxu0
  %v5689 = vadd.f32 %v5544, %v5688
  %v5690 = vpop.f32.mrf.mxu0
  %5691 = vmatprep.mubr.f32.mxu0 0.0
  %5692 = vmatmul.mubr.f32.gmra.mxu0 0.0
  %v5693 = vpop.f32.mrf.mxu0
  %v5694 = vadd.f32 %v5549, %v5693
  %v5695 = vpop.f32.mrf.mxu0
  %5696 = vmatprep.mubr.f32.mxu0 0.0
  %5697 = vmatmul.mubr.f32.gmra.mxu0 %v5248
  %v5698 = vpop.f32.mrf.mxu0
  %v5699 = vadd.f32 %v5554, %v5698
  %v5700 = vpop.f32.mrf.mxu0
  %5701 = vmatprep.mubr.f32.mxu0 0.0
  %5702 = vmatmul.mubr.f32.gmra.mxu0 %v5250
  %v5703 = vpop.f32.mrf.mxu0
  %v5704 = vadd.f32 %v5559, %v5703
  %v5705 = vpop.f32.mrf.mxu0
  %5706 = vmatprep.mubr.f32.mxu0 0.0
  %5707 = vmatmul.mubr.f32.gmra.mxu0 %v5252
  %v5708 = vpop.f32.mrf.mxu0
  %v5709 = vadd.f32 %v5564, %v5708
  %v5710 = vpop.f32.mrf.mxu0
  %5711 = vdwg.mxu0
  %5712 = vmatprep.subr.mxu0 0.0
  %5713 = vmatpush1.msra.mxu0 %v5319
  %5714 = vmatprep.subr.mxu0 0.0
  %5715 = vmatpush1.msra.mxu0 %v5318
  %5716 = vmatprep.subr.mxu0 0.0
  %5717 = vmatpush1.msra.mxu0 %v5317
  %5718 = vmatprep.subr.mxu0 0.0
  %5719 = vmatpush1.msra.mxu0 %v5316
  %5720 = vmatprep.subr.mxu0 0.0
  %5721 = vmatpush1.msra.mxu0 %v5315
  %5722 = vmatprep.subr.mxu0 0.0
  %5723 = vmatpush1.msra.mxu0 %v5314
  %5724 = vmatprep.subr.mxu0 0.0
  %5725 = vmatpush1.msra.mxu0 %v5313
  %5726 = vmatprep.subr.mxu0 0.0
  %5727 = vmatpush1.msra.mxu0 %v5312
  %5728 = vmatprep.subr.mxu0 0.0
  %5729 = vmatpush1.msra.mxu0 %v5311
  %5730 = vmatprep.subr.mxu0 0.0
  %5731 = vmatpush1.msra.mxu0 %v5310
  %5732 = vmatprep.subr.mxu0 0.0
  %5733 = vmatpush1.msra.mxu0 %v5309
  %5734 = vmatprep.subr.mxu0 0.0
  %5735 = vmatpush1.msra.mxu0 %v5308
  %5736 = vmatprep.subr.mxu0 0.0
  %5737 = vmatpush1.msra.mxu0 %v5307
  %5738 = vmatprep.subr.mxu0 0.0
  %5739 = vmatpush1.msra.mxu0 %v5306
  %5740 = vmatprep.subr.mxu0 0.0
  %5741 = vmatpush1.msra.mxu0 %v5305
  %5742 = vmatprep.subr.mxu0 0.0
  %5743 = vmatpush1.msra.mxu0 %v5304
  %5744 = vmatprep.subr.mxu0 0.0
  %5745 = vmatpush2.msra.mxu0 0.0
  %5746 = vmatprep.subr.mxu0 0.0
  %5747 = vmatpush2.msra.mxu0 0.0
  %5748 = vmatprep.subr.mxu0 0.0
  %5749 = vmatpush2.msra.mxu0 0.0
  %5750 = vmatprep.subr.mxu0 0.0
  %5751 = vmatpush2.msra.mxu0 0.0
  %5752 = vmatprep.subr.mxu0 0.0
  %5753 = vmatpush2.msra.mxu0 0.0
  %5754 = vmatprep.subr.mxu0 0.0
  %5755 = vmatpush2.msra.mxu0 0.0
  %5756 = vmatprep.subr.mxu0 0.0
  %5757 = vmatpush2.msra.mxu0 0.0
  %5758 = vmatprep.subr.mxu0 0.0
  %5759 = vmatpush2.msra.mxu0 0.0
  %5760 = vmatprep.subr.mxu0 0.0
  %5761 = vmatpush2.msra.mxu0 0.0
  %5762 = vmatprep.subr.mxu0 0.0
  %5763 = vmatpush2.msra.mxu0 0.0
  %5764 = vmatprep.subr.mxu0 0.0
  %5765 = vmatpush2.msra.mxu0 0.0
  %5766 = vmatprep.subr.mxu0 0.0
  %5767 = vmatpush2.msra.mxu0 0.0
  %5768 = vmatprep.subr.mxu0 0.0
  %5769 = vmatpush2.msra.mxu0 0.0
  %5770 = vmatprep.subr.mxu0 0.0
  %5771 = vmatpush2.msra.mxu0 0.0
  %5772 = vmatprep.subr.mxu0 0.0
  %5773 = vmatpush2.msra.mxu0 0.0
  %5774 = vmatprep.subr.mxu0 0.0
  %5775 = vmatpush2.msra.mxu0 0.0
  %5776 = vmatprep.mubr.f32.mxu0 0.0
  %5777 = vmatmul.mubr.f32.gmra.mxu0 0.0
  %v5778 = vpop.f32.mrf.mxu0
  %v5779 = vadd.f32 0.0, %v5778
  %v5780 = vpop.f32.mrf.mxu0
  %5781 = vmatprep.mubr.f32.mxu0 0.0
  %5782 = vmatmul.mubr.f32.gmra.mxu0 0.0
  %v5783 = vpop.f32.mrf.mxu0
  %v5784 = vadd.f32 0.0, %v5783
  %v5785 = vpop.f32.mrf.mxu0
  %5786 = vmatprep.mubr.f32.mxu0 0.0
  %5787 = vmatmul.mubr.f32.gmra.mxu0 0.0
  %v5788 = vpop.f32.mrf.mxu0
  %v5789 = vadd.f32 0.0, %v5788
  %v5790 = vpop.f32.mrf.mxu0
  %5791 = vmatprep.mubr.f32.mxu0 0.0
  %5792 = vmatmul.mubr.f32.gmra.mxu0 0.0
  %v5793 = vpop.f32.mrf.mxu0
  %v5794 = vadd.f32 0.0, %v5793
  %v5795 = vpop.f32.mrf.mxu0
  %5796 = vmatprep.mubr.f32.mxu0 0.0
  %5797 = vmatmul.mubr.f32.gmra.mxu0 %v5216
  %v5798 = vpop.f32.mrf.mxu0
  %v5799 = vadd.f32 0.0, %v5798
  %v5800 = vpop.f32.mrf.mxu0
  %5801 = vmatprep.mubr.f32.mxu0 0.0
  %5802 = vmatmul.mubr.f32.gmra.mxu0 %v5218
  %v5803 = vpop.f32.mrf.mxu0
  %v5804 = vadd.f32 0.0, %v5803
  %v5805 = vpop.f32.mrf.mxu0
  %5806 = vmatprep.mubr.f32.mxu0 0.0
  %5807 = vmatmul.mubr.f32.gmra.mxu0 %v5220
  %v5808 = vpop.f32.mrf.mxu0
  %v5809 = vadd.f32 0.0, %v5808
  %v5810 = vpop.f32.mrf.mxu0
  %5811 = vmatprep.mubr.f32.mxu0 0.0
  %5812 = vmatmul.mubr.f32.gmra.mxu0 %v5222
  %v5813 = vpop.f32.mrf.mxu0
  %v5814 = vadd.f32 0.0, %v5813
  %v5815 = vpop.f32.mrf.mxu0
  %5816 = vmatprep.mubr.f32.mxu0 0.0
  %5817 = vmatmul.mubr.f32.gmra.mxu0 %v5232
  %v5818 = vpop.f32.mrf.mxu0
  %v5819 = vadd.f32 0.0, %v5818
  %v5820 = vpop.f32.mrf.mxu0
  %5821 = vmatprep.mubr.f32.mxu0 0.0
  %5822 = vmatmul.mubr.f32.gmra.mxu0 %v5234
  %v5823 = vpop.f32.mrf.mxu0
  %v5824 = vadd.f32 0.0, %v5823
  %v5825 = vpop.f32.mrf.mxu0
  %5826 = vmatprep.mubr.f32.mxu0 0.0
  %5827 = vmatmul.mubr.f32.gmra.mxu0 %v5236
  %v5828 = vpop.f32.mrf.mxu0
  %v5829 = vadd.f32 0.0, %v5828
  %v5830 = vpop.f32.mrf.mxu0
  %5831 = vmatprep.mubr.f32.mxu0 0.0
  %5832 = vmatmul.mubr.f32.gmra.mxu0 %v5238
  %v5833 = vpop.f32.mrf.mxu0
  %v5834 = vadd.f32 0.0, %v5833
  %v5835 = vpop.f32.mrf.mxu0
  %5836 = vmatprep.mubr.f32.mxu0 0.0
  %5837 = vmatmul.mubr.f32.gmra.mxu0 %v5248
  %v5838 = vpop.f32.mrf.mxu0
  %v5839 = vadd.f32 0.0, %v5838
  %v5840 = vpop.f32.mrf.mxu0
  %5841 = vmatprep.mubr.f32.mxu0 0.0
  %5842 = vmatmul.mubr.f32.gmra.mxu0 %v5250
  %v5843 = vpop.f32.mrf.mxu0
  %v5844 = vadd.f32 0.0, %v5843
  %v5845 = vpop.f32.mrf.mxu0
  %5846 = vmatprep.mubr.f32.mxu0 0.0
  %5847 = vmatmul.mubr.f32.gmra.mxu0 %v5252
  %v5848 = vpop.f32.mrf.mxu0
  %v5849 = vadd.f32 0.0, %v5848
  %v5850 = vpop.f32.mrf.mxu0
  %5851 = vmatprep.mubr.f32.mxu0 0.0
  %5852 = vmatmul.mubr.f32.gmra.mxu0 %v5254
  %v5853 = vpop.f32.mrf.mxu0
  %v5854 = vadd.f32 0.0, %v5853
  %v5855 = vpop.f32.mrf.mxu0
  %5856 = vdwg.mxu0
  %v5857 = vadd.f32 %v5634, %v5779
  %v5858 = vadd.f32 %v5639, %v5784
  %v5859 = vadd.f32 %v5644, %v5789
  %v5860 = vadd.f32 %v5649, %v5794
  %v5861 = vadd.f32 %v5654, %v5799
  %v5862 = vadd.f32 %v5659, %v5804
  %v5863 = vadd.f32 %v5664, %v5809
  %v5864 = vadd.f32 %v5669, %v5814
  %v5865 = vadd.f32 %v5674, %v5819
  %v5866 = vadd.f32 %v5679, %v5824
  %v5867 = vadd.f32 %v5684, %v5829
  %v5868 = vadd.f32 %v5689, %v5834
  %v5869 = vadd.f32 %v5694, %v5839
  %v5870 = vadd.f32 %v5699, %v5844
  %v5871 = vadd.f32 %v5704, %v5849
  %v5872 = vadd.f32 %v5709, %v5854
  %5873 = vmatprep.subr.mxu0 0.0
  %5874 = vmatpush1.msra.mxu0 %v5335
  %5875 = vmatprep.subr.mxu0 0.0
  %5876 = vmatpush1.msra.mxu0 %v5334
  %5877 = vmatprep.subr.mxu0 0.0
  %5878 = vmatpush1.msra.mxu0 %v5333
  %5879 = vmatprep.subr.mxu0 0.0
  %5880 = vmatpush1.msra.mxu0 %v5332
  %5881 = vmatprep.subr.mxu0 0.0
  %5882 = vmatpush1.msra.mxu0 %v5331
  %5883 = vmatprep.subr.mxu0 0.0
  %5884 = vmatpush1.msra.mxu0 %v5330
  %5885 = vmatprep.subr.mxu0 0.0
  %5886 = vmatpush1.msra.mxu0 %v5329
  %5887 = vmatprep.subr.mxu0 0.0
  %5888 = vmatpush1.msra.mxu0 %v5328
  %5889 = vmatprep.subr.mxu0 0.0
  %5890 = vmatpush1.msra.mxu0 %v5327
  %5891 = vmatprep.subr.mxu0 0.0
  %5892 = vmatpush1.msra.mxu0 %v5326
  %5893 = vmatprep.subr.mxu0 0.0
  %5894 = vmatpush1.msra.mxu0 %v5325
  %5895 = vmatprep.subr.mxu0 0.0
  %5896 = vmatpush1.msra.mxu0 %v5324
  %5897 = vmatprep.subr.mxu0 0.0
  %5898 = vmatpush1.msra.mxu0 %v5323
  %5899 = vmatprep.subr.mxu0 0.0
  %5900 = vmatpush1.msra.mxu0 %v5322
  %5901 = vmatprep.subr.mxu0 0.0
  %5902 = vmatpush1.msra.mxu0 %v5321
  %5903 = vmatprep.subr.mxu0 0.0
  %5904 = vmatpush1.msra.mxu0 %v5320
  %5905 = vmatprep.subr.mxu0 0.0
  %5906 = vmatpush2.msra.mxu0 0.0
  %5907 = vmatprep.subr.mxu0 0.0
  %5908 = vmatpush2.msra.mxu0 0.0
  %5909 = vmatprep.subr.mxu0 0.0
  %5910 = vmatpush2.msra.mxu0 0.0
  %5911 = vmatprep.subr.mxu0 0.0
  %5912 = vmatpush2.msra.mxu0 0.0
  %5913 = vmatprep.subr.mxu0 0.0
  %5914 = vmatpush2.msra.mxu0 0.0
  %5915 = vmatprep.subr.mxu0 0.0
  %5916 = vmatpush2.msra.mxu0 0.0
  %5917 = vmatprep.subr.mxu0 0.0
  %5918 = vmatpush2.msra.mxu0 0.0
  %5919 = vmatprep.subr.mxu0 0.0
  %5920 = vmatpush2.msra.mxu0 0.0
  %5921 = vmatprep.subr.mxu0 0.0
  %5922 = vmatpush2.msra.mxu0 0.0
  %5923 = vmatprep.subr.mxu0 0.0
  %5924 = vmatpush2.msra.mxu0 0.0
  %5925 = vmatprep.subr.mxu0 0.0
  %5926 = vmatpush2.msra.mxu0 0.0
  %5927 = vmatprep.subr.mxu0 0.0
  %5928 = vmatpush2.msra.mxu0 0.0
  %5929 = vmatprep.subr.mxu0 0.0
  %5930 = vmatpush2.msra.mxu0 0.0
  %5931 = vmatprep.subr.mxu0 0.0
  %5932 = vmatpush2.msra.mxu0 0.0
  %5933 = vmatprep.subr.mxu0 0.0
  %5934 = vmatpush2.msra.mxu0 0.0
  %5935 = vmatprep.subr.mxu0 0.0
  %5936 = vmatpush2.msra.mxu0 0.0
  %5937 = vmatprep.mubr.f32.mxu0 0.0
  %5938 = vmatmul.mubr.f32.gmra.mxu0 0.0
  %v5939 = vpop.f32.mrf.mxu0
  %v5940 = vadd.f32 0.0, %v5939
  %v5941 = vpop.f32.mrf.mxu0
  %5942 = vmatprep.mubr.f32.mxu0 0.0
  %5943 = vmatmul.mubr.f32.gmra.mxu0 %v5208
  %v5944 = vpop.f32.mrf.mxu0
  %v5945 = vadd.f32 0.0, %v5944
  %v5946 = vpop.f32.mrf.mxu0
  %5947 = vmatprep.mubr.f32.mxu0 0.0
  %5948 = vmatmul.mubr.f32.gmra.mxu0 %v5210
  %v5949 = vpop.f32.mrf.mxu0
  %v5950 = vadd.f32 0.0, %v5949
  %v5951 = vpop.f32.mrf.mxu0
  %5952 = vmatprep.mubr.f32.mxu0 0.0
  %5953 = vmatmul.mubr.f32.gmra.mxu0 %v5212
  %v5954 = vpop.f32.mrf.mxu0
  %v5955 = vadd.f32 0.0, %v5954
  %v5956 = vpop.f32.mrf.mxu0
  %5957 = vmatprep.mubr.f32.mxu0 0.0
  %5958 = vmatmul.mubr.f32.gmra.mxu0 0.0
  %v5959 = vpop.f32.mrf.mxu0
  %v5960 = vadd.f32 0.0, %v5959
  %v5961 = vpop.f32.mrf.mxu0
  %5962 = vmatprep.mubr.f32.mxu0 0.0
  %5963 = vmatmul.mubr.f32.gmra.mxu0 %v5224
  %v5964 = vpop.f32.mrf.mxu0
  %v5965 = vadd.f32 0.0, %v5964
  %v5966 = vpop.f32.mrf.mxu0
  %5967 = vmatprep.mubr.f32.mxu0 0.0
  %5968 = vmatmul.mubr.f32.gmra.mxu0 %v5226
  %v5969 = vpop.f32.mrf.mxu0
  %v5970 = vadd.f32 0.0, %v5969
  %v5971 = vpop.f32.mrf.mxu0
  %5972 = vmatprep.mubr.f32.mxu0 0.0
  %5973 = vmatmul.mubr.f32.gmra.mxu0 %v5228
  %v5974 = vpop.f32.mrf.mxu0
  %v5975 = vadd.f32 0.0, %v5974
  %v5976 = vpop.f32.mrf.mxu0
  %5977 = vmatprep.mubr.f32.mxu0 0.0
  %5978 = vmatmul.mubr.f32.gmra.mxu0 0.0
  %v5979 = vpop.f32.mrf.mxu0
  %v5980 = vadd.f32 0.0, %v5979
  %v5981 = vpop.f32.mrf.mxu0
  %5982 = vmatprep.mubr.f32.mxu0 0.0
  %5983 = vmatmul.mubr.f32.gmra.mxu0 %v5240
  %v5984 = vpop.f32.mrf.mxu0
  %v5985 = vadd.f32 0.0, %v5984
  %v5986 = vpop.f32.mrf.mxu0
  %5987 = vmatprep.mubr.f32.mxu0 0.0
  %5988 = vmatmul.mubr.f32.gmra.mxu0 %v5242
  %v5989 = vpop.f32.mrf.mxu0
  %v5990 = vadd.f32 0.0, %v5989
  %v5991 = vpop.f32.mrf.mxu0
  %5992 = vmatprep.mubr.f32.mxu0 0.0
  %5993 = vmatmul.mubr.f32.gmra.mxu0 %v5244
  %v5994 = vpop.f32.mrf.mxu0
  %v5995 = vadd.f32 0.0, %v5994
  %v5996 = vpop.f32.mrf.mxu0
  %5997 = vmatprep.mubr.f32.mxu0 0.0
  %5998 = vmatmul.mubr.f32.gmra.mxu0 0.0
  %v5999 = vpop.f32.mrf.mxu0
  %v6000 = vadd.f32 0.0, %v5999
  %v6001 = vpop.f32.mrf.mxu0
  %6002 = vmatprep.mubr.f32.mxu0 0.0
  %6003 = vmatmul.mubr.f32.gmra.mxu0 %v5256
  %v6004 = vpop.f32.mrf.mxu0
  %v6005 = vadd.f32 0.0, %v6004
  %v6006 = vpop.f32.mrf.mxu0
  %6007 = vmatprep.mubr.f32.mxu0 0.0
  %6008 = vmatmul.mubr.f32.gmra.mxu0 %v5258
  %v6009 = vpop.f32.mrf.mxu0
  %v6010 = vadd.f32 0.0, %v6009
  %v6011 = vpop.f32.mrf.mxu0
  %6012 = vmatprep.mubr.f32.mxu0 0.0
  %6013 = vmatmul.mubr.f32.gmra.mxu0 %v5260
  %v6014 = vpop.f32.mrf.mxu0
  %v6015 = vadd.f32 0.0, %v6014
  %v6016 = vpop.f32.mrf.mxu0
  %6017 = vdwg.mxu0
  %v6018 = vadd.f32 %v5857, %v5940
  %v6019 = vadd.f32 %v5858, %v5945
  %v6020 = vadd.f32 %v5859, %v5950
  %v6021 = vadd.f32 %v5860, %v5955
  %v6022 = vadd.f32 %v5861, %v5960
  %v6023 = vadd.f32 %v5862, %v5965
  %v6024 = vadd.f32 %v5863, %v5970
  %v6025 = vadd.f32 %v5864, %v5975
  %v6026 = vadd.f32 %v5865, %v5980
  %v6027 = vadd.f32 %v5866, %v5985
  %v6028 = vadd.f32 %v5867, %v5990
  %v6029 = vadd.f32 %v5868, %v5995
  %v6030 = vadd.f32 %v5869, %v6000
  %v6031 = vadd.f32 %v5870, %v6005
  %v6032 = vadd.f32 %v5871, %v6010
  %v6033 = vadd.f32 %v5872, %v6015
  %6034 = vmatprep.subr.mxu0 0.0
  %6035 = vmatpush1.msra.mxu0 %v5351
  %6036 = vmatprep.subr.mxu0 0.0
  %6037 = vmatpush1.msra.mxu0 %v5350
  %6038 = vmatprep.subr.mxu0 0.0
  %6039 = vmatpush1.msra.mxu0 %v5349
  %6040 = vmatprep.subr.mxu0 0.0
  %6041 = vmatpush1.msra.mxu0 %v5348
  %6042 = vmatprep.subr.mxu0 0.0
  %6043 = vmatpush1.msra.mxu0 %v5347
  %6044 = vmatprep.subr.mxu0 0.0
  %6045 = vmatpush1.msra.mxu0 %v5346
  %6046 = vmatprep.subr.mxu0 0.0
  %6047 = vmatpush1.msra.mxu0 %v5345
  %6048 = vmatprep.subr.mxu0 0.0
  %6049 = vmatpush1.msra.mxu0 %v5344
  %6050 = vmatprep.subr.mxu0 0.0
  %6051 = vmatpush1.msra.mxu0 %v5343
  %6052 = vmatprep.subr.mxu0 0.0
  %6053 = vmatpush1.msra.mxu0 %v5342
  %6054 = vmatprep.subr.mxu0 0.0
  %6055 = vmatpush1.msra.mxu0 %v5341
  %6056 = vmatprep.subr.mxu0 0.0
  %6057 = vmatpush1.msra.mxu0 %v5340
  %6058 = vmatprep.subr.mxu0 0.0
  %6059 = vmatpush1.msra.mxu0 %v5339
  %6060 = vmatprep.subr.mxu0 0.0
  %6061 = vmatpush1.msra.mxu0 %v5338
  %6062 = vmatprep.subr.mxu0 0.0
  %6063 = vmatpush1.msra.mxu0 %v5337
  %6064 = vmatprep.subr.mxu0 0.0
  %6065 = vmatpush1.msra.mxu0 %v5336
  %6066 = vmatprep.subr.mxu0 0.0
  %6067 = vmatpush2.msra.mxu0 0.0
  %6068 = vmatprep.subr.mxu0 0.0
  %6069 = vmatpush2.msra.mxu0 0.0
  %6070 = vmatprep.subr.mxu0 0.0
  %6071 = vmatpush2.msra.mxu0 0.0
  %6072 = vmatprep.subr.mxu0 0.0
  %6073 = vmatpush2.msra.mxu0 0.0
  %6074 = vmatprep.subr.mxu0 0.0
  %6075 = vmatpush2.msra.mxu0 0.0
  %6076 = vmatprep.subr.mxu0 0.0
  %6077 = vmatpush2.msra.mxu0 0.0
  %6078 = vmatprep.subr.mxu0 0.0
  %6079 = vmatpush2.msra.mxu0 0.0
  %6080 = vmatprep.subr.mxu0 0.0
  %6081 = vmatpush2.msra.mxu0 0.0
  %6082 = vmatprep.subr.mxu0 0.0
  %6083 = vmatpush2.msra.mxu0 0.0
  %6084 = vmatprep.subr.mxu0 0.0
  %6085 = vmatpush2.msra.mxu0 0.0
  %6086 = vmatprep.subr.mxu0 0.0
  %6087 = vmatpush2.msra.mxu0 0.0
  %6088 = vmatprep.subr.mxu0 0.0
  %6089 = vmatpush2.msra.mxu0 0.0
  %6090 = vmatprep.subr.mxu0 0.0
  %6091 = vmatpush2.msra.mxu0 0.0
  %6092 = vmatprep.subr.mxu0 0.0
  %6093 = vmatpush2.msra.mxu0 0.0
  %6094 = vmatprep.subr.mxu0 0.0
  %6095 = vmatpush2.msra.mxu0 0.0
  %6096 = vmatprep.subr.mxu0 0.0
  %6097 = vmatpush2.msra.mxu0 0.0
  %6098 = vmatprep.mubr.f32.mxu0 0.0
  %6099 = vmatmul.mubr.f32.gmra.mxu0 %v5207
  %v6100 = vpop.f32.mrf.mxu0
  %v6101 = vadd.f32 0.0, %v6100
  %v6102 = vpop.f32.mrf.mxu0
  %6103 = vmatprep.mubr.f32.mxu0 0.0
  %6104 = vmatmul.mubr.f32.gmra.mxu0 %v5209
  %v6105 = vpop.f32.mrf.mxu0
  %v6106 = vadd.f32 0.0, %v6105
  %v6107 = vpop.f32.mrf.mxu0
  %6108 = vmatprep.mubr.f32.mxu0 0.0
  %6109 = vmatmul.mubr.f32.gmra.mxu0 %v5211
  %v6110 = vpop.f32.mrf.mxu0
  %v6111 = vadd.f32 0.0, %v6110
  %v6112 = vpop.f32.mrf.mxu0
  %6113 = vmatprep.mubr.f32.mxu0 0.0
  %6114 = vmatmul.mubr.f32.gmra.mxu0 %v5213
  %v6115 = vpop.f32.mrf.mxu0
  %v6116 = vadd.f32 0.0, %v6115
  %v6117 = vpop.f32.mrf.mxu0
  %6118 = vmatprep.mubr.f32.mxu0 0.0
  %6119 = vmatmul.mubr.f32.gmra.mxu0 %v5223
  %v6120 = vpop.f32.mrf.mxu0
  %v6121 = vadd.f32 0.0, %v6120
  %v6122 = vpop.f32.mrf.mxu0
  %6123 = vmatprep.mubr.f32.mxu0 0.0
  %6124 = vmatmul.mubr.f32.gmra.mxu0 %v5225
  %v6125 = vpop.f32.mrf.mxu0
  %v6126 = vadd.f32 0.0, %v6125
  %v6127 = vpop.f32.mrf.mxu0
  %6128 = vmatprep.mubr.f32.mxu0 0.0
  %6129 = vmatmul.mubr.f32.gmra.mxu0 %v5227
  %v6130 = vpop.f32.mrf.mxu0
  %v6131 = vadd.f32 0.0, %v6130
  %v6132 = vpop.f32.mrf.mxu0
  %6133 = vmatprep.mubr.f32.mxu0 0.0
  %6134 = vmatmul.mubr.f32.gmra.mxu0 %v5229
  %v6135 = vpop.f32.mrf.mxu0
  %v6136 = vadd.f32 0.0, %v6135
  %v6137 = vpop.f32.mrf.mxu0
  %6138 = vmatprep.mubr.f32.mxu0 0.0
  %6139 = vmatmul.mubr.f32.gmra.mxu0 %v5239
  %v6140 = vpop.f32.mrf.mxu0
  %v6141 = vadd.f32 0.0, %v6140
  %v6142 = vpop.f32.mrf.mxu0
  %6143 = vmatprep.mubr.f32.mxu0 0.0
  %6144 = vmatmul.mubr.f32.gmra.mxu0 %v5241
  %v6145 = vpop.f32.mrf.mxu0
  %v6146 = vadd.f32 0.0, %v6145
  %v6147 = vpop.f32.mrf.mxu0
  %6148 = vmatprep.mubr.f32.mxu0 0.0
  %6149 = vmatmul.mubr.f32.gmra.mxu0 %v5243
  %v6150 = vpop.f32.mrf.mxu0
  %v6151 = vadd.f32 0.0, %v6150
  %v6152 = vpop.f32.mrf.mxu0
  %6153 = vmatprep.mubr.f32.mxu0 0.0
  %6154 = vmatmul.mubr.f32.gmra.mxu0 %v5245
  %v6155 = vpop.f32.mrf.mxu0
  %v6156 = vadd.f32 0.0, %v6155
  %v6157 = vpop.f32.mrf.mxu0
  %6158 = vmatprep.mubr.f32.mxu0 0.0
  %6159 = vmatmul.mubr.f32.gmra.mxu0 %v5255
  %v6160 = vpop.f32.mrf.mxu0
  %v6161 = vadd.f32 0.0, %v6160
  %v6162 = vpop.f32.mrf.mxu0
  %6163 = vmatprep.mubr.f32.mxu0 0.0
  %6164 = vmatmul.mubr.f32.gmra.mxu0 %v5257
  %v6165 = vpop.f32.mrf.mxu0
  %v6166 = vadd.f32 0.0, %v6165
  %v6167 = vpop.f32.mrf.mxu0
  %6168 = vmatprep.mubr.f32.mxu0 0.0
  %6169 = vmatmul.mubr.f32.gmra.mxu0 %v5259
  %v6170 = vpop.f32.mrf.mxu0
  %v6171 = vadd.f32 0.0, %v6170
  %v6172 = vpop.f32.mrf.mxu0
  %6173 = vmatprep.mubr.f32.mxu0 0.0
  %6174 = vmatmul.mubr.f32.gmra.mxu0 %v5261
  %v6175 = vpop.f32.mrf.mxu0
  %v6176 = vadd.f32 0.0, %v6175
  %v6177 = vpop.f32.mrf.mxu0
  %6178 = vdwg.mxu0
  %v6179 = vadd.f32 %v6018, %v6101
  %v6180 = vadd.f32 %v6019, %v6106
  %v6181 = vadd.f32 %v6020, %v6111
  %v6182 = vadd.f32 %v6021, %v6116
  %v6183 = vadd.f32 %v6022, %v6121
  %v6184 = vadd.f32 %v6023, %v6126
  %v6185 = vadd.f32 %v6024, %v6131
  %v6186 = vadd.f32 %v6025, %v6136
  %v6187 = vadd.f32 %v6026, %v6141
  %v6188 = vadd.f32 %v6027, %v6146
  %v6189 = vadd.f32 %v6028, %v6151
  %v6190 = vadd.f32 %v6029, %v6156
  %v6191 = vadd.f32 %v6030, %v6161
  %v6192 = vadd.f32 %v6031, %v6166
  %v6193 = vadd.f32 %v6032, %v6171
  %v6194 = vadd.f32 %v6033, %v6176
  %6195 = vmatprep.subr.mxu0 0.0
  %6196 = vmatpush1.msra.mxu0 %v5367
  %6197 = vmatprep.subr.mxu0 0.0
  %6198 = vmatpush1.msra.mxu0 %v5366
  %6199 = vmatprep.subr.mxu0 0.0
  %6200 = vmatpush1.msra.mxu0 %v5365
  %6201 = vmatprep.subr.mxu0 0.0
  %6202 = vmatpush1.msra.mxu0 %v5364
  %6203 = vmatprep.subr.mxu0 0.0
  %6204 = vmatpush1.msra.mxu0 %v5363
  %6205 = vmatprep.subr.mxu0 0.0
  %6206 = vmatpush1.msra.mxu0 %v5362
  %6207 = vmatprep.subr.mxu0 0.0
  %6208 = vmatpush1.msra.mxu0 %v5361
  %6209 = vmatprep.subr.mxu0 0.0
  %6210 = vmatpush1.msra.mxu0 %v5360
  %6211 = vmatprep.subr.mxu0 0.0
  %6212 = vmatpush1.msra.mxu0 %v5359
  %6213 = vmatprep.subr.mxu0 0.0
  %6214 = vmatpush1.msra.mxu0 %v5358
  %6215 = vmatprep.subr.mxu0 0.0
  %6216 = vmatpush1.msra.mxu0 %v5357
  %6217 = vmatprep.subr.mxu0 0.0
  %6218 = vmatpush1.msra.mxu0 %v5356
  %6219 = vmatprep.subr.mxu0 0.0
  %6220 = vmatpush1.msra.mxu0 %v5355
  %6221 = vmatprep.subr.mxu0 0.0
  %6222 = vmatpush1.msra.mxu0 %v5354
  %6223 = vmatprep.subr.mxu0 0.0
  %6224 = vmatpush1.msra.mxu0 %v5353
  %6225 = vmatprep.subr.mxu0 0.0
  %6226 = vmatpush1.msra.mxu0 %v5352
  %6227 = vmatprep.subr.mxu0 0.0
  %6228 = vmatpush2.msra.mxu0 0.0
  %6229 = vmatprep.subr.mxu0 0.0
  %6230 = vmatpush2.msra.mxu0 0.0
  %6231 = vmatprep.subr.mxu0 0.0
  %6232 = vmatpush2.msra.mxu0 0.0
  %6233 = vmatprep.subr.mxu0 0.0
  %6234 = vmatpush2.msra.mxu0 0.0
  %6235 = vmatprep.subr.mxu0 0.0
  %6236 = vmatpush2.msra.mxu0 0.0
  %6237 = vmatprep.subr.mxu0 0.0
  %6238 = vmatpush2.msra.mxu0 0.0
  %6239 = vmatprep.subr.mxu0 0.0
  %6240 = vmatpush2.msra.mxu0 0.0
  %6241 = vmatprep.subr.mxu0 0.0
  %6242 = vmatpush2.msra.mxu0 0.0
  %6243 = vmatprep.subr.mxu0 0.0
  %6244 = vmatpush2.msra.mxu0 0.0
  %6245 = vmatprep.subr.mxu0 0.0
  %6246 = vmatpush2.msra.mxu0 0.0
  %6247 = vmatprep.subr.mxu0 0.0
  %6248 = vmatpush2.msra.mxu0 0.0
  %6249 = vmatprep.subr.mxu0 0.0
  %6250 = vmatpush2.msra.mxu0 0.0
  %6251 = vmatprep.subr.mxu0 0.0
  %6252 = vmatpush2.msra.mxu0 0.0
  %6253 = vmatprep.subr.mxu0 0.0
  %6254 = vmatpush2.msra.mxu0 0.0
  %6255 = vmatprep.subr.mxu0 0.0
  %6256 = vmatpush2.msra.mxu0 0.0
  %6257 = vmatprep.subr.mxu0 0.0
  %6258 = vmatpush2.msra.mxu0 0.0
  %6259 = vmatprep.mubr.f32.mxu0 0.0
  %6260 = vmatmul.mubr.f32.gmra.mxu0 %v5208
  %v6261 = vpop.f32.mrf.mxu0
  %v6262 = vadd.f32 0.0, %v6261
  %v6263 = vpop.f32.mrf.mxu0
  %6264 = vmatprep.mubr.f32.mxu0 0.0
  %6265 = vmatmul.mubr.f32.gmra.mxu0 %v5210
  %v6266 = vpop.f32.mrf.mxu0
  %v6267 = vadd.f32 0.0, %v6266
  %v6268 = vpop.f32.mrf.mxu0
  %6269 = vmatprep.mubr.f32.mxu0 0.0
  %6270 = vmatmul.mubr.f32.gmra.mxu0 %v5212
  %v6271 = vpop.f32.mrf.mxu0
  %v6272 = vadd.f32 0.0, %v6271
  %v6273 = vpop.f32.mrf.mxu0
  %6274 = vmatprep.mubr.f32.mxu0 0.0
  %6275 = vmatmul.mubr.f32.gmra.mxu0 %v5214
  %v6276 = vpop.f32.mrf.mxu0
  %v6277 = vadd.f32 0.0, %v6276
  %v6278 = vpop.f32.mrf.mxu0
  %6279 = vmatprep.mubr.f32.mxu0 0.0
  %6280 = vmatmul.mubr.f32.gmra.mxu0 %v5224
  %v6281 = vpop.f32.mrf.mxu0
  %v6282 = vadd.f32 0.0, %v6281
  %v6283 = vpop.f32.mrf.mxu0
  %6284 = vmatprep.mubr.f32.mxu0 0.0
  %6285 = vmatmul.mubr.f32.gmra.mxu0 %v5226
  %v6286 = vpop.f32.mrf.mxu0
  %v6287 = vadd.f32 0.0, %v6286
  %v6288 = vpop.f32.mrf.mxu0
  %6289 = vmatprep.mubr.f32.mxu0 0.0
  %6290 = vmatmul.mubr.f32.gmra.mxu0 %v5228
  %v6291 = vpop.f32.mrf.mxu0
  %v6292 = vadd.f32 0.0, %v6291
  %v6293 = vpop.f32.mrf.mxu0
  %6294 = vmatprep.mubr.f32.mxu0 0.0
  %6295 = vmatmul.mubr.f32.gmra.mxu0 %v5230
  %v6296 = vpop.f32.mrf.mxu0
  %v6297 = vadd.f32 0.0, %v6296
  %v6298 = vpop.f32.mrf.mxu0
  %6299 = vmatprep.mubr.f32.mxu0 0.0
  %6300 = vmatmul.mubr.f32.gmra.mxu0 %v5240
  %v6301 = vpop.f32.mrf.mxu0
  %v6302 = vadd.f32 0.0, %v6301
  %v6303 = vpop.f32.mrf.mxu0
  %6304 = vmatprep.mubr.f32.mxu0 0.0
  %6305 = vmatmul.mubr.f32.gmra.mxu0 %v5242
  %v6306 = vpop.f32.mrf.mxu0
  %v6307 = vadd.f32 0.0, %v6306
  %v6308 = vpop.f32.mrf.mxu0
  %6309 = vmatprep.mubr.f32.mxu0 0.0
  %6310 = vmatmul.mubr.f32.gmra.mxu0 %v5244
  %v6311 = vpop.f32.mrf.mxu0
  %v6312 = vadd.f32 0.0, %v6311
  %v6313 = vpop.f32.mrf.mxu0
  %6314 = vmatprep.mubr.f32.mxu0 0.0
  %6315 = vmatmul.mubr.f32.gmra.mxu0 %v5246
  %v6316 = vpop.f32.mrf.mxu0
  %v6317 = vadd.f32 0.0, %v6316
  %v6318 = vpop.f32.mrf.mxu0
  %6319 = vmatprep.mubr.f32.mxu0 0.0
  %6320 = vmatmul.mubr.f32.gmra.mxu0 %v5256
  %v6321 = vpop.f32.mrf.mxu0
  %v6322 = vadd.f32 0.0, %v6321
  %v6323 = vpop.f32.mrf.mxu0
  %6324 = vmatprep.mubr.f32.mxu0 0.0
  %6325 = vmatmul.mubr.f32.gmra.mxu0 %v5258
  %v6326 = vpop.f32.mrf.mxu0
  %v6327 = vadd.f32 0.0, %v6326
  %v6328 = vpop.f32.mrf.mxu0
  %6329 = vmatprep.mubr.f32.mxu0 0.0
  %6330 = vmatmul.mubr.f32.gmra.mxu0 %v5260
  %v6331 = vpop.f32.mrf.mxu0
  %v6332 = vadd.f32 0.0, %v6331
  %v6333 = vpop.f32.mrf.mxu0
  %6334 = vmatprep.mubr.f32.mxu0 0.0
  %6335 = vmatmul.mubr.f32.gmra.mxu0 %v5262
  %v6336 = vpop.f32.mrf.mxu0
  %v6337 = vadd.f32 0.0, %v6336
  %v6338 = vpop.f32.mrf.mxu0
  %6339 = vdwg.mxu0
  %v6340 = vadd.f32 %v6179, %v6262
  %v6341 = vadd.f32 %v6180, %v6267
  %v6342 = vadd.f32 %v6181, %v6272
  %v6343 = vadd.f32 %v6182, %v6277
  %v6344 = vadd.f32 %v6183, %v6282
  %v6345 = vadd.f32 %v6184, %v6287
  %v6346 = vadd.f32 %v6185, %v6292
  %v6347 = vadd.f32 %v6186, %v6297
  %v6348 = vadd.f32 %v6187, %v6302
  %v6349 = vadd.f32 %v6188, %v6307
  %v6350 = vadd.f32 %v6189, %v6312
  %v6351 = vadd.f32 %v6190, %v6317
  %v6352 = vadd.f32 %v6191, %v6322
  %v6353 = vadd.f32 %v6192, %v6327
  %v6354 = vadd.f32 %v6193, %v6332
  %v6355 = vadd.f32 %v6194, %v6337
  %6356 = vmatprep.subr.mxu0 0.0
  %6357 = vmatpush1.msra.mxu0 %v5383
  %6358 = vmatprep.subr.mxu0 0.0
  %6359 = vmatpush1.msra.mxu0 %v5382
  %6360 = vmatprep.subr.mxu0 0.0
  %6361 = vmatpush1.msra.mxu0 %v5381
  %6362 = vmatprep.subr.mxu0 0.0
  %6363 = vmatpush1.msra.mxu0 %v5380
  %6364 = vmatprep.subr.mxu0 0.0
  %6365 = vmatpush1.msra.mxu0 %v5379
  %6366 = vmatprep.subr.mxu0 0.0
  %6367 = vmatpush1.msra.mxu0 %v5378
  %6368 = vmatprep.subr.mxu0 0.0
  %6369 = vmatpush1.msra.mxu0 %v5377
  %6370 = vmatprep.subr.mxu0 0.0
  %6371 = vmatpush1.msra.mxu0 %v5376
  %6372 = vmatprep.subr.mxu0 0.0
  %6373 = vmatpush1.msra.mxu0 %v5375
  %6374 = vmatprep.subr.mxu0 0.0
  %6375 = vmatpush1.msra.mxu0 %v5374
  %6376 = vmatprep.subr.mxu0 0.0
  %6377 = vmatpush1.msra.mxu0 %v5373
  %6378 = vmatprep.subr.mxu0 0.0
  %6379 = vmatpush1.msra.mxu0 %v5372
  %6380 = vmatprep.subr.mxu0 0.0
  %6381 = vmatpush1.msra.mxu0 %v5371
  %6382 = vmatprep.subr.mxu0 0.0
  %6383 = vmatpush1.msra.mxu0 %v5370
  %6384 = vmatprep.subr.mxu0 0.0
  %6385 = vmatpush1.msra.mxu0 %v5369
  %6386 = vmatprep.subr.mxu0 0.0
  %6387 = vmatpush1.msra.mxu0 %v5368
  %6388 = vmatprep.subr.mxu0 0.0
  %6389 = vmatpush2.msra.mxu0 0.0
  %6390 = vmatprep.subr.mxu0 0.0
  %6391 = vmatpush2.msra.mxu0 0.0
  %6392 = vmatprep.subr.mxu0 0.0
  %6393 = vmatpush2.msra.mxu0 0.0
  %6394 = vmatprep.subr.mxu0 0.0
  %6395 = vmatpush2.msra.mxu0 0.0
  %6396 = vmatprep.subr.mxu0 0.0
  %6397 = vmatpush2.msra.mxu0 0.0
  %6398 = vmatprep.subr.mxu0 0.0
  %6399 = vmatpush2.msra.mxu0 0.0
  %6400 = vmatprep.subr.mxu0 0.0
  %6401 = vmatpush2.msra.mxu0 0.0
  %6402 = vmatprep.subr.mxu0 0.0
  %6403 = vmatpush2.msra.mxu0 0.0
  %6404 = vmatprep.subr.mxu0 0.0
  %6405 = vmatpush2.msra.mxu0 0.0
  %6406 = vmatprep.subr.mxu0 0.0
  %6407 = vmatpush2.msra.mxu0 0.0
  %6408 = vmatprep.subr.mxu0 0.0
  %6409 = vmatpush2.msra.mxu0 0.0
  %6410 = vmatprep.subr.mxu0 0.0
  %6411 = vmatpush2.msra.mxu0 0.0
  %6412 = vmatprep.subr.mxu0 0.0
  %6413 = vmatpush2.msra.mxu0 0.0
  %6414 = vmatprep.subr.mxu0 0.0
  %6415 = vmatpush2.msra.mxu0 0.0
  %6416 = vmatprep.subr.mxu0 0.0
  %6417 = vmatpush2.msra.mxu0 0.0
  %6418 = vmatprep.subr.mxu0 0.0
  %6419 = vmatpush2.msra.mxu0 0.0
  %6420 = vmatprep.mubr.f32.mxu0 0.0
  %6421 = vmatmul.mubr.f32.gmra.mxu0 0.0
  %v6422 = vpop.f32.mrf.mxu0
  %v6423 = vadd.f32 0.0, %v6422
  %v6424 = vpop.f32.mrf.mxu0
  %6425 = vmatprep.mubr.f32.mxu0 0.0
  %6426 = vmatmul.mubr.f32.gmra.mxu0 %v5216
  %v6427 = vpop.f32.mrf.mxu0
  %v6428 = vadd.f32 0.0, %v6427
  %v6429 = vpop.f32.mrf.mxu0
  %6430 = vmatprep.mubr.f32.mxu0 0.0
  %6431 = vmatmul.mubr.f32.gmra.mxu0 %v5218
  %v6432 = vpop.f32.mrf.mxu0
  %v6433 = vadd.f32 0.0, %v6432
  %v6434 = vpop.f32.mrf.mxu0
  %6435 = vmatprep.mubr.f32.mxu0 0.0
  %6436 = vmatmul.mubr.f32.gmra.mxu0 %v5220
  %v6437 = vpop.f32.mrf.mxu0
  %v6438 = vadd.f32 0.0, %v6437
  %v6439 = vpop.f32.mrf.mxu0
  %6440 = vmatprep.mubr.f32.mxu0 0.0
  %6441 = vmatmul.mubr.f32.gmra.mxu0 0.0
  %v6442 = vpop.f32.mrf.mxu0
  %v6443 = vadd.f32 0.0, %v6442
  %v6444 = vpop.f32.mrf.mxu0
  %6445 = vmatprep.mubr.f32.mxu0 0.0
  %6446 = vmatmul.mubr.f32.gmra.mxu0 %v5232
  %v6447 = vpop.f32.mrf.mxu0
  %v6448 = vadd.f32 0.0, %v6447
  %v6449 = vpop.f32.mrf.mxu0
  %6450 = vmatprep.mubr.f32.mxu0 0.0
  %6451 = vmatmul.mubr.f32.gmra.mxu0 %v5234
  %v6452 = vpop.f32.mrf.mxu0
  %v6453 = vadd.f32 0.0, %v6452
  %v6454 = vpop.f32.mrf.mxu0
  %6455 = vmatprep.mubr.f32.mxu0 0.0
  %6456 = vmatmul.mubr.f32.gmra.mxu0 %v5236
  %v6457 = vpop.f32.mrf.mxu0
  %v6458 = vadd.f32 0.0, %v6457
  %v6459 = vpop.f32.mrf.mxu0
  %6460 = vmatprep.mubr.f32.mxu0 0.0
  %6461 = vmatmul.mubr.f32.gmra.mxu0 0.0
  %v6462 = vpop.f32.mrf.mxu0
  %v6463 = vadd.f32 0.0, %v6462
  %v6464 = vpop.f32.mrf.mxu0
  %6465 = vmatprep.mubr.f32.mxu0 0.0
  %6466 = vmatmul.mubr.f32.gmra.mxu0 %v5248
  %v6467 = vpop.f32.mrf.mxu0
  %v6468 = vadd.f32 0.0, %v6467
  %v6469 = vpop.f32.mrf.mxu0
  %6470 = vmatprep.mubr.f32.mxu0 0.0
  %6471 = vmatmul.mubr.f32.gmra.mxu0 %v5250
  %v6472 = vpop.f32.mrf.mxu0
  %v6473 = vadd.f32 0.0, %v6472
  %v6474 = vpop.f32.mrf.mxu0
  %6475 = vmatprep.mubr.f32.mxu0 0.0
  %6476 = vmatmul.mubr.f32.gmra.mxu0 %v5252
  %v6477 = vpop.f32.mrf.mxu0
  %v6478 = vadd.f32 0.0, %v6477
  %v6479 = vpop.f32.mrf.mxu0
  %6480 = vmatprep.mubr.f32.mxu0 0.0
  %6481 = vmatmul.mubr.f32.gmra.mxu0 0.0
  %v6482 = vpop.f32.mrf.mxu0
  %v6483 = vadd.f32 0.0, %v6482
  %v6484 = vpop.f32.mrf.mxu0
  %6485 = vmatprep.mubr.f32.mxu0 0.0
  %6486 = vmatmul.mubr.f32.gmra.mxu0 %v5264
  %v6487 = vpop.f32.mrf.mxu0
  %v6488 = vadd.f32 0.0, %v6487
  %v6489 = vpop.f32.mrf.mxu0
  %6490 = vmatprep.mubr.f32.mxu0 0.0
  %6491 = vmatmul.mubr.f32.gmra.mxu0 %v5266
  %v6492 = vpop.f32.mrf.mxu0
  %v6493 = vadd.f32 0.0, %v6492
  %v6494 = vpop.f32.mrf.mxu0
  %6495 = vmatprep.mubr.f32.mxu0 0.0
  %6496 = vmatmul.mubr.f32.gmra.mxu0 %v5268
  %v6497 = vpop.f32.mrf.mxu0
  %v6498 = vadd.f32 0.0, %v6497
  %v6499 = vpop.f32.mrf.mxu0
  %6500 = vdwg.mxu0
  %v6501 = vadd.f32 %v6340, %v6423
  %v6502 = vadd.f32 %v6341, %v6428
  %v6503 = vadd.f32 %v6342, %v6433
  %v6504 = vadd.f32 %v6343, %v6438
  %v6505 = vadd.f32 %v6344, %v6443
  %v6506 = vadd.f32 %v6345, %v6448
  %v6507 = vadd.f32 %v6346, %v6453
  %v6508 = vadd.f32 %v6347, %v6458
  %v6509 = vadd.f32 %v6348, %v6463
  %v6510 = vadd.f32 %v6349, %v6468
  %v6511 = vadd.f32 %v6350, %v6473
  %v6512 = vadd.f32 %v6351, %v6478
  %v6513 = vadd.f32 %v6352, %v6483
  %v6514 = vadd.f32 %v6353, %v6488
  %v6515 = vadd.f32 %v6354, %v6493
  %v6516 = vadd.f32 %v6355, %v6498
  %6517 = vmatprep.subr.mxu0 0.0
  %6518 = vmatpush1.msra.mxu0 %v5399
  %6519 = vmatprep.subr.mxu0 0.0
  %6520 = vmatpush1.msra.mxu0 %v5398
  %6521 = vmatprep.subr.mxu0 0.0
  %6522 = vmatpush1.msra.mxu0 %v5397
  %6523 = vmatprep.subr.mxu0 0.0
  %6524 = vmatpush1.msra.mxu0 %v5396
  %6525 = vmatprep.subr.mxu0 0.0
  %6526 = vmatpush1.msra.mxu0 %v5395
  %6527 = vmatprep.subr.mxu0 0.0
  %6528 = vmatpush1.msra.mxu0 %v5394
  %6529 = vmatprep.subr.mxu0 0.0
  %6530 = vmatpush1.msra.mxu0 %v5393
  %6531 = vmatprep.subr.mxu0 0.0
  %6532 = vmatpush1.msra.mxu0 %v5392
  %6533 = vmatprep.subr.mxu0 0.0
  %6534 = vmatpush1.msra.mxu0 %v5391
  %6535 = vmatprep.subr.mxu0 0.0
  %6536 = vmatpush1.msra.mxu0 %v5390
  %6537 = vmatprep.subr.mxu0 0.0
  %6538 = vmatpush1.msra.mxu0 %v5389
  %6539 = vmatprep.subr.mxu0 0.0
  %6540 = vmatpush1.msra.mxu0 %v5388
  %6541 = vmatprep.subr.mxu0 0.0
  %6542 = vmatpush1.msra.mxu0 %v5387
  %6543 = vmatprep.subr.mxu0 0.0
  %6544 = vmatpush1.msra.mxu0 %v5386
  %6545 = vmatprep.subr.mxu0 0.0
  %6546 = vmatpush1.msra.mxu0 %v5385
  %6547 = vmatprep.subr.mxu0 0.0
  %6548 = vmatpush1.msra.mxu0 %v5384
  %6549 = vmatprep.subr.mxu0 0.0
  %6550 = vmatpush2.msra.mxu0 0.0
  %6551 = vmatprep.subr.mxu0 0.0
  %6552 = vmatpush2.msra.mxu0 0.0
  %6553 = vmatprep.subr.mxu0 0.0
  %6554 = vmatpush2.msra.mxu0 0.0
  %6555 = vmatprep.subr.mxu0 0.0
  %6556 = vmatpush2.msra.mxu0 0.0
  %6557 = vmatprep.subr.mxu0 0.0
  %6558 = vmatpush2.msra.mxu0 0.0
  %6559 = vmatprep.subr.mxu0 0.0
  %6560 = vmatpush2.msra.mxu0 0.0
  %6561 = vmatprep.subr.mxu0 0.0
  %6562 = vmatpush2.msra.mxu0 0.0
  %6563 = vmatprep.subr.mxu0 0.0
  %6564 = vmatpush2.msra.mxu0 0.0
  %6565 = vmatprep.subr.mxu0 0.0
  %6566 = vmatpush2.msra.mxu0 0.0
  %6567 = vmatprep.subr.mxu0 0.0
  %6568 = vmatpush2.msra.mxu0 0.0
  %6569 = vmatprep.subr.mxu0 0.0
  %6570 = vmatpush2.msra.mxu0 0.0
  %6571 = vmatprep.subr.mxu0 0.0
  %6572 = vmatpush2.msra.mxu0 0.0
  %6573 = vmatprep.subr.mxu0 0.0
  %6574 = vmatpush2.msra.mxu0 0.0
  %6575 = vmatprep.subr.mxu0 0.0
  %6576 = vmatpush2.msra.mxu0 0.0
  %6577 = vmatprep.subr.mxu0 0.0
  %6578 = vmatpush2.msra.mxu0 0.0
  %6579 = vmatprep.subr.mxu0 0.0
  %6580 = vmatpush2.msra.mxu0 0.0
  %6581 = vmatprep.mubr.f32.mxu0 0.0
  %6582 = vmatmul.mubr.f32.gmra.mxu0 %v5215
  %v6583 = vpop.f32.mrf.mxu0
  %v6584 = vadd.f32 0.0, %v6583
  %v6585 = vpop.f32.mrf.mxu0
  %6586 = vmatprep.mubr.f32.mxu0 0.0
  %6587 = vmatmul.mubr.f32.gmra.mxu0 %v5217
  %v6588 = vpop.f32.mrf.mxu0
  %v6589 = vadd.f32 0.0, %v6588
  %v6590 = vpop.f32.mrf.mxu0
  %6591 = vmatprep.mubr.f32.mxu0 0.0
  %6592 = vmatmul.mubr.f32.gmra.mxu0 %v5219
  %v6593 = vpop.f32.mrf.mxu0
  %v6594 = vadd.f32 0.0, %v6593
  %v6595 = vpop.f32.mrf.mxu0
  %6596 = vmatprep.mubr.f32.mxu0 0.0
  %6597 = vmatmul.mubr.f32.gmra.mxu0 %v5221
  %v6598 = vpop.f32.mrf.mxu0
  %v6599 = vadd.f32 0.0, %v6598
  %v6600 = vpop.f32.mrf.mxu0
  %6601 = vmatprep.mubr.f32.mxu0 0.0
  %6602 = vmatmul.mubr.f32.gmra.mxu0 %v5231
  %v6603 = vpop.f32.mrf.mxu0
  %v6604 = vadd.f32 0.0, %v6603
  %v6605 = vpop.f32.mrf.mxu0
  %6606 = vmatprep.mubr.f32.mxu0 0.0
  %6607 = vmatmul.mubr.f32.gmra.mxu0 %v5233
  %v6608 = vpop.f32.mrf.mxu0
  %v6609 = vadd.f32 0.0, %v6608
  %v6610 = vpop.f32.mrf.mxu0
  %6611 = vmatprep.mubr.f32.mxu0 0.0
  %6612 = vmatmul.mubr.f32.gmra.mxu0 %v5235
  %v6613 = vpop.f32.mrf.mxu0
  %v6614 = vadd.f32 0.0, %v6613
  %v6615 = vpop.f32.mrf.mxu0
  %6616 = vmatprep.mubr.f32.mxu0 0.0
  %6617 = vmatmul.mubr.f32.gmra.mxu0 %v5237
  %v6618 = vpop.f32.mrf.mxu0
  %v6619 = vadd.f32 0.0, %v6618
  %v6620 = vpop.f32.mrf.mxu0
  %6621 = vmatprep.mubr.f32.mxu0 0.0
  %6622 = vmatmul.mubr.f32.gmra.mxu0 %v5247
  %v6623 = vpop.f32.mrf.mxu0
  %v6624 = vadd.f32 0.0, %v6623
  %v6625 = vpop.f32.mrf.mxu0
  %6626 = vmatprep.mubr.f32.mxu0 0.0
  %6627 = vmatmul.mubr.f32.gmra.mxu0 %v5249
  %v6628 = vpop.f32.mrf.mxu0
  %v6629 = vadd.f32 0.0, %v6628
  %v6630 = vpop.f32.mrf.mxu0
  %6631 = vmatprep.mubr.f32.mxu0 0.0
  %6632 = vmatmul.mubr.f32.gmra.mxu0 %v5251
  %v6633 = vpop.f32.mrf.mxu0
  %v6634 = vadd.f32 0.0, %v6633
  %v6635 = vpop.f32.mrf.mxu0
  %6636 = vmatprep.mubr.f32.mxu0 0.0
  %6637 = vmatmul.mubr.f32.gmra.mxu0 %v5253
  %v6638 = vpop.f32.mrf.mxu0
  %v6639 = vadd.f32 0.0, %v6638
  %v6640 = vpop.f32.mrf.mxu0
  %6641 = vmatprep.mubr.f32.mxu0 0.0
  %6642 = vmatmul.mubr.f32.gmra.mxu0 %v5263
  %v6643 = vpop.f32.mrf.mxu0
  %v6644 = vadd.f32 0.0, %v6643
  %v6645 = vpop.f32.mrf.mxu0
  %6646 = vmatprep.mubr.f32.mxu0 0.0
  %6647 = vmatmul.mubr.f32.gmra.mxu0 %v5265
  %v6648 = vpop.f32.mrf.mxu0
  %v6649 = vadd.f32 0.0, %v6648
  %v6650 = vpop.f32.mrf.mxu0
  %6651 = vmatprep.mubr.f32.mxu0 0.0
  %6652 = vmatmul.mubr.f32.gmra.mxu0 %v5267
  %v6653 = vpop.f32.mrf.mxu0
  %v6654 = vadd.f32 0.0, %v6653
  %v6655 = vpop.f32.mrf.mxu0
  %6656 = vmatprep.mubr.f32.mxu0 0.0
  %6657 = vmatmul.mubr.f32.gmra.mxu0 %v5269
  %v6658 = vpop.f32.mrf.mxu0
  %v6659 = vadd.f32 0.0, %v6658
  %v6660 = vpop.f32.mrf.mxu0
  %6661 = vdwg.mxu0
  %v6662 = vadd.f32 %v6501, %v6584
  %v6663 = vadd.f32 %v6502, %v6589
  %v6664 = vadd.f32 %v6503, %v6594
  %v6665 = vadd.f32 %v6504, %v6599
  %v6666 = vadd.f32 %v6505, %v6604
  %v6667 = vadd.f32 %v6506, %v6609
  %v6668 = vadd.f32 %v6507, %v6614
  %v6669 = vadd.f32 %v6508, %v6619
  %v6670 = vadd.f32 %v6509, %v6624
  %v6671 = vadd.f32 %v6510, %v6629
  %v6672 = vadd.f32 %v6511, %v6634
  %v6673 = vadd.f32 %v6512, %v6639
  %v6674 = vadd.f32 %v6513, %v6644
  %v6675 = vadd.f32 %v6514, %v6649
  %v6676 = vadd.f32 %v6515, %v6654
  %v6677 = vadd.f32 %v6516, %v6659
  %6678 = vmatprep.subr.mxu0 0.0
  %6679 = vmatpush1.msra.mxu0 %v5415
  %6680 = vmatprep.subr.mxu0 0.0
  %6681 = vmatpush1.msra.mxu0 %v5414
  %6682 = vmatprep.subr.mxu0 0.0
  %6683 = vmatpush1.msra.mxu0 %v5413
  %6684 = vmatprep.subr.mxu0 0.0
  %6685 = vmatpush1.msra.mxu0 %v5412
  %6686 = vmatprep.subr.mxu0 0.0
  %6687 = vmatpush1.msra.mxu0 %v5411
  %6688 = vmatprep.subr.mxu0 0.0
  %6689 = vmatpush1.msra.mxu0 %v5410
  %6690 = vmatprep.subr.mxu0 0.0
  %6691 = vmatpush1.msra.mxu0 %v5409
  %6692 = vmatprep.subr.mxu0 0.0
  %6693 = vmatpush1.msra.mxu0 %v5408
  %6694 = vmatprep.subr.mxu0 0.0
  %6695 = vmatpush1.msra.mxu0 %v5407
  %6696 = vmatprep.subr.mxu0 0.0
  %6697 = vmatpush1.msra.mxu0 %v5406
  %6698 = vmatprep.subr.mxu0 0.0
  %6699 = vmatpush1.msra.mxu0 %v5405
  %6700 = vmatprep.subr.mxu0 0.0
  %6701 = vmatpush1.msra.mxu0 %v5404
  %6702 = vmatprep.subr.mxu0 0.0
  %6703 = vmatpush1.msra.mxu0 %v5403
  %6704 = vmatprep.subr.mxu0 0.0
  %6705 = vmatpush1.msra.mxu0 %v5402
  %6706 = vmatprep.subr.mxu0 0.0
  %6707 = vmatpush1.msra.mxu0 %v5401
  %6708 = vmatprep.subr.mxu0 0.0
  %6709 = vmatpush1.msra.mxu0 %v5400
  %6710 = vmatprep.subr.mxu0 0.0
  %6711 = vmatpush2.msra.mxu0 0.0
  %6712 = vmatprep.subr.mxu0 0.0
  %6713 = vmatpush2.msra.mxu0 0.0
  %6714 = vmatprep.subr.mxu0 0.0
  %6715 = vmatpush2.msra.mxu0 0.0
  %6716 = vmatprep.subr.mxu0 0.0
  %6717 = vmatpush2.msra.mxu0 0.0
  %6718 = vmatprep.subr.mxu0 0.0
  %6719 = vmatpush2.msra.mxu0 0.0
  %6720 = vmatprep.subr.mxu0 0.0
  %6721 = vmatpush2.msra.mxu0 0.0
  %6722 = vmatprep.subr.mxu0 0.0
  %6723 = vmatpush2.msra.mxu0 0.0
  %6724 = vmatprep.subr.mxu0 0.0
  %6725 = vmatpush2.msra.mxu0 0.0
  %6726 = vmatprep.subr.mxu0 0.0
  %6727 = vmatpush2.msra.mxu0 0.0
  %6728 = vmatprep.subr.mxu0 0.0
  %6729 = vmatpush2.msra.mxu0 0.0
  %6730 = vmatprep.subr.mxu0 0.0
  %6731 = vmatpush2.msra.mxu0 0.0
  %6732 = vmatprep.subr.mxu0 0.0
  %6733 = vmatpush2.msra.mxu0 0.0
  %6734 = vmatprep.subr.mxu0 0.0
  %6735 = vmatpush2.msra.mxu0 0.0
  %6736 = vmatprep.subr.mxu0 0.0
  %6737 = vmatpush2.msra.mxu0 0.0
  %6738 = vmatprep.subr.mxu0 0.0
  %6739 = vmatpush2.msra.mxu0 0.0
  %6740 = vmatprep.subr.mxu0 0.0
  %6741 = vmatpush2.msra.mxu0 0.0
  %6742 = vmatprep.mubr.f32.mxu0 0.0
  %6743 = vmatmul.mubr.f32.gmra.mxu0 %v5216
  %v6744 = vpop.f32.mrf.mxu0
  %v6745 = vadd.f32 0.0, %v6744
  %v6746 = vpop.f32.mrf.mxu0
  %6747 = vmatprep.mubr.f32.mxu0 0.0
  %6748 = vmatmul.mubr.f32.gmra.mxu0 %v5218
  %v6749 = vpop.f32.mrf.mxu0
  %v6750 = vadd.f32 0.0, %v6749
  %v6751 = vpop.f32.mrf.mxu0
  %6752 = vmatprep.mubr.f32.mxu0 0.0
  %6753 = vmatmul.mubr.f32.gmra.mxu0 %v5220
  %v6754 = vpop.f32.mrf.mxu0
  %v6755 = vadd.f32 0.0, %v6754
  %v6756 = vpop.f32.mrf.mxu0
  %6757 = vmatprep.mubr.f32.mxu0 0.0
  %6758 = vmatmul.mubr.f32.gmra.mxu0 %v5222
  %v6759 = vpop.f32.mrf.mxu0
  %v6760 = vadd.f32 0.0, %v6759
  %v6761 = vpop.f32.mrf.mxu0
  %6762 = vmatprep.mubr.f32.mxu0 0.0
  %6763 = vmatmul.mubr.f32.gmra.mxu0 %v5232
  %v6764 = vpop.f32.mrf.mxu0
  %v6765 = vadd.f32 0.0, %v6764
  %v6766 = vpop.f32.mrf.mxu0
  %6767 = vmatprep.mubr.f32.mxu0 0.0
  %6768 = vmatmul.mubr.f32.gmra.mxu0 %v5234
  %v6769 = vpop.f32.mrf.mxu0
  %v6770 = vadd.f32 0.0, %v6769
  %v6771 = vpop.f32.mrf.mxu0
  %6772 = vmatprep.mubr.f32.mxu0 0.0
  %6773 = vmatmul.mubr.f32.gmra.mxu0 %v5236
  %v6774 = vpop.f32.mrf.mxu0
  %v6775 = vadd.f32 0.0, %v6774
  %v6776 = vpop.f32.mrf.mxu0
  %6777 = vmatprep.mubr.f32.mxu0 0.0
  %6778 = vmatmul.mubr.f32.gmra.mxu0 %v5238
  %v6779 = vpop.f32.mrf.mxu0
  %v6780 = vadd.f32 0.0, %v6779
  %v6781 = vpop.f32.mrf.mxu0
  %6782 = vmatprep.mubr.f32.mxu0 0.0
  %6783 = vmatmul.mubr.f32.gmra.mxu0 %v5248
  %v6784 = vpop.f32.mrf.mxu0
  %v6785 = vadd.f32 0.0, %v6784
  %v6786 = vpop.f32.mrf.mxu0
  %6787 = vmatprep.mubr.f32.mxu0 0.0
  %6788 = vmatmul.mubr.f32.gmra.mxu0 %v5250
  %v6789 = vpop.f32.mrf.mxu0
  %v6790 = vadd.f32 0.0, %v6789
  %v6791 = vpop.f32.mrf.mxu0
  %6792 = vmatprep.mubr.f32.mxu0 0.0
  %6793 = vmatmul.mubr.f32.gmra.mxu0 %v5252
  %v6794 = vpop.f32.mrf.mxu0
  %v6795 = vadd.f32 0.0, %v6794
  %v6796 = vpop.f32.mrf.mxu0
  %6797 = vmatprep.mubr.f32.mxu0 0.0
  %6798 = vmatmul.mubr.f32.gmra.mxu0 %v5254
  %v6799 = vpop.f32.mrf.mxu0
  %v6800 = vadd.f32 0.0, %v6799
  %v6801 = vpop.f32.mrf.mxu0
  %6802 = vmatprep.mubr.f32.mxu0 0.0
  %6803 = vmatmul.mubr.f32.gmra.mxu0 %v5264
  %v6804 = vpop.f32.mrf.mxu0
  %v6805 = vadd.f32 0.0, %v6804
  %v6806 = vpop.f32.mrf.mxu0
  %6807 = vmatprep.mubr.f32.mxu0 0.0
  %6808 = vmatmul.mubr.f32.gmra.mxu0 %v5266
  %v6809 = vpop.f32.mrf.mxu0
  %v6810 = vadd.f32 0.0, %v6809
  %v6811 = vpop.f32.mrf.mxu0
  %6812 = vmatprep.mubr.f32.mxu0 0.0
  %6813 = vmatmul.mubr.f32.gmra.mxu0 %v5268
  %v6814 = vpop.f32.mrf.mxu0
  %v6815 = vadd.f32 0.0, %v6814
  %v6816 = vpop.f32.mrf.mxu0
  %6817 = vmatprep.mubr.f32.mxu0 0.0
  %6818 = vmatmul.mubr.f32.gmra.mxu0 %v5270
  %v6819 = vpop.f32.mrf.mxu0
  %v6820 = vadd.f32 0.0, %v6819
  %v6821 = vpop.f32.mrf.mxu0
  %6822 = vdwg.mxu0
  %v6823 = vadd.f32 %v6662, %v6745
  %v6824 = vadd.f32 %v6663, %v6750
  %v6825 = vadd.f32 %v6664, %v6755
  %v6826 = vadd.f32 %v6665, %v6760
  %v6827 = vadd.f32 %v6666, %v6765
  %v6828 = vadd.f32 %v6667, %v6770
  %v6829 = vadd.f32 %v6668, %v6775
  %v6830 = vadd.f32 %v6669, %v6780
  %v6831 = vadd.f32 %v6670, %v6785
  %v6832 = vadd.f32 %v6671, %v6790
  %v6833 = vadd.f32 %v6672, %v6795
  %v6834 = vadd.f32 %v6673, %v6800
  %v6835 = vadd.f32 %v6674, %v6805
  %v6836 = vadd.f32 %v6675, %v6810
  %v6837 = vadd.f32 %v6676, %v6815
  %v6838 = vadd.f32 %v6677, %v6820
  %v6840 = vlaneseq
  %v6841 = vshrl.u32 %v6840, 7
  %v6842 = vsub.s32 0, %v6841
  %v6843 = vrot.slane %v5417, %v6842
  %v6845 = vadd.f32 %v6823, %v6843
  %v6846 = vadd.f32 %v6824, %v6843
  %v6847 = vadd.f32 %v6825, %v6843
  %v6848 = vadd.f32 %v6826, %v6843
  %v6849 = vadd.f32 %v6827, %v6843
  %v6850 = vadd.f32 %v6828, %v6843
  %v6851 = vadd.f32 %v6829, %v6843
  %v6852 = vadd.f32 %v6830, %v6843
  %v6853 = vadd.f32 %v6831, %v6843
  %v6854 = vadd.f32 %v6832, %v6843
  %v6855 = vadd.f32 %v6833, %v6843
  %v6856 = vadd.f32 %v6834, %v6843
  %v6857 = vadd.f32 %v6835, %v6843
  %v6858 = vadd.f32 %v6836, %v6843
  %v6859 = vadd.f32 %v6837, %v6843
  %v6860 = vadd.f32 %v6838, %v6843
  %v6861 = vmax.f32 %v6845, 0.0
  %v6862 = vmax.f32 %v6846, 0.0
  %v6863 = vmax.f32 %v6847, 0.0
  %v6864 = vmax.f32 %v6848, 0.0
  %v6865 = vmax.f32 %v6849, 0.0
  %v6866 = vmax.f32 %v6850, 0.0
  %v6867 = vmax.f32 %v6851, 0.0
  %v6868 = vmax.f32 %v6852, 0.0
  %v6869 = vmax.f32 %v6853, 0.0
  %v6870 = vmax.f32 %v6854, 0.0
  %v6871 = vmax.f32 %v6855, 0.0
  %v6872 = vmax.f32 %v6856, 0.0
  %v6873 = vmax.f32 %v6857, 0.0
  %v6874 = vmax.f32 %v6858, 0.0
  %v6875 = vmax.f32 %v6859, 0.0
  %v6876 = vmax.f32 %v6860, 0.0
  %v6877 = vmul.f32 %v6861, %v4727
  %v6878 = vmul.f32 %v6862, %v4728
  %v6879 = vmul.f32 %v6863, %v4729
  %v6880 = vmul.f32 %v6864, %v4730
  %v6881 = vmul.f32 %v6865, %v4731
  %v6882 = vmul.f32 %v6866, %v4732
  %v6883 = vmul.f32 %v6867, %v4733
  %v6884 = vmul.f32 %v6868, %v4734
  %v6885 = vmul.f32 %v6869, %v4735
  %v6886 = vmul.f32 %v6870, %v4736
  %v6887 = vmul.f32 %v6871, %v4737
  %v6888 = vmul.f32 %v6872, %v4738
  %v6889 = vmul.f32 %v6873, %v4739
  %v6890 = vmul.f32 %v6874, %v4740
  %v6891 = vmul.f32 %v6875, %v4741
  %v6892 = vmul.f32 %v6876, %v4742
  %v6893 = vadd.f32 %v6877, %v6878
  %v6894 = vadd.f32 %v6893, %v6879
  %v6895 = vadd.f32 %v6894, %v6880
  %v6896 = vadd.f32 %v6895, %v6881
  %v6897 = vadd.f32 %v6896, %v6882
  %v6898 = vadd.f32 %v6897, %v6883
  %v6899 = vadd.f32 %v6898, %v6884
  %v6900 = vadd.f32 %v6899, %v6885
  %v6901 = vadd.f32 %v6900, %v6886
  %v6902 = vadd.f32 %v6901, %v6887
  %v6903 = vadd.f32 %v6902, %v6888
  %v6904 = vadd.f32 %v6903, %v6889
  %v6905 = vadd.f32 %v6904, %v6890
  %v6906 = vadd.f32 %v6905, %v6891
  %v6907 = vadd.f32 %v6906, %v6892
  %v6908 = vrot.slane %v6907, 4
  %v6909 = vadd.f32 %v6907, %v6908
  %v6910 = vrot.slane %v6909, 2
  %v6911 = vadd.f32 %v6909, %v6910
  %v6912 = vrot.slane %v6911, 1
  %v6913 = vadd.f32 %v6911, %v6912
  %v6914 = vmul.f32 %v6861, %v6861
  %v6915 = vmul.f32 %v6862, %v6862
  %v6916 = vmul.f32 %v6863, %v6863
  %v6917 = vmul.f32 %v6864, %v6864
  %v6918 = vmul.f32 %v6865, %v6865
  %v6919 = vmul.f32 %v6866, %v6866
  %v6920 = vmul.f32 %v6867, %v6867
  %v6921 = vmul.f32 %v6868, %v6868
  %v6922 = vmul.f32 %v6869, %v6869
  %v6923 = vmul.f32 %v6870, %v6870
  %v6924 = vmul.f32 %v6871, %v6871
  %v6925 = vmul.f32 %v6872, %v6872
  %v6926 = vmul.f32 %v6873, %v6873
  %v6927 = vmul.f32 %v6874, %v6874
  %v6928 = vmul.f32 %v6875, %v6875
  %v6929 = vmul.f32 %v6876, %v6876
  %v6930 = vmul.f32 %v6914, %v4727
  %v6931 = vmul.f32 %v6915, %v4728
  %v6932 = vmul.f32 %v6916, %v4729
  %v6933 = vmul.f32 %v6917, %v4730
  %v6934 = vmul.f32 %v6918, %v4731
  %v6935 = vmul.f32 %v6919, %v4732
  %v6936 = vmul.f32 %v6920, %v4733
  %v6937 = vmul.f32 %v6921, %v4734
  %v6938 = vmul.f32 %v6922, %v4735
  %v6939 = vmul.f32 %v6923, %v4736
  %v6940 = vmul.f32 %v6924, %v4737
  %v6941 = vmul.f32 %v6925, %v4738
  %v6942 = vmul.f32 %v6926, %v4739
  %v6943 = vmul.f32 %v6927, %v4740
  %v6944 = vmul.f32 %v6928, %v4741
  %v6945 = vmul.f32 %v6929, %v4742
  %v6946 = vadd.f32 %v6930, %v6931
  %v6947 = vadd.f32 %v6946, %v6932
  %v6948 = vadd.f32 %v6947, %v6933
  %v6949 = vadd.f32 %v6948, %v6934
  %v6950 = vadd.f32 %v6949, %v6935
  %v6951 = vadd.f32 %v6950, %v6936
  %v6952 = vadd.f32 %v6951, %v6937
  %v6953 = vadd.f32 %v6952, %v6938
  %v6954 = vadd.f32 %v6953, %v6939
  %v6955 = vadd.f32 %v6954, %v6940
  %v6956 = vadd.f32 %v6955, %v6941
  %v6957 = vadd.f32 %v6956, %v6942
  %v6958 = vadd.f32 %v6957, %v6943
  %v6959 = vadd.f32 %v6958, %v6944
  %v6960 = vadd.f32 %v6959, %v6945
  %v6961 = vrot.slane %v6960, 4
  %v6962 = vadd.f32 %v6960, %v6961
  %v6963 = vrot.slane %v6962, 2
  %v6964 = vadd.f32 %v6962, %v6963
  %v6965 = vrot.slane %v6964, 1
  %v6966 = vadd.f32 %v6964, %v6965
  %v6967 = vmul.f32 %v6913, 0.03125
  %v6968 = vmul.f32 %v6966, 0.03125
  %v6969 = vmul.f32 %v6967, %v6967
  %v6970 = vsub.f32 %v6968, %v6969
  %v6971 = vmax.f32 %v6970, 0.0
  %v6972 = vadd.f32 %v6971, 1e-05
  %v6973 = vrsqrt.pop %v6972
  %v6974 = vmul.f32 %v5419, %v6973
  %v6975 = vmul.f32 %v6967, %v6974
  %v6976 = vsub.f32 %v5421, %v6975
  %v6978 = vlaneseq
  %v6979 = vshrl.u32 %v6978, 7
  %v6980 = vsub.s32 0, %v6979
  %v6981 = vrot.slane %v6974, %v6980
  %v6983 = vmul.f32 %v6861, %v6981
  %v6984 = vmul.f32 %v6862, %v6981
  %v6985 = vmul.f32 %v6863, %v6981
  %v6986 = vmul.f32 %v6864, %v6981
  %v6987 = vmul.f32 %v6865, %v6981
  %v6988 = vmul.f32 %v6866, %v6981
  %v6989 = vmul.f32 %v6867, %v6981
  %v6990 = vmul.f32 %v6868, %v6981
  %v6991 = vmul.f32 %v6869, %v6981
  %v6992 = vmul.f32 %v6870, %v6981
  %v6993 = vmul.f32 %v6871, %v6981
  %v6994 = vmul.f32 %v6872, %v6981
  %v6995 = vmul.f32 %v6873, %v6981
  %v6996 = vmul.f32 %v6874, %v6981
  %v6997 = vmul.f32 %v6875, %v6981
  %v6998 = vmul.f32 %v6876, %v6981
  %v7000 = vlaneseq
  %v7001 = vshrl.u32 %v7000, 7
  %v7002 = vsub.s32 0, %v7001
  %v7003 = vrot.slane %v6976, %v7002
  %v7005 = vadd.f32 %v6983, %v7003
  %v7006 = vadd.f32 %v6984, %v7003
  %v7007 = vadd.f32 %v6985, %v7003
  %v7008 = vadd.f32 %v6986, %v7003
  %v7009 = vadd.f32 %v6987, %v7003
  %v7010 = vadd.f32 %v6988, %v7003
  %v7011 = vadd.f32 %v6989, %v7003
  %v7012 = vadd.f32 %v6990, %v7003
  %v7013 = vadd.f32 %v6991, %v7003
  %v7014 = vadd.f32 %v6992, %v7003
  %v7015 = vadd.f32 %v6993, %v7003
  %v7016 = vadd.f32 %v6994, %v7003
  %v7017 = vadd.f32 %v6995, %v7003
  %v7018 = vadd.f32 %v6996, %v7003
  %v7019 = vadd.f32 %v6997, %v7003
  %v7020 = vadd.f32 %v6998, %v7003
  %s7021 = scalar_lea.vmem %s1, 2304
  %v7022 = vld [vmem:[%s7021] sm:$0xff]
  %v7023 = vld [vmem:[%s7021 + $0x8] sm:$0xff]
  %v7024 = vld [vmem:[%s7021 + $0x10] sm:$0xff]
  %v7025 = vld [vmem:[%s7021 + $0x18] sm:$0xff]
  %v7026 = vld [vmem:[%s7021 + $0x20] sm:$0xff]
  %v7027 = vld [vmem:[%s7021 + $0x28] sm:$0xff]
  %v7028 = vld [vmem:[%s7021 + $0x30] sm:$0xff]
  %v7029 = vld [vmem:[%s7021 + $0x38] sm:$0xff]
  %v7030 = vld [vmem:[%s7021 + $0x40] sm:$0xff]
  %v7031 = vld [vmem:[%s7021 + $0x48] sm:$0xff]
  %v7032 = vld [vmem:[%s7021 + $0x50] sm:$0xff]
  %v7033 = vld [vmem:[%s7021 + $0x58] sm:$0xff]
  %v7034 = vld [vmem:[%s7021 + $0x60] sm:$0xff]
  %v7035 = vld [vmem:[%s7021 + $0x68] sm:$0xff]
  %v7036 = vld [vmem:[%s7021 + $0x70] sm:$0xff]
  %v7037 = vld [vmem:[%s7021 + $0x78] sm:$0xff]
  %v7038 = vld [vmem:[%s7021 + $0x80] sm:$0xff]
  %v7039 = vld [vmem:[%s7021 + $0x88] sm:$0xff]
  %v7040 = vld [vmem:[%s7021 + $0x90] sm:$0xff]
  %v7041 = vld [vmem:[%s7021 + $0x98] sm:$0xff]
  %v7042 = vld [vmem:[%s7021 + $0xa0] sm:$0xff]
  %v7043 = vld [vmem:[%s7021 + $0xa8] sm:$0xff]
  %v7044 = vld [vmem:[%s7021 + $0xb0] sm:$0xff]
  %v7045 = vld [vmem:[%s7021 + $0xb8] sm:$0xff]
  %v7046 = vld [vmem:[%s7021 + $0xc0] sm:$0xff]
  %v7047 = vld [vmem:[%s7021 + $0xc8] sm:$0xff]
  %v7048 = vld [vmem:[%s7021 + $0xd0] sm:$0xff]
  %v7049 = vld [vmem:[%s7021 + $0xd8] sm:$0xff]
  %v7050 = vld [vmem:[%s7021 + $0xe0] sm:$0xff]
  %v7051 = vld [vmem:[%s7021 + $0xe8] sm:$0xff]
  %v7052 = vld [vmem:[%s7021 + $0xf0] sm:$0xff]
  %v7053 = vld [vmem:[%s7021 + $0xf8] sm:$0xff]
  %v7054 = vld [vmem:[%s7021 + $0x100] sm:$0xff]
  %v7055 = vld [vmem:[%s7021 + $0x108] sm:$0xff]
  %v7056 = vld [vmem:[%s7021 + $0x110] sm:$0xff]
  %v7057 = vld [vmem:[%s7021 + $0x118] sm:$0xff]
  %v7058 = vld [vmem:[%s7021 + $0x120] sm:$0xff]
  %v7059 = vld [vmem:[%s7021 + $0x128] sm:$0xff]
  %v7060 = vld [vmem:[%s7021 + $0x130] sm:$0xff]
  %v7061 = vld [vmem:[%s7021 + $0x138] sm:$0xff]
  %v7062 = vld [vmem:[%s7021 + $0x140] sm:$0xff]
  %v7063 = vld [vmem:[%s7021 + $0x148] sm:$0xff]
  %v7064 = vld [vmem:[%s7021 + $0x150] sm:$0xff]
  %v7065 = vld [vmem:[%s7021 + $0x158] sm:$0xff]
  %v7066 = vld [vmem:[%s7021 + $0x160] sm:$0xff]
  %v7067 = vld [vmem:[%s7021 + $0x168] sm:$0xff]
  %v7068 = vld [vmem:[%s7021 + $0x170] sm:$0xff]
  %v7069 = vld [vmem:[%s7021 + $0x178] sm:$0xff]
  %v7070 = vld [vmem:[%s7021 + $0x180] sm:$0xff]
  %v7071 = vld [vmem:[%s7021 + $0x188] sm:$0xff]
  %v7072 = vld [vmem:[%s7021 + $0x190] sm:$0xff]
  %v7073 = vld [vmem:[%s7021 + $0x198] sm:$0xff]
  %v7074 = vld [vmem:[%s7021 + $0x1a0] sm:$0xff]
  %v7075 = vld [vmem:[%s7021 + $0x1a8] sm:$0xff]
  %v7076 = vld [vmem:[%s7021 + $0x1b0] sm:$0xff]
  %v7077 = vld [vmem:[%s7021 + $0x1b8] sm:$0xff]
  %v7078 = vld [vmem:[%s7021 + $0x1c0] sm:$0xff]
  %v7079 = vld [vmem:[%s7021 + $0x1c8] sm:$0xff]
  %v7080 = vld [vmem:[%s7021 + $0x1d0] sm:$0xff]
  %v7081 = vld [vmem:[%s7021 + $0x1d8] sm:$0xff]
  %v7082 = vld [vmem:[%s7021 + $0x1e0] sm:$0xff]
  %v7083 = vld [vmem:[%s7021 + $0x1e8] sm:$0xff]
  %v7084 = vld [vmem:[%s7021 + $0x1f0] sm:$0xff]
  %v7085 = vld [vmem:[%s7021 + $0x1f8] sm:$0xff]
  %v7086 = vld [vmem:[%s7021 + $0x200] sm:$0xff]
  %v7087 = vld [vmem:[%s7021 + $0x208] sm:$0xff]
  %v7088 = vld [vmem:[%s7021 + $0x210] sm:$0xff]
  %v7089 = vld [vmem:[%s7021 + $0x218] sm:$0xff]
  %v7090 = vld [vmem:[%s7021 + $0x220] sm:$0xff]
  %v7091 = vld [vmem:[%s7021 + $0x228] sm:$0xff]
  %v7092 = vld [vmem:[%s7021 + $0x230] sm:$0xff]
  %v7093 = vld [vmem:[%s7021 + $0x238] sm:$0xff]
  %v7094 = vld [vmem:[%s7021 + $0x240] sm:$0xff]
  %v7095 = vld [vmem:[%s7021 + $0x248] sm:$0xff]
  %v7096 = vld [vmem:[%s7021 + $0x250] sm:$0xff]
  %v7097 = vld [vmem:[%s7021 + $0x258] sm:$0xff]
  %v7098 = vld [vmem:[%s7021 + $0x260] sm:$0xff]
  %v7099 = vld [vmem:[%s7021 + $0x268] sm:$0xff]
  %v7100 = vld [vmem:[%s7021 + $0x270] sm:$0xff]
  %v7101 = vld [vmem:[%s7021 + $0x278] sm:$0xff]
  %v7102 = vld [vmem:[%s7021 + $0x280] sm:$0xff]
  %v7103 = vld [vmem:[%s7021 + $0x288] sm:$0xff]
  %v7104 = vld [vmem:[%s7021 + $0x290] sm:$0xff]
  %v7105 = vld [vmem:[%s7021 + $0x298] sm:$0xff]
  %v7106 = vld [vmem:[%s7021 + $0x2a0] sm:$0xff]
  %v7107 = vld [vmem:[%s7021 + $0x2a8] sm:$0xff]
  %v7108 = vld [vmem:[%s7021 + $0x2b0] sm:$0xff]
  %v7109 = vld [vmem:[%s7021 + $0x2b8] sm:$0xff]
  %v7110 = vld [vmem:[%s7021 + $0x2c0] sm:$0xff]
  %v7111 = vld [vmem:[%s7021 + $0x2c8] sm:$0xff]
  %v7112 = vld [vmem:[%s7021 + $0x2d0] sm:$0xff]
  %v7113 = vld [vmem:[%s7021 + $0x2d8] sm:$0xff]
  %v7114 = vld [vmem:[%s7021 + $0x2e0] sm:$0xff]
  %v7115 = vld [vmem:[%s7021 + $0x2e8] sm:$0xff]
  %v7116 = vld [vmem:[%s7021 + $0x2f0] sm:$0xff]
  %v7117 = vld [vmem:[%s7021 + $0x2f8] sm:$0xff]
  %v7118 = vld [vmem:[%s7021 + $0x300] sm:$0xff]
  %v7119 = vld [vmem:[%s7021 + $0x308] sm:$0xff]
  %v7120 = vld [vmem:[%s7021 + $0x310] sm:$0xff]
  %v7121 = vld [vmem:[%s7021 + $0x318] sm:$0xff]
  %v7122 = vld [vmem:[%s7021 + $0x320] sm:$0xff]
  %v7123 = vld [vmem:[%s7021 + $0x328] sm:$0xff]
  %v7124 = vld [vmem:[%s7021 + $0x330] sm:$0xff]
  %v7125 = vld [vmem:[%s7021 + $0x338] sm:$0xff]
  %v7126 = vld [vmem:[%s7021 + $0x340] sm:$0xff]
  %v7127 = vld [vmem:[%s7021 + $0x348] sm:$0xff]
  %v7128 = vld [vmem:[%s7021 + $0x350] sm:$0xff]
  %v7129 = vld [vmem:[%s7021 + $0x358] sm:$0xff]
  %v7130 = vld [vmem:[%s7021 + $0x360] sm:$0xff]
  %v7131 = vld [vmem:[%s7021 + $0x368] sm:$0xff]
  %v7132 = vld [vmem:[%s7021 + $0x370] sm:$0xff]
  %v7133 = vld [vmem:[%s7021 + $0x378] sm:$0xff]
  %v7134 = vld [vmem:[%s7021 + $0x380] sm:$0xff]
  %v7135 = vld [vmem:[%s7021 + $0x388] sm:$0xff]
  %v7136 = vld [vmem:[%s7021 + $0x390] sm:$0xff]
  %v7137 = vld [vmem:[%s7021 + $0x398] sm:$0xff]
  %v7138 = vld [vmem:[%s7021 + $0x3a0] sm:$0xff]
  %v7139 = vld [vmem:[%s7021 + $0x3a8] sm:$0xff]
  %v7140 = vld [vmem:[%s7021 + $0x3b0] sm:$0xff]
  %v7141 = vld [vmem:[%s7021 + $0x3b8] sm:$0xff]
  %v7142 = vld [vmem:[%s7021 + $0x3c0] sm:$0xff]
  %v7143 = vld [vmem:[%s7021 + $0x3c8] sm:$0xff]
  %v7144 = vld [vmem:[%s7021 + $0x3d0] sm:$0xff]
  %v7145 = vld [vmem:[%s7021 + $0x3d8] sm:$0xff]
  %v7146 = vld [vmem:[%s7021 + $0x3e0] sm:$0xff]
  %v7147 = vld [vmem:[%s7021 + $0x3e8] sm:$0xff]
  %v7148 = vld [vmem:[%s7021 + $0x3f0] sm:$0xff]
  %v7149 = vld [vmem:[%s7021 + $0x3f8] sm:$0xff]
  %v7150 = vld [vmem:[%s7021 + $0x400] sm:$0xff]
  %v7151 = vld [vmem:[%s7021 + $0x408] sm:$0xff]
  %v7152 = vld [vmem:[%s7021 + $0x410] sm:$0xff]
  %v7153 = vld [vmem:[%s7021 + $0x418] sm:$0xff]
  %v7154 = vld [vmem:[%s7021 + $0x420] sm:$0xff]
  %v7155 = vld [vmem:[%s7021 + $0x428] sm:$0xff]
  %v7156 = vld [vmem:[%s7021 + $0x430] sm:$0xff]
  %v7157 = vld [vmem:[%s7021 + $0x438] sm:$0xff]
  %v7158 = vld [vmem:[%s7021 + $0x440] sm:$0xff]
  %v7159 = vld [vmem:[%s7021 + $0x448] sm:$0xff]
  %v7160 = vld [vmem:[%s7021 + $0x450] sm:$0xff]
  %v7161 = vld [vmem:[%s7021 + $0x458] sm:$0xff]
  %v7162 = vld [vmem:[%s7021 + $0x460] sm:$0xff]
  %v7163 = vld [vmem:[%s7021 + $0x468] sm:$0xff]
  %v7164 = vld [vmem:[%s7021 + $0x470] sm:$0xff]
  %v7165 = vld [vmem:[%s7021 + $0x478] sm:$0xff]
  %s7166 = scalar_lea.vmem %s2, 2
  %v7167 = vld [vmem:[%s7166] sm:$0x1]
  %s7168 = scalar_lea.vmem %s3, 2
  %v7169 = vld [vmem:[%s7168] sm:$0x1]
  %s7170 = scalar_lea.vmem %s4, 2
  %v7171 = vld [vmem:[%s7170] sm:$0x1]
  %7172 = vmatprep.subr.mxu0 0.0
  %7173 = vmatpush1.msra.mxu0 %v7053
  %7174 = vmatprep.subr.mxu0 0.0
  %7175 = vmatpush1.msra.mxu0 %v7052
  %7176 = vmatprep.subr.mxu0 0.0
  %7177 = vmatpush1.msra.mxu0 %v7051
  %7178 = vmatprep.subr.mxu0 0.0
  %7179 = vmatpush1.msra.mxu0 %v7050
  %7180 = vmatprep.subr.mxu0 0.0
  %7181 = vmatpush1.msra.mxu0 %v7049
  %7182 = vmatprep.subr.mxu0 0.0
  %7183 = vmatpush1.msra.mxu0 %v7048
  %7184 = vmatprep.subr.mxu0 0.0
  %7185 = vmatpush1.msra.mxu0 %v7047
  %7186 = vmatprep.subr.mxu0 0.0
  %7187 = vmatpush1.msra.mxu0 %v7046
  %7188 = vmatprep.subr.mxu0 0.0
  %7189 = vmatpush1.msra.mxu0 %v7045
  %7190 = vmatprep.subr.mxu0 0.0
  %7191 = vmatpush1.msra.mxu0 %v7044
  %7192 = vmatprep.subr.mxu0 0.0
  %7193 = vmatpush1.msra.mxu0 %v7043
  %7194 = vmatprep.subr.mxu0 0.0
  %7195 = vmatpush1.msra.mxu0 %v7042
  %7196 = vmatprep.subr.mxu0 0.0
  %7197 = vmatpush1.msra.mxu0 %v7041
  %7198 = vmatprep.subr.mxu0 0.0
  %7199 = vmatpush1.msra.mxu0 %v7040
  %7200 = vmatprep.subr.mxu0 0.0
  %7201 = vmatpush1.msra.mxu0 %v7039
  %7202 = vmatprep.subr.mxu0 0.0
  %7203 = vmatpush1.msra.mxu0 %v7038
  %7204 = vmatprep.subr.mxu0 0.0
  %7205 = vmatpush2.msra.mxu0 0.0
  %7206 = vmatprep.subr.mxu0 0.0
  %7207 = vmatpush2.msra.mxu0 0.0
  %7208 = vmatprep.subr.mxu0 0.0
  %7209 = vmatpush2.msra.mxu0 0.0
  %7210 = vmatprep.subr.mxu0 0.0
  %7211 = vmatpush2.msra.mxu0 0.0
  %7212 = vmatprep.subr.mxu0 0.0
  %7213 = vmatpush2.msra.mxu0 0.0
  %7214 = vmatprep.subr.mxu0 0.0
  %7215 = vmatpush2.msra.mxu0 0.0
  %7216 = vmatprep.subr.mxu0 0.0
  %7217 = vmatpush2.msra.mxu0 0.0
  %7218 = vmatprep.subr.mxu0 0.0
  %7219 = vmatpush2.msra.mxu0 0.0
  %7220 = vmatprep.subr.mxu0 0.0
  %7221 = vmatpush2.msra.mxu0 0.0
  %7222 = vmatprep.subr.mxu0 0.0
  %7223 = vmatpush2.msra.mxu0 0.0
  %7224 = vmatprep.subr.mxu0 0.0
  %7225 = vmatpush2.msra.mxu0 0.0
  %7226 = vmatprep.subr.mxu0 0.0
  %7227 = vmatpush2.msra.mxu0 0.0
  %7228 = vmatprep.subr.mxu0 0.0
  %7229 = vmatpush2.msra.mxu0 0.0
  %7230 = vmatprep.subr.mxu0 0.0
  %7231 = vmatpush2.msra.mxu0 0.0
  %7232 = vmatprep.subr.mxu0 0.0
  %7233 = vmatpush2.msra.mxu0 0.0
  %7234 = vmatprep.subr.mxu0 0.0
  %7235 = vmatpush2.msra.mxu0 0.0
  %7236 = vmatprep.mubr.f32.mxu0 0.0
  %7237 = vmatmul.mubr.f32.gmra.mxu0 0.0
  %v7238 = vpop.f32.mrf.mxu0
  %v7239 = vadd.f32 0.0, %v7238
  %v7240 = vpop.f32.mrf.mxu0
  %7241 = vmatprep.mubr.f32.mxu0 0.0
  %7242 = vmatmul.mubr.f32.gmra.mxu0 0.0
  %v7243 = vpop.f32.mrf.mxu0
  %v7244 = vadd.f32 0.0, %v7243
  %v7245 = vpop.f32.mrf.mxu0
  %7246 = vmatprep.mubr.f32.mxu0 0.0
  %7247 = vmatmul.mubr.f32.gmra.mxu0 %v7009
  %v7248 = vpop.f32.mrf.mxu0
  %v7249 = vadd.f32 0.0, %v7248
  %v7250 = vpop.f32.mrf.mxu0
  %7251 = vmatprep.mubr.f32.mxu0 0.0
  %7252 = vmatmul.mubr.f32.gmra.mxu0 %v7011
  %v7253 = vpop.f32.mrf.mxu0
  %v7254 = vadd.f32 0.0, %v7253
  %v7255 = vpop.f32.mrf.mxu0
  %7256 = vdwg.mxu0
  %7257 = vmatprep.subr.mxu0 0.0
  %7258 = vmatpush1.msra.mxu0 %v7037
  %7259 = vmatprep.subr.mxu0 0.0
  %7260 = vmatpush1.msra.mxu0 %v7036
  %7261 = vmatprep.subr.mxu0 0.0
  %7262 = vmatpush1.msra.mxu0 %v7035
  %7263 = vmatprep.subr.mxu0 0.0
  %7264 = vmatpush1.msra.mxu0 %v7034
  %7265 = vmatprep.subr.mxu0 0.0
  %7266 = vmatpush1.msra.mxu0 %v7033
  %7267 = vmatprep.subr.mxu0 0.0
  %7268 = vmatpush1.msra.mxu0 %v7032
  %7269 = vmatprep.subr.mxu0 0.0
  %7270 = vmatpush1.msra.mxu0 %v7031
  %7271 = vmatprep.subr.mxu0 0.0
  %7272 = vmatpush1.msra.mxu0 %v7030
  %7273 = vmatprep.subr.mxu0 0.0
  %7274 = vmatpush1.msra.mxu0 %v7029
  %7275 = vmatprep.subr.mxu0 0.0
  %7276 = vmatpush1.msra.mxu0 %v7028
  %7277 = vmatprep.subr.mxu0 0.0
  %7278 = vmatpush1.msra.mxu0 %v7027
  %7279 = vmatprep.subr.mxu0 0.0
  %7280 = vmatpush1.msra.mxu0 %v7026
  %7281 = vmatprep.subr.mxu0 0.0
  %7282 = vmatpush1.msra.mxu0 %v7025
  %7283 = vmatprep.subr.mxu0 0.0
  %7284 = vmatpush1.msra.mxu0 %v7024
  %7285 = vmatprep.subr.mxu0 0.0
  %7286 = vmatpush1.msra.mxu0 %v7023
  %7287 = vmatprep.subr.mxu0 0.0
  %7288 = vmatpush1.msra.mxu0 %v7022
  %7289 = vmatprep.subr.mxu0 0.0
  %7290 = vmatpush2.msra.mxu0 0.0
  %7291 = vmatprep.subr.mxu0 0.0
  %7292 = vmatpush2.msra.mxu0 0.0
  %7293 = vmatprep.subr.mxu0 0.0
  %7294 = vmatpush2.msra.mxu0 0.0
  %7295 = vmatprep.subr.mxu0 0.0
  %7296 = vmatpush2.msra.mxu0 0.0
  %7297 = vmatprep.subr.mxu0 0.0
  %7298 = vmatpush2.msra.mxu0 0.0
  %7299 = vmatprep.subr.mxu0 0.0
  %7300 = vmatpush2.msra.mxu0 0.0
  %7301 = vmatprep.subr.mxu0 0.0
  %7302 = vmatpush2.msra.mxu0 0.0
  %7303 = vmatprep.subr.mxu0 0.0
  %7304 = vmatpush2.msra.mxu0 0.0
  %7305 = vmatprep.subr.mxu0 0.0
  %7306 = vmatpush2.msra.mxu0 0.0
  %7307 = vmatprep.subr.mxu0 0.0
  %7308 = vmatpush2.msra.mxu0 0.0
  %7309 = vmatprep.subr.mxu0 0.0
  %7310 = vmatpush2.msra.mxu0 0.0
  %7311 = vmatprep.subr.mxu0 0.0
  %7312 = vmatpush2.msra.mxu0 0.0
  %7313 = vmatprep.subr.mxu0 0.0
  %7314 = vmatpush2.msra.mxu0 0.0
  %7315 = vmatprep.subr.mxu0 0.0
  %7316 = vmatpush2.msra.mxu0 0.0
  %7317 = vmatprep.subr.mxu0 0.0
  %7318 = vmatpush2.msra.mxu0 0.0
  %7319 = vmatprep.subr.mxu0 0.0
  %7320 = vmatpush2.msra.mxu0 0.0
  %7321 = vmatprep.mubr.f32.mxu0 0.0
  %7322 = vmatmul.mubr.f32.gmra.mxu0 0.0
  %v7323 = vpop.f32.mrf.mxu0
  %v7324 = vadd.f32 %v7239, %v7323
  %v7325 = vpop.f32.mrf.mxu0
  %7326 = vmatprep.mubr.f32.mxu0 0.0
  %7327 = vmatmul.mubr.f32.gmra.mxu0 0.0
  %v7328 = vpop.f32.mrf.mxu0
  %v7329 = vadd.f32 %v7244, %v7328
  %v7330 = vpop.f32.mrf.mxu0
  %7331 = vmatprep.mubr.f32.mxu0 0.0
  %7332 = vmatmul.mubr.f32.gmra.mxu0 0.0
  %v7333 = vpop.f32.mrf.mxu0
  %v7334 = vadd.f32 %v7249, %v7333
  %v7335 = vpop.f32.mrf.mxu0
  %7336 = vmatprep.mubr.f32.mxu0 0.0
  %7337 = vmatmul.mubr.f32.gmra.mxu0 %v7010
  %v7338 = vpop.f32.mrf.mxu0
  %v7339 = vadd.f32 %v7254, %v7338
  %v7340 = vpop.f32.mrf.mxu0
  %7341 = vdwg.mxu0
  %7342 = vmatprep.subr.mxu0 0.0
  %7343 = vmatpush1.msra.mxu0 %v7069
  %7344 = vmatprep.subr.mxu0 0.0
  %7345 = vmatpush1.msra.mxu0 %v7068
  %7346 = vmatprep.subr.mxu0 0.0
  %7347 = vmatpush1.msra.mxu0 %v7067
  %7348 = vmatprep.subr.mxu0 0.0
  %7349 = vmatpush1.msra.mxu0 %v7066
  %7350 = vmatprep.subr.mxu0 0.0
  %7351 = vmatpush1.msra.mxu0 %v7065
  %7352 = vmatprep.subr.mxu0 0.0
  %7353 = vmatpush1.msra.mxu0 %v7064
  %7354 = vmatprep.subr.mxu0 0.0
  %7355 = vmatpush1.msra.mxu0 %v7063
  %7356 = vmatprep.subr.mxu0 0.0
  %7357 = vmatpush1.msra.mxu0 %v7062
  %7358 = vmatprep.subr.mxu0 0.0
  %7359 = vmatpush1.msra.mxu0 %v7061
  %7360 = vmatprep.subr.mxu0 0.0
  %7361 = vmatpush1.msra.mxu0 %v7060
  %7362 = vmatprep.subr.mxu0 0.0
  %7363 = vmatpush1.msra.mxu0 %v7059
  %7364 = vmatprep.subr.mxu0 0.0
  %7365 = vmatpush1.msra.mxu0 %v7058
  %7366 = vmatprep.subr.mxu0 0.0
  %7367 = vmatpush1.msra.mxu0 %v7057
  %7368 = vmatprep.subr.mxu0 0.0
  %7369 = vmatpush1.msra.mxu0 %v7056
  %7370 = vmatprep.subr.mxu0 0.0
  %7371 = vmatpush1.msra.mxu0 %v7055
  %7372 = vmatprep.subr.mxu0 0.0
  %7373 = vmatpush1.msra.mxu0 %v7054
  %7374 = vmatprep.subr.mxu0 0.0
  %7375 = vmatpush2.msra.mxu0 0.0
  %7376 = vmatprep.subr.mxu0 0.0
  %7377 = vmatpush2.msra.mxu0 0.0
  %7378 = vmatprep.subr.mxu0 0.0
  %7379 = vmatpush2.msra.mxu0 0.0
  %7380 = vmatprep.subr.mxu0 0.0
  %7381 = vmatpush2.msra.mxu0 0.0
  %7382 = vmatprep.subr.mxu0 0.0
  %7383 = vmatpush2.msra.mxu0 0.0
  %7384 = vmatprep.subr.mxu0 0.0
  %7385 = vmatpush2.msra.mxu0 0.0
  %7386 = vmatprep.subr.mxu0 0.0
  %7387 = vmatpush2.msra.mxu0 0.0
  %7388 = vmatprep.subr.mxu0 0.0
  %7389 = vmatpush2.msra.mxu0 0.0
  %7390 = vmatprep.subr.mxu0 0.0
  %7391 = vmatpush2.msra.mxu0 0.0
  %7392 = vmatprep.subr.mxu0 0.0
  %7393 = vmatpush2.msra.mxu0 0.0
  %7394 = vmatprep.subr.mxu0 0.0
  %7395 = vmatpush2.msra.mxu0 0.0
  %7396 = vmatprep.subr.mxu0 0.0
  %7397 = vmatpush2.msra.mxu0 0.0
  %7398 = vmatprep.subr.mxu0 0.0
  %7399 = vmatpush2.msra.mxu0 0.0
  %7400 = vmatprep.subr.mxu0 0.0
  %7401 = vmatpush2.msra.mxu0 0.0
  %7402 = vmatprep.subr.mxu0 0.0
  %7403 = vmatpush2.msra.mxu0 0.0
  %7404 = vmatprep.subr.mxu0 0.0
  %7405 = vmatpush2.msra.mxu0 0.0
  %7406 = vmatprep.mubr.f32.mxu0 0.0
  %7407 = vmatmul.mubr.f32.gmra.mxu0 0.0
  %v7408 = vpop.f32.mrf.mxu0
  %v7409 = vadd.f32 0.0, %v7408
  %v7410 = vpop.f32.mrf.mxu0
  %7411 = vmatprep.mubr.f32.mxu0 0.0
  %7412 = vmatmul.mubr.f32.gmra.mxu0 0.0
  %v7413 = vpop.f32.mrf.mxu0
  %v7414 = vadd.f32 0.0, %v7413
  %v7415 = vpop.f32.mrf.mxu0
  %7416 = vmatprep.mubr.f32.mxu0 0.0
  %7417 = vmatmul.mubr.f32.gmra.mxu0 %v7010
  %v7418 = vpop.f32.mrf.mxu0
  %v7419 = vadd.f32 0.0, %v7418
  %v7420 = vpop.f32.mrf.mxu0
  %7421 = vmatprep.mubr.f32.mxu0 0.0
  %7422 = vmatmul.mubr.f32.gmra.mxu0 %v7012
  %v7423 = vpop.f32.mrf.mxu0
  %v7424 = vadd.f32 0.0, %v7423
  %v7425 = vpop.f32.mrf.mxu0
  %7426 = vdwg.mxu0
  %v7427 = vadd.f32 %v7324, %v7409
  %v7428 = vadd.f32 %v7329, %v7414
  %v7429 = vadd.f32 %v7334, %v7419
  %v7430 = vadd.f32 %v7339, %v7424
  %7431 = vmatprep.subr.mxu0 0.0
  %7432 = vmatpush1.msra.mxu0 %v7085
  %7433 = vmatprep.subr.mxu0 0.0
  %7434 = vmatpush1.msra.mxu0 %v7084
  %7435 = vmatprep.subr.mxu0 0.0
  %7436 = vmatpush1.msra.mxu0 %v7083
  %7437 = vmatprep.subr.mxu0 0.0
  %7438 = vmatpush1.msra.mxu0 %v7082
  %7439 = vmatprep.subr.mxu0 0.0
  %7440 = vmatpush1.msra.mxu0 %v7081
  %7441 = vmatprep.subr.mxu0 0.0
  %7442 = vmatpush1.msra.mxu0 %v7080
  %7443 = vmatprep.subr.mxu0 0.0
  %7444 = vmatpush1.msra.mxu0 %v7079
  %7445 = vmatprep.subr.mxu0 0.0
  %7446 = vmatpush1.msra.mxu0 %v7078
  %7447 = vmatprep.subr.mxu0 0.0
  %7448 = vmatpush1.msra.mxu0 %v7077
  %7449 = vmatprep.subr.mxu0 0.0
  %7450 = vmatpush1.msra.mxu0 %v7076
  %7451 = vmatprep.subr.mxu0 0.0
  %7452 = vmatpush1.msra.mxu0 %v7075
  %7453 = vmatprep.subr.mxu0 0.0
  %7454 = vmatpush1.msra.mxu0 %v7074
  %7455 = vmatprep.subr.mxu0 0.0
  %7456 = vmatpush1.msra.mxu0 %v7073
  %7457 = vmatprep.subr.mxu0 0.0
  %7458 = vmatpush1.msra.mxu0 %v7072
  %7459 = vmatprep.subr.mxu0 0.0
  %7460 = vmatpush1.msra.mxu0 %v7071
  %7461 = vmatprep.subr.mxu0 0.0
  %7462 = vmatpush1.msra.mxu0 %v7070
  %7463 = vmatprep.subr.mxu0 0.0
  %7464 = vmatpush2.msra.mxu0 0.0
  %7465 = vmatprep.subr.mxu0 0.0
  %7466 = vmatpush2.msra.mxu0 0.0
  %7467 = vmatprep.subr.mxu0 0.0
  %7468 = vmatpush2.msra.mxu0 0.0
  %7469 = vmatprep.subr.mxu0 0.0
  %7470 = vmatpush2.msra.mxu0 0.0
  %7471 = vmatprep.subr.mxu0 0.0
  %7472 = vmatpush2.msra.mxu0 0.0
  %7473 = vmatprep.subr.mxu0 0.0
  %7474 = vmatpush2.msra.mxu0 0.0
  %7475 = vmatprep.subr.mxu0 0.0
  %7476 = vmatpush2.msra.mxu0 0.0
  %7477 = vmatprep.subr.mxu0 0.0
  %7478 = vmatpush2.msra.mxu0 0.0
  %7479 = vmatprep.subr.mxu0 0.0
  %7480 = vmatpush2.msra.mxu0 0.0
  %7481 = vmatprep.subr.mxu0 0.0
  %7482 = vmatpush2.msra.mxu0 0.0
  %7483 = vmatprep.subr.mxu0 0.0
  %7484 = vmatpush2.msra.mxu0 0.0
  %7485 = vmatprep.subr.mxu0 0.0
  %7486 = vmatpush2.msra.mxu0 0.0
  %7487 = vmatprep.subr.mxu0 0.0
  %7488 = vmatpush2.msra.mxu0 0.0
  %7489 = vmatprep.subr.mxu0 0.0
  %7490 = vmatpush2.msra.mxu0 0.0
  %7491 = vmatprep.subr.mxu0 0.0
  %7492 = vmatpush2.msra.mxu0 0.0
  %7493 = vmatprep.subr.mxu0 0.0
  %7494 = vmatpush2.msra.mxu0 0.0
  %7495 = vmatprep.mubr.f32.mxu0 0.0
  %7496 = vmatmul.mubr.f32.gmra.mxu0 0.0
  %v7497 = vpop.f32.mrf.mxu0
  %v7498 = vadd.f32 0.0, %v7497
  %v7499 = vpop.f32.mrf.mxu0
  %7500 = vmatprep.mubr.f32.mxu0 0.0
  %7501 = vmatmul.mubr.f32.gmra.mxu0 %v7006
  %v7502 = vpop.f32.mrf.mxu0
  %v7503 = vadd.f32 0.0, %v7502
  %v7504 = vpop.f32.mrf.mxu0
  %7505 = vmatprep.mubr.f32.mxu0 0.0
  %7506 = vmatmul.mubr.f32.gmra.mxu0 0.0
  %v7507 = vpop.f32.mrf.mxu0
  %v7508 = vadd.f32 0.0, %v7507
  %v7509 = vpop.f32.mrf.mxu0
  %7510 = vmatprep.mubr.f32.mxu0 0.0
  %7511 = vmatmul.mubr.f32.gmra.mxu0 %v7014
  %v7512 = vpop.f32.mrf.mxu0
  %v7513 = vadd.f32 0.0, %v7512
  %v7514 = vpop.f32.mrf.mxu0
  %7515 = vdwg.mxu0
  %v7516 = vadd.f32 %v7427, %v7498
  %v7517 = vadd.f32 %v7428, %v7503
  %v7518 = vadd.f32 %v7429, %v7508
  %v7519 = vadd.f32 %v7430, %v7513
  %7520 = vmatprep.subr.mxu0 0.0
  %7521 = vmatpush1.msra.mxu0 %v7101
  %7522 = vmatprep.subr.mxu0 0.0
  %7523 = vmatpush1.msra.mxu0 %v7100
  %7524 = vmatprep.subr.mxu0 0.0
  %7525 = vmatpush1.msra.mxu0 %v7099
  %7526 = vmatprep.subr.mxu0 0.0
  %7527 = vmatpush1.msra.mxu0 %v7098
  %7528 = vmatprep.subr.mxu0 0.0
  %7529 = vmatpush1.msra.mxu0 %v7097
  %7530 = vmatprep.subr.mxu0 0.0
  %7531 = vmatpush1.msra.mxu0 %v7096
  %7532 = vmatprep.subr.mxu0 0.0
  %7533 = vmatpush1.msra.mxu0 %v7095
  %7534 = vmatprep.subr.mxu0 0.0
  %7535 = vmatpush1.msra.mxu0 %v7094
  %7536 = vmatprep.subr.mxu0 0.0
  %7537 = vmatpush1.msra.mxu0 %v7093
  %7538 = vmatprep.subr.mxu0 0.0
  %7539 = vmatpush1.msra.mxu0 %v7092
  %7540 = vmatprep.subr.mxu0 0.0
  %7541 = vmatpush1.msra.mxu0 %v7091
  %7542 = vmatprep.subr.mxu0 0.0
  %7543 = vmatpush1.msra.mxu0 %v7090
  %7544 = vmatprep.subr.mxu0 0.0
  %7545 = vmatpush1.msra.mxu0 %v7089
  %7546 = vmatprep.subr.mxu0 0.0
  %7547 = vmatpush1.msra.mxu0 %v7088
  %7548 = vmatprep.subr.mxu0 0.0
  %7549 = vmatpush1.msra.mxu0 %v7087
  %7550 = vmatprep.subr.mxu0 0.0
  %7551 = vmatpush1.msra.mxu0 %v7086
  %7552 = vmatprep.subr.mxu0 0.0
  %7553 = vmatpush2.msra.mxu0 0.0
  %7554 = vmatprep.subr.mxu0 0.0
  %7555 = vmatpush2.msra.mxu0 0.0
  %7556 = vmatprep.subr.mxu0 0.0
  %7557 = vmatpush2.msra.mxu0 0.0
  %7558 = vmatprep.subr.mxu0 0.0
  %7559 = vmatpush2.msra.mxu0 0.0
  %7560 = vmatprep.subr.mxu0 0.0
  %7561 = vmatpush2.msra.mxu0 0.0
  %7562 = vmatprep.subr.mxu0 0.0
  %7563 = vmatpush2.msra.mxu0 0.0
  %7564 = vmatprep.subr.mxu0 0.0
  %7565 = vmatpush2.msra.mxu0 0.0
  %7566 = vmatprep.subr.mxu0 0.0
  %7567 = vmatpush2.msra.mxu0 0.0
  %7568 = vmatprep.subr.mxu0 0.0
  %7569 = vmatpush2.msra.mxu0 0.0
  %7570 = vmatprep.subr.mxu0 0.0
  %7571 = vmatpush2.msra.mxu0 0.0
  %7572 = vmatprep.subr.mxu0 0.0
  %7573 = vmatpush2.msra.mxu0 0.0
  %7574 = vmatprep.subr.mxu0 0.0
  %7575 = vmatpush2.msra.mxu0 0.0
  %7576 = vmatprep.subr.mxu0 0.0
  %7577 = vmatpush2.msra.mxu0 0.0
  %7578 = vmatprep.subr.mxu0 0.0
  %7579 = vmatpush2.msra.mxu0 0.0
  %7580 = vmatprep.subr.mxu0 0.0
  %7581 = vmatpush2.msra.mxu0 0.0
  %7582 = vmatprep.subr.mxu0 0.0
  %7583 = vmatpush2.msra.mxu0 0.0
  %7584 = vmatprep.mubr.f32.mxu0 0.0
  %7585 = vmatmul.mubr.f32.gmra.mxu0 %v7005
  %v7586 = vpop.f32.mrf.mxu0
  %v7587 = vadd.f32 0.0, %v7586
  %v7588 = vpop.f32.mrf.mxu0
  %7589 = vmatprep.mubr.f32.mxu0 0.0
  %7590 = vmatmul.mubr.f32.gmra.mxu0 %v7007
  %v7591 = vpop.f32.mrf.mxu0
  %v7592 = vadd.f32 0.0, %v7591
  %v7593 = vpop.f32.mrf.mxu0
  %7594 = vmatprep.mubr.f32.mxu0 0.0
  %7595 = vmatmul.mubr.f32.gmra.mxu0 %v7013
  %v7596 = vpop.f32.mrf.mxu0
  %v7597 = vadd.f32 0.0, %v7596
  %v7598 = vpop.f32.mrf.mxu0
  %7599 = vmatprep.mubr.f32.mxu0 0.0
  %7600 = vmatmul.mubr.f32.gmra.mxu0 %v7015
  %v7601 = vpop.f32.mrf.mxu0
  %v7602 = vadd.f32 0.0, %v7601
  %v7603 = vpop.f32.mrf.mxu0
  %7604 = vdwg.mxu0
  %v7605 = vadd.f32 %v7516, %v7587
  %v7606 = vadd.f32 %v7517, %v7592
  %v7607 = vadd.f32 %v7518, %v7597
  %v7608 = vadd.f32 %v7519, %v7602
  %7609 = vmatprep.subr.mxu0 0.0
  %7610 = vmatpush1.msra.mxu0 %v7117
  %7611 = vmatprep.subr.mxu0 0.0
  %7612 = vmatpush1.msra.mxu0 %v7116
  %7613 = vmatprep.subr.mxu0 0.0
  %7614 = vmatpush1.msra.mxu0 %v7115
  %7615 = vmatprep.subr.mxu0 0.0
  %7616 = vmatpush1.msra.mxu0 %v7114
  %7617 = vmatprep.subr.mxu0 0.0
  %7618 = vmatpush1.msra.mxu0 %v7113
  %7619 = vmatprep.subr.mxu0 0.0
  %7620 = vmatpush1.msra.mxu0 %v7112
  %7621 = vmatprep.subr.mxu0 0.0
  %7622 = vmatpush1.msra.mxu0 %v7111
  %7623 = vmatprep.subr.mxu0 0.0
  %7624 = vmatpush1.msra.mxu0 %v7110
  %7625 = vmatprep.subr.mxu0 0.0
  %7626 = vmatpush1.msra.mxu0 %v7109
  %7627 = vmatprep.subr.mxu0 0.0
  %7628 = vmatpush1.msra.mxu0 %v7108
  %7629 = vmatprep.subr.mxu0 0.0
  %7630 = vmatpush1.msra.mxu0 %v7107
  %7631 = vmatprep.subr.mxu0 0.0
  %7632 = vmatpush1.msra.mxu0 %v7106
  %7633 = vmatprep.subr.mxu0 0.0
  %7634 = vmatpush1.msra.mxu0 %v7105
  %7635 = vmatprep.subr.mxu0 0.0
  %7636 = vmatpush1.msra.mxu0 %v7104
  %7637 = vmatprep.subr.mxu0 0.0
  %7638 = vmatpush1.msra.mxu0 %v7103
  %7639 = vmatprep.subr.mxu0 0.0
  %7640 = vmatpush1.msra.mxu0 %v7102
  %7641 = vmatprep.subr.mxu0 0.0
  %7642 = vmatpush2.msra.mxu0 0.0
  %7643 = vmatprep.subr.mxu0 0.0
  %7644 = vmatpush2.msra.mxu0 0.0
  %7645 = vmatprep.subr.mxu0 0.0
  %7646 = vmatpush2.msra.mxu0 0.0
  %7647 = vmatprep.subr.mxu0 0.0
  %7648 = vmatpush2.msra.mxu0 0.0
  %7649 = vmatprep.subr.mxu0 0.0
  %7650 = vmatpush2.msra.mxu0 0.0
  %7651 = vmatprep.subr.mxu0 0.0
  %7652 = vmatpush2.msra.mxu0 0.0
  %7653 = vmatprep.subr.mxu0 0.0
  %7654 = vmatpush2.msra.mxu0 0.0
  %7655 = vmatprep.subr.mxu0 0.0
  %7656 = vmatpush2.msra.mxu0 0.0
  %7657 = vmatprep.subr.mxu0 0.0
  %7658 = vmatpush2.msra.mxu0 0.0
  %7659 = vmatprep.subr.mxu0 0.0
  %7660 = vmatpush2.msra.mxu0 0.0
  %7661 = vmatprep.subr.mxu0 0.0
  %7662 = vmatpush2.msra.mxu0 0.0
  %7663 = vmatprep.subr.mxu0 0.0
  %7664 = vmatpush2.msra.mxu0 0.0
  %7665 = vmatprep.subr.mxu0 0.0
  %7666 = vmatpush2.msra.mxu0 0.0
  %7667 = vmatprep.subr.mxu0 0.0
  %7668 = vmatpush2.msra.mxu0 0.0
  %7669 = vmatprep.subr.mxu0 0.0
  %7670 = vmatpush2.msra.mxu0 0.0
  %7671 = vmatprep.subr.mxu0 0.0
  %7672 = vmatpush2.msra.mxu0 0.0
  %7673 = vmatprep.mubr.f32.mxu0 0.0
  %7674 = vmatmul.mubr.f32.gmra.mxu0 %v7006
  %v7675 = vpop.f32.mrf.mxu0
  %v7676 = vadd.f32 0.0, %v7675
  %v7677 = vpop.f32.mrf.mxu0
  %7678 = vmatprep.mubr.f32.mxu0 0.0
  %7679 = vmatmul.mubr.f32.gmra.mxu0 %v7008
  %v7680 = vpop.f32.mrf.mxu0
  %v7681 = vadd.f32 0.0, %v7680
  %v7682 = vpop.f32.mrf.mxu0
  %7683 = vmatprep.mubr.f32.mxu0 0.0
  %7684 = vmatmul.mubr.f32.gmra.mxu0 %v7014
  %v7685 = vpop.f32.mrf.mxu0
  %v7686 = vadd.f32 0.0, %v7685
  %v7687 = vpop.f32.mrf.mxu0
  %7688 = vmatprep.mubr.f32.mxu0 0.0
  %7689 = vmatmul.mubr.f32.gmra.mxu0 %v7016
  %v7690 = vpop.f32.mrf.mxu0
  %v7691 = vadd.f32 0.0, %v7690
  %v7692 = vpop.f32.mrf.mxu0
  %7693 = vdwg.mxu0
  %v7694 = vadd.f32 %v7605, %v7676
  %v7695 = vadd.f32 %v7606, %v7681
  %v7696 = vadd.f32 %v7607, %v7686
  %v7697 = vadd.f32 %v7608, %v7691
  %7698 = vmatprep.subr.mxu0 0.0
  %7699 = vmatpush1.msra.mxu0 %v7133
  %7700 = vmatprep.subr.mxu0 0.0
  %7701 = vmatpush1.msra.mxu0 %v7132
  %7702 = vmatprep.subr.mxu0 0.0
  %7703 = vmatpush1.msra.mxu0 %v7131
  %7704 = vmatprep.subr.mxu0 0.0
  %7705 = vmatpush1.msra.mxu0 %v7130
  %7706 = vmatprep.subr.mxu0 0.0
  %7707 = vmatpush1.msra.mxu0 %v7129
  %7708 = vmatprep.subr.mxu0 0.0
  %7709 = vmatpush1.msra.mxu0 %v7128
  %7710 = vmatprep.subr.mxu0 0.0
  %7711 = vmatpush1.msra.mxu0 %v7127
  %7712 = vmatprep.subr.mxu0 0.0
  %7713 = vmatpush1.msra.mxu0 %v7126
  %7714 = vmatprep.subr.mxu0 0.0
  %7715 = vmatpush1.msra.mxu0 %v7125
  %7716 = vmatprep.subr.mxu0 0.0
  %7717 = vmatpush1.msra.mxu0 %v7124
  %7718 = vmatprep.subr.mxu0 0.0
  %7719 = vmatpush1.msra.mxu0 %v7123
  %7720 = vmatprep.subr.mxu0 0.0
  %7721 = vmatpush1.msra.mxu0 %v7122
  %7722 = vmatprep.subr.mxu0 0.0
  %7723 = vmatpush1.msra.mxu0 %v7121
  %7724 = vmatprep.subr.mxu0 0.0
  %7725 = vmatpush1.msra.mxu0 %v7120
  %7726 = vmatprep.subr.mxu0 0.0
  %7727 = vmatpush1.msra.mxu0 %v7119
  %7728 = vmatprep.subr.mxu0 0.0
  %7729 = vmatpush1.msra.mxu0 %v7118
  %7730 = vmatprep.subr.mxu0 0.0
  %7731 = vmatpush2.msra.mxu0 0.0
  %7732 = vmatprep.subr.mxu0 0.0
  %7733 = vmatpush2.msra.mxu0 0.0
  %7734 = vmatprep.subr.mxu0 0.0
  %7735 = vmatpush2.msra.mxu0 0.0
  %7736 = vmatprep.subr.mxu0 0.0
  %7737 = vmatpush2.msra.mxu0 0.0
  %7738 = vmatprep.subr.mxu0 0.0
  %7739 = vmatpush2.msra.mxu0 0.0
  %7740 = vmatprep.subr.mxu0 0.0
  %7741 = vmatpush2.msra.mxu0 0.0
  %7742 = vmatprep.subr.mxu0 0.0
  %7743 = vmatpush2.msra.mxu0 0.0
  %7744 = vmatprep.subr.mxu0 0.0
  %7745 = vmatpush2.msra.mxu0 0.0
  %7746 = vmatprep.subr.mxu0 0.0
  %7747 = vmatpush2.msra.mxu0 0.0
  %7748 = vmatprep.subr.mxu0 0.0
  %7749 = vmatpush2.msra.mxu0 0.0
  %7750 = vmatprep.subr.mxu0 0.0
  %7751 = vmatpush2.msra.mxu0 0.0
  %7752 = vmatprep.subr.mxu0 0.0
  %7753 = vmatpush2.msra.mxu0 0.0
  %7754 = vmatprep.subr.mxu0 0.0
  %7755 = vmatpush2.msra.mxu0 0.0
  %7756 = vmatprep.subr.mxu0 0.0
  %7757 = vmatpush2.msra.mxu0 0.0
  %7758 = vmatprep.subr.mxu0 0.0
  %7759 = vmatpush2.msra.mxu0 0.0
  %7760 = vmatprep.subr.mxu0 0.0
  %7761 = vmatpush2.msra.mxu0 0.0
  %7762 = vmatprep.mubr.f32.mxu0 0.0
  %7763 = vmatmul.mubr.f32.gmra.mxu0 0.0
  %v7764 = vpop.f32.mrf.mxu0
  %v7765 = vadd.f32 0.0, %v7764
  %v7766 = vpop.f32.mrf.mxu0
  %7767 = vmatprep.mubr.f32.mxu0 0.0
  %7768 = vmatmul.mubr.f32.gmra.mxu0 %v7010
  %v7769 = vpop.f32.mrf.mxu0
  %v7770 = vadd.f32 0.0, %v7769
  %v7771 = vpop.f32.mrf.mxu0
  %7772 = vmatprep.mubr.f32.mxu0 0.0
  %7773 = vmatmul.mubr.f32.gmra.mxu0 0.0
  %v7774 = vpop.f32.mrf.mxu0
  %v7775 = vadd.f32 0.0, %v7774
  %v7776 = vpop.f32.mrf.mxu0
  %7777 = vmatprep.mubr.f32.mxu0 0.0
  %7778 = vmatmul.mubr.f32.gmra.mxu0 %v7018
  %v7779 = vpop.f32.mrf.mxu0
  %v7780 = vadd.f32 0.0, %v7779
  %v7781 = vpop.f32.mrf.mxu0
  %7782 = vdwg.mxu0
  %v7783 = vadd.f32 %v7694, %v7765
  %v7784 = vadd.f32 %v7695, %v7770
  %v7785 = vadd.f32 %v7696, %v7775
  %v7786 = vadd.f32 %v7697, %v7780
  %7787 = vmatprep.subr.mxu0 0.0
  %7788 = vmatpush1.msra.mxu0 %v7149
  %7789 = vmatprep.subr.mxu0 0.0
  %7790 = vmatpush1.msra.mxu0 %v7148
  %7791 = vmatprep.subr.mxu0 0.0
  %7792 = vmatpush1.msra.mxu0 %v7147
  %7793 = vmatprep.subr.mxu0 0.0
  %7794 = vmatpush1.msra.mxu0 %v7146
  %7795 = vmatprep.subr.mxu0 0.0
  %7796 = vmatpush1.msra.mxu0 %v7145
  %7797 = vmatprep.subr.mxu0 0.0
  %7798 = vmatpush1.msra.mxu0 %v7144
  %7799 = vmatprep.subr.mxu0 0.0
  %7800 = vmatpush1.msra.mxu0 %v7143
  %7801 = vmatprep.subr.mxu0 0.0
  %7802 = vmatpush1.msra.mxu0 %v7142
  %7803 = vmatprep.subr.mxu0 0.0
  %7804 = vmatpush1.msra.mxu0 %v7141
  %7805 = vmatprep.subr.mxu0 0.0
  %7806 = vmatpush1.msra.mxu0 %v7140
  %7807 = vmatprep.subr.mxu0 0.0
  %7808 = vmatpush1.msra.mxu0 %v7139
  %7809 = vmatprep.subr.mxu0 0.0
  %7810 = vmatpush1.msra.mxu0 %v7138
  %7811 = vmatprep.subr.mxu0 0.0
  %7812 = vmatpush1.msra.mxu0 %v7137
  %7813 = vmatprep.subr.mxu0 0.0
  %7814 = vmatpush1.msra.mxu0 %v7136
  %7815 = vmatprep.subr.mxu0 0.0
  %7816 = vmatpush1.msra.mxu0 %v7135
  %7817 = vmatprep.subr.mxu0 0.0
  %7818 = vmatpush1.msra.mxu0 %v7134
  %7819 = vmatprep.subr.mxu0 0.0
  %7820 = vmatpush2.msra.mxu0 0.0
  %7821 = vmatprep.subr.mxu0 0.0
  %7822 = vmatpush2.msra.mxu0 0.0
  %7823 = vmatprep.subr.mxu0 0.0
  %7824 = vmatpush2.msra.mxu0 0.0
  %7825 = vmatprep.subr.mxu0 0.0
  %7826 = vmatpush2.msra.mxu0 0.0
  %7827 = vmatprep.subr.mxu0 0.0
  %7828 = vmatpush2.msra.mxu0 0.0
  %7829 = vmatprep.subr.mxu0 0.0
  %7830 = vmatpush2.msra.mxu0 0.0
  %7831 = vmatprep.subr.mxu0 0.0
  %7832 = vmatpush2.msra.mxu0 0.0
  %7833 = vmatprep.subr.mxu0 0.0
  %7834 = vmatpush2.msra.mxu0 0.0
  %7835 = vmatprep.subr.mxu0 0.0
  %7836 = vmatpush2.msra.mxu0 0.0
  %7837 = vmatprep.subr.mxu0 0.0
  %7838 = vmatpush2.msra.mxu0 0.0
  %7839 = vmatprep.subr.mxu0 0.0
  %7840 = vmatpush2.msra.mxu0 0.0
  %7841 = vmatprep.subr.mxu0 0.0
  %7842 = vmatpush2.msra.mxu0 0.0
  %7843 = vmatprep.subr.mxu0 0.0
  %7844 = vmatpush2.msra.mxu0 0.0
  %7845 = vmatprep.subr.mxu0 0.0
  %7846 = vmatpush2.msra.mxu0 0.0
  %7847 = vmatprep.subr.mxu0 0.0
  %7848 = vmatpush2.msra.mxu0 0.0
  %7849 = vmatprep.subr.mxu0 0.0
  %7850 = vmatpush2.msra.mxu0 0.0
  %7851 = vmatprep.mubr.f32.mxu0 0.0
  %7852 = vmatmul.mubr.f32.gmra.mxu0 %v7009
  %v7853 = vpop.f32.mrf.mxu0
  %v7854 = vadd.f32 0.0, %v7853
  %v7855 = vpop.f32.mrf.mxu0
  %7856 = vmatprep.mubr.f32.mxu0 0.0
  %7857 = vmatmul.mubr.f32.gmra.mxu0 %v7011
  %v7858 = vpop.f32.mrf.mxu0
  %v7859 = vadd.f32 0.0, %v7858
  %v7860 = vpop.f32.mrf.mxu0
  %7861 = vmatprep.mubr.f32.mxu0 0.0
  %7862 = vmatmul.mubr.f32.gmra.mxu0 %v7017
  %v7863 = vpop.f32.mrf.mxu0
  %v7864 = vadd.f32 0.0, %v7863
  %v7865 = vpop.f32.mrf.mxu0
  %7866 = vmatprep.mubr.f32.mxu0 0.0
  %7867 = vmatmul.mubr.f32.gmra.mxu0 %v7019
  %v7868 = vpop.f32.mrf.mxu0
  %v7869 = vadd.f32 0.0, %v7868
  %v7870 = vpop.f32.mrf.mxu0
  %7871 = vdwg.mxu0
  %v7872 = vadd.f32 %v7783, %v7854
  %v7873 = vadd.f32 %v7784, %v7859
  %v7874 = vadd.f32 %v7785, %v7864
  %v7875 = vadd.f32 %v7786, %v7869
  %7876 = vmatprep.subr.mxu0 0.0
  %7877 = vmatpush1.msra.mxu0 %v7165
  %7878 = vmatprep.subr.mxu0 0.0
  %7879 = vmatpush1.msra.mxu0 %v7164
  %7880 = vmatprep.subr.mxu0 0.0
  %7881 = vmatpush1.msra.mxu0 %v7163
  %7882 = vmatprep.subr.mxu0 0.0
  %7883 = vmatpush1.msra.mxu0 %v7162
  %7884 = vmatprep.subr.mxu0 0.0
  %7885 = vmatpush1.msra.mxu0 %v7161
  %7886 = vmatprep.subr.mxu0 0.0
  %7887 = vmatpush1.msra.mxu0 %v7160
  %7888 = vmatprep.subr.mxu0 0.0
  %7889 = vmatpush1.msra.mxu0 %v7159
  %7890 = vmatprep.subr.mxu0 0.0
  %7891 = vmatpush1.msra.mxu0 %v7158
  %7892 = vmatprep.subr.mxu0 0.0
  %7893 = vmatpush1.msra.mxu0 %v7157
  %7894 = vmatprep.subr.mxu0 0.0
  %7895 = vmatpush1.msra.mxu0 %v7156
  %7896 = vmatprep.subr.mxu0 0.0
  %7897 = vmatpush1.msra.mxu0 %v7155
  %7898 = vmatprep.subr.mxu0 0.0
  %7899 = vmatpush1.msra.mxu0 %v7154
  %7900 = vmatprep.subr.mxu0 0.0
  %7901 = vmatpush1.msra.mxu0 %v7153
  %7902 = vmatprep.subr.mxu0 0.0
  %7903 = vmatpush1.msra.mxu0 %v7152
  %7904 = vmatprep.subr.mxu0 0.0
  %7905 = vmatpush1.msra.mxu0 %v7151
  %7906 = vmatprep.subr.mxu0 0.0
  %7907 = vmatpush1.msra.mxu0 %v7150
  %7908 = vmatprep.subr.mxu0 0.0
  %7909 = vmatpush2.msra.mxu0 0.0
  %7910 = vmatprep.subr.mxu0 0.0
  %7911 = vmatpush2.msra.mxu0 0.0
  %7912 = vmatprep.subr.mxu0 0.0
  %7913 = vmatpush2.msra.mxu0 0.0
  %7914 = vmatprep.subr.mxu0 0.0
  %7915 = vmatpush2.msra.mxu0 0.0
  %7916 = vmatprep.subr.mxu0 0.0
  %7917 = vmatpush2.msra.mxu0 0.0
  %7918 = vmatprep.subr.mxu0 0.0
  %7919 = vmatpush2.msra.mxu0 0.0
  %7920 = vmatprep.subr.mxu0 0.0
  %7921 = vmatpush2.msra.mxu0 0.0
  %7922 = vmatprep.subr.mxu0 0.0
  %7923 = vmatpush2.msra.mxu0 0.0
  %7924 = vmatprep.subr.mxu0 0.0
  %7925 = vmatpush2.msra.mxu0 0.0
  %7926 = vmatprep.subr.mxu0 0.0
  %7927 = vmatpush2.msra.mxu0 0.0
  %7928 = vmatprep.subr.mxu0 0.0
  %7929 = vmatpush2.msra.mxu0 0.0
  %7930 = vmatprep.subr.mxu0 0.0
  %7931 = vmatpush2.msra.mxu0 0.0
  %7932 = vmatprep.subr.mxu0 0.0
  %7933 = vmatpush2.msra.mxu0 0.0
  %7934 = vmatprep.subr.mxu0 0.0
  %7935 = vmatpush2.msra.mxu0 0.0
  %7936 = vmatprep.subr.mxu0 0.0
  %7937 = vmatpush2.msra.mxu0 0.0
  %7938 = vmatprep.subr.mxu0 0.0
  %7939 = vmatpush2.msra.mxu0 0.0
  %7940 = vmatprep.mubr.f32.mxu0 0.0
  %7941 = vmatmul.mubr.f32.gmra.mxu0 %v7010
  %v7942 = vpop.f32.mrf.mxu0
  %v7943 = vadd.f32 0.0, %v7942
  %v7944 = vpop.f32.mrf.mxu0
  %7945 = vmatprep.mubr.f32.mxu0 0.0
  %7946 = vmatmul.mubr.f32.gmra.mxu0 %v7012
  %v7947 = vpop.f32.mrf.mxu0
  %v7948 = vadd.f32 0.0, %v7947
  %v7949 = vpop.f32.mrf.mxu0
  %7950 = vmatprep.mubr.f32.mxu0 0.0
  %7951 = vmatmul.mubr.f32.gmra.mxu0 %v7018
  %v7952 = vpop.f32.mrf.mxu0
  %v7953 = vadd.f32 0.0, %v7952
  %v7954 = vpop.f32.mrf.mxu0
  %7955 = vmatprep.mubr.f32.mxu0 0.0
  %7956 = vmatmul.mubr.f32.gmra.mxu0 %v7020
  %v7957 = vpop.f32.mrf.mxu0
  %v7958 = vadd.f32 0.0, %v7957
  %v7959 = vpop.f32.mrf.mxu0
  %7960 = vdwg.mxu0
  %v7961 = vadd.f32 %v7872, %v7943
  %v7962 = vadd.f32 %v7873, %v7948
  %v7963 = vadd.f32 %v7874, %v7953
  %v7964 = vadd.f32 %v7875, %v7958
  %v7966 = vlaneseq
  %v7967 = vshrl.u32 %v7966, 7
  %v7968 = vsub.s32 0, %v7967
  %v7969 = vrot.slane %v7167, %v7968
  %v7971 = vadd.f32 %v7961, %v7969
  %v7972 = vadd.f32 %v7962, %v7969
  %v7973 = vadd.f32 %v7963, %v7969
  %v7974 = vadd.f32 %v7964, %v7969
  %v7975 = vmax.f32 %v7971, 0.0
  %v7976 = vmax.f32 %v7972, 0.0
  %v7977 = vmax.f32 %v7973, 0.0
  %v7978 = vmax.f32 %v7974, 0.0
  %v7979 = vmul.f32 %v7975, %v4727
  %v7980 = vmul.f32 %v7976, %v4728
  %v7981 = vmul.f32 %v7977, %v4729
  %v7982 = vmul.f32 %v7978, %v4730
  %v7983 = vadd.f32 %v7979, %v7980
  %v7984 = vadd.f32 %v7983, %v7981
  %v7985 = vadd.f32 %v7984, %v7982
  %v7986 = vrot.slane %v7985, 4
  %v7987 = vadd.f32 %v7985, %v7986
  %v7988 = vrot.slane %v7987, 2
  %v7989 = vadd.f32 %v7987, %v7988
  %v7990 = vrot.slane %v7989, 1
  %v7991 = vadd.f32 %v7989, %v7990
  %v7992 = vmul.f32 %v7975, %v7975
  %v7993 = vmul.f32 %v7976, %v7976
  %v7994 = vmul.f32 %v7977, %v7977
  %v7995 = vmul.f32 %v7978, %v7978
  %v7996 = vmul.f32 %v7992, %v4727
  %v7997 = vmul.f32 %v7993, %v4728
  %v7998 = vmul.f32 %v7994, %v4729
  %v7999 = vmul.f32 %v7995, %v4730
  %v8000 = vadd.f32 %v7996, %v7997
  %v8001 = vadd.f32 %v8000, %v7998
  %v8002 = vadd.f32 %v8001, %v7999
  %v8003 = vrot.slane %v8002, 4
  %v8004 = vadd.f32 %v8002, %v8003
  %v8005 = vrot.slane %v8004, 2
  %v8006 = vadd.f32 %v8004, %v8005
  %v8007 = vrot.slane %v8006, 1
  %v8008 = vadd.f32 %v8006, %v8007
  %v8009 = vmul.f32 %v7991, 0.125
  %v8010 = vmul.f32 %v8008, 0.125
  %v8011 = vmul.f32 %v8009, %v8009
  %v8012 = vsub.f32 %v8010, %v8011
  %v8013 = vmax.f32 %v8012, 0.0
  %v8014 = vadd.f32 %v8013, 1e-05
  %v8015 = vrsqrt.pop %v8014
  %v8016 = vmul.f32 %v7169, %v8015
  %v8017 = vmul.f32 %v8009, %v8016
  %v8018 = vsub.f32 %v7171, %v8017
  %v8020 = vlaneseq
  %v8021 = vshrl.u32 %v8020, 7
  %v8022 = vsub.s32 0, %v8021
  %v8023 = vrot.slane %v8016, %v8022
  %v8025 = vmul.f32 %v7975, %v8023
  %v8026 = vmul.f32 %v7976, %v8023
  %v8027 = vmul.f32 %v7977, %v8023
  %v8028 = vmul.f32 %v7978, %v8023
  %v8030 = vlaneseq
  %v8031 = vshrl.u32 %v8030, 7
  %v8032 = vsub.s32 0, %v8031
  %v8033 = vrot.slane %v8018, %v8032
  %v8035 = vadd.f32 %v8025, %v8033
  %v8036 = vadd.f32 %v8026, %v8033
  %v8037 = vadd.f32 %v8027, %v8033
  %v8038 = vadd.f32 %v8028, %v8033
  %s8039 = scalar_lea.vmem %s1, 3456
  %v8040 = vld [vmem:[%s8039] sm:$0xff]
  %v8041 = vld [vmem:[%s8039 + $0x8] sm:$0xff]
  %v8042 = vld [vmem:[%s8039 + $0x10] sm:$0xff]
  %v8043 = vld [vmem:[%s8039 + $0x18] sm:$0xff]
  %v8044 = vld [vmem:[%s8039 + $0x20] sm:$0xff]
  %v8045 = vld [vmem:[%s8039 + $0x28] sm:$0xff]
  %v8046 = vld [vmem:[%s8039 + $0x30] sm:$0xff]
  %v8047 = vld [vmem:[%s8039 + $0x38] sm:$0xff]
  %v8048 = vld [vmem:[%s8039 + $0x40] sm:$0xff]
  %v8049 = vld [vmem:[%s8039 + $0x48] sm:$0xff]
  %v8050 = vld [vmem:[%s8039 + $0x50] sm:$0xff]
  %v8051 = vld [vmem:[%s8039 + $0x58] sm:$0xff]
  %v8052 = vld [vmem:[%s8039 + $0x60] sm:$0xff]
  %v8053 = vld [vmem:[%s8039 + $0x68] sm:$0xff]
  %v8054 = vld [vmem:[%s8039 + $0x70] sm:$0xff]
  %v8055 = vld [vmem:[%s8039 + $0x78] sm:$0xff]
  %v8056 = vld [vmem:[%s8039 + $0x80] sm:$0xff]
  %v8057 = vld [vmem:[%s8039 + $0x88] sm:$0xff]
  %v8058 = vld [vmem:[%s8039 + $0x90] sm:$0xff]
  %v8059 = vld [vmem:[%s8039 + $0x98] sm:$0xff]
  %v8060 = vld [vmem:[%s8039 + $0xa0] sm:$0xff]
  %v8061 = vld [vmem:[%s8039 + $0xa8] sm:$0xff]
  %v8062 = vld [vmem:[%s8039 + $0xb0] sm:$0xff]
  %v8063 = vld [vmem:[%s8039 + $0xb8] sm:$0xff]
  %v8064 = vld [vmem:[%s8039 + $0xc0] sm:$0xff]
  %v8065 = vld [vmem:[%s8039 + $0xc8] sm:$0xff]
  %v8066 = vld [vmem:[%s8039 + $0xd0] sm:$0xff]
  %v8067 = vld [vmem:[%s8039 + $0xd8] sm:$0xff]
  %v8068 = vld [vmem:[%s8039 + $0xe0] sm:$0xff]
  %v8069 = vld [vmem:[%s8039 + $0xe8] sm:$0xff]
  %v8070 = vld [vmem:[%s8039 + $0xf0] sm:$0xff]
  %v8071 = vld [vmem:[%s8039 + $0xf8] sm:$0xff]
  %v8072 = vld [vmem:[%s8039 + $0x100] sm:$0xff]
  %v8073 = vld [vmem:[%s8039 + $0x108] sm:$0xff]
  %v8074 = vld [vmem:[%s8039 + $0x110] sm:$0xff]
  %v8075 = vld [vmem:[%s8039 + $0x118] sm:$0xff]
  %v8076 = vld [vmem:[%s8039 + $0x120] sm:$0xff]
  %v8077 = vld [vmem:[%s8039 + $0x128] sm:$0xff]
  %v8078 = vld [vmem:[%s8039 + $0x130] sm:$0xff]
  %v8079 = vld [vmem:[%s8039 + $0x138] sm:$0xff]
  %v8080 = vld [vmem:[%s8039 + $0x140] sm:$0xff]
  %v8081 = vld [vmem:[%s8039 + $0x148] sm:$0xff]
  %v8082 = vld [vmem:[%s8039 + $0x150] sm:$0xff]
  %v8083 = vld [vmem:[%s8039 + $0x158] sm:$0xff]
  %v8084 = vld [vmem:[%s8039 + $0x160] sm:$0xff]
  %v8085 = vld [vmem:[%s8039 + $0x168] sm:$0xff]
  %v8086 = vld [vmem:[%s8039 + $0x170] sm:$0xff]
  %v8087 = vld [vmem:[%s8039 + $0x178] sm:$0xff]
  %v8088 = vld [vmem:[%s8039 + $0x180] sm:$0xff]
  %v8089 = vld [vmem:[%s8039 + $0x188] sm:$0xff]
  %v8090 = vld [vmem:[%s8039 + $0x190] sm:$0xff]
  %v8091 = vld [vmem:[%s8039 + $0x198] sm:$0xff]
  %v8092 = vld [vmem:[%s8039 + $0x1a0] sm:$0xff]
  %v8093 = vld [vmem:[%s8039 + $0x1a8] sm:$0xff]
  %v8094 = vld [vmem:[%s8039 + $0x1b0] sm:$0xff]
  %v8095 = vld [vmem:[%s8039 + $0x1b8] sm:$0xff]
  %v8096 = vld [vmem:[%s8039 + $0x1c0] sm:$0xff]
  %v8097 = vld [vmem:[%s8039 + $0x1c8] sm:$0xff]
  %v8098 = vld [vmem:[%s8039 + $0x1d0] sm:$0xff]
  %v8099 = vld [vmem:[%s8039 + $0x1d8] sm:$0xff]
  %v8100 = vld [vmem:[%s8039 + $0x1e0] sm:$0xff]
  %v8101 = vld [vmem:[%s8039 + $0x1e8] sm:$0xff]
  %v8102 = vld [vmem:[%s8039 + $0x1f0] sm:$0xff]
  %v8103 = vld [vmem:[%s8039 + $0x1f8] sm:$0xff]
  %v8104 = vld [vmem:[%s8039 + $0x200] sm:$0xff]
  %v8105 = vld [vmem:[%s8039 + $0x208] sm:$0xff]
  %v8106 = vld [vmem:[%s8039 + $0x210] sm:$0xff]
  %v8107 = vld [vmem:[%s8039 + $0x218] sm:$0xff]
  %v8108 = vld [vmem:[%s8039 + $0x220] sm:$0xff]
  %v8109 = vld [vmem:[%s8039 + $0x228] sm:$0xff]
  %v8110 = vld [vmem:[%s8039 + $0x230] sm:$0xff]
  %v8111 = vld [vmem:[%s8039 + $0x238] sm:$0xff]
  %v8112 = vld [vmem:[%s8039 + $0x240] sm:$0xff]
  %v8113 = vld [vmem:[%s8039 + $0x248] sm:$0xff]
  %v8114 = vld [vmem:[%s8039 + $0x250] sm:$0xff]
  %v8115 = vld [vmem:[%s8039 + $0x258] sm:$0xff]
  %v8116 = vld [vmem:[%s8039 + $0x260] sm:$0xff]
  %v8117 = vld [vmem:[%s8039 + $0x268] sm:$0xff]
  %v8118 = vld [vmem:[%s8039 + $0x270] sm:$0xff]
  %v8119 = vld [vmem:[%s8039 + $0x278] sm:$0xff]
  %v8120 = vld [vmem:[%s8039 + $0x280] sm:$0xff]
  %v8121 = vld [vmem:[%s8039 + $0x288] sm:$0xff]
  %v8122 = vld [vmem:[%s8039 + $0x290] sm:$0xff]
  %v8123 = vld [vmem:[%s8039 + $0x298] sm:$0xff]
  %v8124 = vld [vmem:[%s8039 + $0x2a0] sm:$0xff]
  %v8125 = vld [vmem:[%s8039 + $0x2a8] sm:$0xff]
  %v8126 = vld [vmem:[%s8039 + $0x2b0] sm:$0xff]
  %v8127 = vld [vmem:[%s8039 + $0x2b8] sm:$0xff]
  %v8128 = vld [vmem:[%s8039 + $0x2c0] sm:$0xff]
  %v8129 = vld [vmem:[%s8039 + $0x2c8] sm:$0xff]
  %v8130 = vld [vmem:[%s8039 + $0x2d0] sm:$0xff]
  %v8131 = vld [vmem:[%s8039 + $0x2d8] sm:$0xff]
  %v8132 = vld [vmem:[%s8039 + $0x2e0] sm:$0xff]
  %v8133 = vld [vmem:[%s8039 + $0x2e8] sm:$0xff]
  %v8134 = vld [vmem:[%s8039 + $0x2f0] sm:$0xff]
  %v8135 = vld [vmem:[%s8039 + $0x2f8] sm:$0xff]
  %v8136 = vld [vmem:[%s8039 + $0x300] sm:$0xff]
  %v8137 = vld [vmem:[%s8039 + $0x308] sm:$0xff]
  %v8138 = vld [vmem:[%s8039 + $0x310] sm:$0xff]
  %v8139 = vld [vmem:[%s8039 + $0x318] sm:$0xff]
  %v8140 = vld [vmem:[%s8039 + $0x320] sm:$0xff]
  %v8141 = vld [vmem:[%s8039 + $0x328] sm:$0xff]
  %v8142 = vld [vmem:[%s8039 + $0x330] sm:$0xff]
  %v8143 = vld [vmem:[%s8039 + $0x338] sm:$0xff]
  %v8144 = vld [vmem:[%s8039 + $0x340] sm:$0xff]
  %v8145 = vld [vmem:[%s8039 + $0x348] sm:$0xff]
  %v8146 = vld [vmem:[%s8039 + $0x350] sm:$0xff]
  %v8147 = vld [vmem:[%s8039 + $0x358] sm:$0xff]
  %v8148 = vld [vmem:[%s8039 + $0x360] sm:$0xff]
  %v8149 = vld [vmem:[%s8039 + $0x368] sm:$0xff]
  %v8150 = vld [vmem:[%s8039 + $0x370] sm:$0xff]
  %v8151 = vld [vmem:[%s8039 + $0x378] sm:$0xff]
  %v8152 = vld [vmem:[%s8039 + $0x380] sm:$0xff]
  %v8153 = vld [vmem:[%s8039 + $0x388] sm:$0xff]
  %v8154 = vld [vmem:[%s8039 + $0x390] sm:$0xff]
  %v8155 = vld [vmem:[%s8039 + $0x398] sm:$0xff]
  %v8156 = vld [vmem:[%s8039 + $0x3a0] sm:$0xff]
  %v8157 = vld [vmem:[%s8039 + $0x3a8] sm:$0xff]
  %v8158 = vld [vmem:[%s8039 + $0x3b0] sm:$0xff]
  %v8159 = vld [vmem:[%s8039 + $0x3b8] sm:$0xff]
  %v8160 = vld [vmem:[%s8039 + $0x3c0] sm:$0xff]
  %v8161 = vld [vmem:[%s8039 + $0x3c8] sm:$0xff]
  %v8162 = vld [vmem:[%s8039 + $0x3d0] sm:$0xff]
  %v8163 = vld [vmem:[%s8039 + $0x3d8] sm:$0xff]
  %v8164 = vld [vmem:[%s8039 + $0x3e0] sm:$0xff]
  %v8165 = vld [vmem:[%s8039 + $0x3e8] sm:$0xff]
  %v8166 = vld [vmem:[%s8039 + $0x3f0] sm:$0xff]
  %v8167 = vld [vmem:[%s8039 + $0x3f8] sm:$0xff]
  %v8168 = vld [vmem:[%s8039 + $0x400] sm:$0xff]
  %v8169 = vld [vmem:[%s8039 + $0x408] sm:$0xff]
  %v8170 = vld [vmem:[%s8039 + $0x410] sm:$0xff]
  %v8171 = vld [vmem:[%s8039 + $0x418] sm:$0xff]
  %v8172 = vld [vmem:[%s8039 + $0x420] sm:$0xff]
  %v8173 = vld [vmem:[%s8039 + $0x428] sm:$0xff]
  %v8174 = vld [vmem:[%s8039 + $0x430] sm:$0xff]
  %v8175 = vld [vmem:[%s8039 + $0x438] sm:$0xff]
  %v8176 = vld [vmem:[%s8039 + $0x440] sm:$0xff]
  %v8177 = vld [vmem:[%s8039 + $0x448] sm:$0xff]
  %v8178 = vld [vmem:[%s8039 + $0x450] sm:$0xff]
  %v8179 = vld [vmem:[%s8039 + $0x458] sm:$0xff]
  %v8180 = vld [vmem:[%s8039 + $0x460] sm:$0xff]
  %v8181 = vld [vmem:[%s8039 + $0x468] sm:$0xff]
  %v8182 = vld [vmem:[%s8039 + $0x470] sm:$0xff]
  %v8183 = vld [vmem:[%s8039 + $0x478] sm:$0xff]
  %s8184 = scalar_lea.vmem %s2, 3
  %v8185 = vld [vmem:[%s8184] sm:$0x1]
  %s8186 = scalar_lea.vmem %s3, 3
  %v8187 = vld [vmem:[%s8186] sm:$0x1]
  %s8188 = scalar_lea.vmem %s4, 3
  %v8189 = vld [vmem:[%s8188] sm:$0x1]
  %8190 = vmatprep.subr.mxu0 0.0
  %8191 = vmatpush1.msra.mxu0 %v8071
  %8192 = vmatprep.subr.mxu0 0.0
  %8193 = vmatpush1.msra.mxu0 %v8070
  %8194 = vmatprep.subr.mxu0 0.0
  %8195 = vmatpush1.msra.mxu0 %v8069
  %8196 = vmatprep.subr.mxu0 0.0
  %8197 = vmatpush1.msra.mxu0 %v8068
  %8198 = vmatprep.subr.mxu0 0.0
  %8199 = vmatpush1.msra.mxu0 %v8067
  %8200 = vmatprep.subr.mxu0 0.0
  %8201 = vmatpush1.msra.mxu0 %v8066
  %8202 = vmatprep.subr.mxu0 0.0
  %8203 = vmatpush1.msra.mxu0 %v8065
  %8204 = vmatprep.subr.mxu0 0.0
  %8205 = vmatpush1.msra.mxu0 %v8064
  %8206 = vmatprep.subr.mxu0 0.0
  %8207 = vmatpush1.msra.mxu0 %v8063
  %8208 = vmatprep.subr.mxu0 0.0
  %8209 = vmatpush1.msra.mxu0 %v8062
  %8210 = vmatprep.subr.mxu0 0.0
  %8211 = vmatpush1.msra.mxu0 %v8061
  %8212 = vmatprep.subr.mxu0 0.0
  %8213 = vmatpush1.msra.mxu0 %v8060
  %8214 = vmatprep.subr.mxu0 0.0
  %8215 = vmatpush1.msra.mxu0 %v8059
  %8216 = vmatprep.subr.mxu0 0.0
  %8217 = vmatpush1.msra.mxu0 %v8058
  %8218 = vmatprep.subr.mxu0 0.0
  %8219 = vmatpush1.msra.mxu0 %v8057
  %8220 = vmatprep.subr.mxu0 0.0
  %8221 = vmatpush1.msra.mxu0 %v8056
  %8222 = vmatprep.subr.mxu0 0.0
  %8223 = vmatpush2.msra.mxu0 0.0
  %8224 = vmatprep.subr.mxu0 0.0
  %8225 = vmatpush2.msra.mxu0 0.0
  %8226 = vmatprep.subr.mxu0 0.0
  %8227 = vmatpush2.msra.mxu0 0.0
  %8228 = vmatprep.subr.mxu0 0.0
  %8229 = vmatpush2.msra.mxu0 0.0
  %8230 = vmatprep.subr.mxu0 0.0
  %8231 = vmatpush2.msra.mxu0 0.0
  %8232 = vmatprep.subr.mxu0 0.0
  %8233 = vmatpush2.msra.mxu0 0.0
  %8234 = vmatprep.subr.mxu0 0.0
  %8235 = vmatpush2.msra.mxu0 0.0
  %8236 = vmatprep.subr.mxu0 0.0
  %8237 = vmatpush2.msra.mxu0 0.0
  %8238 = vmatprep.subr.mxu0 0.0
  %8239 = vmatpush2.msra.mxu0 0.0
  %8240 = vmatprep.subr.mxu0 0.0
  %8241 = vmatpush2.msra.mxu0 0.0
  %8242 = vmatprep.subr.mxu0 0.0
  %8243 = vmatpush2.msra.mxu0 0.0
  %8244 = vmatprep.subr.mxu0 0.0
  %8245 = vmatpush2.msra.mxu0 0.0
  %8246 = vmatprep.subr.mxu0 0.0
  %8247 = vmatpush2.msra.mxu0 0.0
  %8248 = vmatprep.subr.mxu0 0.0
  %8249 = vmatpush2.msra.mxu0 0.0
  %8250 = vmatprep.subr.mxu0 0.0
  %8251 = vmatpush2.msra.mxu0 0.0
  %8252 = vmatprep.subr.mxu0 0.0
  %8253 = vmatpush2.msra.mxu0 0.0
  %8254 = vmatprep.mubr.f32.mxu0 0.0
  %8255 = vmatmul.mubr.f32.gmra.mxu0 0.0
  %v8256 = vpop.f32.mrf.mxu0
  %v8257 = vadd.f32 0.0, %v8256
  %v8258 = vpop.f32.mrf.mxu0
  %8259 = vdwg.mxu0
  %8260 = vmatprep.subr.mxu0 0.0
  %8261 = vmatpush1.msra.mxu0 %v8055
  %8262 = vmatprep.subr.mxu0 0.0
  %8263 = vmatpush1.msra.mxu0 %v8054
  %8264 = vmatprep.subr.mxu0 0.0
  %8265 = vmatpush1.msra.mxu0 %v8053
  %8266 = vmatprep.subr.mxu0 0.0
  %8267 = vmatpush1.msra.mxu0 %v8052
  %8268 = vmatprep.subr.mxu0 0.0
  %8269 = vmatpush1.msra.mxu0 %v8051
  %8270 = vmatprep.subr.mxu0 0.0
  %8271 = vmatpush1.msra.mxu0 %v8050
  %8272 = vmatprep.subr.mxu0 0.0
  %8273 = vmatpush1.msra.mxu0 %v8049
  %8274 = vmatprep.subr.mxu0 0.0
  %8275 = vmatpush1.msra.mxu0 %v8048
  %8276 = vmatprep.subr.mxu0 0.0
  %8277 = vmatpush1.msra.mxu0 %v8047
  %8278 = vmatprep.subr.mxu0 0.0
  %8279 = vmatpush1.msra.mxu0 %v8046
  %8280 = vmatprep.subr.mxu0 0.0
  %8281 = vmatpush1.msra.mxu0 %v8045
  %8282 = vmatprep.subr.mxu0 0.0
  %8283 = vmatpush1.msra.mxu0 %v8044
  %8284 = vmatprep.subr.mxu0 0.0
  %8285 = vmatpush1.msra.mxu0 %v8043
  %8286 = vmatprep.subr.mxu0 0.0
  %8287 = vmatpush1.msra.mxu0 %v8042
  %8288 = vmatprep.subr.mxu0 0.0
  %8289 = vmatpush1.msra.mxu0 %v8041
  %8290 = vmatprep.subr.mxu0 0.0
  %8291 = vmatpush1.msra.mxu0 %v8040
  %8292 = vmatprep.subr.mxu0 0.0
  %8293 = vmatpush2.msra.mxu0 0.0
  %8294 = vmatprep.subr.mxu0 0.0
  %8295 = vmatpush2.msra.mxu0 0.0
  %8296 = vmatprep.subr.mxu0 0.0
  %8297 = vmatpush2.msra.mxu0 0.0
  %8298 = vmatprep.subr.mxu0 0.0
  %8299 = vmatpush2.msra.mxu0 0.0
  %8300 = vmatprep.subr.mxu0 0.0
  %8301 = vmatpush2.msra.mxu0 0.0
  %8302 = vmatprep.subr.mxu0 0.0
  %8303 = vmatpush2.msra.mxu0 0.0
  %8304 = vmatprep.subr.mxu0 0.0
  %8305 = vmatpush2.msra.mxu0 0.0
  %8306 = vmatprep.subr.mxu0 0.0
  %8307 = vmatpush2.msra.mxu0 0.0
  %8308 = vmatprep.subr.mxu0 0.0
  %8309 = vmatpush2.msra.mxu0 0.0
  %8310 = vmatprep.subr.mxu0 0.0
  %8311 = vmatpush2.msra.mxu0 0.0
  %8312 = vmatprep.subr.mxu0 0.0
  %8313 = vmatpush2.msra.mxu0 0.0
  %8314 = vmatprep.subr.mxu0 0.0
  %8315 = vmatpush2.msra.mxu0 0.0
  %8316 = vmatprep.subr.mxu0 0.0
  %8317 = vmatpush2.msra.mxu0 0.0
  %8318 = vmatprep.subr.mxu0 0.0
  %8319 = vmatpush2.msra.mxu0 0.0
  %8320 = vmatprep.subr.mxu0 0.0
  %8321 = vmatpush2.msra.mxu0 0.0
  %8322 = vmatprep.subr.mxu0 0.0
  %8323 = vmatpush2.msra.mxu0 0.0
  %8324 = vmatprep.mubr.f32.mxu0 0.0
  %8325 = vmatmul.mubr.f32.gmra.mxu0 0.0
  %v8326 = vpop.f32.mrf.mxu0
  %v8327 = vadd.f32 %v8257, %v8326
  %v8328 = vpop.f32.mrf.mxu0
  %8329 = vdwg.mxu0
  %8330 = vmatprep.subr.mxu0 0.0
  %8331 = vmatpush1.msra.mxu0 %v8087
  %8332 = vmatprep.subr.mxu0 0.0
  %8333 = vmatpush1.msra.mxu0 %v8086
  %8334 = vmatprep.subr.mxu0 0.0
  %8335 = vmatpush1.msra.mxu0 %v8085
  %8336 = vmatprep.subr.mxu0 0.0
  %8337 = vmatpush1.msra.mxu0 %v8084
  %8338 = vmatprep.subr.mxu0 0.0
  %8339 = vmatpush1.msra.mxu0 %v8083
  %8340 = vmatprep.subr.mxu0 0.0
  %8341 = vmatpush1.msra.mxu0 %v8082
  %8342 = vmatprep.subr.mxu0 0.0
  %8343 = vmatpush1.msra.mxu0 %v8081
  %8344 = vmatprep.subr.mxu0 0.0
  %8345 = vmatpush1.msra.mxu0 %v8080
  %8346 = vmatprep.subr.mxu0 0.0
  %8347 = vmatpush1.msra.mxu0 %v8079
  %8348 = vmatprep.subr.mxu0 0.0
  %8349 = vmatpush1.msra.mxu0 %v8078
  %8350 = vmatprep.subr.mxu0 0.0
  %8351 = vmatpush1.msra.mxu0 %v8077
  %8352 = vmatprep.subr.mxu0 0.0
  %8353 = vmatpush1.msra.mxu0 %v8076
  %8354 = vmatprep.subr.mxu0 0.0
  %8355 = vmatpush1.msra.mxu0 %v8075
  %8356 = vmatprep.subr.mxu0 0.0
  %8357 = vmatpush1.msra.mxu0 %v8074
  %8358 = vmatprep.subr.mxu0 0.0
  %8359 = vmatpush1.msra.mxu0 %v8073
  %8360 = vmatprep.subr.mxu0 0.0
  %8361 = vmatpush1.msra.mxu0 %v8072
  %8362 = vmatprep.subr.mxu0 0.0
  %8363 = vmatpush2.msra.mxu0 0.0
  %8364 = vmatprep.subr.mxu0 0.0
  %8365 = vmatpush2.msra.mxu0 0.0
  %8366 = vmatprep.subr.mxu0 0.0
  %8367 = vmatpush2.msra.mxu0 0.0
  %8368 = vmatprep.subr.mxu0 0.0
  %8369 = vmatpush2.msra.mxu0 0.0
  %8370 = vmatprep.subr.mxu0 0.0
  %8371 = vmatpush2.msra.mxu0 0.0
  %8372 = vmatprep.subr.mxu0 0.0
  %8373 = vmatpush2.msra.mxu0 0.0
  %8374 = vmatprep.subr.mxu0 0.0
  %8375 = vmatpush2.msra.mxu0 0.0
  %8376 = vmatprep.subr.mxu0 0.0
  %8377 = vmatpush2.msra.mxu0 0.0
  %8378 = vmatprep.subr.mxu0 0.0
  %8379 = vmatpush2.msra.mxu0 0.0
  %8380 = vmatprep.subr.mxu0 0.0
  %8381 = vmatpush2.msra.mxu0 0.0
  %8382 = vmatprep.subr.mxu0 0.0
  %8383 = vmatpush2.msra.mxu0 0.0
  %8384 = vmatprep.subr.mxu0 0.0
  %8385 = vmatpush2.msra.mxu0 0.0
  %8386 = vmatprep.subr.mxu0 0.0
  %8387 = vmatpush2.msra.mxu0 0.0
  %8388 = vmatprep.subr.mxu0 0.0
  %8389 = vmatpush2.msra.mxu0 0.0
  %8390 = vmatprep.subr.mxu0 0.0
  %8391 = vmatpush2.msra.mxu0 0.0
  %8392 = vmatprep.subr.mxu0 0.0
  %8393 = vmatpush2.msra.mxu0 0.0
  %8394 = vmatprep.mubr.f32.mxu0 0.0
  %8395 = vmatmul.mubr.f32.gmra.mxu0 0.0
  %v8396 = vpop.f32.mrf.mxu0
  %v8397 = vadd.f32 0.0, %v8396
  %v8398 = vpop.f32.mrf.mxu0
  %8399 = vdwg.mxu0
  %v8400 = vadd.f32 %v8327, %v8397
  %8401 = vmatprep.subr.mxu0 0.0
  %8402 = vmatpush1.msra.mxu0 %v8103
  %8403 = vmatprep.subr.mxu0 0.0
  %8404 = vmatpush1.msra.mxu0 %v8102
  %8405 = vmatprep.subr.mxu0 0.0
  %8406 = vmatpush1.msra.mxu0 %v8101
  %8407 = vmatprep.subr.mxu0 0.0
  %8408 = vmatpush1.msra.mxu0 %v8100
  %8409 = vmatprep.subr.mxu0 0.0
  %8410 = vmatpush1.msra.mxu0 %v8099
  %8411 = vmatprep.subr.mxu0 0.0
  %8412 = vmatpush1.msra.mxu0 %v8098
  %8413 = vmatprep.subr.mxu0 0.0
  %8414 = vmatpush1.msra.mxu0 %v8097
  %8415 = vmatprep.subr.mxu0 0.0
  %8416 = vmatpush1.msra.mxu0 %v8096
  %8417 = vmatprep.subr.mxu0 0.0
  %8418 = vmatpush1.msra.mxu0 %v8095
  %8419 = vmatprep.subr.mxu0 0.0
  %8420 = vmatpush1.msra.mxu0 %v8094
  %8421 = vmatprep.subr.mxu0 0.0
  %8422 = vmatpush1.msra.mxu0 %v8093
  %8423 = vmatprep.subr.mxu0 0.0
  %8424 = vmatpush1.msra.mxu0 %v8092
  %8425 = vmatprep.subr.mxu0 0.0
  %8426 = vmatpush1.msra.mxu0 %v8091
  %8427 = vmatprep.subr.mxu0 0.0
  %8428 = vmatpush1.msra.mxu0 %v8090
  %8429 = vmatprep.subr.mxu0 0.0
  %8430 = vmatpush1.msra.mxu0 %v8089
  %8431 = vmatprep.subr.mxu0 0.0
  %8432 = vmatpush1.msra.mxu0 %v8088
  %8433 = vmatprep.subr.mxu0 0.0
  %8434 = vmatpush2.msra.mxu0 0.0
  %8435 = vmatprep.subr.mxu0 0.0
  %8436 = vmatpush2.msra.mxu0 0.0
  %8437 = vmatprep.subr.mxu0 0.0
  %8438 = vmatpush2.msra.mxu0 0.0
  %8439 = vmatprep.subr.mxu0 0.0
  %8440 = vmatpush2.msra.mxu0 0.0
  %8441 = vmatprep.subr.mxu0 0.0
  %8442 = vmatpush2.msra.mxu0 0.0
  %8443 = vmatprep.subr.mxu0 0.0
  %8444 = vmatpush2.msra.mxu0 0.0
  %8445 = vmatprep.subr.mxu0 0.0
  %8446 = vmatpush2.msra.mxu0 0.0
  %8447 = vmatprep.subr.mxu0 0.0
  %8448 = vmatpush2.msra.mxu0 0.0
  %8449 = vmatprep.subr.mxu0 0.0
  %8450 = vmatpush2.msra.mxu0 0.0
  %8451 = vmatprep.subr.mxu0 0.0
  %8452 = vmatpush2.msra.mxu0 0.0
  %8453 = vmatprep.subr.mxu0 0.0
  %8454 = vmatpush2.msra.mxu0 0.0
  %8455 = vmatprep.subr.mxu0 0.0
  %8456 = vmatpush2.msra.mxu0 0.0
  %8457 = vmatprep.subr.mxu0 0.0
  %8458 = vmatpush2.msra.mxu0 0.0
  %8459 = vmatprep.subr.mxu0 0.0
  %8460 = vmatpush2.msra.mxu0 0.0
  %8461 = vmatprep.subr.mxu0 0.0
  %8462 = vmatpush2.msra.mxu0 0.0
  %8463 = vmatprep.subr.mxu0 0.0
  %8464 = vmatpush2.msra.mxu0 0.0
  %8465 = vmatprep.mubr.f32.mxu0 0.0
  %8466 = vmatmul.mubr.f32.gmra.mxu0 0.0
  %v8467 = vpop.f32.mrf.mxu0
  %v8468 = vadd.f32 0.0, %v8467
  %v8469 = vpop.f32.mrf.mxu0
  %8470 = vdwg.mxu0
  %v8471 = vadd.f32 %v8400, %v8468
  %8472 = vmatprep.subr.mxu0 0.0
  %8473 = vmatpush1.msra.mxu0 %v8119
  %8474 = vmatprep.subr.mxu0 0.0
  %8475 = vmatpush1.msra.mxu0 %v8118
  %8476 = vmatprep.subr.mxu0 0.0
  %8477 = vmatpush1.msra.mxu0 %v8117
  %8478 = vmatprep.subr.mxu0 0.0
  %8479 = vmatpush1.msra.mxu0 %v8116
  %8480 = vmatprep.subr.mxu0 0.0
  %8481 = vmatpush1.msra.mxu0 %v8115
  %8482 = vmatprep.subr.mxu0 0.0
  %8483 = vmatpush1.msra.mxu0 %v8114
  %8484 = vmatprep.subr.mxu0 0.0
  %8485 = vmatpush1.msra.mxu0 %v8113
  %8486 = vmatprep.subr.mxu0 0.0
  %8487 = vmatpush1.msra.mxu0 %v8112
  %8488 = vmatprep.subr.mxu0 0.0
  %8489 = vmatpush1.msra.mxu0 %v8111
  %8490 = vmatprep.subr.mxu0 0.0
  %8491 = vmatpush1.msra.mxu0 %v8110
  %8492 = vmatprep.subr.mxu0 0.0
  %8493 = vmatpush1.msra.mxu0 %v8109
  %8494 = vmatprep.subr.mxu0 0.0
  %8495 = vmatpush1.msra.mxu0 %v8108
  %8496 = vmatprep.subr.mxu0 0.0
  %8497 = vmatpush1.msra.mxu0 %v8107
  %8498 = vmatprep.subr.mxu0 0.0
  %8499 = vmatpush1.msra.mxu0 %v8106
  %8500 = vmatprep.subr.mxu0 0.0
  %8501 = vmatpush1.msra.mxu0 %v8105
  %8502 = vmatprep.subr.mxu0 0.0
  %8503 = vmatpush1.msra.mxu0 %v8104
  %8504 = vmatprep.subr.mxu0 0.0
  %8505 = vmatpush2.msra.mxu0 0.0
  %8506 = vmatprep.subr.mxu0 0.0
  %8507 = vmatpush2.msra.mxu0 0.0
  %8508 = vmatprep.subr.mxu0 0.0
  %8509 = vmatpush2.msra.mxu0 0.0
  %8510 = vmatprep.subr.mxu0 0.0
  %8511 = vmatpush2.msra.mxu0 0.0
  %8512 = vmatprep.subr.mxu0 0.0
  %8513 = vmatpush2.msra.mxu0 0.0
  %8514 = vmatprep.subr.mxu0 0.0
  %8515 = vmatpush2.msra.mxu0 0.0
  %8516 = vmatprep.subr.mxu0 0.0
  %8517 = vmatpush2.msra.mxu0 0.0
  %8518 = vmatprep.subr.mxu0 0.0
  %8519 = vmatpush2.msra.mxu0 0.0
  %8520 = vmatprep.subr.mxu0 0.0
  %8521 = vmatpush2.msra.mxu0 0.0
  %8522 = vmatprep.subr.mxu0 0.0
  %8523 = vmatpush2.msra.mxu0 0.0
  %8524 = vmatprep.subr.mxu0 0.0
  %8525 = vmatpush2.msra.mxu0 0.0
  %8526 = vmatprep.subr.mxu0 0.0
  %8527 = vmatpush2.msra.mxu0 0.0
  %8528 = vmatprep.subr.mxu0 0.0
  %8529 = vmatpush2.msra.mxu0 0.0
  %8530 = vmatprep.subr.mxu0 0.0
  %8531 = vmatpush2.msra.mxu0 0.0
  %8532 = vmatprep.subr.mxu0 0.0
  %8533 = vmatpush2.msra.mxu0 0.0
  %8534 = vmatprep.subr.mxu0 0.0
  %8535 = vmatpush2.msra.mxu0 0.0
  %8536 = vmatprep.mubr.f32.mxu0 0.0
  %8537 = vmatmul.mubr.f32.gmra.mxu0 %v8035
  %v8538 = vpop.f32.mrf.mxu0
  %v8539 = vadd.f32 0.0, %v8538
  %v8540 = vpop.f32.mrf.mxu0
  %8541 = vdwg.mxu0
  %v8542 = vadd.f32 %v8471, %v8539
  %8543 = vmatprep.subr.mxu0 0.0
  %8544 = vmatpush1.msra.mxu0 %v8135
  %8545 = vmatprep.subr.mxu0 0.0
  %8546 = vmatpush1.msra.mxu0 %v8134
  %8547 = vmatprep.subr.mxu0 0.0
  %8548 = vmatpush1.msra.mxu0 %v8133
  %8549 = vmatprep.subr.mxu0 0.0
  %8550 = vmatpush1.msra.mxu0 %v8132
  %8551 = vmatprep.subr.mxu0 0.0
  %8552 = vmatpush1.msra.mxu0 %v8131
  %8553 = vmatprep.subr.mxu0 0.0
  %8554 = vmatpush1.msra.mxu0 %v8130
  %8555 = vmatprep.subr.mxu0 0.0
  %8556 = vmatpush1.msra.mxu0 %v8129
  %8557 = vmatprep.subr.mxu0 0.0
  %8558 = vmatpush1.msra.mxu0 %v8128
  %8559 = vmatprep.subr.mxu0 0.0
  %8560 = vmatpush1.msra.mxu0 %v8127
  %8561 = vmatprep.subr.mxu0 0.0
  %8562 = vmatpush1.msra.mxu0 %v8126
  %8563 = vmatprep.subr.mxu0 0.0
  %8564 = vmatpush1.msra.mxu0 %v8125
  %8565 = vmatprep.subr.mxu0 0.0
  %8566 = vmatpush1.msra.mxu0 %v8124
  %8567 = vmatprep.subr.mxu0 0.0
  %8568 = vmatpush1.msra.mxu0 %v8123
  %8569 = vmatprep.subr.mxu0 0.0
  %8570 = vmatpush1.msra.mxu0 %v8122
  %8571 = vmatprep.subr.mxu0 0.0
  %8572 = vmatpush1.msra.mxu0 %v8121
  %8573 = vmatprep.subr.mxu0 0.0
  %8574 = vmatpush1.msra.mxu0 %v8120
  %8575 = vmatprep.subr.mxu0 0.0
  %8576 = vmatpush2.msra.mxu0 0.0
  %8577 = vmatprep.subr.mxu0 0.0
  %8578 = vmatpush2.msra.mxu0 0.0
  %8579 = vmatprep.subr.mxu0 0.0
  %8580 = vmatpush2.msra.mxu0 0.0
  %8581 = vmatprep.subr.mxu0 0.0
  %8582 = vmatpush2.msra.mxu0 0.0
  %8583 = vmatprep.subr.mxu0 0.0
  %8584 = vmatpush2.msra.mxu0 0.0
  %8585 = vmatprep.subr.mxu0 0.0
  %8586 = vmatpush2.msra.mxu0 0.0
  %8587 = vmatprep.subr.mxu0 0.0
  %8588 = vmatpush2.msra.mxu0 0.0
  %8589 = vmatprep.subr.mxu0 0.0
  %8590 = vmatpush2.msra.mxu0 0.0
  %8591 = vmatprep.subr.mxu0 0.0
  %8592 = vmatpush2.msra.mxu0 0.0
  %8593 = vmatprep.subr.mxu0 0.0
  %8594 = vmatpush2.msra.mxu0 0.0
  %8595 = vmatprep.subr.mxu0 0.0
  %8596 = vmatpush2.msra.mxu0 0.0
  %8597 = vmatprep.subr.mxu0 0.0
  %8598 = vmatpush2.msra.mxu0 0.0
  %8599 = vmatprep.subr.mxu0 0.0
  %8600 = vmatpush2.msra.mxu0 0.0
  %8601 = vmatprep.subr.mxu0 0.0
  %8602 = vmatpush2.msra.mxu0 0.0
  %8603 = vmatprep.subr.mxu0 0.0
  %8604 = vmatpush2.msra.mxu0 0.0
  %8605 = vmatprep.subr.mxu0 0.0
  %8606 = vmatpush2.msra.mxu0 0.0
  %8607 = vmatprep.mubr.f32.mxu0 0.0
  %8608 = vmatmul.mubr.f32.gmra.mxu0 %v8036
  %v8609 = vpop.f32.mrf.mxu0
  %v8610 = vadd.f32 0.0, %v8609
  %v8611 = vpop.f32.mrf.mxu0
  %8612 = vdwg.mxu0
  %v8613 = vadd.f32 %v8542, %v8610
  %8614 = vmatprep.subr.mxu0 0.0
  %8615 = vmatpush1.msra.mxu0 %v8151
  %8616 = vmatprep.subr.mxu0 0.0
  %8617 = vmatpush1.msra.mxu0 %v8150
  %8618 = vmatprep.subr.mxu0 0.0
  %8619 = vmatpush1.msra.mxu0 %v8149
  %8620 = vmatprep.subr.mxu0 0.0
  %8621 = vmatpush1.msra.mxu0 %v8148
  %8622 = vmatprep.subr.mxu0 0.0
  %8623 = vmatpush1.msra.mxu0 %v8147
  %8624 = vmatprep.subr.mxu0 0.0
  %8625 = vmatpush1.msra.mxu0 %v8146
  %8626 = vmatprep.subr.mxu0 0.0
  %8627 = vmatpush1.msra.mxu0 %v8145
  %8628 = vmatprep.subr.mxu0 0.0
  %8629 = vmatpush1.msra.mxu0 %v8144
  %8630 = vmatprep.subr.mxu0 0.0
  %8631 = vmatpush1.msra.mxu0 %v8143
  %8632 = vmatprep.subr.mxu0 0.0
  %8633 = vmatpush1.msra.mxu0 %v8142
  %8634 = vmatprep.subr.mxu0 0.0
  %8635 = vmatpush1.msra.mxu0 %v8141
  %8636 = vmatprep.subr.mxu0 0.0
  %8637 = vmatpush1.msra.mxu0 %v8140
  %8638 = vmatprep.subr.mxu0 0.0
  %8639 = vmatpush1.msra.mxu0 %v8139
  %8640 = vmatprep.subr.mxu0 0.0
  %8641 = vmatpush1.msra.mxu0 %v8138
  %8642 = vmatprep.subr.mxu0 0.0
  %8643 = vmatpush1.msra.mxu0 %v8137
  %8644 = vmatprep.subr.mxu0 0.0
  %8645 = vmatpush1.msra.mxu0 %v8136
  %8646 = vmatprep.subr.mxu0 0.0
  %8647 = vmatpush2.msra.mxu0 0.0
  %8648 = vmatprep.subr.mxu0 0.0
  %8649 = vmatpush2.msra.mxu0 0.0
  %8650 = vmatprep.subr.mxu0 0.0
  %8651 = vmatpush2.msra.mxu0 0.0
  %8652 = vmatprep.subr.mxu0 0.0
  %8653 = vmatpush2.msra.mxu0 0.0
  %8654 = vmatprep.subr.mxu0 0.0
  %8655 = vmatpush2.msra.mxu0 0.0
  %8656 = vmatprep.subr.mxu0 0.0
  %8657 = vmatpush2.msra.mxu0 0.0
  %8658 = vmatprep.subr.mxu0 0.0
  %8659 = vmatpush2.msra.mxu0 0.0
  %8660 = vmatprep.subr.mxu0 0.0
  %8661 = vmatpush2.msra.mxu0 0.0
  %8662 = vmatprep.subr.mxu0 0.0
  %8663 = vmatpush2.msra.mxu0 0.0
  %8664 = vmatprep.subr.mxu0 0.0
  %8665 = vmatpush2.msra.mxu0 0.0
  %8666 = vmatprep.subr.mxu0 0.0
  %8667 = vmatpush2.msra.mxu0 0.0
  %8668 = vmatprep.subr.mxu0 0.0
  %8669 = vmatpush2.msra.mxu0 0.0
  %8670 = vmatprep.subr.mxu0 0.0
  %8671 = vmatpush2.msra.mxu0 0.0
  %8672 = vmatprep.subr.mxu0 0.0
  %8673 = vmatpush2.msra.mxu0 0.0
  %8674 = vmatprep.subr.mxu0 0.0
  %8675 = vmatpush2.msra.mxu0 0.0
  %8676 = vmatprep.subr.mxu0 0.0
  %8677 = vmatpush2.msra.mxu0 0.0
  %8678 = vmatprep.mubr.f32.mxu0 0.0
  %8679 = vmatmul.mubr.f32.gmra.mxu0 0.0
  %v8680 = vpop.f32.mrf.mxu0
  %v8681 = vadd.f32 0.0, %v8680
  %v8682 = vpop.f32.mrf.mxu0
  %8683 = vdwg.mxu0
  %v8684 = vadd.f32 %v8613, %v8681
  %8685 = vmatprep.subr.mxu0 0.0
  %8686 = vmatpush1.msra.mxu0 %v8167
  %8687 = vmatprep.subr.mxu0 0.0
  %8688 = vmatpush1.msra.mxu0 %v8166
  %8689 = vmatprep.subr.mxu0 0.0
  %8690 = vmatpush1.msra.mxu0 %v8165
  %8691 = vmatprep.subr.mxu0 0.0
  %8692 = vmatpush1.msra.mxu0 %v8164
  %8693 = vmatprep.subr.mxu0 0.0
  %8694 = vmatpush1.msra.mxu0 %v8163
  %8695 = vmatprep.subr.mxu0 0.0
  %8696 = vmatpush1.msra.mxu0 %v8162
  %8697 = vmatprep.subr.mxu0 0.0
  %8698 = vmatpush1.msra.mxu0 %v8161
  %8699 = vmatprep.subr.mxu0 0.0
  %8700 = vmatpush1.msra.mxu0 %v8160
  %8701 = vmatprep.subr.mxu0 0.0
  %8702 = vmatpush1.msra.mxu0 %v8159
  %8703 = vmatprep.subr.mxu0 0.0
  %8704 = vmatpush1.msra.mxu0 %v8158
  %8705 = vmatprep.subr.mxu0 0.0
  %8706 = vmatpush1.msra.mxu0 %v8157
  %8707 = vmatprep.subr.mxu0 0.0
  %8708 = vmatpush1.msra.mxu0 %v8156
  %8709 = vmatprep.subr.mxu0 0.0
  %8710 = vmatpush1.msra.mxu0 %v8155
  %8711 = vmatprep.subr.mxu0 0.0
  %8712 = vmatpush1.msra.mxu0 %v8154
  %8713 = vmatprep.subr.mxu0 0.0
  %8714 = vmatpush1.msra.mxu0 %v8153
  %8715 = vmatprep.subr.mxu0 0.0
  %8716 = vmatpush1.msra.mxu0 %v8152
  %8717 = vmatprep.subr.mxu0 0.0
  %8718 = vmatpush2.msra.mxu0 0.0
  %8719 = vmatprep.subr.mxu0 0.0
  %8720 = vmatpush2.msra.mxu0 0.0
  %8721 = vmatprep.subr.mxu0 0.0
  %8722 = vmatpush2.msra.mxu0 0.0
  %8723 = vmatprep.subr.mxu0 0.0
  %8724 = vmatpush2.msra.mxu0 0.0
  %8725 = vmatprep.subr.mxu0 0.0
  %8726 = vmatpush2.msra.mxu0 0.0
  %8727 = vmatprep.subr.mxu0 0.0
  %8728 = vmatpush2.msra.mxu0 0.0
  %8729 = vmatprep.subr.mxu0 0.0
  %8730 = vmatpush2.msra.mxu0 0.0
  %8731 = vmatprep.subr.mxu0 0.0
  %8732 = vmatpush2.msra.mxu0 0.0
  %8733 = vmatprep.subr.mxu0 0.0
  %8734 = vmatpush2.msra.mxu0 0.0
  %8735 = vmatprep.subr.mxu0 0.0
  %8736 = vmatpush2.msra.mxu0 0.0
  %8737 = vmatprep.subr.mxu0 0.0
  %8738 = vmatpush2.msra.mxu0 0.0
  %8739 = vmatprep.subr.mxu0 0.0
  %8740 = vmatpush2.msra.mxu0 0.0
  %8741 = vmatprep.subr.mxu0 0.0
  %8742 = vmatpush2.msra.mxu0 0.0
  %8743 = vmatprep.subr.mxu0 0.0
  %8744 = vmatpush2.msra.mxu0 0.0
  %8745 = vmatprep.subr.mxu0 0.0
  %8746 = vmatpush2.msra.mxu0 0.0
  %8747 = vmatprep.subr.mxu0 0.0
  %8748 = vmatpush2.msra.mxu0 0.0
  %8749 = vmatprep.mubr.f32.mxu0 0.0
  %8750 = vmatmul.mubr.f32.gmra.mxu0 %v8037
  %v8751 = vpop.f32.mrf.mxu0
  %v8752 = vadd.f32 0.0, %v8751
  %v8753 = vpop.f32.mrf.mxu0
  %8754 = vdwg.mxu0
  %v8755 = vadd.f32 %v8684, %v8752
  %8756 = vmatprep.subr.mxu0 0.0
  %8757 = vmatpush1.msra.mxu0 %v8183
  %8758 = vmatprep.subr.mxu0 0.0
  %8759 = vmatpush1.msra.mxu0 %v8182
  %8760 = vmatprep.subr.mxu0 0.0
  %8761 = vmatpush1.msra.mxu0 %v8181
  %8762 = vmatprep.subr.mxu0 0.0
  %8763 = vmatpush1.msra.mxu0 %v8180
  %8764 = vmatprep.subr.mxu0 0.0
  %8765 = vmatpush1.msra.mxu0 %v8179
  %8766 = vmatprep.subr.mxu0 0.0
  %8767 = vmatpush1.msra.mxu0 %v8178
  %8768 = vmatprep.subr.mxu0 0.0
  %8769 = vmatpush1.msra.mxu0 %v8177
  %8770 = vmatprep.subr.mxu0 0.0
  %8771 = vmatpush1.msra.mxu0 %v8176
  %8772 = vmatprep.subr.mxu0 0.0
  %8773 = vmatpush1.msra.mxu0 %v8175
  %8774 = vmatprep.subr.mxu0 0.0
  %8775 = vmatpush1.msra.mxu0 %v8174
  %8776 = vmatprep.subr.mxu0 0.0
  %8777 = vmatpush1.msra.mxu0 %v8173
  %8778 = vmatprep.subr.mxu0 0.0
  %8779 = vmatpush1.msra.mxu0 %v8172
  %8780 = vmatprep.subr.mxu0 0.0
  %8781 = vmatpush1.msra.mxu0 %v8171
  %8782 = vmatprep.subr.mxu0 0.0
  %8783 = vmatpush1.msra.mxu0 %v8170
  %8784 = vmatprep.subr.mxu0 0.0
  %8785 = vmatpush1.msra.mxu0 %v8169
  %8786 = vmatprep.subr.mxu0 0.0
  %8787 = vmatpush1.msra.mxu0 %v8168
  %8788 = vmatprep.subr.mxu0 0.0
  %8789 = vmatpush2.msra.mxu0 0.0
  %8790 = vmatprep.subr.mxu0 0.0
  %8791 = vmatpush2.msra.mxu0 0.0
  %8792 = vmatprep.subr.mxu0 0.0
  %8793 = vmatpush2.msra.mxu0 0.0
  %8794 = vmatprep.subr.mxu0 0.0
  %8795 = vmatpush2.msra.mxu0 0.0
  %8796 = vmatprep.subr.mxu0 0.0
  %8797 = vmatpush2.msra.mxu0 0.0
  %8798 = vmatprep.subr.mxu0 0.0
  %8799 = vmatpush2.msra.mxu0 0.0
  %8800 = vmatprep.subr.mxu0 0.0
  %8801 = vmatpush2.msra.mxu0 0.0
  %8802 = vmatprep.subr.mxu0 0.0
  %8803 = vmatpush2.msra.mxu0 0.0
  %8804 = vmatprep.subr.mxu0 0.0
  %8805 = vmatpush2.msra.mxu0 0.0
  %8806 = vmatprep.subr.mxu0 0.0
  %8807 = vmatpush2.msra.mxu0 0.0
  %8808 = vmatprep.subr.mxu0 0.0
  %8809 = vmatpush2.msra.mxu0 0.0
  %8810 = vmatprep.subr.mxu0 0.0
  %8811 = vmatpush2.msra.mxu0 0.0
  %8812 = vmatprep.subr.mxu0 0.0
  %8813 = vmatpush2.msra.mxu0 0.0
  %8814 = vmatprep.subr.mxu0 0.0
  %8815 = vmatpush2.msra.mxu0 0.0
  %8816 = vmatprep.subr.mxu0 0.0
  %8817 = vmatpush2.msra.mxu0 0.0
  %8818 = vmatprep.subr.mxu0 0.0
  %8819 = vmatpush2.msra.mxu0 0.0
  %8820 = vmatprep.mubr.f32.mxu0 0.0
  %8821 = vmatmul.mubr.f32.gmra.mxu0 %v8038
  %v8822 = vpop.f32.mrf.mxu0
  %v8823 = vadd.f32 0.0, %v8822
  %v8824 = vpop.f32.mrf.mxu0
  %8825 = vdwg.mxu0
  %v8826 = vadd.f32 %v8755, %v8823
  %v8828 = vlaneseq
  %v8829 = vshrl.u32 %v8828, 7
  %v8830 = vsub.s32 0, %v8829
  %v8831 = vrot.slane %v8185, %v8830
  %v8833 = vadd.f32 %v8826, %v8831
  %v8834 = vmax.f32 %v8833, 0.0
  %v8835 = vmul.f32 %v8834, %v4727
  %v8836 = vrot.slane %v8835, 4
  %v8837 = vadd.f32 %v8835, %v8836
  %v8838 = vrot.slane %v8837, 2
  %v8839 = vadd.f32 %v8837, %v8838
  %v8840 = vrot.slane %v8839, 1
  %v8841 = vadd.f32 %v8839, %v8840
  %v8842 = vmul.f32 %v8834, %v8834
  %v8843 = vmul.f32 %v8842, %v4727
  %v8844 = vrot.slane %v8843, 4
  %v8845 = vadd.f32 %v8843, %v8844
  %v8846 = vrot.slane %v8845, 2
  %v8847 = vadd.f32 %v8845, %v8846
  %v8848 = vrot.slane %v8847, 1
  %v8849 = vadd.f32 %v8847, %v8848
  %v8850 = vmul.f32 %v8841, 0.5
  %v8851 = vmul.f32 %v8849, 0.5
  %v8852 = vmul.f32 %v8850, %v8850
  %v8853 = vsub.f32 %v8851, %v8852
  %v8854 = vmax.f32 %v8853, 0.0
  %v8855 = vadd.f32 %v8854, 1e-05
  %v8856 = vrsqrt.pop %v8855
  %v8857 = vmul.f32 %v8187, %v8856
  %v8858 = vmul.f32 %v8850, %v8857
  %v8859 = vsub.f32 %v8189, %v8858
  %v8861 = vlaneseq
  %v8862 = vshrl.u32 %v8861, 7
  %v8863 = vsub.s32 0, %v8862
  %v8864 = vrot.slane %v8857, %v8863
  %v8866 = vmul.f32 %v8834, %v8864
  %v8868 = vlaneseq
  %v8869 = vshrl.u32 %v8868, 7
  %v8870 = vsub.s32 0, %v8869
  %v8871 = vrot.slane %v8859, %v8870
  %v8873 = vadd.f32 %v8866, %v8871
  %8874 = vst [vmem:[%s5] sm:$0xff] %v8873
  // Predicated region
  $region22: #{image_encoding.1} parent=0 // pred_check
    _
  $region23: #{image_encoding.1} parent=0 // pred_check_branch
    %8876 = sbr.rel (0) target = $region25
  $region24: #{image_encoding.1} parent=0 // pred_region
    _
  $region25: #{image_encoding.1} parent=0 // pred_fallthru
    _
  // Predicated region
  $region26: #{image_encoding.1} parent=0 // pred_check
    _
  $region27: #{image_encoding.1} parent=0 // pred_check_branch
    %8878 = sbr.rel (0) target = $region29
  $region28: #{image_encoding.1} parent=0 // pred_region
    _
  $region29: #{image_encoding.1} parent=0 // pred_fallthru
    _

</llo_original>
